<compile_context>
chip_gen: v7x
topology: tpu7x:2x2x1
jax: 0.10.0
libtpu: 0.0.40
codegen_flags: <defaults>
</compile_context>

<pallas_src>
import math
import functools

import jax
import jax.numpy as jnp
from jax import lax
from jax.experimental import pallas as pl
from jax.experimental.pallas import tpu as pltpu


def _layernorm(h, gamma, beta, eps=1e-5):
    mean = jnp.mean(h, axis=-1, keepdims=True)
    var = jnp.mean((h - mean) ** 2, axis=-1, keepdims=True)
    return (h - mean) * lax.rsqrt(var + eps) * gamma + beta


def _erf_approx(z):
    # Abramowitz & Stegun 7.1.26 rational approximation (|err| < 1.5e-7), built only
    # from elementwise ops with guaranteed Mosaic lowerings (exp / mul / add / where).
    a1, a2, a3, a4, a5 = 0.254829592, -0.284496736, 1.421413741, -1.453152027, 1.061405429
    p = 0.3275911
    s = jnp.where(z >= 0.0, 1.0, -1.0)
    az = jnp.abs(z)
    t = 1.0 / (1.0 + p * az)
    poly = ((((a5 * t + a4) * t + a3) * t + a2) * t + a1) * t
    return s * (1.0 - poly * jnp.exp(-az * az))


def _gelu_exact(x):
    # PyTorch nn.GELU() default: exact erf-based GELU (erf via 1.5e-7-accurate poly).
    return 0.5 * x * (1.0 + _erf_approx(x * (1.0 / math.sqrt(2.0))))


def block_kernel(x_ref,
                 ln1_g_ref, ln1_b_ref,
                 wqkv_ref, bqkv_ref,
                 wp_ref, bp_ref,
                 ln2_g_ref, ln2_b_ref,
                 w1_ref, b1_ref, w2_ref, b2_ref,
                 out_ref,
                 *, n_head, n_modality):
    Bb, T, C = x_ref.shape
    R = Bb * T
    hd = C // n_head
    t = T // n_modality

    # Fold the batch block into the GEMM row (M) dimension.
    x = x_ref[...].reshape(R, C).astype(jnp.float32)

    # ---------- LN1 (f32) ----------
    h = _layernorm(x, ln1_g_ref[...], ln1_b_ref[...])

    # ---------- fused QKV projection: one wide bf16 MXU GEMM, f32 accumulation ----------
    # (1/sqrt(hd) is already folded into Wq / bq at pack time.)
    qkv = jnp.dot(h.astype(jnp.bfloat16), wqkv_ref[...],
                  preferred_element_type=jnp.float32) + bqkv_ref[...]
    q = qkv[:, 0 * C:1 * C].astype(jnp.bfloat16).reshape(Bb, T, C)
    k = qkv[:, 1 * C:2 * C].astype(jnp.bfloat16).reshape(Bb, T, C)
    v = qkv[:, 2 * C:3 * C].astype(jnp.bfloat16).reshape(Bb, T, C)

    # ---------- cross-conditional causal mask as a single hoisted additive bias ----------
    # allowed(i, j) = (j % t) <= (i % t)  == tril(t, t) tiled (n_modality x n_modality)
    row_mod = lax.broadcasted_iota(jnp.int32, (T, 1), 0) % t
    col_mod = lax.broadcasted_iota(jnp.int32, (1, T), 1) % t
    mask_bias = jnp.where(col_mod <= row_mod,
                          jnp.float32(0.0), jnp.float32(-1e30))       # (T, T)

    # ---------- per-head attention, batched over the Bb rows of this block ----------
    head_outs = []
    for hi in range(n_head):
        sl = slice(hi * hd, (hi + 1) * hd)
        qh = q[:, :, sl]                                              # (Bb, T, hd) bf16
        kh = k[:, :, sl]
        vh = v[:, :, sl]
        att = jnp.einsum('bqd,bkd->bqk', qh, kh,
                         preferred_element_type=jnp.float32)          # (Bb, T, T) f32
        att = att + mask_bias[None, :, :]
        att = att - jnp.max(att, axis=-1, keepdims=True)
        p = jnp.exp(att)
        denom = jnp.sum(p, axis=-1, keepdims=True)                    # (Bb, T, 1)
        yh = jnp.einsum('bqk,bkd->bqd', p.astype(jnp.bfloat16), vh,
                        preferred_element_type=jnp.float32)           # (Bb, T, hd)
        # normalize AFTER the PV matmul (T*hd mults, not T*T); EUP reciprocal slot
        head_outs.append(yh * pl.reciprocal(denom, approx=True))

    # lane-concat heads, then ONE full-depth (K = C) output-projection GEMM
    y = jnp.concatenate(head_outs, axis=-1).reshape(R, C)
    x1 = x + jnp.dot(y.astype(jnp.bfloat16), wp_ref[...],
                     preferred_element_type=jnp.float32) + bp_ref[...]

    # ---------- LN2 + MLP (bf16 GEMMs, exact GELU in f32) + residual ----------
    h2 = _layernorm(x1, ln2_g_ref[...], ln2_b_ref[...])
    m = jnp.dot(h2.astype(jnp.bfloat16), w1_ref[...],
                preferred_element_type=jnp.float32) + b1_ref[...]
    m = _gelu_exact(m)
    m = jnp.dot(m.astype(jnp.bfloat16), w2_ref[...],
                preferred_element_type=jnp.float32) + b2_ref[...]
    out_ref[...] = (x1 + m).reshape(Bb, T, C).astype(out_ref.dtype)


def _pick_batch_block(B, T, target_rows=256):
    """Largest divisor of B whose row tile B_blk*T stays <= target_rows, while keeping
    at least 2 grid steps when possible (v7x has 2 TensorCores per chip)."""
    divisors = [d for d in range(1, B + 1) if B % d == 0]
    fitting = [d for d in divisors if d * T <= max(target_rows, T)]
    blk = max(fitting) if fitting else 1
    if blk == B and B > 1:
        blk = max(d for d in divisors if d < B)
    return blk


def _vmem_limit_bytes(b_blk, T, C, single_buffered_weights):
    R = b_blk * T
    wmul = 1 if single_buffered_weights else 2
    weight_bytes = wmul * 2 * 12 * C * C                 # bf16 Wqkv + Wp + W1 + W2
    bias_bytes = wmul * 4 * 13 * C                       # f32 biases + LN params
    io_bytes = 2 * 2 * 4 * R * C                         # x / out blocks, double-buffered
    work_bytes = 4 * (R * 13 * C + b_blk * T * T * 4)    # qkv / activations / f32 scores
    needed = weight_bytes + bias_bytes + io_bytes + 2 * work_bytes + (4 << 20)
    try:
        # Generation-aware cap: never request more than physical VMEM minus headroom
        # (v7x has only 64 MiB per TensorCore).
        cap = pltpu.get_tpu_info().vmem_capacity_bytes - (16 << 20)
    except Exception:
        cap = 48 << 20                                   # v7x-safe fallback
    return int(min(cap, max(32 << 20, needed)))


def block_forward(x, packed_params, *, n_head, n_modality, batch_block=None):
    B, T, C = x.shape
    if batch_block is None:
        batch_block = _pick_batch_block(B, T)
    assert B % batch_block == 0, "batch_block must divide B"
    grid = (B // batch_block,)

    kernel = functools.partial(block_kernel, n_head=n_head, n_modality=n_modality)

    def build(weight_mode):
        def w_spec(shape):
            zeros = (0,) * len(shape)
            if weight_mode is None:
                return pl.BlockSpec(shape, lambda b: zeros)
            # grid-invariant weights: single-buffer to halve their VMEM footprint
            return pl.BlockSpec(shape, lambda b: zeros, pipeline_mode=weight_mode)

        io_spec = pl.BlockSpec((batch_block, T, C), lambda b: (b, 0, 0))
        return pl.pallas_call(
            kernel,
            out_shape=jax.ShapeDtypeStruct((B, T, C), x.dtype),
            grid_spec=pltpu.PrefetchScalarGridSpec(
                num_scalar_prefetch=0,
                grid=grid,
                in_specs=[
                    io_spec,                                        # x
                    w_spec((1, C)), w_spec((1, C)),                 # ln1 gamma / beta
                    w_spec((C, 3 * C)), w_spec((1, 3 * C)),         # fused Wqkv (bf16), bqkv
                    w_spec((C, C)), w_spec((1, C)),                 # Wproj (bf16), bproj
                    w_spec((1, C)), w_spec((1, C)),                 # ln2 gamma / beta
                    w_spec((C, 4 * C)), w_spec((1, 4 * C)),         # W1 (bf16), b1
                    w_spec((4 * C, C)), w_spec((1, C)),             # W2 (bf16), b2
                ],
                out_specs=io_spec,
            ),
            compiler_params=pltpu.CompilerParams(
                dimension_semantics=("parallel",),
                vmem_limit_bytes=_vmem_limit_bytes(
                    batch_block, T, C, weight_mode is not None)),
        )

    try:
        out = build(pl.Buffered(1))(x, *packed_params)
        return jax.block_until_ready(out)
    except Exception:
        # pipeline_mode=pl.Buffered(1) not supported on this jax version:
        # fall back to default double-buffered weight specs (identical numerics).
        out = build(None)(x, *packed_params)
        return jax.block_until_ready(out)


def pack_params(raw_params, *, n_head):
    """Fuse Wq|Wk|Wv into one (C, 3C) bf16 weight (with 1/sqrt(hd) folded into the query
    projection) and cast all GEMM weights to bf16; keep biases / LN params in f32."""
    (ln1_g, ln1_b, wq, bq, wk, bk, wv, bv, wp, bp,
     ln2_g, ln2_b, w1, b1, w2, b2) = raw_params
    C = wq.shape[0]
    scale = 1.0 / math.sqrt(C // n_head)
    wqkv = jnp.concatenate([wq * scale, wk, wv], axis=1).astype(jnp.bfloat16)
    bqkv = jnp.concatenate([bq * scale, bk, bv], axis=1).astype(jnp.float32)
    return (ln1_g.astype(jnp.float32), ln1_b.astype(jnp.float32),
            wqkv, bqkv,
            wp.astype(jnp.bfloat16), bp.astype(jnp.float32),
            ln2_g.astype(jnp.float32), ln2_b.astype(jnp.float32),
            w1.astype(jnp.bfloat16), b1.astype(jnp.float32),
            w2.astype(jnp.bfloat16), b2.astype(jnp.float32))


# ---------------- pure-JAX f32 reference (for correctness check) ----------------
def block_reference(x, raw_params, *, n_head, n_modality):
    (ln1_g, ln1_b, wq, bq, wk, bk, wv, bv, wp, bp,
     ln2_g, ln2_b, w1, b1, w2, b2) = raw_params
    B, T, C = x.shape
    hd = C // n_head
    t = T // n_modality

    def ln(h, g, b):
        mu = jnp.mean(h, axis=-1, keepdims=True)
        var = jnp.mean((h - mu) ** 2, axis=-1, keepdims=True)
        return (h - mu) / jnp.sqrt(var + 1e-5) * g + b

    h = ln(x, ln1_g, ln1_b)
    q = (h @ wq + bq).reshape(B, T, n_head, hd).transpose(0, 2, 1, 3)
    k = (h @ wk + bk).reshape(B, T, n_head, hd).transpose(0, 2, 1, 3)
    v = (h @ wv + bv).reshape(B, T, n_head, hd).transpose(0, 2, 1, 3)
    att = jnp.einsum("bhqd,bhkd->bhqk", q, k) / math.sqrt(hd)
    i = jnp.arange(T)[:, None]
    j = jnp.arange(T)[None, :]
    allowed = (j % t) <= (i % t)
    att = jnp.where(allowed[None, None], att, -jnp.inf)
    att = jax.nn.softmax(att, axis=-1)
    y = jnp.einsum("bhqk,bhkd->bhqd", att, v).transpose(0, 2, 1, 3).reshape(B, T, C)
    x1 = x + (y @ wp + bp)
    h2 = ln(x1, ln2_g, ln2_b)
    m = jax.nn.gelu(h2 @ w1 + b1, approximate=False)
    return x1 + (m @ w2 + b2)


if __name__ == "__main__":
    # Small config consistent with the module: n_embd=128, n_head=4, n_modality=2,
    # T = n_modality * t with t=8 -> T=16, batch=8 (=> two batch-folded grid steps,
    # lane-dense C=128 output).
    B, T, C = 8, 16, 128
    n_head, n_modality = 4, 2

    key = jax.random.PRNGKey(0)
    keys = jax.random.split(key, 16)

    def nrm(k, shape, scale=0.02):
        return (scale * jax.random.normal(k, shape)).astype(jnp.float32)

    ln1_g = jnp.ones((1, C), jnp.float32)
    ln1_b = jnp.zeros((1, C), jnp.float32)
    ln2_g = jnp.ones((1, C), jnp.float32)
    ln2_b = jnp.zeros((1, C), jnp.float32)
    wq, bq = nrm(keys[0], (C, C)), nrm(keys[1], (1, C))
    wk, bk = nrm(keys[2], (C, C)), nrm(keys[3], (1, C))
    wv, bv = nrm(keys[4], (C, C)), nrm(keys[5], (1, C))
    wp, bp = nrm(keys[6], (C, C)), nrm(keys[7], (1, C))
    w1, b1 = nrm(keys[8], (C, 4 * C)), nrm(keys[9], (1, 4 * C))
    w2, b2 = nrm(keys[10], (4 * C, C)), nrm(keys[11], (1, C))

    raw_params = (ln1_g, ln1_b, wq, bq, wk, bk, wv, bv, wp, bp,
                  ln2_g, ln2_b, w1, b1, w2, b2)
    packed = pack_params(raw_params, n_head=n_head)

    x = jax.random.normal(keys[12], (B, T, C), jnp.float32)

    out = block_forward(x, packed, n_head=n_head, n_modality=n_modality)
    out = jax.block_until_ready(out)

    ref = block_reference(x, raw_params, n_head=n_head, n_modality=n_modality)
    # bf16 MXU inputs (f32 accumulation) => relaxed tolerance vs the f32 reference.
    assert jnp.allclose(out, ref, rtol=2e-2, atol=2e-2), "mismatch vs reference"

    print("KERNEL_OK")
</pallas_src>

<mosaic_0001>
module attributes {stable_mosaic.version = 11 : i64} {
  func.func @block_kernel(%arg0: i32, %arg1: memref<4x16x128xf32, #tpu.memory_space<vmem>>, %arg2: memref<1x128xf32, #tpu.memory_space<vmem>>, %arg3: memref<1x128xf32, #tpu.memory_space<vmem>>, %arg4: memref<128x384xbf16, #tpu.memory_space<vmem>>, %arg5: memref<1x384xf32, #tpu.memory_space<vmem>>, %arg6: memref<128x128xbf16, #tpu.memory_space<vmem>>, %arg7: memref<1x128xf32, #tpu.memory_space<vmem>>, %arg8: memref<1x128xf32, #tpu.memory_space<vmem>>, %arg9: memref<1x128xf32, #tpu.memory_space<vmem>>, %arg10: memref<128x512xbf16, #tpu.memory_space<vmem>>, %arg11: memref<1x512xf32, #tpu.memory_space<vmem>>, %arg12: memref<512x128xbf16, #tpu.memory_space<vmem>>, %arg13: memref<1x128xf32, #tpu.memory_space<vmem>>, %arg14: memref<4x16x128xf32, #tpu.memory_space<vmem>>) attributes {dimension_semantics = [#tpu.dimension_semantics<parallel>], iteration_bounds = array<i64: 2>, scalar_prefetch = 0 : i64, scratch_operands = 0 : i64, tpu.core_type = #tpu.core_type<tc>, window_params = [{transform_indices = @transform_0, window_bounds = array<i64: 4, 16, 128>}, {pipeline_mode = #tpu.pipeline_mode<synchronous>, transform_indices = @transform_1, window_bounds = array<i64: 1, 128>}, {pipeline_mode = #tpu.pipeline_mode<synchronous>, transform_indices = @transform_2, window_bounds = array<i64: 1, 128>}, {pipeline_mode = #tpu.pipeline_mode<synchronous>, transform_indices = @transform_3, window_bounds = array<i64: 128, 384>}, {pipeline_mode = #tpu.pipeline_mode<synchronous>, transform_indices = @transform_4, window_bounds = array<i64: 1, 384>}, {pipeline_mode = #tpu.pipeline_mode<synchronous>, transform_indices = @transform_5, window_bounds = array<i64: 128, 128>}, {pipeline_mode = #tpu.pipeline_mode<synchronous>, transform_indices = @transform_6, window_bounds = array<i64: 1, 128>}, {pipeline_mode = #tpu.pipeline_mode<synchronous>, transform_indices = @transform_7, window_bounds = array<i64: 1, 128>}, {pipeline_mode = #tpu.pipeline_mode<synchronous>, transform_indices = @transform_8, window_bounds = array<i64: 1, 128>}, {pipeline_mode = #tpu.pipeline_mode<synchronous>, transform_indices = @transform_9, window_bounds = array<i64: 128, 512>}, {pipeline_mode = #tpu.pipeline_mode<synchronous>, transform_indices = @transform_10, window_bounds = array<i64: 1, 512>}, {pipeline_mode = #tpu.pipeline_mode<synchronous>, transform_indices = @transform_11, window_bounds = array<i64: 512, 128>}, {pipeline_mode = #tpu.pipeline_mode<synchronous>, transform_indices = @transform_12, window_bounds = array<i64: 1, 128>}, {transform_indices = @transform_13, window_bounds = array<i64: 4, 16, 128>}]} {
    %c0 = arith.constant 0 : index
    %c0_0 = arith.constant 0 : index
    %c0_1 = arith.constant 0 : index
    %0 = vector.load %arg1[%c0, %c0_0, %c0_1] : memref<4x16x128xf32, #tpu.memory_space<vmem>>, vector<4x16x128xf32>
    %1 = vector.shape_cast %0 : vector<4x16x128xf32> to vector<64x128xf32>
    %c0_2 = arith.constant 0 : index
    %c0_3 = arith.constant 0 : index
    %2 = vector.load %arg2[%c0_2, %c0_3] : memref<1x128xf32, #tpu.memory_space<vmem>>, vector<1x128xf32>
    %c0_4 = arith.constant 0 : index
    %c0_5 = arith.constant 0 : index
    %3 = vector.load %arg3[%c0_4, %c0_5] : memref<1x128xf32, #tpu.memory_space<vmem>>, vector<1x128xf32>
    %cst = arith.constant dense<0.000000e+00> : vector<64xf32>
    %4 = vector.multi_reduction <add>, %1, %cst [1] : vector<64x128xf32> to vector<64xf32>
    %5 = vector.shape_cast %4 : vector<64xf32> to vector<64x1xf32>
    %cst_6 = arith.constant 1.280000e+02 : f32
    %6 = vector.broadcast %cst_6 : f32 to vector<64x1xf32>
    %7 = arith.divf %5, %6 : vector<64x1xf32>
    %8 = vector.broadcast %7 : vector<64x1xf32> to vector<64x128xf32>
    %9 = arith.subf %1, %8 : vector<64x128xf32>
    %10 = arith.mulf %9, %9 : vector<64x128xf32>
    %cst_7 = arith.constant dense<0.000000e+00> : vector<64xf32>
    %11 = vector.multi_reduction <add>, %10, %cst_7 [1] : vector<64x128xf32> to vector<64xf32>
    %12 = vector.shape_cast %11 : vector<64xf32> to vector<64x1xf32>
    %cst_8 = arith.constant 1.280000e+02 : f32
    %13 = vector.broadcast %cst_8 : f32 to vector<64x1xf32>
    %14 = arith.divf %12, %13 : vector<64x1xf32>
    %15 = vector.broadcast %7 : vector<64x1xf32> to vector<64x128xf32>
    %16 = arith.subf %1, %15 : vector<64x128xf32>
    %cst_9 = arith.constant 9.99999974E-6 : f32
    %17 = vector.broadcast %cst_9 : f32 to vector<64x1xf32>
    %18 = arith.addf %14, %17 : vector<64x1xf32>
    %19 = math.rsqrt %18 : vector<64x1xf32>
    %20 = vector.broadcast %19 : vector<64x1xf32> to vector<64x128xf32>
    %21 = arith.mulf %16, %20 : vector<64x128xf32>
    %22 = vector.broadcast %2 : vector<1x128xf32> to vector<64x128xf32>
    %23 = arith.mulf %21, %22 : vector<64x128xf32>
    %24 = vector.broadcast %3 : vector<1x128xf32> to vector<64x128xf32>
    %25 = arith.addf %23, %24 : vector<64x128xf32>
    %26 = arith.truncf %25 : vector<64x128xf32> to vector<64x128xbf16>
    %c0_10 = arith.constant 0 : index
    %c0_11 = arith.constant 0 : index
    %27 = vector.load %arg4[%c0_10, %c0_11] : memref<128x384xbf16, #tpu.memory_space<vmem>>, vector<128x384xbf16>
    %cst_12 = arith.constant dense<0.000000e+00> : vector<64x384xf32>
    %28 = tpu.matmul %26, %27, %cst_12 {dimension_numbers = #tpu.dot_dimension_numbers<[1], [0], [0], [1], [0, 0, 1, 1], [], []>} : vector<64x128xbf16>, vector<128x384xbf16>, vector<64x384xf32> -> vector<64x384xf32>
    %c0_13 = arith.constant 0 : index
    %c0_14 = arith.constant 0 : index
    %29 = vector.load %arg5[%c0_13, %c0_14] : memref<1x384xf32, #tpu.memory_space<vmem>>, vector<1x384xf32>
    %30 = vector.broadcast %29 : vector<1x384xf32> to vector<64x384xf32>
    %31 = arith.addf %28, %30 : vector<64x384xf32>
    %32 = vector.extract_strided_slice %31 {offsets = [0, 0], sizes = [64, 128], strides = [1, 1]} : vector<64x384xf32> to vector<64x128xf32>
    %33 = arith.truncf %32 : vector<64x128xf32> to vector<64x128xbf16>
    %34 = vector.shape_cast %33 : vector<64x128xbf16> to vector<4x16x128xbf16>
    %35 = vector.extract_strided_slice %31 {offsets = [0, 128], sizes = [64, 128], strides = [1, 1]} : vector<64x384xf32> to vector<64x128xf32>
    %36 = arith.truncf %35 : vector<64x128xf32> to vector<64x128xbf16>
    %37 = vector.shape_cast %36 : vector<64x128xbf16> to vector<4x16x128xbf16>
    %38 = vector.extract_strided_slice %31 {offsets = [0, 256], sizes = [64, 128], strides = [1, 1]} : vector<64x384xf32> to vector<64x128xf32>
    %39 = arith.truncf %38 : vector<64x128xf32> to vector<64x128xbf16>
    %40 = vector.shape_cast %39 : vector<64x128xbf16> to vector<4x16x128xbf16>
    %41 = tpu.iota {dimensions = array<i32: 0>} : vector<16x1xi32>
    %c8_i32 = arith.constant 8 : i32
    %c0_i32 = arith.constant 0 : i32
    %42 = arith.cmpi eq, %c8_i32, %c0_i32 : i32
    %c1_i32 = arith.constant 1 : i32
    %43 = arith.select %42, %c1_i32, %c8_i32 : i32
    %44 = vector.broadcast %43 : i32 to vector<16x1xi32>
    %45 = arith.remsi %41, %44 : vector<16x1xi32>
    %c0_i32_15 = arith.constant 0 : i32
    %46 = vector.broadcast %c0_i32_15 : i32 to vector<16x1xi32>
    %47 = arith.cmpi ne, %45, %46 : vector<16x1xi32>
    %c0_i32_16 = arith.constant 0 : i32
    %48 = vector.broadcast %c0_i32_16 : i32 to vector<16x1xi32>
    %49 = arith.cmpi slt, %45, %48 : vector<16x1xi32>
    %c0_i32_17 = arith.constant 0 : i32
    %50 = arith.cmpi slt, %43, %c0_i32_17 : i32
    %51 = vector.broadcast %50 : i1 to vector<16x1xi1>
    %52 = vector.broadcast %51 : vector<16x1xi1> to vector<16x1xi1>
    %53 = arith.xori %49, %52 : vector<16x1xi1>
    %54 = arith.andi %53, %47 : vector<16x1xi1>
    %55 = vector.broadcast %43 : i32 to vector<16x1xi32>
    %56 = arith.addi %45, %55 : vector<16x1xi32>
    %57 = arith.select %54, %56, %45 : vector<16x1xi1>, vector<16x1xi32>
    %58 = tpu.iota {dimensions = array<i32: 1>} : vector<1x16xi32>
    %c8_i32_18 = arith.constant 8 : i32
    %c0_i32_19 = arith.constant 0 : i32
    %59 = arith.cmpi eq, %c8_i32_18, %c0_i32_19 : i32
    %c1_i32_20 = arith.constant 1 : i32
    %60 = arith.select %59, %c1_i32_20, %c8_i32_18 : i32
    %61 = vector.broadcast %60 : i32 to vector<1x16xi32>
    %62 = arith.remsi %58, %61 : vector<1x16xi32>
    %c0_i32_21 = arith.constant 0 : i32
    %63 = vector.broadcast %c0_i32_21 : i32 to vector<1x16xi32>
    %64 = arith.cmpi ne, %62, %63 : vector<1x16xi32>
    %c0_i32_22 = arith.constant 0 : i32
    %65 = vector.broadcast %c0_i32_22 : i32 to vector<1x16xi32>
    %66 = arith.cmpi slt, %62, %65 : vector<1x16xi32>
    %c0_i32_23 = arith.constant 0 : i32
    %67 = arith.cmpi slt, %60, %c0_i32_23 : i32
    %68 = vector.broadcast %67 : i1 to vector<1x16xi1>
    %69 = vector.broadcast %68 : vector<1x16xi1> to vector<1x16xi1>
    %70 = arith.xori %66, %69 : vector<1x16xi1>
    %71 = arith.andi %70, %64 : vector<1x16xi1>
    %72 = vector.broadcast %60 : i32 to vector<1x16xi32>
    %73 = arith.addi %62, %72 : vector<1x16xi32>
    %74 = arith.select %71, %73, %62 : vector<1x16xi1>, vector<1x16xi32>
    %75 = vector.broadcast %74 : vector<1x16xi32> to vector<16x16xi32>
    %76 = vector.broadcast %57 : vector<16x1xi32> to vector<16x16xi32>
    %77 = arith.cmpi sle, %75, %76 : vector<16x16xi32>
    %cst_24 = arith.constant 0.000000e+00 : f32
    %cst_25 = arith.constant -1.000000e+30 : f32
    %78 = vector.broadcast %cst_24 : f32 to vector<16x16xf32>
    %79 = vector.broadcast %cst_25 : f32 to vector<16x16xf32>
    %80 = arith.select %77, %78, %79 : vector<16x16xi1>, vector<16x16xf32>
    %81 = vector.extract_strided_slice %34 {offsets = [0, 0, 0], sizes = [4, 16, 32], strides = [1, 1, 1]} : vector<4x16x128xbf16> to vector<4x16x32xbf16>
    %82 = vector.extract_strided_slice %37 {offsets = [0, 0, 0], sizes = [4, 16, 32], strides = [1, 1, 1]} : vector<4x16x128xbf16> to vector<4x16x32xbf16>
    %83 = vector.extract_strided_slice %40 {offsets = [0, 0, 0], sizes = [4, 16, 32], strides = [1, 1, 1]} : vector<4x16x128xbf16> to vector<4x16x32xbf16>
    "tpu.trace_start"() <{level = 10 : i32, message = "bqd,bkd->bqk"}> : () -> ()
    %cst_26 = arith.constant dense<0.000000e+00> : vector<4x16x16xf32>
    %84 = tpu.matmul %81, %82, %cst_26 {dimension_numbers = #tpu.dot_dimension_numbers<[2], [2], [1], [1], [0, 0, 0, 1, 1, 1], [0], [0]>} : vector<4x16x32xbf16>, vector<4x16x32xbf16>, vector<4x16x16xf32> -> vector<4x16x16xf32>
    "tpu.trace_stop"() : () -> ()
    %85 = vector.shape_cast %80 : vector<16x16xf32> to vector<1x16x16xf32>
    %86 = vector.broadcast %85 : vector<1x16x16xf32> to vector<4x16x16xf32>
    %87 = arith.addf %84, %86 : vector<4x16x16xf32>
    %cst_27 = arith.constant dense<0xFF800000> : vector<4x16xf32>
    %88 = vector.multi_reduction <maximumf>, %87, %cst_27 [2] : vector<4x16x16xf32> to vector<4x16xf32>
    %89 = vector.shape_cast %88 : vector<4x16xf32> to vector<4x16x1xf32>
    %90 = vector.broadcast %89 : vector<4x16x1xf32> to vector<4x16x16xf32>
    %91 = arith.subf %87, %90 : vector<4x16x16xf32>
    %92 = math.exp %91 : vector<4x16x16xf32>
    %cst_28 = arith.constant dense<0.000000e+00> : vector<4x16xf32>
    %93 = vector.multi_reduction <add>, %92, %cst_28 [2] : vector<4x16x16xf32> to vector<4x16xf32>
    %94 = vector.shape_cast %93 : vector<4x16xf32> to vector<4x16x1xf32>
    %95 = arith.truncf %92 : vector<4x16x16xf32> to vector<4x16x16xbf16>
    "tpu.trace_start"() <{level = 10 : i32, message = "bqk,bkd->bqd"}> : () -> ()
    %cst_29 = arith.constant dense<0.000000e+00> : vector<4x16x32xf32>
    %96 = tpu.matmul %95, %83, %cst_29 {dimension_numbers = #tpu.dot_dimension_numbers<[2], [1], [1], [2], [0, 0, 0, 1, 1, 2], [0], [0]>} : vector<4x16x16xbf16>, vector<4x16x32xbf16>, vector<4x16x32xf32> -> vector<4x16x32xf32>
    "tpu.trace_stop"() : () -> ()
    %97 = tpu.reciprocal %94 {approx = true} : vector<4x16x1xf32> -> vector<4x16x1xf32>
    %98 = vector.broadcast %97 : vector<4x16x1xf32> to vector<4x16x32xf32>
    %99 = arith.mulf %96, %98 : vector<4x16x32xf32>
    %100 = vector.extract_strided_slice %34 {offsets = [0, 0, 32], sizes = [4, 16, 32], strides = [1, 1, 1]} : vector<4x16x128xbf16> to vector<4x16x32xbf16>
    %101 = vector.extract_strided_slice %37 {offsets = [0, 0, 32], sizes = [4, 16, 32], strides = [1, 1, 1]} : vector<4x16x128xbf16> to vector<4x16x32xbf16>
    %102 = vector.extract_strided_slice %40 {offsets = [0, 0, 32], sizes = [4, 16, 32], strides = [1, 1, 1]} : vector<4x16x128xbf16> to vector<4x16x32xbf16>
    "tpu.trace_start"() <{level = 10 : i32, message = "bqd,bkd->bqk"}> : () -> ()
    %cst_30 = arith.constant dense<0.000000e+00> : vector<4x16x16xf32>
    %103 = tpu.matmul %100, %101, %cst_30 {dimension_numbers = #tpu.dot_dimension_numbers<[2], [2], [1], [1], [0, 0, 0, 1, 1, 1], [0], [0]>} : vector<4x16x32xbf16>, vector<4x16x32xbf16>, vector<4x16x16xf32> -> vector<4x16x16xf32>
    "tpu.trace_stop"() : () -> ()
    %104 = vector.shape_cast %80 : vector<16x16xf32> to vector<1x16x16xf32>
    %105 = vector.broadcast %104 : vector<1x16x16xf32> to vector<4x16x16xf32>
    %106 = arith.addf %103, %105 : vector<4x16x16xf32>
    %cst_31 = arith.constant dense<0xFF800000> : vector<4x16xf32>
    %107 = vector.multi_reduction <maximumf>, %106, %cst_31 [2] : vector<4x16x16xf32> to vector<4x16xf32>
    %108 = vector.shape_cast %107 : vector<4x16xf32> to vector<4x16x1xf32>
    %109 = vector.broadcast %108 : vector<4x16x1xf32> to vector<4x16x16xf32>
    %110 = arith.subf %106, %109 : vector<4x16x16xf32>
    %111 = math.exp %110 : vector<4x16x16xf32>
    %cst_32 = arith.constant dense<0.000000e+00> : vector<4x16xf32>
    %112 = vector.multi_reduction <add>, %111, %cst_32 [2] : vector<4x16x16xf32> to vector<4x16xf32>
    %113 = vector.shape_cast %112 : vector<4x16xf32> to vector<4x16x1xf32>
    %114 = arith.truncf %111 : vector<4x16x16xf32> to vector<4x16x16xbf16>
    "tpu.trace_start"() <{level = 10 : i32, message = "bqk,bkd->bqd"}> : () -> ()
    %cst_33 = arith.constant dense<0.000000e+00> : vector<4x16x32xf32>
    %115 = tpu.matmul %114, %102, %cst_33 {dimension_numbers = #tpu.dot_dimension_numbers<[2], [1], [1], [2], [0, 0, 0, 1, 1, 2], [0], [0]>} : vector<4x16x16xbf16>, vector<4x16x32xbf16>, vector<4x16x32xf32> -> vector<4x16x32xf32>
    "tpu.trace_stop"() : () -> ()
    %116 = tpu.reciprocal %113 {approx = true} : vector<4x16x1xf32> -> vector<4x16x1xf32>
    %117 = vector.broadcast %116 : vector<4x16x1xf32> to vector<4x16x32xf32>
    %118 = arith.mulf %115, %117 : vector<4x16x32xf32>
    %119 = vector.extract_strided_slice %34 {offsets = [0, 0, 64], sizes = [4, 16, 32], strides = [1, 1, 1]} : vector<4x16x128xbf16> to vector<4x16x32xbf16>
    %120 = vector.extract_strided_slice %37 {offsets = [0, 0, 64], sizes = [4, 16, 32], strides = [1, 1, 1]} : vector<4x16x128xbf16> to vector<4x16x32xbf16>
    %121 = vector.extract_strided_slice %40 {offsets = [0, 0, 64], sizes = [4, 16, 32], strides = [1, 1, 1]} : vector<4x16x128xbf16> to vector<4x16x32xbf16>
    "tpu.trace_start"() <{level = 10 : i32, message = "bqd,bkd->bqk"}> : () -> ()
    %cst_34 = arith.constant dense<0.000000e+00> : vector<4x16x16xf32>
    %122 = tpu.matmul %119, %120, %cst_34 {dimension_numbers = #tpu.dot_dimension_numbers<[2], [2], [1], [1], [0, 0, 0, 1, 1, 1], [0], [0]>} : vector<4x16x32xbf16>, vector<4x16x32xbf16>, vector<4x16x16xf32> -> vector<4x16x16xf32>
    "tpu.trace_stop"() : () -> ()
    %123 = vector.shape_cast %80 : vector<16x16xf32> to vector<1x16x16xf32>
    %124 = vector.broadcast %123 : vector<1x16x16xf32> to vector<4x16x16xf32>
    %125 = arith.addf %122, %124 : vector<4x16x16xf32>
    %cst_35 = arith.constant dense<0xFF800000> : vector<4x16xf32>
    %126 = vector.multi_reduction <maximumf>, %125, %cst_35 [2] : vector<4x16x16xf32> to vector<4x16xf32>
    %127 = vector.shape_cast %126 : vector<4x16xf32> to vector<4x16x1xf32>
    %128 = vector.broadcast %127 : vector<4x16x1xf32> to vector<4x16x16xf32>
    %129 = arith.subf %125, %128 : vector<4x16x16xf32>
    %130 = math.exp %129 : vector<4x16x16xf32>
    %cst_36 = arith.constant dense<0.000000e+00> : vector<4x16xf32>
    %131 = vector.multi_reduction <add>, %130, %cst_36 [2] : vector<4x16x16xf32> to vector<4x16xf32>
    %132 = vector.shape_cast %131 : vector<4x16xf32> to vector<4x16x1xf32>
    %133 = arith.truncf %130 : vector<4x16x16xf32> to vector<4x16x16xbf16>
    "tpu.trace_start"() <{level = 10 : i32, message = "bqk,bkd->bqd"}> : () -> ()
    %cst_37 = arith.constant dense<0.000000e+00> : vector<4x16x32xf32>
    %134 = tpu.matmul %133, %121, %cst_37 {dimension_numbers = #tpu.dot_dimension_numbers<[2], [1], [1], [2], [0, 0, 0, 1, 1, 2], [0], [0]>} : vector<4x16x16xbf16>, vector<4x16x32xbf16>, vector<4x16x32xf32> -> vector<4x16x32xf32>
    "tpu.trace_stop"() : () -> ()
    %135 = tpu.reciprocal %132 {approx = true} : vector<4x16x1xf32> -> vector<4x16x1xf32>
    %136 = vector.broadcast %135 : vector<4x16x1xf32> to vector<4x16x32xf32>
    %137 = arith.mulf %134, %136 : vector<4x16x32xf32>
    %138 = vector.extract_strided_slice %34 {offsets = [0, 0, 96], sizes = [4, 16, 32], strides = [1, 1, 1]} : vector<4x16x128xbf16> to vector<4x16x32xbf16>
    %139 = vector.extract_strided_slice %37 {offsets = [0, 0, 96], sizes = [4, 16, 32], strides = [1, 1, 1]} : vector<4x16x128xbf16> to vector<4x16x32xbf16>
    %140 = vector.extract_strided_slice %40 {offsets = [0, 0, 96], sizes = [4, 16, 32], strides = [1, 1, 1]} : vector<4x16x128xbf16> to vector<4x16x32xbf16>
    "tpu.trace_start"() <{level = 10 : i32, message = "bqd,bkd->bqk"}> : () -> ()
    %cst_38 = arith.constant dense<0.000000e+00> : vector<4x16x16xf32>
    %141 = tpu.matmul %138, %139, %cst_38 {dimension_numbers = #tpu.dot_dimension_numbers<[2], [2], [1], [1], [0, 0, 0, 1, 1, 1], [0], [0]>} : vector<4x16x32xbf16>, vector<4x16x32xbf16>, vector<4x16x16xf32> -> vector<4x16x16xf32>
    "tpu.trace_stop"() : () -> ()
    %142 = vector.shape_cast %80 : vector<16x16xf32> to vector<1x16x16xf32>
    %143 = vector.broadcast %142 : vector<1x16x16xf32> to vector<4x16x16xf32>
    %144 = arith.addf %141, %143 : vector<4x16x16xf32>
    %cst_39 = arith.constant dense<0xFF800000> : vector<4x16xf32>
    %145 = vector.multi_reduction <maximumf>, %144, %cst_39 [2] : vector<4x16x16xf32> to vector<4x16xf32>
    %146 = vector.shape_cast %145 : vector<4x16xf32> to vector<4x16x1xf32>
    %147 = vector.broadcast %146 : vector<4x16x1xf32> to vector<4x16x16xf32>
    %148 = arith.subf %144, %147 : vector<4x16x16xf32>
    %149 = math.exp %148 : vector<4x16x16xf32>
    %cst_40 = arith.constant dense<0.000000e+00> : vector<4x16xf32>
    %150 = vector.multi_reduction <add>, %149, %cst_40 [2] : vector<4x16x16xf32> to vector<4x16xf32>
    %151 = vector.shape_cast %150 : vector<4x16xf32> to vector<4x16x1xf32>
    %152 = arith.truncf %149 : vector<4x16x16xf32> to vector<4x16x16xbf16>
    "tpu.trace_start"() <{level = 10 : i32, message = "bqk,bkd->bqd"}> : () -> ()
    %cst_41 = arith.constant dense<0.000000e+00> : vector<4x16x32xf32>
    %153 = tpu.matmul %152, %140, %cst_41 {dimension_numbers = #tpu.dot_dimension_numbers<[2], [1], [1], [2], [0, 0, 0, 1, 1, 2], [0], [0]>} : vector<4x16x16xbf16>, vector<4x16x32xbf16>, vector<4x16x32xf32> -> vector<4x16x32xf32>
    "tpu.trace_stop"() : () -> ()
    %154 = tpu.reciprocal %151 {approx = true} : vector<4x16x1xf32> -> vector<4x16x1xf32>
    %155 = vector.broadcast %154 : vector<4x16x1xf32> to vector<4x16x32xf32>
    %156 = arith.mulf %153, %155 : vector<4x16x32xf32>
    %157 = tpu.concatenate %99, %118, %137, %156 in 2 : vector<4x16x32xf32>, vector<4x16x32xf32>, vector<4x16x32xf32>, vector<4x16x32xf32> -> vector<4x16x128xf32>
    %158 = vector.shape_cast %157 : vector<4x16x128xf32> to vector<64x128xf32>
    %159 = arith.truncf %158 : vector<64x128xf32> to vector<64x128xbf16>
    %c0_42 = arith.constant 0 : index
    %c0_43 = arith.constant 0 : index
    %160 = vector.load %arg6[%c0_42, %c0_43] : memref<128x128xbf16, #tpu.memory_space<vmem>>, vector<128x128xbf16>
    %cst_44 = arith.constant dense<0.000000e+00> : vector<64x128xf32>
    %161 = tpu.matmul %159, %160, %cst_44 {dimension_numbers = #tpu.dot_dimension_numbers<[1], [0], [0], [1], [0, 0, 1, 1], [], []>} : vector<64x128xbf16>, vector<128x128xbf16>, vector<64x128xf32> -> vector<64x128xf32>
    %162 = arith.addf %1, %161 : vector<64x128xf32>
    %c0_45 = arith.constant 0 : index
    %c0_46 = arith.constant 0 : index
    %163 = vector.load %arg7[%c0_45, %c0_46] : memref<1x128xf32, #tpu.memory_space<vmem>>, vector<1x128xf32>
    %164 = vector.broadcast %163 : vector<1x128xf32> to vector<64x128xf32>
    %165 = arith.addf %162, %164 : vector<64x128xf32>
    %c0_47 = arith.constant 0 : index
    %c0_48 = arith.constant 0 : index
    %166 = vector.load %arg8[%c0_47, %c0_48] : memref<1x128xf32, #tpu.memory_space<vmem>>, vector<1x128xf32>
    %c0_49 = arith.constant 0 : index
    %c0_50 = arith.constant 0 : index
    %167 = vector.load %arg9[%c0_49, %c0_50] : memref<1x128xf32, #tpu.memory_space<vmem>>, vector<1x128xf32>
    %cst_51 = arith.constant dense<0.000000e+00> : vector<64xf32>
    %168 = vector.multi_reduction <add>, %165, %cst_51 [1] : vector<64x128xf32> to vector<64xf32>
    %169 = vector.shape_cast %168 : vector<64xf32> to vector<64x1xf32>
    %cst_52 = arith.constant 1.280000e+02 : f32
    %170 = vector.broadcast %cst_52 : f32 to vector<64x1xf32>
    %171 = arith.divf %169, %170 : vector<64x1xf32>
    %172 = vector.broadcast %171 : vector<64x1xf32> to vector<64x128xf32>
    %173 = arith.subf %165, %172 : vector<64x128xf32>
    %174 = arith.mulf %173, %173 : vector<64x128xf32>
    %cst_53 = arith.constant dense<0.000000e+00> : vector<64xf32>
    %175 = vector.multi_reduction <add>, %174, %cst_53 [1] : vector<64x128xf32> to vector<64xf32>
    %176 = vector.shape_cast %175 : vector<64xf32> to vector<64x1xf32>
    %cst_54 = arith.constant 1.280000e+02 : f32
    %177 = vector.broadcast %cst_54 : f32 to vector<64x1xf32>
    %178 = arith.divf %176, %177 : vector<64x1xf32>
    %179 = vector.broadcast %171 : vector<64x1xf32> to vector<64x128xf32>
    %180 = arith.subf %165, %179 : vector<64x128xf32>
    %cst_55 = arith.constant 9.99999974E-6 : f32
    %181 = vector.broadcast %cst_55 : f32 to vector<64x1xf32>
    %182 = arith.addf %178, %181 : vector<64x1xf32>
    %183 = math.rsqrt %182 : vector<64x1xf32>
    %184 = vector.broadcast %183 : vector<64x1xf32> to vector<64x128xf32>
    %185 = arith.mulf %180, %184 : vector<64x128xf32>
    %186 = vector.broadcast %166 : vector<1x128xf32> to vector<64x128xf32>
    %187 = arith.mulf %185, %186 : vector<64x128xf32>
    %188 = vector.broadcast %167 : vector<1x128xf32> to vector<64x128xf32>
    %189 = arith.addf %187, %188 : vector<64x128xf32>
    %190 = arith.truncf %189 : vector<64x128xf32> to vector<64x128xbf16>
    %c0_56 = arith.constant 0 : index
    %c0_57 = arith.constant 0 : index
    %191 = vector.load %arg10[%c0_56, %c0_57] : memref<128x512xbf16, #tpu.memory_space<vmem>>, vector<128x512xbf16>
    %cst_58 = arith.constant dense<0.000000e+00> : vector<64x512xf32>
    %192 = tpu.matmul %190, %191, %cst_58 {dimension_numbers = #tpu.dot_dimension_numbers<[1], [0], [0], [1], [0, 0, 1, 1], [], []>} : vector<64x128xbf16>, vector<128x512xbf16>, vector<64x512xf32> -> vector<64x512xf32>
    %c0_59 = arith.constant 0 : index
    %c0_60 = arith.constant 0 : index
    %193 = vector.load %arg11[%c0_59, %c0_60] : memref<1x512xf32, #tpu.memory_space<vmem>>, vector<1x512xf32>
    %194 = vector.broadcast %193 : vector<1x512xf32> to vector<64x512xf32>
    %195 = arith.addf %192, %194 : vector<64x512xf32>
    %cst_61 = arith.constant 5.000000e-01 : f32
    %196 = vector.broadcast %cst_61 : f32 to vector<64x512xf32>
    %197 = arith.mulf %196, %195 : vector<64x512xf32>
    %cst_62 = arith.constant 0.707106769 : f32
    %198 = vector.broadcast %cst_62 : f32 to vector<64x512xf32>
    %199 = arith.mulf %195, %198 : vector<64x512xf32>
    %cst_63 = arith.constant 0.000000e+00 : f32
    %200 = vector.broadcast %cst_63 : f32 to vector<64x512xf32>
    %201 = arith.cmpf oge, %199, %200 : vector<64x512xf32>
    %cst_64 = arith.constant 1.000000e+00 : f32
    %cst_65 = arith.constant -1.000000e+00 : f32
    %202 = vector.broadcast %cst_64 : f32 to vector<64x512xf32>
    %203 = vector.broadcast %cst_65 : f32 to vector<64x512xf32>
    %204 = arith.select %201, %202, %203 : vector<64x512xi1>, vector<64x512xf32>
    %205 = math.absf %199 : vector<64x512xf32>
    %cst_66 = arith.constant 0.327591091 : f32
    %206 = vector.broadcast %cst_66 : f32 to vector<64x512xf32>
    %207 = arith.mulf %206, %205 : vector<64x512xf32>
    %cst_67 = arith.constant 1.000000e+00 : f32
    %208 = vector.broadcast %cst_67 : f32 to vector<64x512xf32>
    %209 = arith.addf %208, %207 : vector<64x512xf32>
    %cst_68 = arith.constant 1.000000e+00 : f32
    %210 = vector.broadcast %cst_68 : f32 to vector<64x512xf32>
    %211 = arith.divf %210, %209 : vector<64x512xf32>
    %cst_69 = arith.constant 1.06140542 : f32
    %212 = vector.broadcast %cst_69 : f32 to vector<64x512xf32>
    %213 = arith.mulf %212, %211 : vector<64x512xf32>
    %cst_70 = arith.constant -1.45315206 : f32
    %214 = vector.broadcast %cst_70 : f32 to vector<64x512xf32>
    %215 = arith.addf %213, %214 : vector<64x512xf32>
    %216 = arith.mulf %215, %211 : vector<64x512xf32>
    %cst_71 = arith.constant 1.42141378 : f32
    %217 = vector.broadcast %cst_71 : f32 to vector<64x512xf32>
    %218 = arith.addf %216, %217 : vector<64x512xf32>
    %219 = arith.mulf %218, %211 : vector<64x512xf32>
    %cst_72 = arith.constant -0.284496725 : f32
    %220 = vector.broadcast %cst_72 : f32 to vector<64x512xf32>
    %221 = arith.addf %219, %220 : vector<64x512xf32>
    %222 = arith.mulf %221, %211 : vector<64x512xf32>
    %cst_73 = arith.constant 0.254829586 : f32
    %223 = vector.broadcast %cst_73 : f32 to vector<64x512xf32>
    %224 = arith.addf %222, %223 : vector<64x512xf32>
    %225 = arith.mulf %224, %211 : vector<64x512xf32>
    %cst_74 = arith.constant 0.000000e+00 : f32
    %226 = vector.broadcast %cst_74 : f32 to vector<64x512xf32>
    %227 = arith.subf %226, %205 : vector<64x512xf32>
    %228 = arith.mulf %227, %205 : vector<64x512xf32>
    %229 = math.exp %228 : vector<64x512xf32>
    %230 = arith.mulf %225, %229 : vector<64x512xf32>
    %cst_75 = arith.constant 1.000000e+00 : f32
    %231 = vector.broadcast %cst_75 : f32 to vector<64x512xf32>
    %232 = arith.subf %231, %230 : vector<64x512xf32>
    %233 = arith.mulf %204, %232 : vector<64x512xf32>
    %cst_76 = arith.constant 1.000000e+00 : f32
    %234 = vector.broadcast %cst_76 : f32 to vector<64x512xf32>
    %235 = arith.addf %234, %233 : vector<64x512xf32>
    %236 = arith.mulf %197, %235 : vector<64x512xf32>
    %237 = arith.truncf %236 : vector<64x512xf32> to vector<64x512xbf16>
    %c0_77 = arith.constant 0 : index
    %c0_78 = arith.constant 0 : index
    %238 = vector.load %arg12[%c0_77, %c0_78] : memref<512x128xbf16, #tpu.memory_space<vmem>>, vector<512x128xbf16>
    %cst_79 = arith.constant dense<0.000000e+00> : vector<64x128xf32>
    %239 = tpu.matmul %237, %238, %cst_79 {dimension_numbers = #tpu.dot_dimension_numbers<[1], [0], [0], [1], [0, 0, 1, 1], [], []>} : vector<64x512xbf16>, vector<512x128xbf16>, vector<64x128xf32> -> vector<64x128xf32>
    %c0_80 = arith.constant 0 : index
    %c0_81 = arith.constant 0 : index
    %240 = vector.load %arg13[%c0_80, %c0_81] : memref<1x128xf32, #tpu.memory_space<vmem>>, vector<1x128xf32>
    %241 = vector.broadcast %240 : vector<1x128xf32> to vector<64x128xf32>
    %242 = arith.addf %239, %241 : vector<64x128xf32>
    %243 = arith.addf %165, %242 : vector<64x128xf32>
    %244 = vector.shape_cast %243 : vector<64x128xf32> to vector<4x16x128xf32>
    %c0_82 = arith.constant 0 : index
    %c0_83 = arith.constant 0 : index
    %c0_84 = arith.constant 0 : index
    %245 = vector.load %arg14[%c0_82, %c0_83, %c0_84] : memref<4x16x128xf32, #tpu.memory_space<vmem>>, vector<4x16x128xf32>
    tpu.vector_store %arg14[%c0_82, %c0_83, %c0_84], %244 {strides = array<i32>} : memref<4x16x128xf32, #tpu.memory_space<vmem>>, vector<4x16x128xf32>,
    return
  }
  func.func @transform_0(%arg0: i32) -> (i32, i32, i32) {
    %c0_i32 = arith.constant 0 : i32
    %c0_i32_0 = arith.constant 0 : i32
    %c0_i32_1 = arith.constant 0 : i32
    return %arg0, %c0_i32, %c0_i32_0 : i32, i32, i32
  }
  func.func @transform_1(%arg0: i32) -> (i32, i32) {
    %c0_i32 = arith.constant 0 : i32
    %c0_i32_0 = arith.constant 0 : i32
    %c0_i32_1 = arith.constant 0 : i32
    return %c0_i32, %c0_i32_0 : i32, i32
  }
  func.func @transform_2(%arg0: i32) -> (i32, i32) {
    %c0_i32 = arith.constant 0 : i32
    %c0_i32_0 = arith.constant 0 : i32
    %c0_i32_1 = arith.constant 0 : i32
    return %c0_i32, %c0_i32_0 : i32, i32
  }
  func.func @transform_3(%arg0: i32) -> (i32, i32) {
    %c0_i32 = arith.constant 0 : i32
    %c0_i32_0 = arith.constant 0 : i32
    %c0_i32_1 = arith.constant 0 : i32
    return %c0_i32, %c0_i32_0 : i32, i32
  }
  func.func @transform_4(%arg0: i32) -> (i32, i32) {
    %c0_i32 = arith.constant 0 : i32
    %c0_i32_0 = arith.constant 0 : i32
    %c0_i32_1 = arith.constant 0 : i32
    return %c0_i32, %c0_i32_0 : i32, i32
  }
  func.func @transform_5(%arg0: i32) -> (i32, i32) {
    %c0_i32 = arith.constant 0 : i32
    %c0_i32_0 = arith.constant 0 : i32
    %c0_i32_1 = arith.constant 0 : i32
    return %c0_i32, %c0_i32_0 : i32, i32
  }
  func.func @transform_6(%arg0: i32) -> (i32, i32) {
    %c0_i32 = arith.constant 0 : i32
    %c0_i32_0 = arith.constant 0 : i32
    %c0_i32_1 = arith.constant 0 : i32
    return %c0_i32, %c0_i32_0 : i32, i32
  }
  func.func @transform_7(%arg0: i32) -> (i32, i32) {
    %c0_i32 = arith.constant 0 : i32
    %c0_i32_0 = arith.constant 0 : i32
    %c0_i32_1 = arith.constant 0 : i32
    return %c0_i32, %c0_i32_0 : i32, i32
  }
  func.func @transform_8(%arg0: i32) -> (i32, i32) {
    %c0_i32 = arith.constant 0 : i32
    %c0_i32_0 = arith.constant 0 : i32
    %c0_i32_1 = arith.constant 0 : i32
    return %c0_i32, %c0_i32_0 : i32, i32
  }
  func.func @transform_9(%arg0: i32) -> (i32, i32) {
    %c0_i32 = arith.constant 0 : i32
    %c0_i32_0 = arith.constant 0 : i32
    %c0_i32_1 = arith.constant 0 : i32
    return %c0_i32, %c0_i32_0 : i32, i32
  }
  func.func @transform_10(%arg0: i32) -> (i32, i32) {
    %c0_i32 = arith.constant 0 : i32
    %c0_i32_0 = arith.constant 0 : i32
    %c0_i32_1 = arith.constant 0 : i32
    return %c0_i32, %c0_i32_0 : i32, i32
  }
  func.func @transform_11(%arg0: i32) -> (i32, i32) {
    %c0_i32 = arith.constant 0 : i32
    %c0_i32_0 = arith.constant 0 : i32
    %c0_i32_1 = arith.constant 0 : i32
    return %c0_i32, %c0_i32_0 : i32, i32
  }
  func.func @transform_12(%arg0: i32) -> (i32, i32) {
    %c0_i32 = arith.constant 0 : i32
    %c0_i32_0 = arith.constant 0 : i32
    %c0_i32_1 = arith.constant 0 : i32
    return %c0_i32, %c0_i32_0 : i32, i32
  }
  func.func @transform_13(%arg0: i32) -> (i32, i32, i32) {
    %c0_i32 = arith.constant 0 : i32
    %c0_i32_0 = arith.constant 0 : i32
    %c0_i32_1 = arith.constant 0 : i32
    return %arg0, %c0_i32, %c0_i32_0 : i32, i32, i32
  }
}

module attributes {stable_mosaic.version = 11 : i64} {
  func.func @block_kernel(%arg0: i32, %arg1: memref<4x16x128xf32, #tpu.memory_space<vmem>>, %arg2: memref<1x128xf32, #tpu.memory_space<vmem>>, %arg3: memref<1x128xf32, #tpu.memory_space<vmem>>, %arg4: memref<128x384xbf16, #tpu.memory_space<vmem>>, %arg5: memref<1x384xf32, #tpu.memory_space<vmem>>, %arg6: memref<128x128xbf16, #tpu.memory_space<vmem>>, %arg7: memref<1x128xf32, #tpu.memory_space<vmem>>, %arg8: memref<1x128xf32, #tpu.memory_space<vmem>>, %arg9: memref<1x128xf32, #tpu.memory_space<vmem>>, %arg10: memref<128x512xbf16, #tpu.memory_space<vmem>>, %arg11: memref<1x512xf32, #tpu.memory_space<vmem>>, %arg12: memref<512x128xbf16, #tpu.memory_space<vmem>>, %arg13: memref<1x128xf32, #tpu.memory_space<vmem>>, %arg14: memref<4x16x128xf32, #tpu.memory_space<vmem>>) attributes {dimension_semantics = [#tpu.dimension_semantics<parallel>], iteration_bounds = array<i64: 2>, scalar_prefetch = 0 : i64, scratch_operands = 0 : i64, tpu.core_type = #tpu.core_type<tc>, window_params = [{transform_indices = @transform_0, window_bounds = array<i64: 4, 16, 128>}, {pipeline_mode = #tpu.pipeline_mode<synchronous>, transform_indices = @transform_1, window_bounds = array<i64: 1, 128>}, {pipeline_mode = #tpu.pipeline_mode<synchronous>, transform_indices = @transform_2, window_bounds = array<i64: 1, 128>}, {pipeline_mode = #tpu.pipeline_mode<synchronous>, transform_indices = @transform_3, window_bounds = array<i64: 128, 384>}, {pipeline_mode = #tpu.pipeline_mode<synchronous>, transform_indices = @transform_4, window_bounds = array<i64: 1, 384>}, {pipeline_mode = #tpu.pipeline_mode<synchronous>, transform_indices = @transform_5, window_bounds = array<i64: 128, 128>}, {pipeline_mode = #tpu.pipeline_mode<synchronous>, transform_indices = @transform_6, window_bounds = array<i64: 1, 128>}, {pipeline_mode = #tpu.pipeline_mode<synchronous>, transform_indices = @transform_7, window_bounds = array<i64: 1, 128>}, {pipeline_mode = #tpu.pipeline_mode<synchronous>, transform_indices = @transform_8, window_bounds = array<i64: 1, 128>}, {pipeline_mode = #tpu.pipeline_mode<synchronous>, transform_indices = @transform_9, window_bounds = array<i64: 128, 512>}, {pipeline_mode = #tpu.pipeline_mode<synchronous>, transform_indices = @transform_10, window_bounds = array<i64: 1, 512>}, {pipeline_mode = #tpu.pipeline_mode<synchronous>, transform_indices = @transform_11, window_bounds = array<i64: 512, 128>}, {pipeline_mode = #tpu.pipeline_mode<synchronous>, transform_indices = @transform_12, window_bounds = array<i64: 1, 128>}, {transform_indices = @transform_13, window_bounds = array<i64: 4, 16, 128>}]} {
    %c0 = arith.constant 0 : index
    %c0_0 = arith.constant 0 : index
    %c0_1 = arith.constant 0 : index
    %0 = vector.load %arg1[%c0, %c0_0, %c0_1] : memref<4x16x128xf32, #tpu.memory_space<vmem>>, vector<4x16x128xf32>
    %1 = vector.shape_cast %0 : vector<4x16x128xf32> to vector<64x128xf32>
    %c0_2 = arith.constant 0 : index
    %c0_3 = arith.constant 0 : index
    %2 = vector.load %arg2[%c0_2, %c0_3] : memref<1x128xf32, #tpu.memory_space<vmem>>, vector<1x128xf32>
    %c0_4 = arith.constant 0 : index
    %c0_5 = arith.constant 0 : index
    %3 = vector.load %arg3[%c0_4, %c0_5] : memref<1x128xf32, #tpu.memory_space<vmem>>, vector<1x128xf32>
    %cst = arith.constant dense<0.000000e+00> : vector<64xf32>
    %4 = vector.multi_reduction <add>, %1, %cst [1] : vector<64x128xf32> to vector<64xf32>
    %5 = vector.shape_cast %4 : vector<64xf32> to vector<64x1xf32>
    %cst_6 = arith.constant 1.280000e+02 : f32
    %6 = vector.broadcast %cst_6 : f32 to vector<64x1xf32>
    %7 = arith.divf %5, %6 : vector<64x1xf32>
    %8 = vector.broadcast %7 : vector<64x1xf32> to vector<64x128xf32>
    %9 = arith.subf %1, %8 : vector<64x128xf32>
    %10 = arith.mulf %9, %9 : vector<64x128xf32>
    %cst_7 = arith.constant dense<0.000000e+00> : vector<64xf32>
    %11 = vector.multi_reduction <add>, %10, %cst_7 [1] : vector<64x128xf32> to vector<64xf32>
    %12 = vector.shape_cast %11 : vector<64xf32> to vector<64x1xf32>
    %cst_8 = arith.constant 1.280000e+02 : f32
    %13 = vector.broadcast %cst_8 : f32 to vector<64x1xf32>
    %14 = arith.divf %12, %13 : vector<64x1xf32>
    %15 = vector.broadcast %7 : vector<64x1xf32> to vector<64x128xf32>
    %16 = arith.subf %1, %15 : vector<64x128xf32>
    %cst_9 = arith.constant 9.99999974E-6 : f32
    %17 = vector.broadcast %cst_9 : f32 to vector<64x1xf32>
    %18 = arith.addf %14, %17 : vector<64x1xf32>
    %19 = math.rsqrt %18 : vector<64x1xf32>
    %20 = vector.broadcast %19 : vector<64x1xf32> to vector<64x128xf32>
    %21 = arith.mulf %16, %20 : vector<64x128xf32>
    %22 = vector.broadcast %2 : vector<1x128xf32> to vector<64x128xf32>
    %23 = arith.mulf %21, %22 : vector<64x128xf32>
    %24 = vector.broadcast %3 : vector<1x128xf32> to vector<64x128xf32>
    %25 = arith.addf %23, %24 : vector<64x128xf32>
    %26 = arith.truncf %25 : vector<64x128xf32> to vector<64x128xbf16>
    %c0_10 = arith.constant 0 : index
    %c0_11 = arith.constant 0 : index
    %27 = vector.load %arg4[%c0_10, %c0_11] : memref<128x384xbf16, #tpu.memory_space<vmem>>, vector<128x384xbf16>
    %cst_12 = arith.constant dense<0.000000e+00> : vector<64x384xf32>
    %28 = tpu.matmul %26, %27, %cst_12 {dimension_numbers = #tpu.dot_dimension_numbers<[1], [0], [0], [1], [0, 0, 1, 1], [], []>} : vector<64x128xbf16>, vector<128x384xbf16>, vector<64x384xf32> -> vector<64x384xf32>
    %c0_13 = arith.constant 0 : index
    %c0_14 = arith.constant 0 : index
    %29 = vector.load %arg5[%c0_13, %c0_14] : memref<1x384xf32, #tpu.memory_space<vmem>>, vector<1x384xf32>
    %30 = vector.broadcast %29 : vector<1x384xf32> to vector<64x384xf32>
    %31 = arith.addf %28, %30 : vector<64x384xf32>
    %32 = vector.extract_strided_slice %31 {offsets = [0, 0], sizes = [64, 128], strides = [1, 1]} : vector<64x384xf32> to vector<64x128xf32>
    %33 = arith.truncf %32 : vector<64x128xf32> to vector<64x128xbf16>
    %34 = vector.shape_cast %33 : vector<64x128xbf16> to vector<4x16x128xbf16>
    %35 = vector.extract_strided_slice %31 {offsets = [0, 128], sizes = [64, 128], strides = [1, 1]} : vector<64x384xf32> to vector<64x128xf32>
    %36 = arith.truncf %35 : vector<64x128xf32> to vector<64x128xbf16>
    %37 = vector.shape_cast %36 : vector<64x128xbf16> to vector<4x16x128xbf16>
    %38 = vector.extract_strided_slice %31 {offsets = [0, 256], sizes = [64, 128], strides = [1, 1]} : vector<64x384xf32> to vector<64x128xf32>
    %39 = arith.truncf %38 : vector<64x128xf32> to vector<64x128xbf16>
    %40 = vector.shape_cast %39 : vector<64x128xbf16> to vector<4x16x128xbf16>
    %41 = tpu.iota {dimensions = array<i32: 0>} : vector<16x1xi32>
    %c8_i32 = arith.constant 8 : i32
    %c0_i32 = arith.constant 0 : i32
    %42 = arith.cmpi eq, %c8_i32, %c0_i32 : i32
    %c1_i32 = arith.constant 1 : i32
    %43 = arith.select %42, %c1_i32, %c8_i32 : i32
    %44 = vector.broadcast %43 : i32 to vector<16x1xi32>
    %45 = arith.remsi %41, %44 : vector<16x1xi32>
    %c0_i32_15 = arith.constant 0 : i32
    %46 = vector.broadcast %c0_i32_15 : i32 to vector<16x1xi32>
    %47 = arith.cmpi ne, %45, %46 : vector<16x1xi32>
    %c0_i32_16 = arith.constant 0 : i32
    %48 = vector.broadcast %c0_i32_16 : i32 to vector<16x1xi32>
    %49 = arith.cmpi slt, %45, %48 : vector<16x1xi32>
    %c0_i32_17 = arith.constant 0 : i32
    %50 = arith.cmpi slt, %43, %c0_i32_17 : i32
    %51 = vector.broadcast %50 : i1 to vector<16x1xi1>
    %52 = vector.broadcast %51 : vector<16x1xi1> to vector<16x1xi1>
    %53 = arith.xori %49, %52 : vector<16x1xi1>
    %54 = arith.andi %53, %47 : vector<16x1xi1>
    %55 = vector.broadcast %43 : i32 to vector<16x1xi32>
    %56 = arith.addi %45, %55 : vector<16x1xi32>
    %57 = arith.select %54, %56, %45 : vector<16x1xi1>, vector<16x1xi32>
    %58 = tpu.iota {dimensions = array<i32: 1>} : vector<1x16xi32>
    %c8_i32_18 = arith.constant 8 : i32
    %c0_i32_19 = arith.constant 0 : i32
    %59 = arith.cmpi eq, %c8_i32_18, %c0_i32_19 : i32
    %c1_i32_20 = arith.constant 1 : i32
    %60 = arith.select %59, %c1_i32_20, %c8_i32_18 : i32
    %61 = vector.broadcast %60 : i32 to vector<1x16xi32>
    %62 = arith.remsi %58, %61 : vector<1x16xi32>
    %c0_i32_21 = arith.constant 0 : i32
    %63 = vector.broadcast %c0_i32_21 : i32 to vector<1x16xi32>
    %64 = arith.cmpi ne, %62, %63 : vector<1x16xi32>
    %c0_i32_22 = arith.constant 0 : i32
    %65 = vector.broadcast %c0_i32_22 : i32 to vector<1x16xi32>
    %66 = arith.cmpi slt, %62, %65 : vector<1x16xi32>
    %c0_i32_23 = arith.constant 0 : i32
    %67 = arith.cmpi slt, %60, %c0_i32_23 : i32
    %68 = vector.broadcast %67 : i1 to vector<1x16xi1>
    %69 = vector.broadcast %68 : vector<1x16xi1> to vector<1x16xi1>
    %70 = arith.xori %66, %69 : vector<1x16xi1>
    %71 = arith.andi %70, %64 : vector<1x16xi1>
    %72 = vector.broadcast %60 : i32 to vector<1x16xi32>
    %73 = arith.addi %62, %72 : vector<1x16xi32>
    %74 = arith.select %71, %73, %62 : vector<1x16xi1>, vector<1x16xi32>
    %75 = vector.broadcast %74 : vector<1x16xi32> to vector<16x16xi32>
    %76 = vector.broadcast %57 : vector<16x1xi32> to vector<16x16xi32>
    %77 = arith.cmpi sle, %75, %76 : vector<16x16xi32>
    %cst_24 = arith.constant 0.000000e+00 : f32
    %cst_25 = arith.constant -1.000000e+30 : f32
    %78 = vector.broadcast %cst_24 : f32 to vector<16x16xf32>
    %79 = vector.broadcast %cst_25 : f32 to vector<16x16xf32>
    %80 = arith.select %77, %78, %79 : vector<16x16xi1>, vector<16x16xf32>
    %81 = vector.extract_strided_slice %34 {offsets = [0, 0, 0], sizes = [4, 16, 32], strides = [1, 1, 1]} : vector<4x16x128xbf16> to vector<4x16x32xbf16>
    %82 = vector.extract_strided_slice %37 {offsets = [0, 0, 0], sizes = [4, 16, 32], strides = [1, 1, 1]} : vector<4x16x128xbf16> to vector<4x16x32xbf16>
    %83 = vector.extract_strided_slice %40 {offsets = [0, 0, 0], sizes = [4, 16, 32], strides = [1, 1, 1]} : vector<4x16x128xbf16> to vector<4x16x32xbf16>
    "tpu.trace_start"() <{level = 10 : i32, message = "bqd,bkd->bqk"}> : () -> ()
    %cst_26 = arith.constant dense<0.000000e+00> : vector<4x16x16xf32>
    %84 = tpu.matmul %81, %82, %cst_26 {dimension_numbers = #tpu.dot_dimension_numbers<[2], [2], [1], [1], [0, 0, 0, 1, 1, 1], [0], [0]>} : vector<4x16x32xbf16>, vector<4x16x32xbf16>, vector<4x16x16xf32> -> vector<4x16x16xf32>
    "tpu.trace_stop"() : () -> ()
    %85 = vector.shape_cast %80 : vector<16x16xf32> to vector<1x16x16xf32>
    %86 = vector.broadcast %85 : vector<1x16x16xf32> to vector<4x16x16xf32>
    %87 = arith.addf %84, %86 : vector<4x16x16xf32>
    %cst_27 = arith.constant dense<0xFF800000> : vector<4x16xf32>
    %88 = vector.multi_reduction <maximumf>, %87, %cst_27 [2] : vector<4x16x16xf32> to vector<4x16xf32>
    %89 = vector.shape_cast %88 : vector<4x16xf32> to vector<4x16x1xf32>
    %90 = vector.broadcast %89 : vector<4x16x1xf32> to vector<4x16x16xf32>
    %91 = arith.subf %87, %90 : vector<4x16x16xf32>
    %92 = math.exp %91 : vector<4x16x16xf32>
    %cst_28 = arith.constant dense<0.000000e+00> : vector<4x16xf32>
    %93 = vector.multi_reduction <add>, %92, %cst_28 [2] : vector<4x16x16xf32> to vector<4x16xf32>
    %94 = vector.shape_cast %93 : vector<4x16xf32> to vector<4x16x1xf32>
    %95 = arith.truncf %92 : vector<4x16x16xf32> to vector<4x16x16xbf16>
    "tpu.trace_start"() <{level = 10 : i32, message = "bqk,bkd->bqd"}> : () -> ()
    %cst_29 = arith.constant dense<0.000000e+00> : vector<4x16x32xf32>
    %96 = tpu.matmul %95, %83, %cst_29 {dimension_numbers = #tpu.dot_dimension_numbers<[2], [1], [1], [2], [0, 0, 0, 1, 1, 2], [0], [0]>} : vector<4x16x16xbf16>, vector<4x16x32xbf16>, vector<4x16x32xf32> -> vector<4x16x32xf32>
    "tpu.trace_stop"() : () -> ()
    %97 = tpu.reciprocal %94 {approx = true} : vector<4x16x1xf32> -> vector<4x16x1xf32>
    %98 = vector.broadcast %97 : vector<4x16x1xf32> to vector<4x16x32xf32>
    %99 = arith.mulf %96, %98 : vector<4x16x32xf32>
    %100 = vector.extract_strided_slice %34 {offsets = [0, 0, 32], sizes = [4, 16, 32], strides = [1, 1, 1]} : vector<4x16x128xbf16> to vector<4x16x32xbf16>
    %101 = vector.extract_strided_slice %37 {offsets = [0, 0, 32], sizes = [4, 16, 32], strides = [1, 1, 1]} : vector<4x16x128xbf16> to vector<4x16x32xbf16>
    %102 = vector.extract_strided_slice %40 {offsets = [0, 0, 32], sizes = [4, 16, 32], strides = [1, 1, 1]} : vector<4x16x128xbf16> to vector<4x16x32xbf16>
    "tpu.trace_start"() <{level = 10 : i32, message = "bqd,bkd->bqk"}> : () -> ()
    %cst_30 = arith.constant dense<0.000000e+00> : vector<4x16x16xf32>
    %103 = tpu.matmul %100, %101, %cst_30 {dimension_numbers = #tpu.dot_dimension_numbers<[2], [2], [1], [1], [0, 0, 0, 1, 1, 1], [0], [0]>} : vector<4x16x32xbf16>, vector<4x16x32xbf16>, vector<4x16x16xf32> -> vector<4x16x16xf32>
    "tpu.trace_stop"() : () -> ()
    %104 = vector.shape_cast %80 : vector<16x16xf32> to vector<1x16x16xf32>
    %105 = vector.broadcast %104 : vector<1x16x16xf32> to vector<4x16x16xf32>
    %106 = arith.addf %103, %105 : vector<4x16x16xf32>
    %cst_31 = arith.constant dense<0xFF800000> : vector<4x16xf32>
    %107 = vector.multi_reduction <maximumf>, %106, %cst_31 [2] : vector<4x16x16xf32> to vector<4x16xf32>
    %108 = vector.shape_cast %107 : vector<4x16xf32> to vector<4x16x1xf32>
    %109 = vector.broadcast %108 : vector<4x16x1xf32> to vector<4x16x16xf32>
    %110 = arith.subf %106, %109 : vector<4x16x16xf32>
    %111 = math.exp %110 : vector<4x16x16xf32>
    %cst_32 = arith.constant dense<0.000000e+00> : vector<4x16xf32>
    %112 = vector.multi_reduction <add>, %111, %cst_32 [2] : vector<4x16x16xf32> to vector<4x16xf32>
    %113 = vector.shape_cast %112 : vector<4x16xf32> to vector<4x16x1xf32>
    %114 = arith.truncf %111 : vector<4x16x16xf32> to vector<4x16x16xbf16>
    "tpu.trace_start"() <{level = 10 : i32, message = "bqk,bkd->bqd"}> : () -> ()
    %cst_33 = arith.constant dense<0.000000e+00> : vector<4x16x32xf32>
    %115 = tpu.matmul %114, %102, %cst_33 {dimension_numbers = #tpu.dot_dimension_numbers<[2], [1], [1], [2], [0, 0, 0, 1, 1, 2], [0], [0]>} : vector<4x16x16xbf16>, vector<4x16x32xbf16>, vector<4x16x32xf32> -> vector<4x16x32xf32>
    "tpu.trace_stop"() : () -> ()
    %116 = tpu.reciprocal %113 {approx = true} : vector<4x16x1xf32> -> vector<4x16x1xf32>
    %117 = vector.broadcast %116 : vector<4x16x1xf32> to vector<4x16x32xf32>
    %118 = arith.mulf %115, %117 : vector<4x16x32xf32>
    %119 = vector.extract_strided_slice %34 {offsets = [0, 0, 64], sizes = [4, 16, 32], strides = [1, 1, 1]} : vector<4x16x128xbf16> to vector<4x16x32xbf16>
    %120 = vector.extract_strided_slice %37 {offsets = [0, 0, 64], sizes = [4, 16, 32], strides = [1, 1, 1]} : vector<4x16x128xbf16> to vector<4x16x32xbf16>
    %121 = vector.extract_strided_slice %40 {offsets = [0, 0, 64], sizes = [4, 16, 32], strides = [1, 1, 1]} : vector<4x16x128xbf16> to vector<4x16x32xbf16>
    "tpu.trace_start"() <{level = 10 : i32, message = "bqd,bkd->bqk"}> : () -> ()
    %cst_34 = arith.constant dense<0.000000e+00> : vector<4x16x16xf32>
    %122 = tpu.matmul %119, %120, %cst_34 {dimension_numbers = #tpu.dot_dimension_numbers<[2], [2], [1], [1], [0, 0, 0, 1, 1, 1], [0], [0]>} : vector<4x16x32xbf16>, vector<4x16x32xbf16>, vector<4x16x16xf32> -> vector<4x16x16xf32>
    "tpu.trace_stop"() : () -> ()
    %123 = vector.shape_cast %80 : vector<16x16xf32> to vector<1x16x16xf32>
    %124 = vector.broadcast %123 : vector<1x16x16xf32> to vector<4x16x16xf32>
    %125 = arith.addf %122, %124 : vector<4x16x16xf32>
    %cst_35 = arith.constant dense<0xFF800000> : vector<4x16xf32>
    %126 = vector.multi_reduction <maximumf>, %125, %cst_35 [2] : vector<4x16x16xf32> to vector<4x16xf32>
    %127 = vector.shape_cast %126 : vector<4x16xf32> to vector<4x16x1xf32>
    %128 = vector.broadcast %127 : vector<4x16x1xf32> to vector<4x16x16xf32>
    %129 = arith.subf %125, %128 : vector<4x16x16xf32>
    %130 = math.exp %129 : vector<4x16x16xf32>
    %cst_36 = arith.constant dense<0.000000e+00> : vector<4x16xf32>
    %131 = vector.multi_reduction <add>, %130, %cst_36 [2] : vector<4x16x16xf32> to vector<4x16xf32>
    %132 = vector.shape_cast %131 : vector<4x16xf32> to vector<4x16x1xf32>
    %133 = arith.truncf %130 : vector<4x16x16xf32> to vector<4x16x16xbf16>
    "tpu.trace_start"() <{level = 10 : i32, message = "bqk,bkd->bqd"}> : () -> ()
    %cst_37 = arith.constant dense<0.000000e+00> : vector<4x16x32xf32>
    %134 = tpu.matmul %133, %121, %cst_37 {dimension_numbers = #tpu.dot_dimension_numbers<[2], [1], [1], [2], [0, 0, 0, 1, 1, 2], [0], [0]>} : vector<4x16x16xbf16>, vector<4x16x32xbf16>, vector<4x16x32xf32> -> vector<4x16x32xf32>
    "tpu.trace_stop"() : () -> ()
    %135 = tpu.reciprocal %132 {approx = true} : vector<4x16x1xf32> -> vector<4x16x1xf32>
    %136 = vector.broadcast %135 : vector<4x16x1xf32> to vector<4x16x32xf32>
    %137 = arith.mulf %134, %136 : vector<4x16x32xf32>
    %138 = vector.extract_strided_slice %34 {offsets = [0, 0, 96], sizes = [4, 16, 32], strides = [1, 1, 1]} : vector<4x16x128xbf16> to vector<4x16x32xbf16>
    %139 = vector.extract_strided_slice %37 {offsets = [0, 0, 96], sizes = [4, 16, 32], strides = [1, 1, 1]} : vector<4x16x128xbf16> to vector<4x16x32xbf16>
    %140 = vector.extract_strided_slice %40 {offsets = [0, 0, 96], sizes = [4, 16, 32], strides = [1, 1, 1]} : vector<4x16x128xbf16> to vector<4x16x32xbf16>
    "tpu.trace_start"() <{level = 10 : i32, message = "bqd,bkd->bqk"}> : () -> ()
    %cst_38 = arith.constant dense<0.000000e+00> : vector<4x16x16xf32>
    %141 = tpu.matmul %138, %139, %cst_38 {dimension_numbers = #tpu.dot_dimension_numbers<[2], [2], [1], [1], [0, 0, 0, 1, 1, 1], [0], [0]>} : vector<4x16x32xbf16>, vector<4x16x32xbf16>, vector<4x16x16xf32> -> vector<4x16x16xf32>
    "tpu.trace_stop"() : () -> ()
    %142 = vector.shape_cast %80 : vector<16x16xf32> to vector<1x16x16xf32>
    %143 = vector.broadcast %142 : vector<1x16x16xf32> to vector<4x16x16xf32>
    %144 = arith.addf %141, %143 : vector<4x16x16xf32>
    %cst_39 = arith.constant dense<0xFF800000> : vector<4x16xf32>
    %145 = vector.multi_reduction <maximumf>, %144, %cst_39 [2] : vector<4x16x16xf32> to vector<4x16xf32>
    %146 = vector.shape_cast %145 : vector<4x16xf32> to vector<4x16x1xf32>
    %147 = vector.broadcast %146 : vector<4x16x1xf32> to vector<4x16x16xf32>
    %148 = arith.subf %144, %147 : vector<4x16x16xf32>
    %149 = math.exp %148 : vector<4x16x16xf32>
    %cst_40 = arith.constant dense<0.000000e+00> : vector<4x16xf32>
    %150 = vector.multi_reduction <add>, %149, %cst_40 [2] : vector<4x16x16xf32> to vector<4x16xf32>
    %151 = vector.shape_cast %150 : vector<4x16xf32> to vector<4x16x1xf32>
    %152 = arith.truncf %149 : vector<4x16x16xf32> to vector<4x16x16xbf16>
    "tpu.trace_start"() <{level = 10 : i32, message = "bqk,bkd->bqd"}> : () -> ()
    %cst_41 = arith.constant dense<0.000000e+00> : vector<4x16x32xf32>
    %153 = tpu.matmul %152, %140, %cst_41 {dimension_numbers = #tpu.dot_dimension_numbers<[2], [1], [1], [2], [0, 0, 0, 1, 1, 2], [0], [0]>} : vector<4x16x16xbf16>, vector<4x16x32xbf16>, vector<4x16x32xf32> -> vector<4x16x32xf32>
    "tpu.trace_stop"() : () -> ()
    %154 = tpu.reciprocal %151 {approx = true} : vector<4x16x1xf32> -> vector<4x16x1xf32>
    %155 = vector.broadcast %154 : vector<4x16x1xf32> to vector<4x16x32xf32>
    %156 = arith.mulf %153, %155 : vector<4x16x32xf32>
    %157 = tpu.concatenate %99, %118, %137, %156 in 2 : vector<4x16x32xf32>, vector<4x16x32xf32>, vector<4x16x32xf32>, vector<4x16x32xf32> -> vector<4x16x128xf32>
    %158 = vector.shape_cast %157 : vector<4x16x128xf32> to vector<64x128xf32>
    %159 = arith.truncf %158 : vector<64x128xf32> to vector<64x128xbf16>
    %c0_42 = arith.constant 0 : index
    %c0_43 = arith.constant 0 : index
    %160 = vector.load %arg6[%c0_42, %c0_43] : memref<128x128xbf16, #tpu.memory_space<vmem>>, vector<128x128xbf16>
    %cst_44 = arith.constant dense<0.000000e+00> : vector<64x128xf32>
    %161 = tpu.matmul %159, %160, %cst_44 {dimension_numbers = #tpu.dot_dimension_numbers<[1], [0], [0], [1], [0, 0, 1, 1], [], []>} : vector<64x128xbf16>, vector<128x128xbf16>, vector<64x128xf32> -> vector<64x128xf32>
    %162 = arith.addf %1, %161 : vector<64x128xf32>
    %c0_45 = arith.constant 0 : index
    %c0_46 = arith.constant 0 : index
    %163 = vector.load %arg7[%c0_45, %c0_46] : memref<1x128xf32, #tpu.memory_space<vmem>>, vector<1x128xf32>
    %164 = vector.broadcast %163 : vector<1x128xf32> to vector<64x128xf32>
    %165 = arith.addf %162, %164 : vector<64x128xf32>
    %c0_47 = arith.constant 0 : index
    %c0_48 = arith.constant 0 : index
    %166 = vector.load %arg8[%c0_47, %c0_48] : memref<1x128xf32, #tpu.memory_space<vmem>>, vector<1x128xf32>
    %c0_49 = arith.constant 0 : index
    %c0_50 = arith.constant 0 : index
    %167 = vector.load %arg9[%c0_49, %c0_50] : memref<1x128xf32, #tpu.memory_space<vmem>>, vector<1x128xf32>
    %cst_51 = arith.constant dense<0.000000e+00> : vector<64xf32>
    %168 = vector.multi_reduction <add>, %165, %cst_51 [1] : vector<64x128xf32> to vector<64xf32>
    %169 = vector.shape_cast %168 : vector<64xf32> to vector<64x1xf32>
    %cst_52 = arith.constant 1.280000e+02 : f32
    %170 = vector.broadcast %cst_52 : f32 to vector<64x1xf32>
    %171 = arith.divf %169, %170 : vector<64x1xf32>
    %172 = vector.broadcast %171 : vector<64x1xf32> to vector<64x128xf32>
    %173 = arith.subf %165, %172 : vector<64x128xf32>
    %174 = arith.mulf %173, %173 : vector<64x128xf32>
    %cst_53 = arith.constant dense<0.000000e+00> : vector<64xf32>
    %175 = vector.multi_reduction <add>, %174, %cst_53 [1] : vector<64x128xf32> to vector<64xf32>
    %176 = vector.shape_cast %175 : vector<64xf32> to vector<64x1xf32>
    %cst_54 = arith.constant 1.280000e+02 : f32
    %177 = vector.broadcast %cst_54 : f32 to vector<64x1xf32>
    %178 = arith.divf %176, %177 : vector<64x1xf32>
    %179 = vector.broadcast %171 : vector<64x1xf32> to vector<64x128xf32>
    %180 = arith.subf %165, %179 : vector<64x128xf32>
    %cst_55 = arith.constant 9.99999974E-6 : f32
    %181 = vector.broadcast %cst_55 : f32 to vector<64x1xf32>
    %182 = arith.addf %178, %181 : vector<64x1xf32>
    %183 = math.rsqrt %182 : vector<64x1xf32>
    %184 = vector.broadcast %183 : vector<64x1xf32> to vector<64x128xf32>
    %185 = arith.mulf %180, %184 : vector<64x128xf32>
    %186 = vector.broadcast %166 : vector<1x128xf32> to vector<64x128xf32>
    %187 = arith.mulf %185, %186 : vector<64x128xf32>
    %188 = vector.broadcast %167 : vector<1x128xf32> to vector<64x128xf32>
    %189 = arith.addf %187, %188 : vector<64x128xf32>
    %190 = arith.truncf %189 : vector<64x128xf32> to vector<64x128xbf16>
    %c0_56 = arith.constant 0 : index
    %c0_57 = arith.constant 0 : index
    %191 = vector.load %arg10[%c0_56, %c0_57] : memref<128x512xbf16, #tpu.memory_space<vmem>>, vector<128x512xbf16>
    %cst_58 = arith.constant dense<0.000000e+00> : vector<64x512xf32>
    %192 = tpu.matmul %190, %191, %cst_58 {dimension_numbers = #tpu.dot_dimension_numbers<[1], [0], [0], [1], [0, 0, 1, 1], [], []>} : vector<64x128xbf16>, vector<128x512xbf16>, vector<64x512xf32> -> vector<64x512xf32>
    %c0_59 = arith.constant 0 : index
    %c0_60 = arith.constant 0 : index
    %193 = vector.load %arg11[%c0_59, %c0_60] : memref<1x512xf32, #tpu.memory_space<vmem>>, vector<1x512xf32>
    %194 = vector.broadcast %193 : vector<1x512xf32> to vector<64x512xf32>
    %195 = arith.addf %192, %194 : vector<64x512xf32>
    %cst_61 = arith.constant 5.000000e-01 : f32
    %196 = vector.broadcast %cst_61 : f32 to vector<64x512xf32>
    %197 = arith.mulf %196, %195 : vector<64x512xf32>
    %cst_62 = arith.constant 0.707106769 : f32
    %198 = vector.broadcast %cst_62 : f32 to vector<64x512xf32>
    %199 = arith.mulf %195, %198 : vector<64x512xf32>
    %cst_63 = arith.constant 0.000000e+00 : f32
    %200 = vector.broadcast %cst_63 : f32 to vector<64x512xf32>
    %201 = arith.cmpf oge, %199, %200 : vector<64x512xf32>
    %cst_64 = arith.constant 1.000000e+00 : f32
    %cst_65 = arith.constant -1.000000e+00 : f32
    %202 = vector.broadcast %cst_64 : f32 to vector<64x512xf32>
    %203 = vector.broadcast %cst_65 : f32 to vector<64x512xf32>
    %204 = arith.select %201, %202, %203 : vector<64x512xi1>, vector<64x512xf32>
    %205 = math.absf %199 : vector<64x512xf32>
    %cst_66 = arith.constant 0.327591091 : f32
    %206 = vector.broadcast %cst_66 : f32 to vector<64x512xf32>
    %207 = arith.mulf %206, %205 : vector<64x512xf32>
    %cst_67 = arith.constant 1.000000e+00 : f32
    %208 = vector.broadcast %cst_67 : f32 to vector<64x512xf32>
    %209 = arith.addf %208, %207 : vector<64x512xf32>
    %cst_68 = arith.constant 1.000000e+00 : f32
    %210 = vector.broadcast %cst_68 : f32 to vector<64x512xf32>
    %211 = arith.divf %210, %209 : vector<64x512xf32>
    %cst_69 = arith.constant 1.06140542 : f32
    %212 = vector.broadcast %cst_69 : f32 to vector<64x512xf32>
    %213 = arith.mulf %212, %211 : vector<64x512xf32>
    %cst_70 = arith.constant -1.45315206 : f32
    %214 = vector.broadcast %cst_70 : f32 to vector<64x512xf32>
    %215 = arith.addf %213, %214 : vector<64x512xf32>
    %216 = arith.mulf %215, %211 : vector<64x512xf32>
    %cst_71 = arith.constant 1.42141378 : f32
    %217 = vector.broadcast %cst_71 : f32 to vector<64x512xf32>
    %218 = arith.addf %216, %217 : vector<64x512xf32>
    %219 = arith.mulf %218, %211 : vector<64x512xf32>
    %cst_72 = arith.constant -0.284496725 : f32
    %220 = vector.broadcast %cst_72 : f32 to vector<64x512xf32>
    %221 = arith.addf %219, %220 : vector<64x512xf32>
    %222 = arith.mulf %221, %211 : vector<64x512xf32>
    %cst_73 = arith.constant 0.254829586 : f32
    %223 = vector.broadcast %cst_73 : f32 to vector<64x512xf32>
    %224 = arith.addf %222, %223 : vector<64x512xf32>
    %225 = arith.mulf %224, %211 : vector<64x512xf32>
    %cst_74 = arith.constant 0.000000e+00 : f32
    %226 = vector.broadcast %cst_74 : f32 to vector<64x512xf32>
    %227 = arith.subf %226, %205 : vector<64x512xf32>
    %228 = arith.mulf %227, %205 : vector<64x512xf32>
    %229 = math.exp %228 : vector<64x512xf32>
    %230 = arith.mulf %225, %229 : vector<64x512xf32>
    %cst_75 = arith.constant 1.000000e+00 : f32
    %231 = vector.broadcast %cst_75 : f32 to vector<64x512xf32>
    %232 = arith.subf %231, %230 : vector<64x512xf32>
    %233 = arith.mulf %204, %232 : vector<64x512xf32>
    %cst_76 = arith.constant 1.000000e+00 : f32
    %234 = vector.broadcast %cst_76 : f32 to vector<64x512xf32>
    %235 = arith.addf %234, %233 : vector<64x512xf32>
    %236 = arith.mulf %197, %235 : vector<64x512xf32>
    %237 = arith.truncf %236 : vector<64x512xf32> to vector<64x512xbf16>
    %c0_77 = arith.constant 0 : index
    %c0_78 = arith.constant 0 : index
    %238 = vector.load %arg12[%c0_77, %c0_78] : memref<512x128xbf16, #tpu.memory_space<vmem>>, vector<512x128xbf16>
    %cst_79 = arith.constant dense<0.000000e+00> : vector<64x128xf32>
    %239 = tpu.matmul %237, %238, %cst_79 {dimension_numbers = #tpu.dot_dimension_numbers<[1], [0], [0], [1], [0, 0, 1, 1], [], []>} : vector<64x512xbf16>, vector<512x128xbf16>, vector<64x128xf32> -> vector<64x128xf32>
    %c0_80 = arith.constant 0 : index
    %c0_81 = arith.constant 0 : index
    %240 = vector.load %arg13[%c0_80, %c0_81] : memref<1x128xf32, #tpu.memory_space<vmem>>, vector<1x128xf32>
    %241 = vector.broadcast %240 : vector<1x128xf32> to vector<64x128xf32>
    %242 = arith.addf %239, %241 : vector<64x128xf32>
    %243 = arith.addf %165, %242 : vector<64x128xf32>
    %244 = vector.shape_cast %243 : vector<64x128xf32> to vector<4x16x128xf32>
    %c0_82 = arith.constant 0 : index
    %c0_83 = arith.constant 0 : index
    %c0_84 = arith.constant 0 : index
    %245 = vector.load %arg14[%c0_82, %c0_83, %c0_84] : memref<4x16x128xf32, #tpu.memory_space<vmem>>, vector<4x16x128xf32>
    tpu.vector_store %arg14[%c0_82, %c0_83, %c0_84], %244 {strides = array<i32>} : memref<4x16x128xf32, #tpu.memory_space<vmem>>, vector<4x16x128xf32>,
    return
  }
  func.func @transform_0(%arg0: i32) -> (i32, i32, i32) {
    %c0_i32 = arith.constant 0 : i32
    %c0_i32_0 = arith.constant 0 : i32
    %c0_i32_1 = arith.constant 0 : i32
    return %arg0, %c0_i32, %c0_i32_0 : i32, i32, i32
  }
  func.func @transform_1(%arg0: i32) -> (i32, i32) {
    %c0_i32 = arith.constant 0 : i32
    %c0_i32_0 = arith.constant 0 : i32
    %c0_i32_1 = arith.constant 0 : i32
    return %c0_i32, %c0_i32_0 : i32, i32
  }
  func.func @transform_2(%arg0: i32) -> (i32, i32) {
    %c0_i32 = arith.constant 0 : i32
    %c0_i32_0 = arith.constant 0 : i32
    %c0_i32_1 = arith.constant 0 : i32
    return %c0_i32, %c0_i32_0 : i32, i32
  }
  func.func @transform_3(%arg0: i32) -> (i32, i32) {
    %c0_i32 = arith.constant 0 : i32
    %c0_i32_0 = arith.constant 0 : i32
    %c0_i32_1 = arith.constant 0 : i32
    return %c0_i32, %c0_i32_0 : i32, i32
  }
  func.func @transform_4(%arg0: i32) -> (i32, i32) {
    %c0_i32 = arith.constant 0 : i32
    %c0_i32_0 = arith.constant 0 : i32
    %c0_i32_1 = arith.constant 0 : i32
    return %c0_i32, %c0_i32_0 : i32, i32
  }
  func.func @transform_5(%arg0: i32) -> (i32, i32) {
    %c0_i32 = arith.constant 0 : i32
    %c0_i32_0 = arith.constant 0 : i32
    %c0_i32_1 = arith.constant 0 : i32
    return %c0_i32, %c0_i32_0 : i32, i32
  }
  func.func @transform_6(%arg0: i32) -> (i32, i32) {
    %c0_i32 = arith.constant 0 : i32
    %c0_i32_0 = arith.constant 0 : i32
    %c0_i32_1 = arith.constant 0 : i32
    return %c0_i32, %c0_i32_0 : i32, i32
  }
  func.func @transform_7(%arg0: i32) -> (i32, i32) {
    %c0_i32 = arith.constant 0 : i32
    %c0_i32_0 = arith.constant 0 : i32
    %c0_i32_1 = arith.constant 0 : i32
    return %c0_i32, %c0_i32_0 : i32, i32
  }
  func.func @transform_8(%arg0: i32) -> (i32, i32) {
    %c0_i32 = arith.constant 0 : i32
    %c0_i32_0 = arith.constant 0 : i32
    %c0_i32_1 = arith.constant 0 : i32
    return %c0_i32, %c0_i32_0 : i32, i32
  }
  func.func @transform_9(%arg0: i32) -> (i32, i32) {
    %c0_i32 = arith.constant 0 : i32
    %c0_i32_0 = arith.constant 0 : i32
    %c0_i32_1 = arith.constant 0 : i32
    return %c0_i32, %c0_i32_0 : i32, i32
  }
  func.func @transform_10(%arg0: i32) -> (i32, i32) {
    %c0_i32 = arith.constant 0 : i32
    %c0_i32_0 = arith.constant 0 : i32
    %c0_i32_1 = arith.constant 0 : i32
    return %c0_i32, %c0_i32_0 : i32, i32
  }
  func.func @transform_11(%arg0: i32) -> (i32, i32) {
    %c0_i32 = arith.constant 0 : i32
    %c0_i32_0 = arith.constant 0 : i32
    %c0_i32_1 = arith.constant 0 : i32
    return %c0_i32, %c0_i32_0 : i32, i32
  }
  func.func @transform_12(%arg0: i32) -> (i32, i32) {
    %c0_i32 = arith.constant 0 : i32
    %c0_i32_0 = arith.constant 0 : i32
    %c0_i32_1 = arith.constant 0 : i32
    return %c0_i32, %c0_i32_0 : i32, i32
  }
  func.func @transform_13(%arg0: i32) -> (i32, i32, i32) {
    %c0_i32 = arith.constant 0 : i32
    %c0_i32_0 = arith.constant 0 : i32
    %c0_i32_1 = arith.constant 0 : i32
    return %arg0, %c0_i32, %c0_i32_0 : i32, i32, i32
  }
}

</mosaic_0001>

<llo_original>
// kernel: tpu_custom_call.1
$region0: #{tpu_custom_call.1}
  #allocation0 [shape = 'u32[]', space=smem, size = 0x4, offset = 0x4, fixed_abs, tag = 'smem constant byte address 0x4 - core index']
  #allocation1 [shape = 'u32[144,128]{1,0:T(1,128)}', space=vmem, size = 0x12000, scoped, tag = 'internal scratch']
  %s0 = inlined_call_operand.hbm [shape: f32[8,16,128], index: 0, kind: input, shape index: {}]
  %s1 = inlined_call_operand.hbm [shape: f32[1,128], index: 1, kind: input, shape index: {}]
  %s2 = inlined_call_operand.hbm [shape: f32[1,128], index: 2, kind: input, shape index: {}]
  %s3 = inlined_call_operand.hbm [shape: bf16[128,384], index: 3, kind: input, shape index: {}]
  %s4 = inlined_call_operand.vmem [shape: f32[1,384], index: 4, kind: input, shape index: {}]
  %s5 = inlined_call_operand.hbm [shape: bf16[128,128], index: 5, kind: input, shape index: {}]
  %s6 = inlined_call_operand.vmem [shape: f32[1,128], index: 6, kind: input, shape index: {}]
  %s7 = inlined_call_operand.vmem [shape: f32[1,128], index: 7, kind: input, shape index: {}]
  %s8 = inlined_call_operand.vmem [shape: f32[1,128], index: 8, kind: input, shape index: {}]
  %s9 = inlined_call_operand.hbm [shape: bf16[128,512], index: 9, kind: input, shape index: {}]
  %s10 = inlined_call_operand.vmem [shape: f32[1,512], index: 10, kind: input, shape index: {}]
  %s11 = inlined_call_operand.hbm [shape: bf16[512,128], index: 11, kind: input, shape index: {}]
  %s12 = inlined_call_operand.vmem [shape: f32[1,128], index: 12, kind: input, shape index: {}]
  %s13 = inlined_call_operand.hbm [shape: f32[8,16,128], index: 13, kind: output, shape index: {}]
  %s14 = sld [smem:[#allocation0]]
  $region113: #{tpu_custom_call.1} parent=0
    _
  %s16 = ssub.s32 1, %s14
  %s17 = scalar_select 0, %s16, %s14
  $region1: #{tpu_custom_call.1} parent=0
    #allocation2 [shape = 'u8[65536]{0}', space=vmem, size = 0x10000, scoped, tag = 'input window, operand 0']
    #allocation3 [shape = 's32[2]{0}', space=sflag, size = 0x8, scoped, tag = 'scoped memory for tpu_custom_call.1']
    #allocation4 [shape = 's32[2]{0}', space=sflag, size = 0x8, scoped, tag = 'scoped memory for tpu_custom_call.1']
    #allocation5 [shape = 'u8[512]{0}', space=vmem, size = 0x400, scoped, tag = 'input window, operand 1, single buffered']
    #allocation6 [shape = 's32[1]{0}', space=sflag, size = 0x4, scoped, tag = 'scoped memory for tpu_custom_call.1']
    #allocation7 [shape = 'u8[512]{0}', space=vmem, size = 0x400, scoped, tag = 'input window, operand 2, single buffered']
    #allocation8 [shape = 'u8[98304]{0}', space=vmem, size = 0x18000, scoped, tag = 'input window, operand 3, single buffered']
    #allocation9 [shape = 's32[1]{0}', space=sflag, size = 0x4, scoped, tag = 'scoped memory for tpu_custom_call.1']
    #allocation10 [shape = 'u8[32768]{0}', space=vmem, size = 0x8000, scoped, tag = 'input window, operand 5, single buffered']
    #allocation11 [shape = 'u8[131072]{0}', space=vmem, size = 0x20000, scoped, tag = 'input window, operand 9, single buffered']
    #allocation12 [shape = 's32[1]{0}', space=sflag, size = 0x4, scoped, tag = 'scoped memory for tpu_custom_call.1']
    #allocation13 [shape = 'u8[131072]{0}', space=vmem, size = 0x20000, scoped, tag = 'input window, operand 11, single buffered']
    #allocation14 [shape = 'u8[65536]{0}', space=vmem, size = 0x10000, scoped, tag = 'output window, operand 0']
    %18 = vsyncpa [#allocation3], 0
    %s19 = scalar_lea.sflag [#allocation3], 1
    %20 = vsyncpa %s19, 0
    %21 = vsyncpa [#allocation6], 0
    %22 = vsyncpa [#allocation9], 0
    %23 = vsyncpa [#allocation12], 0
    %24 = vsyncpa [#allocation4], 0
    %s25 = scalar_lea.sflag [#allocation4], 1
    %26 = vsyncpa %s25, 0
    loop: start=0, step=1, limit=4
    $region2: #{tpu_custom_call.1} parent=1 // loop_pre_header
      _
    $region3: #{tpu_custom_call.1} parent=1 // loop_header
      %s28 = sphi 0, %s32
      %p29 = scmp.ge.s32.totalorder %s28, 4
      %s38 = sphi 0, %s40
      %s41 = sphi 0, %s38
      %s42 = sphi 0, %s41
      %s58 = sphi 0, %s42
      %s62 = sphi 0, %s62
      %s64 = sphi 0, %s62
      %s65 = sphi 0, %s64
      %s79 = sphi 0, %s65
      %s83 = sphi 0, %s83
      %s85 = sphi 0, %s83
      %s86 = sphi 0, %s85
      %s100 = sphi 0, %s86
      %s104 = sphi 0, %s104
      %s106 = sphi 0, %s104
      %s107 = sphi 0, %s106
      %s121 = sphi 0, %s107
      %s125 = sphi 0, %s125
      %s127 = sphi 0, %s125
      %s128 = sphi 0, %s127
      %s142 = sphi 0, %s128
      %s146 = sphi 0, %s146
      %s148 = sphi 0, %s146
      %s149 = sphi 0, %s148
      %s163 = sphi 0, %s149
      %s167 = sphi 0, %s167
      %s169 = sphi 0, %s167
      %s170 = sphi 0, %s169
      %s184 = sphi 0, %s170
      %s188 = sphi 0, %s188
      %s190 = sphi 0, %s188
      %s191 = sphi 0, %s190
      %s205 = sphi 0, %s191
      %s209 = sphi 0, %s209
      %s211 = sphi 0, %s209
      %s212 = sphi 0, %s211
      %s226 = sphi 0, %s212
      %s230 = sphi 0, %s230
      %s232 = sphi 0, %s230
      %s233 = sphi 0, %s232
      %s247 = sphi 0, %s233
      %s251 = sphi 0, %s251
      %s253 = sphi 0, %s251
      %s254 = sphi 0, %s253
      %s268 = sphi 0, %s254
      %s272 = sphi 0, %s272
      %s274 = sphi 0, %s272
      %s275 = sphi 0, %s274
      %s289 = sphi 0, %s275
      %s293 = sphi 0, %s293
      %s295 = sphi 0, %s293
      %s296 = sphi 0, %s295
      %s310 = sphi 0, %s296
      %s316 = sphi 0, %s318
      %s319 = sphi 0, %s316
      %s320 = sphi 0, %s319
      %s336 = sphi 0, %s320
    $region4: #{tpu_custom_call.1} parent=1 // loop_header_branch
      %31 = sbr.rel (%p29) target = $region8
    $region5: #{tpu_custom_call.1} parent=1 // loop_body
      %s33 = ssub.s32 %s28, 1
      %s34 = ssub.s32 %s28, 2
      %s35 = sadd.s32 %s28, 1
      %s36 = ssub.s32 %s28, %s35
      %p37 = scmp.eq.s32.totalorder %s36, 0
      %s39 = sadd.s32 %s38, 1
      %s40 = scalar_select %p37, %s38, %s39
      %p43 = pneg %p37
      %p44 = scmp.eq.s32.totalorder %s28, 1
      %p45 = por %p43, %p44
      %p46 = scmp.ne.s32.totalorder %s38, %s41
      %p47 = scmp.eq.s32.totalorder %s28, 0
      %p48 = por %p46, %p47
      %p49 = scmp.ne.s32.totalorder %s38, %s41
      %p50 = scmp.eq.s32.totalorder %s33, 1
      %p51 = por %p49, %p50
      %p52 = scmp.ne.s32.totalorder %s41, %s42
      %p53 = scmp.eq.s32.totalorder %s33, 0
      %p54 = por %p52, %p53
      %p55 = scmp.ne.s32.totalorder %s41, %s42
      %p56 = scmp.eq.s32.totalorder %s34, 1
      %p57 = por %p55, %p56
      %p59 = scmp.ne.s32.totalorder %s42, %s58
      %p60 = scmp.eq.s32.totalorder %s34, 0
      %p61 = por %p59, %p60
      %s63 = sadd.s32 %s62, 1
      %p66 = scmp.eq.s32.totalorder %s28, 1
      %p67 = scmp.ne.s32.totalorder %s62, %s64
      %p68 = scmp.eq.s32.totalorder %s28, 0
      %p69 = por %p67, %p68
      %p70 = scmp.ne.s32.totalorder %s62, %s64
      %p71 = scmp.eq.s32.totalorder %s33, 1
      %p72 = por %p70, %p71
      %p73 = scmp.ne.s32.totalorder %s64, %s65
      %p74 = scmp.eq.s32.totalorder %s33, 0
      %p75 = por %p73, %p74
      %p76 = scmp.ne.s32.totalorder %s64, %s65
      %p77 = scmp.eq.s32.totalorder %s34, 1
      %p78 = por %p76, %p77
      %p80 = scmp.ne.s32.totalorder %s65, %s79
      %p81 = scmp.eq.s32.totalorder %s34, 0
      %p82 = por %p80, %p81
      %s84 = sadd.s32 %s83, 1
      %p87 = scmp.eq.s32.totalorder %s28, 1
      %p88 = scmp.ne.s32.totalorder %s83, %s85
      %p89 = scmp.eq.s32.totalorder %s28, 0
      %p90 = por %p88, %p89
      %p91 = scmp.ne.s32.totalorder %s83, %s85
      %p92 = scmp.eq.s32.totalorder %s33, 1
      %p93 = por %p91, %p92
      %p94 = scmp.ne.s32.totalorder %s85, %s86
      %p95 = scmp.eq.s32.totalorder %s33, 0
      %p96 = por %p94, %p95
      %p97 = scmp.ne.s32.totalorder %s85, %s86
      %p98 = scmp.eq.s32.totalorder %s34, 1
      %p99 = por %p97, %p98
      %p101 = scmp.ne.s32.totalorder %s86, %s100
      %p102 = scmp.eq.s32.totalorder %s34, 0
      %p103 = por %p101, %p102
      %s105 = sadd.s32 %s104, 1
      %p108 = scmp.eq.s32.totalorder %s28, 1
      %p109 = scmp.ne.s32.totalorder %s104, %s106
      %p110 = scmp.eq.s32.totalorder %s28, 0
      %p111 = por %p109, %p110
      %p112 = scmp.ne.s32.totalorder %s104, %s106
      %p113 = scmp.eq.s32.totalorder %s33, 1
      %p114 = por %p112, %p113
      %p115 = scmp.ne.s32.totalorder %s106, %s107
      %p116 = scmp.eq.s32.totalorder %s33, 0
      %p117 = por %p115, %p116
      %p118 = scmp.ne.s32.totalorder %s106, %s107
      %p119 = scmp.eq.s32.totalorder %s34, 1
      %p120 = por %p118, %p119
      %p122 = scmp.ne.s32.totalorder %s107, %s121
      %p123 = scmp.eq.s32.totalorder %s34, 0
      %p124 = por %p122, %p123
      %s126 = sadd.s32 %s125, 1
      %p129 = scmp.eq.s32.totalorder %s28, 1
      %p130 = scmp.ne.s32.totalorder %s125, %s127
      %p131 = scmp.eq.s32.totalorder %s28, 0
      %p132 = por %p130, %p131
      %p133 = scmp.ne.s32.totalorder %s125, %s127
      %p134 = scmp.eq.s32.totalorder %s33, 1
      %p135 = por %p133, %p134
      %p136 = scmp.ne.s32.totalorder %s127, %s128
      %p137 = scmp.eq.s32.totalorder %s33, 0
      %p138 = por %p136, %p137
      %p139 = scmp.ne.s32.totalorder %s127, %s128
      %p140 = scmp.eq.s32.totalorder %s34, 1
      %p141 = por %p139, %p140
      %p143 = scmp.ne.s32.totalorder %s128, %s142
      %p144 = scmp.eq.s32.totalorder %s34, 0
      %p145 = por %p143, %p144
      %s147 = sadd.s32 %s146, 1
      %p150 = scmp.eq.s32.totalorder %s28, 1
      %p151 = scmp.ne.s32.totalorder %s146, %s148
      %p152 = scmp.eq.s32.totalorder %s28, 0
      %p153 = por %p151, %p152
      %p154 = scmp.ne.s32.totalorder %s146, %s148
      %p155 = scmp.eq.s32.totalorder %s33, 1
      %p156 = por %p154, %p155
      %p157 = scmp.ne.s32.totalorder %s148, %s149
      %p158 = scmp.eq.s32.totalorder %s33, 0
      %p159 = por %p157, %p158
      %p160 = scmp.ne.s32.totalorder %s148, %s149
      %p161 = scmp.eq.s32.totalorder %s34, 1
      %p162 = por %p160, %p161
      %p164 = scmp.ne.s32.totalorder %s149, %s163
      %p165 = scmp.eq.s32.totalorder %s34, 0
      %p166 = por %p164, %p165
      %s168 = sadd.s32 %s167, 1
      %p171 = scmp.eq.s32.totalorder %s28, 1
      %p172 = scmp.ne.s32.totalorder %s167, %s169
      %p173 = scmp.eq.s32.totalorder %s28, 0
      %p174 = por %p172, %p173
      %p175 = scmp.ne.s32.totalorder %s167, %s169
      %p176 = scmp.eq.s32.totalorder %s33, 1
      %p177 = por %p175, %p176
      %p178 = scmp.ne.s32.totalorder %s169, %s170
      %p179 = scmp.eq.s32.totalorder %s33, 0
      %p180 = por %p178, %p179
      %p181 = scmp.ne.s32.totalorder %s169, %s170
      %p182 = scmp.eq.s32.totalorder %s34, 1
      %p183 = por %p181, %p182
      %p185 = scmp.ne.s32.totalorder %s170, %s184
      %p186 = scmp.eq.s32.totalorder %s34, 0
      %p187 = por %p185, %p186
      %s189 = sadd.s32 %s188, 1
      %p192 = scmp.eq.s32.totalorder %s28, 1
      %p193 = scmp.ne.s32.totalorder %s188, %s190
      %p194 = scmp.eq.s32.totalorder %s28, 0
      %p195 = por %p193, %p194
      %p196 = scmp.ne.s32.totalorder %s188, %s190
      %p197 = scmp.eq.s32.totalorder %s33, 1
      %p198 = por %p196, %p197
      %p199 = scmp.ne.s32.totalorder %s190, %s191
      %p200 = scmp.eq.s32.totalorder %s33, 0
      %p201 = por %p199, %p200
      %p202 = scmp.ne.s32.totalorder %s190, %s191
      %p203 = scmp.eq.s32.totalorder %s34, 1
      %p204 = por %p202, %p203
      %p206 = scmp.ne.s32.totalorder %s191, %s205
      %p207 = scmp.eq.s32.totalorder %s34, 0
      %p208 = por %p206, %p207
      %s210 = sadd.s32 %s209, 1
      %p213 = scmp.eq.s32.totalorder %s28, 1
      %p214 = scmp.ne.s32.totalorder %s209, %s211
      %p215 = scmp.eq.s32.totalorder %s28, 0
      %p216 = por %p214, %p215
      %p217 = scmp.ne.s32.totalorder %s209, %s211
      %p218 = scmp.eq.s32.totalorder %s33, 1
      %p219 = por %p217, %p218
      %p220 = scmp.ne.s32.totalorder %s211, %s212
      %p221 = scmp.eq.s32.totalorder %s33, 0
      %p222 = por %p220, %p221
      %p223 = scmp.ne.s32.totalorder %s211, %s212
      %p224 = scmp.eq.s32.totalorder %s34, 1
      %p225 = por %p223, %p224
      %p227 = scmp.ne.s32.totalorder %s212, %s226
      %p228 = scmp.eq.s32.totalorder %s34, 0
      %p229 = por %p227, %p228
      %s231 = sadd.s32 %s230, 1
      %p234 = scmp.eq.s32.totalorder %s28, 1
      %p235 = scmp.ne.s32.totalorder %s230, %s232
      %p236 = scmp.eq.s32.totalorder %s28, 0
      %p237 = por %p235, %p236
      %p238 = scmp.ne.s32.totalorder %s230, %s232
      %p239 = scmp.eq.s32.totalorder %s33, 1
      %p240 = por %p238, %p239
      %p241 = scmp.ne.s32.totalorder %s232, %s233
      %p242 = scmp.eq.s32.totalorder %s33, 0
      %p243 = por %p241, %p242
      %p244 = scmp.ne.s32.totalorder %s232, %s233
      %p245 = scmp.eq.s32.totalorder %s34, 1
      %p246 = por %p244, %p245
      %p248 = scmp.ne.s32.totalorder %s233, %s247
      %p249 = scmp.eq.s32.totalorder %s34, 0
      %p250 = por %p248, %p249
      %s252 = sadd.s32 %s251, 1
      %p255 = scmp.eq.s32.totalorder %s28, 1
      %p256 = scmp.ne.s32.totalorder %s251, %s253
      %p257 = scmp.eq.s32.totalorder %s28, 0
      %p258 = por %p256, %p257
      %p259 = scmp.ne.s32.totalorder %s251, %s253
      %p260 = scmp.eq.s32.totalorder %s33, 1
      %p261 = por %p259, %p260
      %p262 = scmp.ne.s32.totalorder %s253, %s254
      %p263 = scmp.eq.s32.totalorder %s33, 0
      %p264 = por %p262, %p263
      %p265 = scmp.ne.s32.totalorder %s253, %s254
      %p266 = scmp.eq.s32.totalorder %s34, 1
      %p267 = por %p265, %p266
      %p269 = scmp.ne.s32.totalorder %s254, %s268
      %p270 = scmp.eq.s32.totalorder %s34, 0
      %p271 = por %p269, %p270
      %s273 = sadd.s32 %s272, 1
      %p276 = scmp.eq.s32.totalorder %s28, 1
      %p277 = scmp.ne.s32.totalorder %s272, %s274
      %p278 = scmp.eq.s32.totalorder %s28, 0
      %p279 = por %p277, %p278
      %p280 = scmp.ne.s32.totalorder %s272, %s274
      %p281 = scmp.eq.s32.totalorder %s33, 1
      %p282 = por %p280, %p281
      %p283 = scmp.ne.s32.totalorder %s274, %s275
      %p284 = scmp.eq.s32.totalorder %s33, 0
      %p285 = por %p283, %p284
      %p286 = scmp.ne.s32.totalorder %s274, %s275
      %p287 = scmp.eq.s32.totalorder %s34, 1
      %p288 = por %p286, %p287
      %p290 = scmp.ne.s32.totalorder %s275, %s289
      %p291 = scmp.eq.s32.totalorder %s34, 0
      %p292 = por %p290, %p291
      %s294 = sadd.s32 %s293, 1
      %p297 = scmp.eq.s32.totalorder %s28, 1
      %p298 = scmp.ne.s32.totalorder %s293, %s295
      %p299 = scmp.eq.s32.totalorder %s28, 0
      %p300 = por %p298, %p299
      %p301 = scmp.ne.s32.totalorder %s293, %s295
      %p302 = scmp.eq.s32.totalorder %s33, 1
      %p303 = por %p301, %p302
      %p304 = scmp.ne.s32.totalorder %s295, %s296
      %p305 = scmp.eq.s32.totalorder %s33, 0
      %p306 = por %p304, %p305
      %p307 = scmp.ne.s32.totalorder %s295, %s296
      %p308 = scmp.eq.s32.totalorder %s34, 1
      %p309 = por %p307, %p308
      %p311 = scmp.ne.s32.totalorder %s296, %s310
      %p312 = scmp.eq.s32.totalorder %s34, 0
      %p313 = por %p311, %p312
      %s314 = ssub.s32 %s28, %s35
      %p315 = scmp.eq.s32.totalorder %s314, 0
      %s317 = sadd.s32 %s316, 1
      %s318 = scalar_select %p315, %s316, %s317
      %p321 = pneg %p315
      %p322 = scmp.eq.s32.totalorder %s28, 1
      %p323 = por %p321, %p322
      %p324 = scmp.ne.s32.totalorder %s316, %s319
      %p325 = scmp.eq.s32.totalorder %s28, 0
      %p326 = por %p324, %p325
      %p327 = scmp.ne.s32.totalorder %s316, %s319
      %p328 = scmp.eq.s32.totalorder %s33, 1
      %p329 = por %p327, %p328
      %p330 = scmp.ne.s32.totalorder %s319, %s320
      %p331 = scmp.eq.s32.totalorder %s33, 0
      %p332 = por %p330, %p331
      %p333 = scmp.ne.s32.totalorder %s319, %s320
      %p334 = scmp.eq.s32.totalorder %s34, 1
      %p335 = por %p333, %p334
      %p337 = scmp.ne.s32.totalorder %s320, %s336
      %p338 = scmp.eq.s32.totalorder %s34, 0
      %p339 = por %p337, %p338
      %p340 = scmp.le.s32.totalorder 1, %s28
      %p341 = scmp.lt.s32.totalorder %s28, 3
      %p342 = pnand %p340, %p341
      %p343 = pneg %p342
      // Predicated region
      $region9: #{tpu_custom_call.1} parent=5 // pred_check
        _
      $region10: #{tpu_custom_call.1} parent=5 // pred_check_branch
        %345 = sbr.rel (%p342) target = $region12
      $region11: #{tpu_custom_call.1} parent=5 // pred_region
        %s346 = ssub.s32 %s28, 1
        // Predicated region
        $region13: #{tpu_custom_call.1} parent=11 // pred_check
          %p347 = pneg %p75
        $region14: #{tpu_custom_call.1} parent=11 // pred_check_branch
          %349 = sbr.rel (%p347) target = $region16
        $region15: #{tpu_custom_call.1} parent=11 // pred_region
          %s351 = ssub.s32 16, 16
          %352 = vsyncadd [#allocation6], %s351
          %s354 = sshll.u32 [#allocation5], 4
          %s355 = int_to_ptr.vmem [resolvable:$true] %s354
          %357 = dma.hbm_to_vmem [thread:$0]  %s1, 16, %s355, [#allocation6]
        $region16: #{tpu_custom_call.1} parent=11 // pred_fallthru
          _
        // Predicated region
        $region17: #{tpu_custom_call.1} parent=11 // pred_check
          %p358 = pneg %p96
        $region18: #{tpu_custom_call.1} parent=11 // pred_check_branch
          %360 = sbr.rel (%p358) target = $region20
        $region19: #{tpu_custom_call.1} parent=11 // pred_region
          %s362 = ssub.s32 16, 16
          %363 = vsyncadd [#allocation6], %s362
          %s365 = sshll.u32 [#allocation7], 4
          %s366 = int_to_ptr.vmem [resolvable:$true] %s365
          %368 = dma.hbm_to_vmem [thread:$0]  %s2, 16, %s366, [#allocation6]
        $region20: #{tpu_custom_call.1} parent=11 // pred_fallthru
          _
        // Predicated region
        $region21: #{tpu_custom_call.1} parent=11 // pred_check
          %p369 = pneg %p117
        $region22: #{tpu_custom_call.1} parent=11 // pred_check_branch
          %371 = sbr.rel (%p369) target = $region24
        $region23: #{tpu_custom_call.1} parent=11 // pred_region
          %s373 = ssub.s32 3072, 3072
          %374 = vsyncadd [#allocation9], %s373
          %s375 = sshll.u32 [#allocation8], 4
          %s376 = int_to_ptr.vmem [resolvable:$true] %s375
          %381 = dma.hbm_to_vmem [thread:$0]  %s3, 3072, %s376, [#allocation9], 192, 192, 12
        $region24: #{tpu_custom_call.1} parent=11 // pred_fallthru
          _
        // Predicated region
        $region25: #{tpu_custom_call.1} parent=11 // pred_check
          %p382 = pneg %p138
        $region26: #{tpu_custom_call.1} parent=11 // pred_check_branch
          %384 = sbr.rel (%p382) target = $region28
        $region27: #{tpu_custom_call.1} parent=11 // pred_region
          _
        $region28: #{tpu_custom_call.1} parent=11 // pred_fallthru
          _
        // Predicated region
        $region29: #{tpu_custom_call.1} parent=11 // pred_check
          %p385 = pneg %p159
        $region30: #{tpu_custom_call.1} parent=11 // pred_check_branch
          %387 = sbr.rel (%p385) target = $region32
        $region31: #{tpu_custom_call.1} parent=11 // pred_region
          %s389 = ssub.s32 1024, 1024
          %390 = vsyncadd [#allocation9], %s389
          %s391 = sshll.u32 [#allocation10], 4
          %s392 = int_to_ptr.vmem [resolvable:$true] %s391
          %397 = dma.hbm_to_vmem [thread:$0]  %s5, 1024, %s392, [#allocation9], 64, 64, 4
        $region32: #{tpu_custom_call.1} parent=11 // pred_fallthru
          _
        // Predicated region
        $region33: #{tpu_custom_call.1} parent=11 // pred_check
          %p398 = pneg %p180
        $region34: #{tpu_custom_call.1} parent=11 // pred_check_branch
          %400 = sbr.rel (%p398) target = $region36
        $region35: #{tpu_custom_call.1} parent=11 // pred_region
          _
        $region36: #{tpu_custom_call.1} parent=11 // pred_fallthru
          _
        // Predicated region
        $region37: #{tpu_custom_call.1} parent=11 // pred_check
          %p401 = pneg %p201
        $region38: #{tpu_custom_call.1} parent=11 // pred_check_branch
          %403 = sbr.rel (%p401) target = $region40
        $region39: #{tpu_custom_call.1} parent=11 // pred_region
          _
        $region40: #{tpu_custom_call.1} parent=11 // pred_fallthru
          _
        // Predicated region
        $region41: #{tpu_custom_call.1} parent=11 // pred_check
          %p404 = pneg %p222
        $region42: #{tpu_custom_call.1} parent=11 // pred_check_branch
          %406 = sbr.rel (%p404) target = $region44
        $region43: #{tpu_custom_call.1} parent=11 // pred_region
          _
        $region44: #{tpu_custom_call.1} parent=11 // pred_fallthru
          _
        // Predicated region
        $region45: #{tpu_custom_call.1} parent=11 // pred_check
          %p407 = pneg %p243
        $region46: #{tpu_custom_call.1} parent=11 // pred_check_branch
          %409 = sbr.rel (%p407) target = $region48
        $region47: #{tpu_custom_call.1} parent=11 // pred_region
          %s411 = ssub.s32 4096, 4096
          %412 = vsyncadd [#allocation12], %s411
          %s413 = sshll.u32 [#allocation11], 4
          %s414 = int_to_ptr.vmem [resolvable:$true] %s413
          %419 = dma.hbm_to_vmem [thread:$0]  %s9, 4096, %s414, [#allocation12], 256, 256, 16
        $region48: #{tpu_custom_call.1} parent=11 // pred_fallthru
          _
        // Predicated region
        $region49: #{tpu_custom_call.1} parent=11 // pred_check
          %p420 = pneg %p264
        $region50: #{tpu_custom_call.1} parent=11 // pred_check_branch
          %422 = sbr.rel (%p420) target = $region52
        $region51: #{tpu_custom_call.1} parent=11 // pred_region
          _
        $region52: #{tpu_custom_call.1} parent=11 // pred_fallthru
          _
        // Predicated region
        $region53: #{tpu_custom_call.1} parent=11 // pred_check
          %p423 = pneg %p285
        $region54: #{tpu_custom_call.1} parent=11 // pred_check_branch
          %425 = sbr.rel (%p423) target = $region56
        $region55: #{tpu_custom_call.1} parent=11 // pred_region
          %s427 = ssub.s32 4096, 4096
          %428 = vsyncadd [#allocation12], %s427
          %s429 = sshll.u32 [#allocation13], 4
          %s430 = int_to_ptr.vmem [resolvable:$true] %s429
          %435 = dma.hbm_to_vmem [thread:$0]  %s11, 4096, %s430, [#allocation12], 64, 64, 4
        $region56: #{tpu_custom_call.1} parent=11 // pred_fallthru
          _
        // Predicated region
        $region57: #{tpu_custom_call.1} parent=11 // pred_check
          %p436 = pneg %p306
        $region58: #{tpu_custom_call.1} parent=11 // pred_check_branch
          %438 = sbr.rel (%p436) target = $region60
        $region59: #{tpu_custom_call.1} parent=11 // pred_region
          _
        $region60: #{tpu_custom_call.1} parent=11 // pred_fallthru
          _
      $region12: #{tpu_custom_call.1} parent=5 // pred_fallthru
        _
      %p439 = scmp.lt.s32.totalorder %s28, 2
      // Predicated region
      $region61: #{tpu_custom_call.1} parent=5 // pred_check
        %p440 = pneg %p439
      $region62: #{tpu_custom_call.1} parent=5 // pred_check_branch
        %442 = sbr.rel (%p440) target = $region64
      $region63: #{tpu_custom_call.1} parent=5 // pred_region
        // Predicated region
        $region65: #{tpu_custom_call.1} parent=63 // pred_check
          %p443 = pneg %p48
        $region66: #{tpu_custom_call.1} parent=63 // pred_check_branch
          %445 = sbr.rel (%p443) target = $region68
        $region67: #{tpu_custom_call.1} parent=63 // pred_region
          %s446 = sand.u32 %s38, 1
          %s447 = scalar_lea.sflag [#allocation3], %s446
          %s448 = sand.u32 %s38, 1
          %s449 = smul.addr %s448, 64
          %s450 = scalar_lea.vmem [#allocation2], %s449
          %s451 = smul.u32 4, %s28
          %s453 = ssub.s32 1024, 1024
          %454 = vsyncadd %s447, %s453
          %s455 = smul.addr %s451, 2
          %s456 = smul.addr %s455, 128
          %s457 = scalar_lea.hbm %s0, %s456
          %s458 = sshll.u32 %s450, 4
          %s459 = int_to_ptr.vmem [resolvable:$true] %s458
          %464 = dma.hbm_to_vmem [thread:$0]  %s457, 1024, %s459, %s447, 128, 128, 8
        $region68: #{tpu_custom_call.1} parent=63 // pred_fallthru
          _
      $region64: #{tpu_custom_call.1} parent=5 // pred_fallthru
        _
      %p465 = scmp.le.s32.totalorder 1, %s28
      %p466 = scmp.lt.s32.totalorder %s28, 3
      %p467 = pnand %p465, %p466
      %p468 = pneg %p467
      // Predicated region
      $region69: #{tpu_custom_call.1} parent=5 // pred_check
        _
      $region70: #{tpu_custom_call.1} parent=5 // pred_check_branch
        %470 = sbr.rel (%p467) target = $region72
      $region71: #{tpu_custom_call.1} parent=5 // pred_region
        %s471 = ssub.s32 %s28, 1
        %s472 = sand.u32 %s41, 1
        %s473 = scalar_lea.sflag [#allocation3], %s472
        %s474 = sand.u32 %s41, 1
        %s475 = smul.addr %s474, 64
        %s476 = scalar_lea.vmem [#allocation2], %s475
        // Predicated region
        $region73: #{tpu_custom_call.1} parent=71 // pred_check
          %p477 = pneg %p54
        $region74: #{tpu_custom_call.1} parent=71 // pred_check_branch
          %479 = sbr.rel (%p477) target = $region76
        $region75: #{tpu_custom_call.1} parent=71 // pred_region
          %480 = dma.done %s473, 1024
        $region76: #{tpu_custom_call.1} parent=71 // pred_fallthru
          _
        // Predicated region
        $region77: #{tpu_custom_call.1} parent=71 // pred_check
          %p481 = pneg %p75
        $region78: #{tpu_custom_call.1} parent=71 // pred_check_branch
          %483 = sbr.rel (%p481) target = $region80
        $region79: #{tpu_custom_call.1} parent=71 // pred_region
          %484 = dma.done [#allocation6], 16
        $region80: #{tpu_custom_call.1} parent=71 // pred_fallthru
          _
        // Predicated region
        $region81: #{tpu_custom_call.1} parent=71 // pred_check
          %p485 = pneg %p96
        $region82: #{tpu_custom_call.1} parent=71 // pred_check_branch
          %487 = sbr.rel (%p485) target = $region84
        $region83: #{tpu_custom_call.1} parent=71 // pred_region
          %488 = dma.done [#allocation6], 16
        $region84: #{tpu_custom_call.1} parent=71 // pred_fallthru
          _
        // Predicated region
        $region85: #{tpu_custom_call.1} parent=71 // pred_check
          %p489 = pneg %p117
        $region86: #{tpu_custom_call.1} parent=71 // pred_check_branch
          %491 = sbr.rel (%p489) target = $region88
        $region87: #{tpu_custom_call.1} parent=71 // pred_region
          %492 = dma.done [#allocation9], 3072
        $region88: #{tpu_custom_call.1} parent=71 // pred_fallthru
          _
        // Predicated region
        $region89: #{tpu_custom_call.1} parent=71 // pred_check
          %p493 = pneg %p159
        $region90: #{tpu_custom_call.1} parent=71 // pred_check_branch
          %495 = sbr.rel (%p493) target = $region92
        $region91: #{tpu_custom_call.1} parent=71 // pred_region
          %496 = dma.done [#allocation9], 1024
        $region92: #{tpu_custom_call.1} parent=71 // pred_fallthru
          _
        // Predicated region
        $region93: #{tpu_custom_call.1} parent=71 // pred_check
          %p497 = pneg %p243
        $region94: #{tpu_custom_call.1} parent=71 // pred_check_branch
          %499 = sbr.rel (%p497) target = $region96
        $region95: #{tpu_custom_call.1} parent=71 // pred_region
          %500 = dma.done [#allocation12], 4096
        $region96: #{tpu_custom_call.1} parent=71 // pred_fallthru
          _
        // Predicated region
        $region97: #{tpu_custom_call.1} parent=71 // pred_check
          %p501 = pneg %p285
        $region98: #{tpu_custom_call.1} parent=71 // pred_check_branch
          %503 = sbr.rel (%p501) target = $region100
        $region99: #{tpu_custom_call.1} parent=71 // pred_region
          %504 = dma.done [#allocation12], 4096
        $region100: #{tpu_custom_call.1} parent=71 // pred_fallthru
          _
        %s505 = sand.u32 %s41, 1
        %s506 = scalar_lea.sflag [#allocation3], %s505
        %s507 = sand.u32 %s41, 1
        %s508 = smul.addr %s507, 64
        %s509 = scalar_lea.vmem [#allocation2], %s508
        %p510 = pneg %p54
        %p511 = pneg %p51
        %p512 = pneg %p75
        %p513 = pneg %p72
        %p514 = pneg %p96
        %p515 = pneg %p93
        %p516 = pneg %p117
        %p517 = pneg %p114
        %p518 = pneg %p138
        %p519 = pneg %p135
        %p520 = pneg %p159
        %p521 = pneg %p156
        %p522 = pneg %p180
        %p523 = pneg %p177
        %p524 = pneg %p201
        %p525 = pneg %p198
        %p526 = pneg %p222
        %p527 = pneg %p219
        %p528 = pneg %p243
        %p529 = pneg %p240
        %p530 = pneg %p264
        %p531 = pneg %p261
        %p532 = pneg %p285
        %p533 = pneg %p282
        %p534 = pneg %p306
        %p535 = pneg %p303
        %p536 = pneg %p332
        %p537 = pneg %p329
        %s538 = sand.u32 %s319, 1
        %s539 = scalar_lea.sflag [#allocation4], %s538
        %s540 = sand.u32 %s319, 1
        %s541 = smul.addr %s540, 64
        %s542 = scalar_lea.vmem [#allocation14], %s541
        %s543 = smul.u32 4, %s33
        %s544 = smul.u32 4, %s33
        %v546 = vld [vmem:[%s476] sm:$0xff]
        %v547 = vld [vmem:[%s476 + $0x8] sm:$0xff]
        %v548 = vld [vmem:[%s476 + $0x10] sm:$0xff]
        %v549 = vld [vmem:[%s476 + $0x18] sm:$0xff]
        %v550 = vld [vmem:[%s476 + $0x20] sm:$0xff]
        %v551 = vld [vmem:[%s476 + $0x28] sm:$0xff]
        %v552 = vld [vmem:[%s476 + $0x30] sm:$0xff]
        %v553 = vld [vmem:[%s476 + $0x38] sm:$0xff]
        %v554 = vld [vmem:[#allocation5] sm:$0x1]
        %v555 = vld [vmem:[#allocation7] sm:$0x1]
        %556 = vadd.xlane.f32.xlu0 %v546
        %v557 = vpop.xlane.xlu0 %556
        %558 = vadd.xlane.f32.xlu0 %v547
        %v559 = vpop.xlane.xlu0 %558
        %560 = vadd.xlane.f32.xlu0 %v548
        %v561 = vpop.xlane.xlu0 %560
        %562 = vadd.xlane.f32.xlu0 %v549
        %v563 = vpop.xlane.xlu0 %562
        %564 = vadd.xlane.f32.xlu0 %v550
        %v565 = vpop.xlane.xlu0 %564
        %566 = vadd.xlane.f32.xlu0 %v551
        %v567 = vpop.xlane.xlu0 %566
        %568 = vadd.xlane.f32.xlu0 %v552
        %v569 = vpop.xlane.xlu0 %568
        %570 = vadd.xlane.f32.xlu0 %v553
        %v571 = vpop.xlane.xlu0 %570
        %v572 = vrcp.pop 128.0
        %v573 = vmul.f32 %v557, %v572
        %v574 = vmul.f32 %v559, %v572
        %v575 = vmul.f32 %v561, %v572
        %v576 = vmul.f32 %v563, %v572
        %v577 = vmul.f32 %v565, %v572
        %v578 = vmul.f32 %v567, %v572
        %v579 = vmul.f32 %v569, %v572
        %v580 = vmul.f32 %v571, %v572
        %v581 = vsub.f32 %v546, %v573
        %v582 = vsub.f32 %v547, %v574
        %v583 = vsub.f32 %v548, %v575
        %v584 = vsub.f32 %v549, %v576
        %v585 = vsub.f32 %v550, %v577
        %v586 = vsub.f32 %v551, %v578
        %v587 = vsub.f32 %v552, %v579
        %v588 = vsub.f32 %v553, %v580
        %v589 = vmul.f32 %v581, %v581
        %v590 = vmul.f32 %v582, %v582
        %v591 = vmul.f32 %v583, %v583
        %v592 = vmul.f32 %v584, %v584
        %v593 = vmul.f32 %v585, %v585
        %v594 = vmul.f32 %v586, %v586
        %v595 = vmul.f32 %v587, %v587
        %v596 = vmul.f32 %v588, %v588
        %597 = vadd.xlane.f32.xlu0 %v589
        %v598 = vpop.xlane.xlu0 %597
        %599 = vadd.xlane.f32.xlu0 %v590
        %v600 = vpop.xlane.xlu0 %599
        %601 = vadd.xlane.f32.xlu0 %v591
        %v602 = vpop.xlane.xlu0 %601
        %603 = vadd.xlane.f32.xlu0 %v592
        %v604 = vpop.xlane.xlu0 %603
        %605 = vadd.xlane.f32.xlu0 %v593
        %v606 = vpop.xlane.xlu0 %605
        %607 = vadd.xlane.f32.xlu0 %v594
        %v608 = vpop.xlane.xlu0 %607
        %609 = vadd.xlane.f32.xlu0 %v595
        %v610 = vpop.xlane.xlu0 %609
        %611 = vadd.xlane.f32.xlu0 %v596
        %v612 = vpop.xlane.xlu0 %611
        %v613 = vmul.f32 %v598, %v572
        %v614 = vmul.f32 %v600, %v572
        %v615 = vmul.f32 %v602, %v572
        %v616 = vmul.f32 %v604, %v572
        %v617 = vmul.f32 %v606, %v572
        %v618 = vmul.f32 %v608, %v572
        %v619 = vmul.f32 %v610, %v572
        %v620 = vmul.f32 %v612, %v572
        %v621 = vadd.f32 %v613, 1e-05
        %v622 = vadd.f32 %v614, 1e-05
        %v623 = vadd.f32 %v615, 1e-05
        %v624 = vadd.f32 %v616, 1e-05
        %v625 = vadd.f32 %v617, 1e-05
        %v626 = vadd.f32 %v618, 1e-05
        %v627 = vadd.f32 %v619, 1e-05
        %v628 = vadd.f32 %v620, 1e-05
        %v629 = vrsqrt.pop %v621
        %v630 = vrsqrt.pop %v622
        %v631 = vrsqrt.pop %v623
        %v632 = vrsqrt.pop %v624
        %v633 = vrsqrt.pop %v625
        %v634 = vrsqrt.pop %v626
        %v635 = vrsqrt.pop %v627
        %v636 = vrsqrt.pop %v628
        %v637 = vmul.f32 %v581, %v629
        %v638 = vmul.f32 %v582, %v630
        %v639 = vmul.f32 %v583, %v631
        %v640 = vmul.f32 %v584, %v632
        %v641 = vmul.f32 %v585, %v633
        %v642 = vmul.f32 %v586, %v634
        %v643 = vmul.f32 %v587, %v635
        %v644 = vmul.f32 %v588, %v636
        %v646 = vlaneseq
        %v647 = vshrl.u32 %v646, 7
        %v648 = vsub.s32 0, %v647
        %v649 = vrot.slane %v554, %v648
        %v651 = vmul.f32 %v637, %v649
        %v652 = vmul.f32 %v638, %v649
        %v653 = vmul.f32 %v639, %v649
        %v654 = vmul.f32 %v640, %v649
        %v655 = vmul.f32 %v641, %v649
        %v656 = vmul.f32 %v642, %v649
        %v657 = vmul.f32 %v643, %v649
        %v658 = vmul.f32 %v644, %v649
        %v660 = vlaneseq
        %v661 = vshrl.u32 %v660, 7
        %v662 = vsub.s32 0, %v661
        %v663 = vrot.slane %v555, %v662
        %v665 = vadd.f32 %v651, %v663
        %v666 = vadd.f32 %v652, %v663
        %v667 = vadd.f32 %v653, %v663
        %v668 = vadd.f32 %v654, %v663
        %v669 = vadd.f32 %v655, %v663
        %v670 = vadd.f32 %v656, %v663
        %v671 = vadd.f32 %v657, %v663
        %v672 = vadd.f32 %v658, %v663
        %v673 = vpack.c.bf16 %v666, %v665
        %v674 = vpack.c.bf16 %v668, %v667
        %v675 = vpack.c.bf16 %v670, %v669
        %v676 = vpack.c.bf16 %v672, %v671
        %v677 = vld [vmem:[#allocation8] sm:$0xff]
        %v678 = vld [vmem:[#allocation8 + $0x8] sm:$0xf]
        %v679 = vld [vmem:[#allocation8 + $0xc] sm:$0xff]
        %v680 = vld [vmem:[#allocation8 + $0x14] sm:$0xf]
        %v681 = vld [vmem:[#allocation8 + $0x18] sm:$0xff]
        %v682 = vld [vmem:[#allocation8 + $0x20] sm:$0xf]
        %v683 = vld [vmem:[#allocation8 + $0x24] sm:$0xff]
        %v684 = vld [vmem:[#allocation8 + $0x2c] sm:$0xf]
        %v685 = vld [vmem:[#allocation8 + $0x30] sm:$0xff]
        %v686 = vld [vmem:[#allocation8 + $0x38] sm:$0xf]
        %v687 = vld [vmem:[#allocation8 + $0x3c] sm:$0xff]
        %v688 = vld [vmem:[#allocation8 + $0x44] sm:$0xf]
        %v689 = vld [vmem:[#allocation8 + $0x48] sm:$0xff]
        %v690 = vld [vmem:[#allocation8 + $0x50] sm:$0xf]
        %v691 = vld [vmem:[#allocation8 + $0x54] sm:$0xff]
        %v692 = vld [vmem:[#allocation8 + $0x5c] sm:$0xf]
        %v693 = vld [vmem:[#allocation8 + $0x60] sm:$0xff]
        %v694 = vld [vmem:[#allocation8 + $0x68] sm:$0xf]
        %v695 = vld [vmem:[#allocation8 + $0x6c] sm:$0xff]
        %v696 = vld [vmem:[#allocation8 + $0x74] sm:$0xf]
        %v697 = vld [vmem:[#allocation8 + $0x78] sm:$0xff]
        %v698 = vld [vmem:[#allocation8 + $0x80] sm:$0xf]
        %v699 = vld [vmem:[#allocation8 + $0x84] sm:$0xff]
        %v700 = vld [vmem:[#allocation8 + $0x8c] sm:$0xf]
        %v701 = vld [vmem:[#allocation8 + $0x90] sm:$0xff]
        %v702 = vld [vmem:[#allocation8 + $0x98] sm:$0xf]
        %v703 = vld [vmem:[#allocation8 + $0x9c] sm:$0xff]
        %v704 = vld [vmem:[#allocation8 + $0xa4] sm:$0xf]
        %v705 = vld [vmem:[#allocation8 + $0xa8] sm:$0xff]
        %v706 = vld [vmem:[#allocation8 + $0xb0] sm:$0xf]
        %v707 = vld [vmem:[#allocation8 + $0xb4] sm:$0xff]
        %v708 = vld [vmem:[#allocation8 + $0xbc] sm:$0xf]
        %v709 = vld [vmem:[%s4] sm:$0x7]
        %v711 = vlaneseq
        %v712 = vshrl.u32 %v711, 7
        %v713 = vsub.s32 0, %v712
        %v714 = vrot.slane %v709, %v713
        %v715 = vlaneseq
        %v716 = vshrl.u32 %v715, 7
        %v717 = vsub.s32 1, %v716
        %v718 = vrot.slane %v709, %v717
        %v719 = vlaneseq
        %v720 = vshrl.u32 %v719, 7
        %v721 = vsub.s32 2, %v720
        %v722 = vrot.slane %v709, %v721
        %v758 = vunpack.c.l.b16 %v677
        %v759 = vunpack.c.h.b16 %v677
        %v760 = vunpack.c.l.b16 %v678
        %v761 = vunpack.c.l.b16 %v679
        %v762 = vunpack.c.h.b16 %v679
        %v763 = vunpack.c.l.b16 %v680
        %v764 = vunpack.c.l.b16 %v681
        %v765 = vunpack.c.h.b16 %v681
        %v766 = vunpack.c.l.b16 %v682
        %v767 = vunpack.c.l.b16 %v683
        %v768 = vunpack.c.h.b16 %v683
        %v769 = vunpack.c.l.b16 %v684
        %v770 = vunpack.c.l.b16 %v685
        %v771 = vunpack.c.h.b16 %v685
        %v772 = vunpack.c.l.b16 %v686
        %v773 = vunpack.c.l.b16 %v687
        %v774 = vunpack.c.h.b16 %v687
        %v775 = vunpack.c.l.b16 %v688
        %v776 = vunpack.c.l.b16 %v689
        %v777 = vunpack.c.h.b16 %v689
        %v778 = vunpack.c.l.b16 %v690
        %v779 = vunpack.c.l.b16 %v691
        %v780 = vunpack.c.h.b16 %v691
        %v781 = vunpack.c.l.b16 %v692
        %v782 = vunpack.c.l.b16 %v693
        %v783 = vunpack.c.h.b16 %v693
        %v784 = vunpack.c.l.b16 %v694
        %v785 = vunpack.c.l.b16 %v695
        %v786 = vunpack.c.h.b16 %v695
        %v787 = vunpack.c.l.b16 %v696
        %v788 = vunpack.c.l.b16 %v697
        %v789 = vunpack.c.h.b16 %v697
        %v790 = vunpack.c.l.b16 %v698
        %v791 = vunpack.c.l.b16 %v699
        %v792 = vunpack.c.h.b16 %v699
        %v793 = vunpack.c.l.b16 %v700
        %v794 = vunpack.c.l.b16 %v701
        %v795 = vunpack.c.h.b16 %v701
        %v796 = vunpack.c.l.b16 %v702
        %v797 = vunpack.c.l.b16 %v703
        %v798 = vunpack.c.h.b16 %v703
        %v799 = vunpack.c.l.b16 %v704
        %v800 = vunpack.c.l.b16 %v705
        %v801 = vunpack.c.h.b16 %v705
        %v802 = vunpack.c.l.b16 %v706
        %v803 = vunpack.c.l.b16 %v707
        %v804 = vunpack.c.h.b16 %v707
        %v805 = vunpack.c.l.b16 %v708
        %v806 = vpack.c.b16 %v761, %v758
        %v807 = vpack.c.b16 %v762, %v759
        %v808 = vpack.c.b16 %v763, %v760
        %v809 = vpack.c.b16 %v767, %v764
        %v810 = vpack.c.b16 %v768, %v765
        %v811 = vpack.c.b16 %v769, %v766
        %v812 = vpack.c.b16 %v773, %v770
        %v813 = vpack.c.b16 %v774, %v771
        %v814 = vpack.c.b16 %v775, %v772
        %v815 = vpack.c.b16 %v779, %v776
        %v816 = vpack.c.b16 %v780, %v777
        %v817 = vpack.c.b16 %v781, %v778
        %v818 = vpack.c.b16 %v785, %v782
        %v819 = vpack.c.b16 %v786, %v783
        %v820 = vpack.c.b16 %v787, %v784
        %v821 = vpack.c.b16 %v791, %v788
        %v822 = vpack.c.b16 %v792, %v789
        %v823 = vpack.c.b16 %v793, %v790
        %v824 = vpack.c.b16 %v797, %v794
        %v825 = vpack.c.b16 %v798, %v795
        %v826 = vpack.c.b16 %v799, %v796
        %v827 = vpack.c.b16 %v803, %v800
        %v828 = vpack.c.b16 %v804, %v801
        %v829 = vpack.c.b16 %v805, %v802
        %854 = vmatprep.subr.bf16.mxu0 %v807
        %855 = vmatpush1.bf16.msra.mxu0 %v806
        %856 = vmatprep.subr.bf16.mxu0 %v810
        %857 = vmatpush1.bf16.msra.mxu0 %v809
        %858 = vmatprep.subr.bf16.mxu0 %v813
        %859 = vmatpush1.bf16.msra.mxu0 %v812
        %860 = vmatprep.subr.bf16.mxu0 %v816
        %861 = vmatpush1.bf16.msra.mxu0 %v815
        %862 = vmatprep.subr.bf16.mxu0 %v819
        %863 = vmatpush1.bf16.msra.mxu0 %v818
        %864 = vmatprep.subr.bf16.mxu0 %v822
        %865 = vmatpush1.bf16.msra.mxu0 %v821
        %866 = vmatprep.subr.bf16.mxu0 %v825
        %867 = vmatpush1.bf16.msra.mxu0 %v824
        %868 = vmatprep.subr.bf16.mxu0 %v828
        %869 = vmatpush1.bf16.msra.mxu0 %v827
        %870 = vmatprep.subr.bf16.mxu0 0
        %871 = vmatpush1.bf16.msra.mxu0 0
        %872 = vmatprep.subr.bf16.mxu0 0
        %873 = vmatpush1.bf16.msra.mxu0 0
        %874 = vmatprep.subr.bf16.mxu0 0
        %875 = vmatpush1.bf16.msra.mxu0 0
        %876 = vmatprep.subr.bf16.mxu0 0
        %877 = vmatpush1.bf16.msra.mxu0 0
        %878 = vmatprep.subr.bf16.mxu0 0
        %879 = vmatpush1.bf16.msra.mxu0 0
        %880 = vmatprep.subr.bf16.mxu0 0
        %881 = vmatpush1.bf16.msra.mxu0 0
        %882 = vmatprep.subr.bf16.mxu0 0
        %883 = vmatpush1.bf16.msra.mxu0 0
        %884 = vmatprep.subr.bf16.mxu0 0
        %885 = vmatpush1.bf16.msra.mxu0 0
        %886 = vmatprep.mubr.bf16.mxu0 0
        %887 = vmatmul.mubr.bf16.gmra.mrb[0].mxu0 %v673
        %v888 = vpop.f32.mrb[0].mxu0
        %v889 = vadd.f32 %v714, %v888
        %v890 = vpop.f32.mrb[0].mxu0
        %v891 = vadd.f32 %v718, %v890
        %v892 = vpop.f32.mrb[0].mxu0
        %v893 = vadd.f32 %v714, %v892
        %v894 = vpop.f32.mrb[0].mxu0
        %v895 = vadd.f32 %v718, %v894
        %896 = vmatprep.mubr.bf16.mxu0 0
        %897 = vmatmul.mubr.bf16.gmra.mrb[0].mxu0 %v674
        %v898 = vpop.f32.mrb[0].mxu0
        %v899 = vadd.f32 %v714, %v898
        %v900 = vpop.f32.mrb[0].mxu0
        %v901 = vadd.f32 %v718, %v900
        %v902 = vpop.f32.mrb[0].mxu0
        %v903 = vadd.f32 %v714, %v902
        %v904 = vpop.f32.mrb[0].mxu0
        %v905 = vadd.f32 %v718, %v904
        %906 = vmatprep.mubr.bf16.mxu0 0
        %907 = vmatmul.mubr.bf16.gmra.mrb[0].mxu0 %v675
        %v908 = vpop.f32.mrb[0].mxu0
        %v909 = vadd.f32 %v714, %v908
        %v910 = vpop.f32.mrb[0].mxu0
        %v911 = vadd.f32 %v718, %v910
        %v912 = vpop.f32.mrb[0].mxu0
        %v913 = vadd.f32 %v714, %v912
        %v914 = vpop.f32.mrb[0].mxu0
        %v915 = vadd.f32 %v718, %v914
        %916 = vmatprep.mubr.bf16.mxu0 0
        %917 = vmatmul.mubr.bf16.gmra.mrb[0].mxu0 %v676
        %v918 = vpop.f32.mrb[0].mxu0
        %v919 = vadd.f32 %v714, %v918
        %v920 = vpop.f32.mrb[0].mxu0
        %v921 = vadd.f32 %v718, %v920
        %v922 = vpop.f32.mrb[0].mxu0
        %v923 = vadd.f32 %v714, %v922
        %v924 = vpop.f32.mrb[0].mxu0
        %v925 = vadd.f32 %v718, %v924
        %926 = vdwg.mxu0
        %927 = vmatprep.subr.bf16.mxu0 0
        %928 = vmatpush1.bf16.msra.mxu0 %v808
        %929 = vmatprep.subr.bf16.mxu0 0
        %930 = vmatpush1.bf16.msra.mxu0 %v811
        %931 = vmatprep.subr.bf16.mxu0 0
        %932 = vmatpush1.bf16.msra.mxu0 %v814
        %933 = vmatprep.subr.bf16.mxu0 0
        %934 = vmatpush1.bf16.msra.mxu0 %v817
        %935 = vmatprep.subr.bf16.mxu0 0
        %936 = vmatpush1.bf16.msra.mxu0 %v820
        %937 = vmatprep.subr.bf16.mxu0 0
        %938 = vmatpush1.bf16.msra.mxu0 %v823
        %939 = vmatprep.subr.bf16.mxu0 0
        %940 = vmatpush1.bf16.msra.mxu0 %v826
        %941 = vmatprep.subr.bf16.mxu0 0
        %942 = vmatpush1.bf16.msra.mxu0 %v829
        %943 = vmatprep.subr.bf16.mxu0 0
        %944 = vmatpush1.bf16.msra.mxu0 0
        %945 = vmatprep.subr.bf16.mxu0 0
        %946 = vmatpush1.bf16.msra.mxu0 0
        %947 = vmatprep.subr.bf16.mxu0 0
        %948 = vmatpush1.bf16.msra.mxu0 0
        %949 = vmatprep.subr.bf16.mxu0 0
        %950 = vmatpush1.bf16.msra.mxu0 0
        %951 = vmatprep.subr.bf16.mxu0 0
        %952 = vmatpush1.bf16.msra.mxu0 0
        %953 = vmatprep.subr.bf16.mxu0 0
        %954 = vmatpush1.bf16.msra.mxu0 0
        %955 = vmatprep.subr.bf16.mxu0 0
        %956 = vmatpush1.bf16.msra.mxu0 0
        %957 = vmatprep.subr.bf16.mxu0 0
        %958 = vmatpush1.bf16.msra.mxu0 0
        %959 = vmatprep.mubr.bf16.mxu0 0
        %960 = vmatmul.mubr.bf16.gmra.mrb[0].mxu0 %v673
        %v961 = vpop.f32.mrb[0].mxu0
        %v962 = vadd.f32 %v722, %v961
        %v963 = vpop.f32.mrb[0].mxu0
        %v964 = vpop.f32.mrb[0].mxu0
        %v965 = vadd.f32 %v722, %v964
        %v966 = vpop.f32.mrb[0].mxu0
        %967 = vmatprep.mubr.bf16.mxu0 0
        %968 = vmatmul.mubr.bf16.gmra.mrb[0].mxu0 %v674
        %v969 = vpop.f32.mrb[0].mxu0
        %v970 = vadd.f32 %v722, %v969
        %v971 = vpop.f32.mrb[0].mxu0
        %v972 = vpop.f32.mrb[0].mxu0
        %v973 = vadd.f32 %v722, %v972
        %v974 = vpop.f32.mrb[0].mxu0
        %975 = vmatprep.mubr.bf16.mxu0 0
        %976 = vmatmul.mubr.bf16.gmra.mrb[0].mxu0 %v675
        %v977 = vpop.f32.mrb[0].mxu0
        %v978 = vadd.f32 %v722, %v977
        %v979 = vpop.f32.mrb[0].mxu0
        %v980 = vpop.f32.mrb[0].mxu0
        %v981 = vadd.f32 %v722, %v980
        %v982 = vpop.f32.mrb[0].mxu0
        %983 = vmatprep.mubr.bf16.mxu0 0
        %984 = vmatmul.mubr.bf16.gmra.mrb[0].mxu0 %v676
        %v985 = vpop.f32.mrb[0].mxu0
        %v986 = vadd.f32 %v722, %v985
        %v987 = vpop.f32.mrb[0].mxu0
        %v988 = vpop.f32.mrb[0].mxu0
        %v989 = vadd.f32 %v722, %v988
        %v990 = vpop.f32.mrb[0].mxu0
        %991 = vdwg.mxu0
        %v992 = vpack.c.bf16 %v893, %v889
        %v993 = vpack.c.bf16 %v903, %v899
        %v994 = vpack.c.bf16 %v913, %v909
        %v995 = vpack.c.bf16 %v923, %v919
        %v996 = vpack.c.bf16 %v895, %v891
        %v997 = vpack.c.bf16 %v905, %v901
        %v998 = vpack.c.bf16 %v915, %v911
        %v999 = vpack.c.bf16 %v925, %v921
        %v1000 = vpack.c.bf16 %v965, %v962
        %v1001 = vpack.c.bf16 %v973, %v970
        %v1002 = vpack.c.bf16 %v981, %v978
        %v1003 = vpack.c.bf16 %v989, %v986
        %v1004 = vlaneseq
        %v1005 = vshrl.u32 %v1004, 7
        %v1006 = vadd.s32 %v1005, 8
        %vm1007 = vcmp.lt.s32.totalorder %v1005, 0
        %v1008 = vsub.s32 0, %v1005
        %v1009 = vsel %vm1007, %v1008, %v1005
        %v1010 = vshrl.u32 %v1009, 3
        %v1011 = vand.u32 %v1009, 7
        %v1012 = vsub.s32 0, %v1011
        %v1013 = vsel %vm1007, %v1012, %v1011
        %vm1014 = vcmp.lt.s32.totalorder %v1006, 0
        %v1015 = vsub.s32 0, %v1006
        %v1016 = vsel %vm1014, %v1015, %v1006
        %v1017 = vshrl.u32 %v1016, 3
        %v1018 = vand.u32 %v1016, 7
        %v1019 = vsub.s32 0, %v1018
        %v1020 = vsel %vm1014, %v1019, %v1018
        %vm1021 = vcmp.ne.s32.totalorder %v1013, 0
        %vm1022 = vcmp.ne.s32.totalorder %v1020, 0
        %vm1023 = vcmp.lt.s32.totalorder %v1013, 0
        %vm1024 = vcmp.lt.s32.totalorder %v1020, 0
        %vm1025 = vmand %vm1023, %vm1021
        %vm1026 = vmand %vm1024, %vm1022
        %v1027 = vadd.s32 %v1013, 8
        %v1028 = vadd.s32 %v1020, 8
        %v1029 = vsel %vm1025, %v1027, %v1013
        %v1030 = vsel %vm1026, %v1028, %v1020
        %v1031 = vlaneseq
        %v1032 = vand.u32 %v1031, 127
        %vm1033 = vcmp.lt.s32.totalorder %v1032, 0
        %v1034 = vsub.s32 0, %v1032
        %v1035 = vsel %vm1033, %v1034, %v1032
        %v1036 = vshrl.u32 %v1035, 3
        %v1037 = vand.u32 %v1035, 7
        %v1038 = vsub.s32 0, %v1037
        %v1039 = vsel %vm1033, %v1038, %v1037
        %vm1040 = vcmp.ne.s32.totalorder %v1039, 0
        %vm1041 = vcmp.lt.s32.totalorder %v1039, 0
        %vm1042 = vmand %vm1041, %vm1040
        %v1043 = vadd.s32 %v1039, 8
        %v1044 = vsel %vm1042, %v1043, %v1039
        %vm1045 = vcmp.le.s32.totalorder %v1044, %v1029
        %vm1046 = vcmp.le.s32.totalorder %v1044, %v1030
        %v1047 = vsel %vm1045, 0.0, -1e+30
        %v1048 = vsel %vm1046, 0.0, -1e+30
        %vm1049 = vcmask 261120
        %v1051 = vsel %vm1049, %v992, 0
        %v1054 = vsel %vm1049, %v996, 0
        %1056 = vmatprep.subr.bf16.mxu0 0
        %1057 = vmatpush1.bf16.xpose.msra.mxu0 %v1054
        %1058 = vmatprep.subr.bf16.mxu0 0
        %1059 = vmatpush1.bf16.xpose.msra.mxu0 0
        %1060 = vmatprep.subr.bf16.mxu0 0
        %1061 = vmatpush1.bf16.xpose.msra.mxu0 0
        %1062 = vmatprep.subr.bf16.mxu0 0
        %1063 = vmatpush1.bf16.xpose.msra.mxu0 0
        %1064 = vmatprep.subr.bf16.mxu0 0
        %1065 = vmatpush1.bf16.xpose.msra.mxu0 0
        %1066 = vmatprep.subr.bf16.mxu0 0
        %1067 = vmatpush1.bf16.xpose.msra.mxu0 0
        %1068 = vmatprep.subr.bf16.mxu0 0
        %1069 = vmatpush1.bf16.xpose.msra.mxu0 0
        %1070 = vmatprep.subr.bf16.mxu0 0
        %1071 = vmatpush1.bf16.xpose.msra.mxu0 0
        %1072 = vmatprep.subr.bf16.mxu0 0
        %1073 = vmatpush1.bf16.xpose.msra.mxu0 0
        %1074 = vmatprep.subr.bf16.mxu0 0
        %1075 = vmatpush1.bf16.xpose.msra.mxu0 0
        %1076 = vmatprep.subr.bf16.mxu0 0
        %1077 = vmatpush1.bf16.xpose.msra.mxu0 0
        %1078 = vmatprep.subr.bf16.mxu0 0
        %1079 = vmatpush1.bf16.xpose.msra.mxu0 0
        %1080 = vmatprep.subr.bf16.mxu0 0
        %1081 = vmatpush1.bf16.xpose.msra.mxu0 0
        %1082 = vmatprep.subr.bf16.mxu0 0
        %1083 = vmatpush1.bf16.xpose.msra.mxu0 0
        %1084 = vmatprep.subr.bf16.mxu0 0
        %1085 = vmatpush1.bf16.xpose.msra.mxu0 0
        %1086 = vmatprep.subr.bf16.mxu0 0
        %1087 = vmatpush1.bf16.xpose.msra.mxu0 0
        %1088 = vmatprep.mubr.bf16.mxu0 0
        %1089 = vmatmul.mubr.bf16.gmra.mrb[0].mxu0 %v1051
        %v1090 = vpop.f32.mrb[0].mxu0
        %v1091 = vadd.f32 %v1047, %v1090
        %v1092 = vpop.f32.mrb[0].mxu0
        %v1093 = vpop.f32.mrb[0].mxu0
        %v1094 = vadd.f32 %v1048, %v1093
        %v1095 = vpop.f32.mrb[0].mxu0
        %1096 = vdwg.mxu0
        %v1098 = vsel %vm1049, %v993, 0
        %v1101 = vsel %vm1049, %v997, 0
        %1103 = vmatprep.subr.bf16.mxu0 0
        %1104 = vmatpush1.bf16.xpose.msra.mxu0 %v1101
        %1105 = vmatprep.subr.bf16.mxu0 0
        %1106 = vmatpush1.bf16.xpose.msra.mxu0 0
        %1107 = vmatprep.subr.bf16.mxu0 0
        %1108 = vmatpush1.bf16.xpose.msra.mxu0 0
        %1109 = vmatprep.subr.bf16.mxu0 0
        %1110 = vmatpush1.bf16.xpose.msra.mxu0 0
        %1111 = vmatprep.subr.bf16.mxu0 0
        %1112 = vmatpush1.bf16.xpose.msra.mxu0 0
        %1113 = vmatprep.subr.bf16.mxu0 0
        %1114 = vmatpush1.bf16.xpose.msra.mxu0 0
        %1115 = vmatprep.subr.bf16.mxu0 0
        %1116 = vmatpush1.bf16.xpose.msra.mxu0 0
        %1117 = vmatprep.subr.bf16.mxu0 0
        %1118 = vmatpush1.bf16.xpose.msra.mxu0 0
        %1119 = vmatprep.subr.bf16.mxu0 0
        %1120 = vmatpush1.bf16.xpose.msra.mxu0 0
        %1121 = vmatprep.subr.bf16.mxu0 0
        %1122 = vmatpush1.bf16.xpose.msra.mxu0 0
        %1123 = vmatprep.subr.bf16.mxu0 0
        %1124 = vmatpush1.bf16.xpose.msra.mxu0 0
        %1125 = vmatprep.subr.bf16.mxu0 0
        %1126 = vmatpush1.bf16.xpose.msra.mxu0 0
        %1127 = vmatprep.subr.bf16.mxu0 0
        %1128 = vmatpush1.bf16.xpose.msra.mxu0 0
        %1129 = vmatprep.subr.bf16.mxu0 0
        %1130 = vmatpush1.bf16.xpose.msra.mxu0 0
        %1131 = vmatprep.subr.bf16.mxu0 0
        %1132 = vmatpush1.bf16.xpose.msra.mxu0 0
        %1133 = vmatprep.subr.bf16.mxu0 0
        %1134 = vmatpush1.bf16.xpose.msra.mxu0 0
        %1135 = vmatprep.mubr.bf16.mxu0 0
        %1136 = vmatmul.mubr.bf16.gmra.mrb[0].mxu0 %v1098
        %v1137 = vpop.f32.mrb[0].mxu0
        %v1138 = vadd.f32 %v1047, %v1137
        %v1139 = vpop.f32.mrb[0].mxu0
        %v1140 = vpop.f32.mrb[0].mxu0
        %v1141 = vadd.f32 %v1048, %v1140
        %v1142 = vpop.f32.mrb[0].mxu0
        %1143 = vdwg.mxu0
        %v1145 = vsel %vm1049, %v994, 0
        %v1148 = vsel %vm1049, %v998, 0
        %1150 = vmatprep.subr.bf16.mxu0 0
        %1151 = vmatpush1.bf16.xpose.msra.mxu0 %v1148
        %1152 = vmatprep.subr.bf16.mxu0 0
        %1153 = vmatpush1.bf16.xpose.msra.mxu0 0
        %1154 = vmatprep.subr.bf16.mxu0 0
        %1155 = vmatpush1.bf16.xpose.msra.mxu0 0
        %1156 = vmatprep.subr.bf16.mxu0 0
        %1157 = vmatpush1.bf16.xpose.msra.mxu0 0
        %1158 = vmatprep.subr.bf16.mxu0 0
        %1159 = vmatpush1.bf16.xpose.msra.mxu0 0
        %1160 = vmatprep.subr.bf16.mxu0 0
        %1161 = vmatpush1.bf16.xpose.msra.mxu0 0
        %1162 = vmatprep.subr.bf16.mxu0 0
        %1163 = vmatpush1.bf16.xpose.msra.mxu0 0
        %1164 = vmatprep.subr.bf16.mxu0 0
        %1165 = vmatpush1.bf16.xpose.msra.mxu0 0
        %1166 = vmatprep.subr.bf16.mxu0 0
        %1167 = vmatpush1.bf16.xpose.msra.mxu0 0
        %1168 = vmatprep.subr.bf16.mxu0 0
        %1169 = vmatpush1.bf16.xpose.msra.mxu0 0
        %1170 = vmatprep.subr.bf16.mxu0 0
        %1171 = vmatpush1.bf16.xpose.msra.mxu0 0
        %1172 = vmatprep.subr.bf16.mxu0 0
        %1173 = vmatpush1.bf16.xpose.msra.mxu0 0
        %1174 = vmatprep.subr.bf16.mxu0 0
        %1175 = vmatpush1.bf16.xpose.msra.mxu0 0
        %1176 = vmatprep.subr.bf16.mxu0 0
        %1177 = vmatpush1.bf16.xpose.msra.mxu0 0
        %1178 = vmatprep.subr.bf16.mxu0 0
        %1179 = vmatpush1.bf16.xpose.msra.mxu0 0
        %1180 = vmatprep.subr.bf16.mxu0 0
        %1181 = vmatpush1.bf16.xpose.msra.mxu0 0
        %1182 = vmatprep.mubr.bf16.mxu0 0
        %1183 = vmatmul.mubr.bf16.gmra.mrb[0].mxu0 %v1145
        %v1184 = vpop.f32.mrb[0].mxu0
        %v1185 = vadd.f32 %v1047, %v1184
        %v1186 = vpop.f32.mrb[0].mxu0
        %v1187 = vpop.f32.mrb[0].mxu0
        %v1188 = vadd.f32 %v1048, %v1187
        %v1189 = vpop.f32.mrb[0].mxu0
        %1190 = vdwg.mxu0
        %v1192 = vsel %vm1049, %v995, 0
        %v1195 = vsel %vm1049, %v999, 0
        %1197 = vmatprep.subr.bf16.mxu0 0
        %1198 = vmatpush1.bf16.xpose.msra.mxu0 %v1195
        %1199 = vmatprep.subr.bf16.mxu0 0
        %1200 = vmatpush1.bf16.xpose.msra.mxu0 0
        %1201 = vmatprep.subr.bf16.mxu0 0
        %1202 = vmatpush1.bf16.xpose.msra.mxu0 0
        %1203 = vmatprep.subr.bf16.mxu0 0
        %1204 = vmatpush1.bf16.xpose.msra.mxu0 0
        %1205 = vmatprep.subr.bf16.mxu0 0
        %1206 = vmatpush1.bf16.xpose.msra.mxu0 0
        %1207 = vmatprep.subr.bf16.mxu0 0
        %1208 = vmatpush1.bf16.xpose.msra.mxu0 0
        %1209 = vmatprep.subr.bf16.mxu0 0
        %1210 = vmatpush1.bf16.xpose.msra.mxu0 0
        %1211 = vmatprep.subr.bf16.mxu0 0
        %1212 = vmatpush1.bf16.xpose.msra.mxu0 0
        %1213 = vmatprep.subr.bf16.mxu0 0
        %1214 = vmatpush1.bf16.xpose.msra.mxu0 0
        %1215 = vmatprep.subr.bf16.mxu0 0
        %1216 = vmatpush1.bf16.xpose.msra.mxu0 0
        %1217 = vmatprep.subr.bf16.mxu0 0
        %1218 = vmatpush1.bf16.xpose.msra.mxu0 0
        %1219 = vmatprep.subr.bf16.mxu0 0
        %1220 = vmatpush1.bf16.xpose.msra.mxu0 0
        %1221 = vmatprep.subr.bf16.mxu0 0
        %1222 = vmatpush1.bf16.xpose.msra.mxu0 0
        %1223 = vmatprep.subr.bf16.mxu0 0
        %1224 = vmatpush1.bf16.xpose.msra.mxu0 0
        %1225 = vmatprep.subr.bf16.mxu0 0
        %1226 = vmatpush1.bf16.xpose.msra.mxu0 0
        %1227 = vmatprep.subr.bf16.mxu0 0
        %1228 = vmatpush1.bf16.xpose.msra.mxu0 0
        %1229 = vmatprep.mubr.bf16.mxu0 0
        %1230 = vmatmul.mubr.bf16.gmra.mrb[0].mxu0 %v1192
        %v1231 = vpop.f32.mrb[0].mxu0
        %v1232 = vadd.f32 %v1047, %v1231
        %v1233 = vpop.f32.mrb[0].mxu0
        %v1234 = vpop.f32.mrb[0].mxu0
        %v1235 = vadd.f32 %v1048, %v1234
        %v1236 = vpop.f32.mrb[0].mxu0
        %1237 = vdwg.mxu0
        %vm1238 = vcmask 130048
        %v1239 = vsel %vm1238, %v1091, -inf
        %1240 = vmax.xlane.f32.xlu0 %v1239
        %v1241 = vpop.xlane.xlu0 %1240
        %v1242 = vsel %vm1238, %v1094, -inf
        %1243 = vmax.xlane.f32.xlu0 %v1242
        %v1244 = vpop.xlane.xlu0 %1243
        %v1245 = vsel %vm1238, %v1138, -inf
        %1246 = vmax.xlane.f32.xlu0 %v1245
        %v1247 = vpop.xlane.xlu0 %1246
        %v1248 = vsel %vm1238, %v1141, -inf
        %1249 = vmax.xlane.f32.xlu0 %v1248
        %v1250 = vpop.xlane.xlu0 %1249
        %v1251 = vsel %vm1238, %v1185, -inf
        %1252 = vmax.xlane.f32.xlu0 %v1251
        %v1253 = vpop.xlane.xlu0 %1252
        %v1254 = vsel %vm1238, %v1188, -inf
        %1255 = vmax.xlane.f32.xlu0 %v1254
        %v1256 = vpop.xlane.xlu0 %1255
        %v1257 = vsel %vm1238, %v1232, -inf
        %1258 = vmax.xlane.f32.xlu0 %v1257
        %v1259 = vpop.xlane.xlu0 %1258
        %v1260 = vsel %vm1238, %v1235, -inf
        %1261 = vmax.xlane.f32.xlu0 %v1260
        %v1262 = vpop.xlane.xlu0 %1261
        %v1263 = vsub.f32 %v1091, %v1241
        %v1264 = vsub.f32 %v1094, %v1244
        %v1265 = vsub.f32 %v1138, %v1247
        %v1266 = vsub.f32 %v1141, %v1250
        %v1267 = vsub.f32 %v1185, %v1253
        %v1268 = vsub.f32 %v1188, %v1256
        %v1269 = vsub.f32 %v1232, %v1259
        %v1270 = vsub.f32 %v1235, %v1262
        %v1271 = vmul.f32 %v1263, 1.442695
        %v1272 = vpow.pop %v1271
        %v1273 = vmul.f32 %v1264, 1.442695
        %v1274 = vpow.pop %v1273
        %v1275 = vmul.f32 %v1265, 1.442695
        %v1276 = vpow.pop %v1275
        %v1277 = vmul.f32 %v1266, 1.442695
        %v1278 = vpow.pop %v1277
        %v1279 = vmul.f32 %v1267, 1.442695
        %v1280 = vpow.pop %v1279
        %v1281 = vmul.f32 %v1268, 1.442695
        %v1282 = vpow.pop %v1281
        %v1283 = vmul.f32 %v1269, 1.442695
        %v1284 = vpow.pop %v1283
        %v1285 = vmul.f32 %v1270, 1.442695
        %v1286 = vpow.pop %v1285
        %v1287 = vsel %vm1238, %v1272, 0.0
        %1288 = vadd.xlane.f32.xlu0 %v1287
        %v1289 = vpop.xlane.xlu0 %1288
        %v1290 = vsel %vm1238, %v1274, 0.0
        %1291 = vadd.xlane.f32.xlu0 %v1290
        %v1292 = vpop.xlane.xlu0 %1291
        %v1293 = vsel %vm1238, %v1276, 0.0
        %1294 = vadd.xlane.f32.xlu0 %v1293
        %v1295 = vpop.xlane.xlu0 %1294
        %v1296 = vsel %vm1238, %v1278, 0.0
        %1297 = vadd.xlane.f32.xlu0 %v1296
        %v1298 = vpop.xlane.xlu0 %1297
        %v1299 = vsel %vm1238, %v1280, 0.0
        %1300 = vadd.xlane.f32.xlu0 %v1299
        %v1301 = vpop.xlane.xlu0 %1300
        %v1302 = vsel %vm1238, %v1282, 0.0
        %1303 = vadd.xlane.f32.xlu0 %v1302
        %v1304 = vpop.xlane.xlu0 %1303
        %v1305 = vsel %vm1238, %v1284, 0.0
        %1306 = vadd.xlane.f32.xlu0 %v1305
        %v1307 = vpop.xlane.xlu0 %1306
        %v1308 = vsel %vm1238, %v1286, 0.0
        %1309 = vadd.xlane.f32.xlu0 %v1308
        %v1310 = vpop.xlane.xlu0 %1309
        %v1311 = vpack.c.bf16 %v1274, %v1272
        %v1312 = vpack.c.bf16 %v1278, %v1276
        %v1313 = vpack.c.bf16 %v1282, %v1280
        %v1314 = vpack.c.bf16 %v1286, %v1284
        %v1316 = vsel %vm1238, %v1311, 0
        %1318 = vmatprep.subr.bf16.mxu0 0
        %1319 = vmatpush1.bf16.msra.mxu0 %v1000
        %1320 = vmatprep.subr.bf16.mxu0 0
        %1321 = vmatpush1.bf16.msra.mxu0 0
        %1322 = vmatprep.subr.bf16.mxu0 0
        %1323 = vmatpush1.bf16.msra.mxu0 0
        %1324 = vmatprep.subr.bf16.mxu0 0
        %1325 = vmatpush1.bf16.msra.mxu0 0
        %1326 = vmatprep.subr.bf16.mxu0 0
        %1327 = vmatpush1.bf16.msra.mxu0 0
        %1328 = vmatprep.subr.bf16.mxu0 0
        %1329 = vmatpush1.bf16.msra.mxu0 0
        %1330 = vmatprep.subr.bf16.mxu0 0
        %1331 = vmatpush1.bf16.msra.mxu0 0
        %1332 = vmatprep.subr.bf16.mxu0 0
        %1333 = vmatpush1.bf16.msra.mxu0 0
        %1334 = vmatprep.subr.bf16.mxu0 0
        %1335 = vmatpush1.bf16.msra.mxu0 0
        %1336 = vmatprep.subr.bf16.mxu0 0
        %1337 = vmatpush1.bf16.msra.mxu0 0
        %1338 = vmatprep.subr.bf16.mxu0 0
        %1339 = vmatpush1.bf16.msra.mxu0 0
        %1340 = vmatprep.subr.bf16.mxu0 0
        %1341 = vmatpush1.bf16.msra.mxu0 0
        %1342 = vmatprep.subr.bf16.mxu0 0
        %1343 = vmatpush1.bf16.msra.mxu0 0
        %1344 = vmatprep.subr.bf16.mxu0 0
        %1345 = vmatpush1.bf16.msra.mxu0 0
        %1346 = vmatprep.subr.bf16.mxu0 0
        %1347 = vmatpush1.bf16.msra.mxu0 0
        %1348 = vmatprep.subr.bf16.mxu0 0
        %1349 = vmatpush1.bf16.msra.mxu0 0
        %1350 = vmatprep.mubr.bf16.mxu0 0
        %1351 = vmatmul.mubr.bf16.gmra.mrb[0].mxu0 %v1316
        %v1352 = vpop.f32.mrb[0].mxu0
        %v1353 = vadd.f32 0.0, %v1352
        %v1354 = vpop.f32.mrb[0].mxu0
        %v1355 = vpop.f32.mrb[0].mxu0
        %v1356 = vadd.f32 0.0, %v1355
        %v1357 = vpop.f32.mrb[0].mxu0
        %1358 = vdwg.mxu0
        %v1360 = vsel %vm1238, %v1312, 0
        %1362 = vmatprep.subr.bf16.mxu0 0
        %1363 = vmatpush1.bf16.msra.mxu0 %v1001
        %1364 = vmatprep.subr.bf16.mxu0 0
        %1365 = vmatpush1.bf16.msra.mxu0 0
        %1366 = vmatprep.subr.bf16.mxu0 0
        %1367 = vmatpush1.bf16.msra.mxu0 0
        %1368 = vmatprep.subr.bf16.mxu0 0
        %1369 = vmatpush1.bf16.msra.mxu0 0
        %1370 = vmatprep.subr.bf16.mxu0 0
        %1371 = vmatpush1.bf16.msra.mxu0 0
        %1372 = vmatprep.subr.bf16.mxu0 0
        %1373 = vmatpush1.bf16.msra.mxu0 0
        %1374 = vmatprep.subr.bf16.mxu0 0
        %1375 = vmatpush1.bf16.msra.mxu0 0
        %1376 = vmatprep.subr.bf16.mxu0 0
        %1377 = vmatpush1.bf16.msra.mxu0 0
        %1378 = vmatprep.subr.bf16.mxu0 0
        %1379 = vmatpush1.bf16.msra.mxu0 0
        %1380 = vmatprep.subr.bf16.mxu0 0
        %1381 = vmatpush1.bf16.msra.mxu0 0
        %1382 = vmatprep.subr.bf16.mxu0 0
        %1383 = vmatpush1.bf16.msra.mxu0 0
        %1384 = vmatprep.subr.bf16.mxu0 0
        %1385 = vmatpush1.bf16.msra.mxu0 0
        %1386 = vmatprep.subr.bf16.mxu0 0
        %1387 = vmatpush1.bf16.msra.mxu0 0
        %1388 = vmatprep.subr.bf16.mxu0 0
        %1389 = vmatpush1.bf16.msra.mxu0 0
        %1390 = vmatprep.subr.bf16.mxu0 0
        %1391 = vmatpush1.bf16.msra.mxu0 0
        %1392 = vmatprep.subr.bf16.mxu0 0
        %1393 = vmatpush1.bf16.msra.mxu0 0
        %1394 = vmatprep.mubr.bf16.mxu0 0
        %1395 = vmatmul.mubr.bf16.gmra.mrb[0].mxu0 %v1360
        %v1396 = vpop.f32.mrb[0].mxu0
        %v1397 = vadd.f32 0.0, %v1396
        %v1398 = vpop.f32.mrb[0].mxu0
        %v1399 = vpop.f32.mrb[0].mxu0
        %v1400 = vadd.f32 0.0, %v1399
        %v1401 = vpop.f32.mrb[0].mxu0
        %1402 = vdwg.mxu0
        %v1404 = vsel %vm1238, %v1313, 0
        %1406 = vmatprep.subr.bf16.mxu0 0
        %1407 = vmatpush1.bf16.msra.mxu0 %v1002
        %1408 = vmatprep.subr.bf16.mxu0 0
        %1409 = vmatpush1.bf16.msra.mxu0 0
        %1410 = vmatprep.subr.bf16.mxu0 0
        %1411 = vmatpush1.bf16.msra.mxu0 0
        %1412 = vmatprep.subr.bf16.mxu0 0
        %1413 = vmatpush1.bf16.msra.mxu0 0
        %1414 = vmatprep.subr.bf16.mxu0 0
        %1415 = vmatpush1.bf16.msra.mxu0 0
        %1416 = vmatprep.subr.bf16.mxu0 0
        %1417 = vmatpush1.bf16.msra.mxu0 0
        %1418 = vmatprep.subr.bf16.mxu0 0
        %1419 = vmatpush1.bf16.msra.mxu0 0
        %1420 = vmatprep.subr.bf16.mxu0 0
        %1421 = vmatpush1.bf16.msra.mxu0 0
        %1422 = vmatprep.subr.bf16.mxu0 0
        %1423 = vmatpush1.bf16.msra.mxu0 0
        %1424 = vmatprep.subr.bf16.mxu0 0
        %1425 = vmatpush1.bf16.msra.mxu0 0
        %1426 = vmatprep.subr.bf16.mxu0 0
        %1427 = vmatpush1.bf16.msra.mxu0 0
        %1428 = vmatprep.subr.bf16.mxu0 0
        %1429 = vmatpush1.bf16.msra.mxu0 0
        %1430 = vmatprep.subr.bf16.mxu0 0
        %1431 = vmatpush1.bf16.msra.mxu0 0
        %1432 = vmatprep.subr.bf16.mxu0 0
        %1433 = vmatpush1.bf16.msra.mxu0 0
        %1434 = vmatprep.subr.bf16.mxu0 0
        %1435 = vmatpush1.bf16.msra.mxu0 0
        %1436 = vmatprep.subr.bf16.mxu0 0
        %1437 = vmatpush1.bf16.msra.mxu0 0
        %1438 = vmatprep.mubr.bf16.mxu0 0
        %1439 = vmatmul.mubr.bf16.gmra.mrb[0].mxu0 %v1404
        %v1440 = vpop.f32.mrb[0].mxu0
        %v1441 = vadd.f32 0.0, %v1440
        %v1442 = vpop.f32.mrb[0].mxu0
        %v1443 = vpop.f32.mrb[0].mxu0
        %v1444 = vadd.f32 0.0, %v1443
        %v1445 = vpop.f32.mrb[0].mxu0
        %1446 = vdwg.mxu0
        %v1448 = vsel %vm1238, %v1314, 0
        %1450 = vmatprep.subr.bf16.mxu0 0
        %1451 = vmatpush1.bf16.msra.mxu0 %v1003
        %1452 = vmatprep.subr.bf16.mxu0 0
        %1453 = vmatpush1.bf16.msra.mxu0 0
        %1454 = vmatprep.subr.bf16.mxu0 0
        %1455 = vmatpush1.bf16.msra.mxu0 0
        %1456 = vmatprep.subr.bf16.mxu0 0
        %1457 = vmatpush1.bf16.msra.mxu0 0
        %1458 = vmatprep.subr.bf16.mxu0 0
        %1459 = vmatpush1.bf16.msra.mxu0 0
        %1460 = vmatprep.subr.bf16.mxu0 0
        %1461 = vmatpush1.bf16.msra.mxu0 0
        %1462 = vmatprep.subr.bf16.mxu0 0
        %1463 = vmatpush1.bf16.msra.mxu0 0
        %1464 = vmatprep.subr.bf16.mxu0 0
        %1465 = vmatpush1.bf16.msra.mxu0 0
        %1466 = vmatprep.subr.bf16.mxu0 0
        %1467 = vmatpush1.bf16.msra.mxu0 0
        %1468 = vmatprep.subr.bf16.mxu0 0
        %1469 = vmatpush1.bf16.msra.mxu0 0
        %1470 = vmatprep.subr.bf16.mxu0 0
        %1471 = vmatpush1.bf16.msra.mxu0 0
        %1472 = vmatprep.subr.bf16.mxu0 0
        %1473 = vmatpush1.bf16.msra.mxu0 0
        %1474 = vmatprep.subr.bf16.mxu0 0
        %1475 = vmatpush1.bf16.msra.mxu0 0
        %1476 = vmatprep.subr.bf16.mxu0 0
        %1477 = vmatpush1.bf16.msra.mxu0 0
        %1478 = vmatprep.subr.bf16.mxu0 0
        %1479 = vmatpush1.bf16.msra.mxu0 0
        %1480 = vmatprep.subr.bf16.mxu0 0
        %1481 = vmatpush1.bf16.msra.mxu0 0
        %1482 = vmatprep.mubr.bf16.mxu0 0
        %1483 = vmatmul.mubr.bf16.gmra.mrb[0].mxu0 %v1448
        %v1484 = vpop.f32.mrb[0].mxu0
        %v1485 = vadd.f32 0.0, %v1484
        %v1486 = vpop.f32.mrb[0].mxu0
        %v1487 = vpop.f32.mrb[0].mxu0
        %v1488 = vadd.f32 0.0, %v1487
        %v1489 = vpop.f32.mrb[0].mxu0
        %1490 = vdwg.mxu0
        %v1491 = vrcp.pop %v1289
        %v1492 = vrcp.pop %v1292
        %v1493 = vrcp.pop %v1295
        %v1494 = vrcp.pop %v1298
        %v1495 = vrcp.pop %v1301
        %v1496 = vrcp.pop %v1304
        %v1497 = vrcp.pop %v1307
        %v1498 = vrcp.pop %v1310
        %v1499 = vmul.f32 %v1353, %v1491
        %v1500 = vmul.f32 %v1356, %v1492
        %v1501 = vmul.f32 %v1397, %v1493
        %v1502 = vmul.f32 %v1400, %v1494
        %v1503 = vmul.f32 %v1441, %v1495
        %v1504 = vmul.f32 %v1444, %v1496
        %v1505 = vmul.f32 %v1485, %v1497
        %v1506 = vmul.f32 %v1488, %v1498
        %1508 = vrot.lane.b32.xlu0 %v992, 96
        %v1509 = vpop.permute.xlu0 %1508
        %1511 = vrot.lane.b32.xlu0 %v996, 96
        %v1512 = vpop.permute.xlu0 %1511
        %v1514 = vsel %vm1049, %v1509, 0
        %v1517 = vsel %vm1049, %v1512, 0
        %1519 = vmatprep.subr.bf16.mxu0 0
        %1520 = vmatpush1.bf16.xpose.msra.mxu0 %v1517
        %1521 = vmatprep.subr.bf16.mxu0 0
        %1522 = vmatpush1.bf16.xpose.msra.mxu0 0
        %1523 = vmatprep.subr.bf16.mxu0 0
        %1524 = vmatpush1.bf16.xpose.msra.mxu0 0
        %1525 = vmatprep.subr.bf16.mxu0 0
        %1526 = vmatpush1.bf16.xpose.msra.mxu0 0
        %1527 = vmatprep.subr.bf16.mxu0 0
        %1528 = vmatpush1.bf16.xpose.msra.mxu0 0
        %1529 = vmatprep.subr.bf16.mxu0 0
        %1530 = vmatpush1.bf16.xpose.msra.mxu0 0
        %1531 = vmatprep.subr.bf16.mxu0 0
        %1532 = vmatpush1.bf16.xpose.msra.mxu0 0
        %1533 = vmatprep.subr.bf16.mxu0 0
        %1534 = vmatpush1.bf16.xpose.msra.mxu0 0
        %1535 = vmatprep.subr.bf16.mxu0 0
        %1536 = vmatpush1.bf16.xpose.msra.mxu0 0
        %1537 = vmatprep.subr.bf16.mxu0 0
        %1538 = vmatpush1.bf16.xpose.msra.mxu0 0
        %1539 = vmatprep.subr.bf16.mxu0 0
        %1540 = vmatpush1.bf16.xpose.msra.mxu0 0
        %1541 = vmatprep.subr.bf16.mxu0 0
        %1542 = vmatpush1.bf16.xpose.msra.mxu0 0
        %1543 = vmatprep.subr.bf16.mxu0 0
        %1544 = vmatpush1.bf16.xpose.msra.mxu0 0
        %1545 = vmatprep.subr.bf16.mxu0 0
        %1546 = vmatpush1.bf16.xpose.msra.mxu0 0
        %1547 = vmatprep.subr.bf16.mxu0 0
        %1548 = vmatpush1.bf16.xpose.msra.mxu0 0
        %1549 = vmatprep.subr.bf16.mxu0 0
        %1550 = vmatpush1.bf16.xpose.msra.mxu0 0
        %1551 = vmatprep.mubr.bf16.mxu0 0
        %1552 = vmatmul.mubr.bf16.gmra.mrb[0].mxu0 %v1514
        %v1553 = vpop.f32.mrb[0].mxu0
        %v1554 = vadd.f32 %v1047, %v1553
        %v1555 = vpop.f32.mrb[0].mxu0
        %v1556 = vpop.f32.mrb[0].mxu0
        %v1557 = vadd.f32 %v1048, %v1556
        %v1558 = vpop.f32.mrb[0].mxu0
        %1559 = vdwg.mxu0
        %1561 = vrot.lane.b32.xlu0 %v993, 96
        %v1562 = vpop.permute.xlu0 %1561
        %1564 = vrot.lane.b32.xlu0 %v997, 96
        %v1565 = vpop.permute.xlu0 %1564
        %v1567 = vsel %vm1049, %v1562, 0
        %v1570 = vsel %vm1049, %v1565, 0
        %1572 = vmatprep.subr.bf16.mxu0 0
        %1573 = vmatpush1.bf16.xpose.msra.mxu0 %v1570
        %1574 = vmatprep.subr.bf16.mxu0 0
        %1575 = vmatpush1.bf16.xpose.msra.mxu0 0
        %1576 = vmatprep.subr.bf16.mxu0 0
        %1577 = vmatpush1.bf16.xpose.msra.mxu0 0
        %1578 = vmatprep.subr.bf16.mxu0 0
        %1579 = vmatpush1.bf16.xpose.msra.mxu0 0
        %1580 = vmatprep.subr.bf16.mxu0 0
        %1581 = vmatpush1.bf16.xpose.msra.mxu0 0
        %1582 = vmatprep.subr.bf16.mxu0 0
        %1583 = vmatpush1.bf16.xpose.msra.mxu0 0
        %1584 = vmatprep.subr.bf16.mxu0 0
        %1585 = vmatpush1.bf16.xpose.msra.mxu0 0
        %1586 = vmatprep.subr.bf16.mxu0 0
        %1587 = vmatpush1.bf16.xpose.msra.mxu0 0
        %1588 = vmatprep.subr.bf16.mxu0 0
        %1589 = vmatpush1.bf16.xpose.msra.mxu0 0
        %1590 = vmatprep.subr.bf16.mxu0 0
        %1591 = vmatpush1.bf16.xpose.msra.mxu0 0
        %1592 = vmatprep.subr.bf16.mxu0 0
        %1593 = vmatpush1.bf16.xpose.msra.mxu0 0
        %1594 = vmatprep.subr.bf16.mxu0 0
        %1595 = vmatpush1.bf16.xpose.msra.mxu0 0
        %1596 = vmatprep.subr.bf16.mxu0 0
        %1597 = vmatpush1.bf16.xpose.msra.mxu0 0
        %1598 = vmatprep.subr.bf16.mxu0 0
        %1599 = vmatpush1.bf16.xpose.msra.mxu0 0
        %1600 = vmatprep.subr.bf16.mxu0 0
        %1601 = vmatpush1.bf16.xpose.msra.mxu0 0
        %1602 = vmatprep.subr.bf16.mxu0 0
        %1603 = vmatpush1.bf16.xpose.msra.mxu0 0
        %1604 = vmatprep.mubr.bf16.mxu0 0
        %1605 = vmatmul.mubr.bf16.gmra.mrb[0].mxu0 %v1567
        %v1606 = vpop.f32.mrb[0].mxu0
        %v1607 = vadd.f32 %v1047, %v1606
        %v1608 = vpop.f32.mrb[0].mxu0
        %v1609 = vpop.f32.mrb[0].mxu0
        %v1610 = vadd.f32 %v1048, %v1609
        %v1611 = vpop.f32.mrb[0].mxu0
        %1612 = vdwg.mxu0
        %1614 = vrot.lane.b32.xlu0 %v994, 96
        %v1615 = vpop.permute.xlu0 %1614
        %1617 = vrot.lane.b32.xlu0 %v998, 96
        %v1618 = vpop.permute.xlu0 %1617
        %v1620 = vsel %vm1049, %v1615, 0
        %v1623 = vsel %vm1049, %v1618, 0
        %1625 = vmatprep.subr.bf16.mxu0 0
        %1626 = vmatpush1.bf16.xpose.msra.mxu0 %v1623
        %1627 = vmatprep.subr.bf16.mxu0 0
        %1628 = vmatpush1.bf16.xpose.msra.mxu0 0
        %1629 = vmatprep.subr.bf16.mxu0 0
        %1630 = vmatpush1.bf16.xpose.msra.mxu0 0
        %1631 = vmatprep.subr.bf16.mxu0 0
        %1632 = vmatpush1.bf16.xpose.msra.mxu0 0
        %1633 = vmatprep.subr.bf16.mxu0 0
        %1634 = vmatpush1.bf16.xpose.msra.mxu0 0
        %1635 = vmatprep.subr.bf16.mxu0 0
        %1636 = vmatpush1.bf16.xpose.msra.mxu0 0
        %1637 = vmatprep.subr.bf16.mxu0 0
        %1638 = vmatpush1.bf16.xpose.msra.mxu0 0
        %1639 = vmatprep.subr.bf16.mxu0 0
        %1640 = vmatpush1.bf16.xpose.msra.mxu0 0
        %1641 = vmatprep.subr.bf16.mxu0 0
        %1642 = vmatpush1.bf16.xpose.msra.mxu0 0
        %1643 = vmatprep.subr.bf16.mxu0 0
        %1644 = vmatpush1.bf16.xpose.msra.mxu0 0
        %1645 = vmatprep.subr.bf16.mxu0 0
        %1646 = vmatpush1.bf16.xpose.msra.mxu0 0
        %1647 = vmatprep.subr.bf16.mxu0 0
        %1648 = vmatpush1.bf16.xpose.msra.mxu0 0
        %1649 = vmatprep.subr.bf16.mxu0 0
        %1650 = vmatpush1.bf16.xpose.msra.mxu0 0
        %1651 = vmatprep.subr.bf16.mxu0 0
        %1652 = vmatpush1.bf16.xpose.msra.mxu0 0
        %1653 = vmatprep.subr.bf16.mxu0 0
        %1654 = vmatpush1.bf16.xpose.msra.mxu0 0
        %1655 = vmatprep.subr.bf16.mxu0 0
        %1656 = vmatpush1.bf16.xpose.msra.mxu0 0
        %1657 = vmatprep.mubr.bf16.mxu0 0
        %1658 = vmatmul.mubr.bf16.gmra.mrb[0].mxu0 %v1620
        %v1659 = vpop.f32.mrb[0].mxu0
        %v1660 = vadd.f32 %v1047, %v1659
        %v1661 = vpop.f32.mrb[0].mxu0
        %v1662 = vpop.f32.mrb[0].mxu0
        %v1663 = vadd.f32 %v1048, %v1662
        %v1664 = vpop.f32.mrb[0].mxu0
        %1665 = vdwg.mxu0
        %1667 = vrot.lane.b32.xlu0 %v995, 96
        %v1668 = vpop.permute.xlu0 %1667
        %1670 = vrot.lane.b32.xlu0 %v999, 96
        %v1671 = vpop.permute.xlu0 %1670
        %v1673 = vsel %vm1049, %v1668, 0
        %v1676 = vsel %vm1049, %v1671, 0
        %1678 = vmatprep.subr.bf16.mxu0 0
        %1679 = vmatpush1.bf16.xpose.msra.mxu0 %v1676
        %1680 = vmatprep.subr.bf16.mxu0 0
        %1681 = vmatpush1.bf16.xpose.msra.mxu0 0
        %1682 = vmatprep.subr.bf16.mxu0 0
        %1683 = vmatpush1.bf16.xpose.msra.mxu0 0
        %1684 = vmatprep.subr.bf16.mxu0 0
        %1685 = vmatpush1.bf16.xpose.msra.mxu0 0
        %1686 = vmatprep.subr.bf16.mxu0 0
        %1687 = vmatpush1.bf16.xpose.msra.mxu0 0
        %1688 = vmatprep.subr.bf16.mxu0 0
        %1689 = vmatpush1.bf16.xpose.msra.mxu0 0
        %1690 = vmatprep.subr.bf16.mxu0 0
        %1691 = vmatpush1.bf16.xpose.msra.mxu0 0
        %1692 = vmatprep.subr.bf16.mxu0 0
        %1693 = vmatpush1.bf16.xpose.msra.mxu0 0
        %1694 = vmatprep.subr.bf16.mxu0 0
        %1695 = vmatpush1.bf16.xpose.msra.mxu0 0
        %1696 = vmatprep.subr.bf16.mxu0 0
        %1697 = vmatpush1.bf16.xpose.msra.mxu0 0
        %1698 = vmatprep.subr.bf16.mxu0 0
        %1699 = vmatpush1.bf16.xpose.msra.mxu0 0
        %1700 = vmatprep.subr.bf16.mxu0 0
        %1701 = vmatpush1.bf16.xpose.msra.mxu0 0
        %1702 = vmatprep.subr.bf16.mxu0 0
        %1703 = vmatpush1.bf16.xpose.msra.mxu0 0
        %1704 = vmatprep.subr.bf16.mxu0 0
        %1705 = vmatpush1.bf16.xpose.msra.mxu0 0
        %1706 = vmatprep.subr.bf16.mxu0 0
        %1707 = vmatpush1.bf16.xpose.msra.mxu0 0
        %1708 = vmatprep.subr.bf16.mxu0 0
        %1709 = vmatpush1.bf16.xpose.msra.mxu0 0
        %1710 = vmatprep.mubr.bf16.mxu0 0
        %1711 = vmatmul.mubr.bf16.gmra.mrb[0].mxu0 %v1673
        %v1712 = vpop.f32.mrb[0].mxu0
        %v1713 = vadd.f32 %v1047, %v1712
        %v1714 = vpop.f32.mrb[0].mxu0
        %v1715 = vpop.f32.mrb[0].mxu0
        %v1716 = vadd.f32 %v1048, %v1715
        %v1717 = vpop.f32.mrb[0].mxu0
        %1718 = vdwg.mxu0
        %v1719 = vsel %vm1238, %v1554, -inf
        %1720 = vmax.xlane.f32.xlu0 %v1719
        %v1721 = vpop.xlane.xlu0 %1720
        %v1722 = vsel %vm1238, %v1557, -inf
        %1723 = vmax.xlane.f32.xlu0 %v1722
        %v1724 = vpop.xlane.xlu0 %1723
        %v1725 = vsel %vm1238, %v1607, -inf
        %1726 = vmax.xlane.f32.xlu0 %v1725
        %v1727 = vpop.xlane.xlu0 %1726
        %v1728 = vsel %vm1238, %v1610, -inf
        %1729 = vmax.xlane.f32.xlu0 %v1728
        %v1730 = vpop.xlane.xlu0 %1729
        %v1731 = vsel %vm1238, %v1660, -inf
        %1732 = vmax.xlane.f32.xlu0 %v1731
        %v1733 = vpop.xlane.xlu0 %1732
        %v1734 = vsel %vm1238, %v1663, -inf
        %1735 = vmax.xlane.f32.xlu0 %v1734
        %v1736 = vpop.xlane.xlu0 %1735
        %v1737 = vsel %vm1238, %v1713, -inf
        %1738 = vmax.xlane.f32.xlu0 %v1737
        %v1739 = vpop.xlane.xlu0 %1738
        %v1740 = vsel %vm1238, %v1716, -inf
        %1741 = vmax.xlane.f32.xlu0 %v1740
        %v1742 = vpop.xlane.xlu0 %1741
        %v1743 = vsub.f32 %v1554, %v1721
        %v1744 = vsub.f32 %v1557, %v1724
        %v1745 = vsub.f32 %v1607, %v1727
        %v1746 = vsub.f32 %v1610, %v1730
        %v1747 = vsub.f32 %v1660, %v1733
        %v1748 = vsub.f32 %v1663, %v1736
        %v1749 = vsub.f32 %v1713, %v1739
        %v1750 = vsub.f32 %v1716, %v1742
        %v1751 = vmul.f32 %v1743, 1.442695
        %v1752 = vpow.pop %v1751
        %v1753 = vmul.f32 %v1744, 1.442695
        %v1754 = vpow.pop %v1753
        %v1755 = vmul.f32 %v1745, 1.442695
        %v1756 = vpow.pop %v1755
        %v1757 = vmul.f32 %v1746, 1.442695
        %v1758 = vpow.pop %v1757
        %v1759 = vmul.f32 %v1747, 1.442695
        %v1760 = vpow.pop %v1759
        %v1761 = vmul.f32 %v1748, 1.442695
        %v1762 = vpow.pop %v1761
        %v1763 = vmul.f32 %v1749, 1.442695
        %v1764 = vpow.pop %v1763
        %v1765 = vmul.f32 %v1750, 1.442695
        %v1766 = vpow.pop %v1765
        %v1767 = vsel %vm1238, %v1752, 0.0
        %1768 = vadd.xlane.f32.xlu0 %v1767
        %v1769 = vpop.xlane.xlu0 %1768
        %v1770 = vsel %vm1238, %v1754, 0.0
        %1771 = vadd.xlane.f32.xlu0 %v1770
        %v1772 = vpop.xlane.xlu0 %1771
        %v1773 = vsel %vm1238, %v1756, 0.0
        %1774 = vadd.xlane.f32.xlu0 %v1773
        %v1775 = vpop.xlane.xlu0 %1774
        %v1776 = vsel %vm1238, %v1758, 0.0
        %1777 = vadd.xlane.f32.xlu0 %v1776
        %v1778 = vpop.xlane.xlu0 %1777
        %v1779 = vsel %vm1238, %v1760, 0.0
        %1780 = vadd.xlane.f32.xlu0 %v1779
        %v1781 = vpop.xlane.xlu0 %1780
        %v1782 = vsel %vm1238, %v1762, 0.0
        %1783 = vadd.xlane.f32.xlu0 %v1782
        %v1784 = vpop.xlane.xlu0 %1783
        %v1785 = vsel %vm1238, %v1764, 0.0
        %1786 = vadd.xlane.f32.xlu0 %v1785
        %v1787 = vpop.xlane.xlu0 %1786
        %v1788 = vsel %vm1238, %v1766, 0.0
        %1789 = vadd.xlane.f32.xlu0 %v1788
        %v1790 = vpop.xlane.xlu0 %1789
        %v1791 = vpack.c.bf16 %v1754, %v1752
        %v1792 = vpack.c.bf16 %v1758, %v1756
        %v1793 = vpack.c.bf16 %v1762, %v1760
        %v1794 = vpack.c.bf16 %v1766, %v1764
        %1796 = vrot.lane.b32.xlu0 %v1000, 96
        %v1797 = vpop.permute.xlu0 %1796
        %v1800 = vsel %vm1238, %v1791, 0
        %1802 = vmatprep.subr.bf16.mxu0 0
        %1803 = vmatpush1.bf16.msra.mxu0 %v1797
        %1804 = vmatprep.subr.bf16.mxu0 0
        %1805 = vmatpush1.bf16.msra.mxu0 0
        %1806 = vmatprep.subr.bf16.mxu0 0
        %1807 = vmatpush1.bf16.msra.mxu0 0
        %1808 = vmatprep.subr.bf16.mxu0 0
        %1809 = vmatpush1.bf16.msra.mxu0 0
        %1810 = vmatprep.subr.bf16.mxu0 0
        %1811 = vmatpush1.bf16.msra.mxu0 0
        %1812 = vmatprep.subr.bf16.mxu0 0
        %1813 = vmatpush1.bf16.msra.mxu0 0
        %1814 = vmatprep.subr.bf16.mxu0 0
        %1815 = vmatpush1.bf16.msra.mxu0 0
        %1816 = vmatprep.subr.bf16.mxu0 0
        %1817 = vmatpush1.bf16.msra.mxu0 0
        %1818 = vmatprep.subr.bf16.mxu0 0
        %1819 = vmatpush1.bf16.msra.mxu0 0
        %1820 = vmatprep.subr.bf16.mxu0 0
        %1821 = vmatpush1.bf16.msra.mxu0 0
        %1822 = vmatprep.subr.bf16.mxu0 0
        %1823 = vmatpush1.bf16.msra.mxu0 0
        %1824 = vmatprep.subr.bf16.mxu0 0
        %1825 = vmatpush1.bf16.msra.mxu0 0
        %1826 = vmatprep.subr.bf16.mxu0 0
        %1827 = vmatpush1.bf16.msra.mxu0 0
        %1828 = vmatprep.subr.bf16.mxu0 0
        %1829 = vmatpush1.bf16.msra.mxu0 0
        %1830 = vmatprep.subr.bf16.mxu0 0
        %1831 = vmatpush1.bf16.msra.mxu0 0
        %1832 = vmatprep.subr.bf16.mxu0 0
        %1833 = vmatpush1.bf16.msra.mxu0 0
        %1834 = vmatprep.mubr.bf16.mxu0 0
        %1835 = vmatmul.mubr.bf16.gmra.mrb[0].mxu0 %v1800
        %v1836 = vpop.f32.mrb[0].mxu0
        %v1837 = vadd.f32 0.0, %v1836
        %v1838 = vpop.f32.mrb[0].mxu0
        %v1839 = vpop.f32.mrb[0].mxu0
        %v1840 = vadd.f32 0.0, %v1839
        %v1841 = vpop.f32.mrb[0].mxu0
        %1842 = vdwg.mxu0
        %1844 = vrot.lane.b32.xlu0 %v1001, 96
        %v1845 = vpop.permute.xlu0 %1844
        %v1848 = vsel %vm1238, %v1792, 0
        %1850 = vmatprep.subr.bf16.mxu0 0
        %1851 = vmatpush1.bf16.msra.mxu0 %v1845
        %1852 = vmatprep.subr.bf16.mxu0 0
        %1853 = vmatpush1.bf16.msra.mxu0 0
        %1854 = vmatprep.subr.bf16.mxu0 0
        %1855 = vmatpush1.bf16.msra.mxu0 0
        %1856 = vmatprep.subr.bf16.mxu0 0
        %1857 = vmatpush1.bf16.msra.mxu0 0
        %1858 = vmatprep.subr.bf16.mxu0 0
        %1859 = vmatpush1.bf16.msra.mxu0 0
        %1860 = vmatprep.subr.bf16.mxu0 0
        %1861 = vmatpush1.bf16.msra.mxu0 0
        %1862 = vmatprep.subr.bf16.mxu0 0
        %1863 = vmatpush1.bf16.msra.mxu0 0
        %1864 = vmatprep.subr.bf16.mxu0 0
        %1865 = vmatpush1.bf16.msra.mxu0 0
        %1866 = vmatprep.subr.bf16.mxu0 0
        %1867 = vmatpush1.bf16.msra.mxu0 0
        %1868 = vmatprep.subr.bf16.mxu0 0
        %1869 = vmatpush1.bf16.msra.mxu0 0
        %1870 = vmatprep.subr.bf16.mxu0 0
        %1871 = vmatpush1.bf16.msra.mxu0 0
        %1872 = vmatprep.subr.bf16.mxu0 0
        %1873 = vmatpush1.bf16.msra.mxu0 0
        %1874 = vmatprep.subr.bf16.mxu0 0
        %1875 = vmatpush1.bf16.msra.mxu0 0
        %1876 = vmatprep.subr.bf16.mxu0 0
        %1877 = vmatpush1.bf16.msra.mxu0 0
        %1878 = vmatprep.subr.bf16.mxu0 0
        %1879 = vmatpush1.bf16.msra.mxu0 0
        %1880 = vmatprep.subr.bf16.mxu0 0
        %1881 = vmatpush1.bf16.msra.mxu0 0
        %1882 = vmatprep.mubr.bf16.mxu0 0
        %1883 = vmatmul.mubr.bf16.gmra.mrb[0].mxu0 %v1848
        %v1884 = vpop.f32.mrb[0].mxu0
        %v1885 = vadd.f32 0.0, %v1884
        %v1886 = vpop.f32.mrb[0].mxu0
        %v1887 = vpop.f32.mrb[0].mxu0
        %v1888 = vadd.f32 0.0, %v1887
        %v1889 = vpop.f32.mrb[0].mxu0
        %1890 = vdwg.mxu0
        %1892 = vrot.lane.b32.xlu0 %v1002, 96
        %v1893 = vpop.permute.xlu0 %1892
        %v1896 = vsel %vm1238, %v1793, 0
        %1898 = vmatprep.subr.bf16.mxu0 0
        %1899 = vmatpush1.bf16.msra.mxu0 %v1893
        %1900 = vmatprep.subr.bf16.mxu0 0
        %1901 = vmatpush1.bf16.msra.mxu0 0
        %1902 = vmatprep.subr.bf16.mxu0 0
        %1903 = vmatpush1.bf16.msra.mxu0 0
        %1904 = vmatprep.subr.bf16.mxu0 0
        %1905 = vmatpush1.bf16.msra.mxu0 0
        %1906 = vmatprep.subr.bf16.mxu0 0
        %1907 = vmatpush1.bf16.msra.mxu0 0
        %1908 = vmatprep.subr.bf16.mxu0 0
        %1909 = vmatpush1.bf16.msra.mxu0 0
        %1910 = vmatprep.subr.bf16.mxu0 0
        %1911 = vmatpush1.bf16.msra.mxu0 0
        %1912 = vmatprep.subr.bf16.mxu0 0
        %1913 = vmatpush1.bf16.msra.mxu0 0
        %1914 = vmatprep.subr.bf16.mxu0 0
        %1915 = vmatpush1.bf16.msra.mxu0 0
        %1916 = vmatprep.subr.bf16.mxu0 0
        %1917 = vmatpush1.bf16.msra.mxu0 0
        %1918 = vmatprep.subr.bf16.mxu0 0
        %1919 = vmatpush1.bf16.msra.mxu0 0
        %1920 = vmatprep.subr.bf16.mxu0 0
        %1921 = vmatpush1.bf16.msra.mxu0 0
        %1922 = vmatprep.subr.bf16.mxu0 0
        %1923 = vmatpush1.bf16.msra.mxu0 0
        %1924 = vmatprep.subr.bf16.mxu0 0
        %1925 = vmatpush1.bf16.msra.mxu0 0
        %1926 = vmatprep.subr.bf16.mxu0 0
        %1927 = vmatpush1.bf16.msra.mxu0 0
        %1928 = vmatprep.subr.bf16.mxu0 0
        %1929 = vmatpush1.bf16.msra.mxu0 0
        %1930 = vmatprep.mubr.bf16.mxu0 0
        %1931 = vmatmul.mubr.bf16.gmra.mrb[0].mxu0 %v1896
        %v1932 = vpop.f32.mrb[0].mxu0
        %v1933 = vadd.f32 0.0, %v1932
        %v1934 = vpop.f32.mrb[0].mxu0
        %v1935 = vpop.f32.mrb[0].mxu0
        %v1936 = vadd.f32 0.0, %v1935
        %v1937 = vpop.f32.mrb[0].mxu0
        %1938 = vdwg.mxu0
        %1940 = vrot.lane.b32.xlu0 %v1003, 96
        %v1941 = vpop.permute.xlu0 %1940
        %v1944 = vsel %vm1238, %v1794, 0
        %1946 = vmatprep.subr.bf16.mxu0 0
        %1947 = vmatpush1.bf16.msra.mxu0 %v1941
        %1948 = vmatprep.subr.bf16.mxu0 0
        %1949 = vmatpush1.bf16.msra.mxu0 0
        %1950 = vmatprep.subr.bf16.mxu0 0
        %1951 = vmatpush1.bf16.msra.mxu0 0
        %1952 = vmatprep.subr.bf16.mxu0 0
        %1953 = vmatpush1.bf16.msra.mxu0 0
        %1954 = vmatprep.subr.bf16.mxu0 0
        %1955 = vmatpush1.bf16.msra.mxu0 0
        %1956 = vmatprep.subr.bf16.mxu0 0
        %1957 = vmatpush1.bf16.msra.mxu0 0
        %1958 = vmatprep.subr.bf16.mxu0 0
        %1959 = vmatpush1.bf16.msra.mxu0 0
        %1960 = vmatprep.subr.bf16.mxu0 0
        %1961 = vmatpush1.bf16.msra.mxu0 0
        %1962 = vmatprep.subr.bf16.mxu0 0
        %1963 = vmatpush1.bf16.msra.mxu0 0
        %1964 = vmatprep.subr.bf16.mxu0 0
        %1965 = vmatpush1.bf16.msra.mxu0 0
        %1966 = vmatprep.subr.bf16.mxu0 0
        %1967 = vmatpush1.bf16.msra.mxu0 0
        %1968 = vmatprep.subr.bf16.mxu0 0
        %1969 = vmatpush1.bf16.msra.mxu0 0
        %1970 = vmatprep.subr.bf16.mxu0 0
        %1971 = vmatpush1.bf16.msra.mxu0 0
        %1972 = vmatprep.subr.bf16.mxu0 0
        %1973 = vmatpush1.bf16.msra.mxu0 0
        %1974 = vmatprep.subr.bf16.mxu0 0
        %1975 = vmatpush1.bf16.msra.mxu0 0
        %1976 = vmatprep.subr.bf16.mxu0 0
        %1977 = vmatpush1.bf16.msra.mxu0 0
        %1978 = vmatprep.mubr.bf16.mxu0 0
        %1979 = vmatmul.mubr.bf16.gmra.mrb[0].mxu0 %v1944
        %v1980 = vpop.f32.mrb[0].mxu0
        %v1981 = vadd.f32 0.0, %v1980
        %v1982 = vpop.f32.mrb[0].mxu0
        %v1983 = vpop.f32.mrb[0].mxu0
        %v1984 = vadd.f32 0.0, %v1983
        %v1985 = vpop.f32.mrb[0].mxu0
        %1986 = vdwg.mxu0
        %v1987 = vrcp.pop %v1769
        %v1988 = vrcp.pop %v1772
        %v1989 = vrcp.pop %v1775
        %v1990 = vrcp.pop %v1778
        %v1991 = vrcp.pop %v1781
        %v1992 = vrcp.pop %v1784
        %v1993 = vrcp.pop %v1787
        %v1994 = vrcp.pop %v1790
        %v1995 = vmul.f32 %v1837, %v1987
        %v1996 = vmul.f32 %v1840, %v1988
        %v1997 = vmul.f32 %v1885, %v1989
        %v1998 = vmul.f32 %v1888, %v1990
        %v1999 = vmul.f32 %v1933, %v1991
        %v2000 = vmul.f32 %v1936, %v1992
        %v2001 = vmul.f32 %v1981, %v1993
        %v2002 = vmul.f32 %v1984, %v1994
        %2003 = vrot.lane.b32.xlu0 %v992, 64
        %v2004 = vpop.permute.xlu0 %2003
        %2005 = vrot.lane.b32.xlu0 %v996, 64
        %v2006 = vpop.permute.xlu0 %2005
        %v2008 = vsel %vm1049, %v2004, 0
        %v2011 = vsel %vm1049, %v2006, 0
        %2013 = vmatprep.subr.bf16.mxu0 0
        %2014 = vmatpush1.bf16.xpose.msra.mxu0 %v2011
        %2015 = vmatprep.subr.bf16.mxu0 0
        %2016 = vmatpush1.bf16.xpose.msra.mxu0 0
        %2017 = vmatprep.subr.bf16.mxu0 0
        %2018 = vmatpush1.bf16.xpose.msra.mxu0 0
        %2019 = vmatprep.subr.bf16.mxu0 0
        %2020 = vmatpush1.bf16.xpose.msra.mxu0 0
        %2021 = vmatprep.subr.bf16.mxu0 0
        %2022 = vmatpush1.bf16.xpose.msra.mxu0 0
        %2023 = vmatprep.subr.bf16.mxu0 0
        %2024 = vmatpush1.bf16.xpose.msra.mxu0 0
        %2025 = vmatprep.subr.bf16.mxu0 0
        %2026 = vmatpush1.bf16.xpose.msra.mxu0 0
        %2027 = vmatprep.subr.bf16.mxu0 0
        %2028 = vmatpush1.bf16.xpose.msra.mxu0 0
        %2029 = vmatprep.subr.bf16.mxu0 0
        %2030 = vmatpush1.bf16.xpose.msra.mxu0 0
        %2031 = vmatprep.subr.bf16.mxu0 0
        %2032 = vmatpush1.bf16.xpose.msra.mxu0 0
        %2033 = vmatprep.subr.bf16.mxu0 0
        %2034 = vmatpush1.bf16.xpose.msra.mxu0 0
        %2035 = vmatprep.subr.bf16.mxu0 0
        %2036 = vmatpush1.bf16.xpose.msra.mxu0 0
        %2037 = vmatprep.subr.bf16.mxu0 0
        %2038 = vmatpush1.bf16.xpose.msra.mxu0 0
        %2039 = vmatprep.subr.bf16.mxu0 0
        %2040 = vmatpush1.bf16.xpose.msra.mxu0 0
        %2041 = vmatprep.subr.bf16.mxu0 0
        %2042 = vmatpush1.bf16.xpose.msra.mxu0 0
        %2043 = vmatprep.subr.bf16.mxu0 0
        %2044 = vmatpush1.bf16.xpose.msra.mxu0 0
        %2045 = vmatprep.mubr.bf16.mxu0 0
        %2046 = vmatmul.mubr.bf16.gmra.mrb[0].mxu0 %v2008
        %v2047 = vpop.f32.mrb[0].mxu0
        %v2048 = vadd.f32 %v1047, %v2047
        %v2049 = vpop.f32.mrb[0].mxu0
        %v2050 = vpop.f32.mrb[0].mxu0
        %v2051 = vadd.f32 %v1048, %v2050
        %v2052 = vpop.f32.mrb[0].mxu0
        %2053 = vdwg.mxu0
        %2054 = vrot.lane.b32.xlu0 %v993, 64
        %v2055 = vpop.permute.xlu0 %2054
        %2056 = vrot.lane.b32.xlu0 %v997, 64
        %v2057 = vpop.permute.xlu0 %2056
        %v2059 = vsel %vm1049, %v2055, 0
        %v2062 = vsel %vm1049, %v2057, 0
        %2064 = vmatprep.subr.bf16.mxu0 0
        %2065 = vmatpush1.bf16.xpose.msra.mxu0 %v2062
        %2066 = vmatprep.subr.bf16.mxu0 0
        %2067 = vmatpush1.bf16.xpose.msra.mxu0 0
        %2068 = vmatprep.subr.bf16.mxu0 0
        %2069 = vmatpush1.bf16.xpose.msra.mxu0 0
        %2070 = vmatprep.subr.bf16.mxu0 0
        %2071 = vmatpush1.bf16.xpose.msra.mxu0 0
        %2072 = vmatprep.subr.bf16.mxu0 0
        %2073 = vmatpush1.bf16.xpose.msra.mxu0 0
        %2074 = vmatprep.subr.bf16.mxu0 0
        %2075 = vmatpush1.bf16.xpose.msra.mxu0 0
        %2076 = vmatprep.subr.bf16.mxu0 0
        %2077 = vmatpush1.bf16.xpose.msra.mxu0 0
        %2078 = vmatprep.subr.bf16.mxu0 0
        %2079 = vmatpush1.bf16.xpose.msra.mxu0 0
        %2080 = vmatprep.subr.bf16.mxu0 0
        %2081 = vmatpush1.bf16.xpose.msra.mxu0 0
        %2082 = vmatprep.subr.bf16.mxu0 0
        %2083 = vmatpush1.bf16.xpose.msra.mxu0 0
        %2084 = vmatprep.subr.bf16.mxu0 0
        %2085 = vmatpush1.bf16.xpose.msra.mxu0 0
        %2086 = vmatprep.subr.bf16.mxu0 0
        %2087 = vmatpush1.bf16.xpose.msra.mxu0 0
        %2088 = vmatprep.subr.bf16.mxu0 0
        %2089 = vmatpush1.bf16.xpose.msra.mxu0 0
        %2090 = vmatprep.subr.bf16.mxu0 0
        %2091 = vmatpush1.bf16.xpose.msra.mxu0 0
        %2092 = vmatprep.subr.bf16.mxu0 0
        %2093 = vmatpush1.bf16.xpose.msra.mxu0 0
        %2094 = vmatprep.subr.bf16.mxu0 0
        %2095 = vmatpush1.bf16.xpose.msra.mxu0 0
        %2096 = vmatprep.mubr.bf16.mxu0 0
        %2097 = vmatmul.mubr.bf16.gmra.mrb[0].mxu0 %v2059
        %v2098 = vpop.f32.mrb[0].mxu0
        %v2099 = vadd.f32 %v1047, %v2098
        %v2100 = vpop.f32.mrb[0].mxu0
        %v2101 = vpop.f32.mrb[0].mxu0
        %v2102 = vadd.f32 %v1048, %v2101
        %v2103 = vpop.f32.mrb[0].mxu0
        %2104 = vdwg.mxu0
        %2105 = vrot.lane.b32.xlu0 %v994, 64
        %v2106 = vpop.permute.xlu0 %2105
        %2107 = vrot.lane.b32.xlu0 %v998, 64
        %v2108 = vpop.permute.xlu0 %2107
        %v2110 = vsel %vm1049, %v2106, 0
        %v2113 = vsel %vm1049, %v2108, 0
        %2115 = vmatprep.subr.bf16.mxu0 0
        %2116 = vmatpush1.bf16.xpose.msra.mxu0 %v2113
        %2117 = vmatprep.subr.bf16.mxu0 0
        %2118 = vmatpush1.bf16.xpose.msra.mxu0 0
        %2119 = vmatprep.subr.bf16.mxu0 0
        %2120 = vmatpush1.bf16.xpose.msra.mxu0 0
        %2121 = vmatprep.subr.bf16.mxu0 0
        %2122 = vmatpush1.bf16.xpose.msra.mxu0 0
        %2123 = vmatprep.subr.bf16.mxu0 0
        %2124 = vmatpush1.bf16.xpose.msra.mxu0 0
        %2125 = vmatprep.subr.bf16.mxu0 0
        %2126 = vmatpush1.bf16.xpose.msra.mxu0 0
        %2127 = vmatprep.subr.bf16.mxu0 0
        %2128 = vmatpush1.bf16.xpose.msra.mxu0 0
        %2129 = vmatprep.subr.bf16.mxu0 0
        %2130 = vmatpush1.bf16.xpose.msra.mxu0 0
        %2131 = vmatprep.subr.bf16.mxu0 0
        %2132 = vmatpush1.bf16.xpose.msra.mxu0 0
        %2133 = vmatprep.subr.bf16.mxu0 0
        %2134 = vmatpush1.bf16.xpose.msra.mxu0 0
        %2135 = vmatprep.subr.bf16.mxu0 0
        %2136 = vmatpush1.bf16.xpose.msra.mxu0 0
        %2137 = vmatprep.subr.bf16.mxu0 0
        %2138 = vmatpush1.bf16.xpose.msra.mxu0 0
        %2139 = vmatprep.subr.bf16.mxu0 0
        %2140 = vmatpush1.bf16.xpose.msra.mxu0 0
        %2141 = vmatprep.subr.bf16.mxu0 0
        %2142 = vmatpush1.bf16.xpose.msra.mxu0 0
        %2143 = vmatprep.subr.bf16.mxu0 0
        %2144 = vmatpush1.bf16.xpose.msra.mxu0 0
        %2145 = vmatprep.subr.bf16.mxu0 0
        %2146 = vmatpush1.bf16.xpose.msra.mxu0 0
        %2147 = vmatprep.mubr.bf16.mxu0 0
        %2148 = vmatmul.mubr.bf16.gmra.mrb[0].mxu0 %v2110
        %v2149 = vpop.f32.mrb[0].mxu0
        %v2150 = vadd.f32 %v1047, %v2149
        %v2151 = vpop.f32.mrb[0].mxu0
        %v2152 = vpop.f32.mrb[0].mxu0
        %v2153 = vadd.f32 %v1048, %v2152
        %v2154 = vpop.f32.mrb[0].mxu0
        %2155 = vdwg.mxu0
        %2156 = vrot.lane.b32.xlu0 %v995, 64
        %v2157 = vpop.permute.xlu0 %2156
        %2158 = vrot.lane.b32.xlu0 %v999, 64
        %v2159 = vpop.permute.xlu0 %2158
        %v2161 = vsel %vm1049, %v2157, 0
        %v2164 = vsel %vm1049, %v2159, 0
        %2166 = vmatprep.subr.bf16.mxu0 0
        %2167 = vmatpush1.bf16.xpose.msra.mxu0 %v2164
        %2168 = vmatprep.subr.bf16.mxu0 0
        %2169 = vmatpush1.bf16.xpose.msra.mxu0 0
        %2170 = vmatprep.subr.bf16.mxu0 0
        %2171 = vmatpush1.bf16.xpose.msra.mxu0 0
        %2172 = vmatprep.subr.bf16.mxu0 0
        %2173 = vmatpush1.bf16.xpose.msra.mxu0 0
        %2174 = vmatprep.subr.bf16.mxu0 0
        %2175 = vmatpush1.bf16.xpose.msra.mxu0 0
        %2176 = vmatprep.subr.bf16.mxu0 0
        %2177 = vmatpush1.bf16.xpose.msra.mxu0 0
        %2178 = vmatprep.subr.bf16.mxu0 0
        %2179 = vmatpush1.bf16.xpose.msra.mxu0 0
        %2180 = vmatprep.subr.bf16.mxu0 0
        %2181 = vmatpush1.bf16.xpose.msra.mxu0 0
        %2182 = vmatprep.subr.bf16.mxu0 0
        %2183 = vmatpush1.bf16.xpose.msra.mxu0 0
        %2184 = vmatprep.subr.bf16.mxu0 0
        %2185 = vmatpush1.bf16.xpose.msra.mxu0 0
        %2186 = vmatprep.subr.bf16.mxu0 0
        %2187 = vmatpush1.bf16.xpose.msra.mxu0 0
        %2188 = vmatprep.subr.bf16.mxu0 0
        %2189 = vmatpush1.bf16.xpose.msra.mxu0 0
        %2190 = vmatprep.subr.bf16.mxu0 0
        %2191 = vmatpush1.bf16.xpose.msra.mxu0 0
        %2192 = vmatprep.subr.bf16.mxu0 0
        %2193 = vmatpush1.bf16.xpose.msra.mxu0 0
        %2194 = vmatprep.subr.bf16.mxu0 0
        %2195 = vmatpush1.bf16.xpose.msra.mxu0 0
        %2196 = vmatprep.subr.bf16.mxu0 0
        %2197 = vmatpush1.bf16.xpose.msra.mxu0 0
        %2198 = vmatprep.mubr.bf16.mxu0 0
        %2199 = vmatmul.mubr.bf16.gmra.mrb[0].mxu0 %v2161
        %v2200 = vpop.f32.mrb[0].mxu0
        %v2201 = vadd.f32 %v1047, %v2200
        %v2202 = vpop.f32.mrb[0].mxu0
        %v2203 = vpop.f32.mrb[0].mxu0
        %v2204 = vadd.f32 %v1048, %v2203
        %v2205 = vpop.f32.mrb[0].mxu0
        %2206 = vdwg.mxu0
        %v2207 = vsel %vm1238, %v2048, -inf
        %2208 = vmax.xlane.f32.xlu0 %v2207
        %v2209 = vpop.xlane.xlu0 %2208
        %v2210 = vsel %vm1238, %v2051, -inf
        %2211 = vmax.xlane.f32.xlu0 %v2210
        %v2212 = vpop.xlane.xlu0 %2211
        %v2213 = vsel %vm1238, %v2099, -inf
        %2214 = vmax.xlane.f32.xlu0 %v2213
        %v2215 = vpop.xlane.xlu0 %2214
        %v2216 = vsel %vm1238, %v2102, -inf
        %2217 = vmax.xlane.f32.xlu0 %v2216
        %v2218 = vpop.xlane.xlu0 %2217
        %v2219 = vsel %vm1238, %v2150, -inf
        %2220 = vmax.xlane.f32.xlu0 %v2219
        %v2221 = vpop.xlane.xlu0 %2220
        %v2222 = vsel %vm1238, %v2153, -inf
        %2223 = vmax.xlane.f32.xlu0 %v2222
        %v2224 = vpop.xlane.xlu0 %2223
        %v2225 = vsel %vm1238, %v2201, -inf
        %2226 = vmax.xlane.f32.xlu0 %v2225
        %v2227 = vpop.xlane.xlu0 %2226
        %v2228 = vsel %vm1238, %v2204, -inf
        %2229 = vmax.xlane.f32.xlu0 %v2228
        %v2230 = vpop.xlane.xlu0 %2229
        %v2231 = vsub.f32 %v2048, %v2209
        %v2232 = vsub.f32 %v2051, %v2212
        %v2233 = vsub.f32 %v2099, %v2215
        %v2234 = vsub.f32 %v2102, %v2218
        %v2235 = vsub.f32 %v2150, %v2221
        %v2236 = vsub.f32 %v2153, %v2224
        %v2237 = vsub.f32 %v2201, %v2227
        %v2238 = vsub.f32 %v2204, %v2230
        %v2239 = vmul.f32 %v2231, 1.442695
        %v2240 = vpow.pop %v2239
        %v2241 = vmul.f32 %v2232, 1.442695
        %v2242 = vpow.pop %v2241
        %v2243 = vmul.f32 %v2233, 1.442695
        %v2244 = vpow.pop %v2243
        %v2245 = vmul.f32 %v2234, 1.442695
        %v2246 = vpow.pop %v2245
        %v2247 = vmul.f32 %v2235, 1.442695
        %v2248 = vpow.pop %v2247
        %v2249 = vmul.f32 %v2236, 1.442695
        %v2250 = vpow.pop %v2249
        %v2251 = vmul.f32 %v2237, 1.442695
        %v2252 = vpow.pop %v2251
        %v2253 = vmul.f32 %v2238, 1.442695
        %v2254 = vpow.pop %v2253
        %v2255 = vsel %vm1238, %v2240, 0.0
        %2256 = vadd.xlane.f32.xlu0 %v2255
        %v2257 = vpop.xlane.xlu0 %2256
        %v2258 = vsel %vm1238, %v2242, 0.0
        %2259 = vadd.xlane.f32.xlu0 %v2258
        %v2260 = vpop.xlane.xlu0 %2259
        %v2261 = vsel %vm1238, %v2244, 0.0
        %2262 = vadd.xlane.f32.xlu0 %v2261
        %v2263 = vpop.xlane.xlu0 %2262
        %v2264 = vsel %vm1238, %v2246, 0.0
        %2265 = vadd.xlane.f32.xlu0 %v2264
        %v2266 = vpop.xlane.xlu0 %2265
        %v2267 = vsel %vm1238, %v2248, 0.0
        %2268 = vadd.xlane.f32.xlu0 %v2267
        %v2269 = vpop.xlane.xlu0 %2268
        %v2270 = vsel %vm1238, %v2250, 0.0
        %2271 = vadd.xlane.f32.xlu0 %v2270
        %v2272 = vpop.xlane.xlu0 %2271
        %v2273 = vsel %vm1238, %v2252, 0.0
        %2274 = vadd.xlane.f32.xlu0 %v2273
        %v2275 = vpop.xlane.xlu0 %2274
        %v2276 = vsel %vm1238, %v2254, 0.0
        %2277 = vadd.xlane.f32.xlu0 %v2276
        %v2278 = vpop.xlane.xlu0 %2277
        %v2279 = vpack.c.bf16 %v2242, %v2240
        %v2280 = vpack.c.bf16 %v2246, %v2244
        %v2281 = vpack.c.bf16 %v2250, %v2248
        %v2282 = vpack.c.bf16 %v2254, %v2252
        %2283 = vrot.lane.b32.xlu0 %v1000, 64
        %v2284 = vpop.permute.xlu0 %2283
        %v2287 = vsel %vm1238, %v2279, 0
        %2289 = vmatprep.subr.bf16.mxu0 0
        %2290 = vmatpush1.bf16.msra.mxu0 %v2284
        %2291 = vmatprep.subr.bf16.mxu0 0
        %2292 = vmatpush1.bf16.msra.mxu0 0
        %2293 = vmatprep.subr.bf16.mxu0 0
        %2294 = vmatpush1.bf16.msra.mxu0 0
        %2295 = vmatprep.subr.bf16.mxu0 0
        %2296 = vmatpush1.bf16.msra.mxu0 0
        %2297 = vmatprep.subr.bf16.mxu0 0
        %2298 = vmatpush1.bf16.msra.mxu0 0
        %2299 = vmatprep.subr.bf16.mxu0 0
        %2300 = vmatpush1.bf16.msra.mxu0 0
        %2301 = vmatprep.subr.bf16.mxu0 0
        %2302 = vmatpush1.bf16.msra.mxu0 0
        %2303 = vmatprep.subr.bf16.mxu0 0
        %2304 = vmatpush1.bf16.msra.mxu0 0
        %2305 = vmatprep.subr.bf16.mxu0 0
        %2306 = vmatpush1.bf16.msra.mxu0 0
        %2307 = vmatprep.subr.bf16.mxu0 0
        %2308 = vmatpush1.bf16.msra.mxu0 0
        %2309 = vmatprep.subr.bf16.mxu0 0
        %2310 = vmatpush1.bf16.msra.mxu0 0
        %2311 = vmatprep.subr.bf16.mxu0 0
        %2312 = vmatpush1.bf16.msra.mxu0 0
        %2313 = vmatprep.subr.bf16.mxu0 0
        %2314 = vmatpush1.bf16.msra.mxu0 0
        %2315 = vmatprep.subr.bf16.mxu0 0
        %2316 = vmatpush1.bf16.msra.mxu0 0
        %2317 = vmatprep.subr.bf16.mxu0 0
        %2318 = vmatpush1.bf16.msra.mxu0 0
        %2319 = vmatprep.subr.bf16.mxu0 0
        %2320 = vmatpush1.bf16.msra.mxu0 0
        %2321 = vmatprep.mubr.bf16.mxu0 0
        %2322 = vmatmul.mubr.bf16.gmra.mrb[0].mxu0 %v2287
        %v2323 = vpop.f32.mrb[0].mxu0
        %v2324 = vadd.f32 0.0, %v2323
        %v2325 = vpop.f32.mrb[0].mxu0
        %v2326 = vpop.f32.mrb[0].mxu0
        %v2327 = vadd.f32 0.0, %v2326
        %v2328 = vpop.f32.mrb[0].mxu0
        %2329 = vdwg.mxu0
        %2330 = vrot.lane.b32.xlu0 %v1001, 64
        %v2331 = vpop.permute.xlu0 %2330
        %v2334 = vsel %vm1238, %v2280, 0
        %2336 = vmatprep.subr.bf16.mxu0 0
        %2337 = vmatpush1.bf16.msra.mxu0 %v2331
        %2338 = vmatprep.subr.bf16.mxu0 0
        %2339 = vmatpush1.bf16.msra.mxu0 0
        %2340 = vmatprep.subr.bf16.mxu0 0
        %2341 = vmatpush1.bf16.msra.mxu0 0
        %2342 = vmatprep.subr.bf16.mxu0 0
        %2343 = vmatpush1.bf16.msra.mxu0 0
        %2344 = vmatprep.subr.bf16.mxu0 0
        %2345 = vmatpush1.bf16.msra.mxu0 0
        %2346 = vmatprep.subr.bf16.mxu0 0
        %2347 = vmatpush1.bf16.msra.mxu0 0
        %2348 = vmatprep.subr.bf16.mxu0 0
        %2349 = vmatpush1.bf16.msra.mxu0 0
        %2350 = vmatprep.subr.bf16.mxu0 0
        %2351 = vmatpush1.bf16.msra.mxu0 0
        %2352 = vmatprep.subr.bf16.mxu0 0
        %2353 = vmatpush1.bf16.msra.mxu0 0
        %2354 = vmatprep.subr.bf16.mxu0 0
        %2355 = vmatpush1.bf16.msra.mxu0 0
        %2356 = vmatprep.subr.bf16.mxu0 0
        %2357 = vmatpush1.bf16.msra.mxu0 0
        %2358 = vmatprep.subr.bf16.mxu0 0
        %2359 = vmatpush1.bf16.msra.mxu0 0
        %2360 = vmatprep.subr.bf16.mxu0 0
        %2361 = vmatpush1.bf16.msra.mxu0 0
        %2362 = vmatprep.subr.bf16.mxu0 0
        %2363 = vmatpush1.bf16.msra.mxu0 0
        %2364 = vmatprep.subr.bf16.mxu0 0
        %2365 = vmatpush1.bf16.msra.mxu0 0
        %2366 = vmatprep.subr.bf16.mxu0 0
        %2367 = vmatpush1.bf16.msra.mxu0 0
        %2368 = vmatprep.mubr.bf16.mxu0 0
        %2369 = vmatmul.mubr.bf16.gmra.mrb[0].mxu0 %v2334
        %v2370 = vpop.f32.mrb[0].mxu0
        %v2371 = vadd.f32 0.0, %v2370
        %v2372 = vpop.f32.mrb[0].mxu0
        %v2373 = vpop.f32.mrb[0].mxu0
        %v2374 = vadd.f32 0.0, %v2373
        %v2375 = vpop.f32.mrb[0].mxu0
        %2376 = vdwg.mxu0
        %2377 = vrot.lane.b32.xlu0 %v1002, 64
        %v2378 = vpop.permute.xlu0 %2377
        %v2381 = vsel %vm1238, %v2281, 0
        %2383 = vmatprep.subr.bf16.mxu0 0
        %2384 = vmatpush1.bf16.msra.mxu0 %v2378
        %2385 = vmatprep.subr.bf16.mxu0 0
        %2386 = vmatpush1.bf16.msra.mxu0 0
        %2387 = vmatprep.subr.bf16.mxu0 0
        %2388 = vmatpush1.bf16.msra.mxu0 0
        %2389 = vmatprep.subr.bf16.mxu0 0
        %2390 = vmatpush1.bf16.msra.mxu0 0
        %2391 = vmatprep.subr.bf16.mxu0 0
        %2392 = vmatpush1.bf16.msra.mxu0 0
        %2393 = vmatprep.subr.bf16.mxu0 0
        %2394 = vmatpush1.bf16.msra.mxu0 0
        %2395 = vmatprep.subr.bf16.mxu0 0
        %2396 = vmatpush1.bf16.msra.mxu0 0
        %2397 = vmatprep.subr.bf16.mxu0 0
        %2398 = vmatpush1.bf16.msra.mxu0 0
        %2399 = vmatprep.subr.bf16.mxu0 0
        %2400 = vmatpush1.bf16.msra.mxu0 0
        %2401 = vmatprep.subr.bf16.mxu0 0
        %2402 = vmatpush1.bf16.msra.mxu0 0
        %2403 = vmatprep.subr.bf16.mxu0 0
        %2404 = vmatpush1.bf16.msra.mxu0 0
        %2405 = vmatprep.subr.bf16.mxu0 0
        %2406 = vmatpush1.bf16.msra.mxu0 0
        %2407 = vmatprep.subr.bf16.mxu0 0
        %2408 = vmatpush1.bf16.msra.mxu0 0
        %2409 = vmatprep.subr.bf16.mxu0 0
        %2410 = vmatpush1.bf16.msra.mxu0 0
        %2411 = vmatprep.subr.bf16.mxu0 0
        %2412 = vmatpush1.bf16.msra.mxu0 0
        %2413 = vmatprep.subr.bf16.mxu0 0
        %2414 = vmatpush1.bf16.msra.mxu0 0
        %2415 = vmatprep.mubr.bf16.mxu0 0
        %2416 = vmatmul.mubr.bf16.gmra.mrb[0].mxu0 %v2381
        %v2417 = vpop.f32.mrb[0].mxu0
        %v2418 = vadd.f32 0.0, %v2417
        %v2419 = vpop.f32.mrb[0].mxu0
        %v2420 = vpop.f32.mrb[0].mxu0
        %v2421 = vadd.f32 0.0, %v2420
        %v2422 = vpop.f32.mrb[0].mxu0
        %2423 = vdwg.mxu0
        %2424 = vrot.lane.b32.xlu0 %v1003, 64
        %v2425 = vpop.permute.xlu0 %2424
        %v2428 = vsel %vm1238, %v2282, 0
        %2430 = vmatprep.subr.bf16.mxu0 0
        %2431 = vmatpush1.bf16.msra.mxu0 %v2425
        %2432 = vmatprep.subr.bf16.mxu0 0
        %2433 = vmatpush1.bf16.msra.mxu0 0
        %2434 = vmatprep.subr.bf16.mxu0 0
        %2435 = vmatpush1.bf16.msra.mxu0 0
        %2436 = vmatprep.subr.bf16.mxu0 0
        %2437 = vmatpush1.bf16.msra.mxu0 0
        %2438 = vmatprep.subr.bf16.mxu0 0
        %2439 = vmatpush1.bf16.msra.mxu0 0
        %2440 = vmatprep.subr.bf16.mxu0 0
        %2441 = vmatpush1.bf16.msra.mxu0 0
        %2442 = vmatprep.subr.bf16.mxu0 0
        %2443 = vmatpush1.bf16.msra.mxu0 0
        %2444 = vmatprep.subr.bf16.mxu0 0
        %2445 = vmatpush1.bf16.msra.mxu0 0
        %2446 = vmatprep.subr.bf16.mxu0 0
        %2447 = vmatpush1.bf16.msra.mxu0 0
        %2448 = vmatprep.subr.bf16.mxu0 0
        %2449 = vmatpush1.bf16.msra.mxu0 0
        %2450 = vmatprep.subr.bf16.mxu0 0
        %2451 = vmatpush1.bf16.msra.mxu0 0
        %2452 = vmatprep.subr.bf16.mxu0 0
        %2453 = vmatpush1.bf16.msra.mxu0 0
        %2454 = vmatprep.subr.bf16.mxu0 0
        %2455 = vmatpush1.bf16.msra.mxu0 0
        %2456 = vmatprep.subr.bf16.mxu0 0
        %2457 = vmatpush1.bf16.msra.mxu0 0
        %2458 = vmatprep.subr.bf16.mxu0 0
        %2459 = vmatpush1.bf16.msra.mxu0 0
        %2460 = vmatprep.subr.bf16.mxu0 0
        %2461 = vmatpush1.bf16.msra.mxu0 0
        %2462 = vmatprep.mubr.bf16.mxu0 0
        %2463 = vmatmul.mubr.bf16.gmra.mrb[0].mxu0 %v2428
        %v2464 = vpop.f32.mrb[0].mxu0
        %v2465 = vadd.f32 0.0, %v2464
        %v2466 = vpop.f32.mrb[0].mxu0
        %v2467 = vpop.f32.mrb[0].mxu0
        %v2468 = vadd.f32 0.0, %v2467
        %v2469 = vpop.f32.mrb[0].mxu0
        %2470 = vdwg.mxu0
        %v2471 = vrcp.pop %v2257
        %v2472 = vrcp.pop %v2260
        %v2473 = vrcp.pop %v2263
        %v2474 = vrcp.pop %v2266
        %v2475 = vrcp.pop %v2269
        %v2476 = vrcp.pop %v2272
        %v2477 = vrcp.pop %v2275
        %v2478 = vrcp.pop %v2278
        %v2479 = vmul.f32 %v2324, %v2471
        %v2480 = vmul.f32 %v2327, %v2472
        %v2481 = vmul.f32 %v2371, %v2473
        %v2482 = vmul.f32 %v2374, %v2474
        %v2483 = vmul.f32 %v2418, %v2475
        %v2484 = vmul.f32 %v2421, %v2476
        %v2485 = vmul.f32 %v2465, %v2477
        %v2486 = vmul.f32 %v2468, %v2478
        %2487 = vrot.lane.b32.xlu0 %v992, 32
        %v2488 = vpop.permute.xlu0 %2487
        %2489 = vrot.lane.b32.xlu0 %v996, 32
        %v2490 = vpop.permute.xlu0 %2489
        %v2492 = vsel %vm1049, %v2488, 0
        %v2495 = vsel %vm1049, %v2490, 0
        %2497 = vmatprep.subr.bf16.mxu0 0
        %2498 = vmatpush1.bf16.xpose.msra.mxu0 %v2495
        %2499 = vmatprep.subr.bf16.mxu0 0
        %2500 = vmatpush1.bf16.xpose.msra.mxu0 0
        %2501 = vmatprep.subr.bf16.mxu0 0
        %2502 = vmatpush1.bf16.xpose.msra.mxu0 0
        %2503 = vmatprep.subr.bf16.mxu0 0
        %2504 = vmatpush1.bf16.xpose.msra.mxu0 0
        %2505 = vmatprep.subr.bf16.mxu0 0
        %2506 = vmatpush1.bf16.xpose.msra.mxu0 0
        %2507 = vmatprep.subr.bf16.mxu0 0
        %2508 = vmatpush1.bf16.xpose.msra.mxu0 0
        %2509 = vmatprep.subr.bf16.mxu0 0
        %2510 = vmatpush1.bf16.xpose.msra.mxu0 0
        %2511 = vmatprep.subr.bf16.mxu0 0
        %2512 = vmatpush1.bf16.xpose.msra.mxu0 0
        %2513 = vmatprep.subr.bf16.mxu0 0
        %2514 = vmatpush1.bf16.xpose.msra.mxu0 0
        %2515 = vmatprep.subr.bf16.mxu0 0
        %2516 = vmatpush1.bf16.xpose.msra.mxu0 0
        %2517 = vmatprep.subr.bf16.mxu0 0
        %2518 = vmatpush1.bf16.xpose.msra.mxu0 0
        %2519 = vmatprep.subr.bf16.mxu0 0
        %2520 = vmatpush1.bf16.xpose.msra.mxu0 0
        %2521 = vmatprep.subr.bf16.mxu0 0
        %2522 = vmatpush1.bf16.xpose.msra.mxu0 0
        %2523 = vmatprep.subr.bf16.mxu0 0
        %2524 = vmatpush1.bf16.xpose.msra.mxu0 0
        %2525 = vmatprep.subr.bf16.mxu0 0
        %2526 = vmatpush1.bf16.xpose.msra.mxu0 0
        %2527 = vmatprep.subr.bf16.mxu0 0
        %2528 = vmatpush1.bf16.xpose.msra.mxu0 0
        %2529 = vmatprep.mubr.bf16.mxu0 0
        %2530 = vmatmul.mubr.bf16.gmra.mrb[0].mxu0 %v2492
        %v2531 = vpop.f32.mrb[0].mxu0
        %v2532 = vadd.f32 %v1047, %v2531
        %v2533 = vpop.f32.mrb[0].mxu0
        %v2534 = vpop.f32.mrb[0].mxu0
        %v2535 = vadd.f32 %v1048, %v2534
        %v2536 = vpop.f32.mrb[0].mxu0
        %2537 = vdwg.mxu0
        %2538 = vrot.lane.b32.xlu0 %v993, 32
        %v2539 = vpop.permute.xlu0 %2538
        %2540 = vrot.lane.b32.xlu0 %v997, 32
        %v2541 = vpop.permute.xlu0 %2540
        %v2543 = vsel %vm1049, %v2539, 0
        %v2546 = vsel %vm1049, %v2541, 0
        %2548 = vmatprep.subr.bf16.mxu0 0
        %2549 = vmatpush1.bf16.xpose.msra.mxu0 %v2546
        %2550 = vmatprep.subr.bf16.mxu0 0
        %2551 = vmatpush1.bf16.xpose.msra.mxu0 0
        %2552 = vmatprep.subr.bf16.mxu0 0
        %2553 = vmatpush1.bf16.xpose.msra.mxu0 0
        %2554 = vmatprep.subr.bf16.mxu0 0
        %2555 = vmatpush1.bf16.xpose.msra.mxu0 0
        %2556 = vmatprep.subr.bf16.mxu0 0
        %2557 = vmatpush1.bf16.xpose.msra.mxu0 0
        %2558 = vmatprep.subr.bf16.mxu0 0
        %2559 = vmatpush1.bf16.xpose.msra.mxu0 0
        %2560 = vmatprep.subr.bf16.mxu0 0
        %2561 = vmatpush1.bf16.xpose.msra.mxu0 0
        %2562 = vmatprep.subr.bf16.mxu0 0
        %2563 = vmatpush1.bf16.xpose.msra.mxu0 0
        %2564 = vmatprep.subr.bf16.mxu0 0
        %2565 = vmatpush1.bf16.xpose.msra.mxu0 0
        %2566 = vmatprep.subr.bf16.mxu0 0
        %2567 = vmatpush1.bf16.xpose.msra.mxu0 0
        %2568 = vmatprep.subr.bf16.mxu0 0
        %2569 = vmatpush1.bf16.xpose.msra.mxu0 0
        %2570 = vmatprep.subr.bf16.mxu0 0
        %2571 = vmatpush1.bf16.xpose.msra.mxu0 0
        %2572 = vmatprep.subr.bf16.mxu0 0
        %2573 = vmatpush1.bf16.xpose.msra.mxu0 0
        %2574 = vmatprep.subr.bf16.mxu0 0
        %2575 = vmatpush1.bf16.xpose.msra.mxu0 0
        %2576 = vmatprep.subr.bf16.mxu0 0
        %2577 = vmatpush1.bf16.xpose.msra.mxu0 0
        %2578 = vmatprep.subr.bf16.mxu0 0
        %2579 = vmatpush1.bf16.xpose.msra.mxu0 0
        %2580 = vmatprep.mubr.bf16.mxu0 0
        %2581 = vmatmul.mubr.bf16.gmra.mrb[0].mxu0 %v2543
        %v2582 = vpop.f32.mrb[0].mxu0
        %v2583 = vadd.f32 %v1047, %v2582
        %v2584 = vpop.f32.mrb[0].mxu0
        %v2585 = vpop.f32.mrb[0].mxu0
        %v2586 = vadd.f32 %v1048, %v2585
        %v2587 = vpop.f32.mrb[0].mxu0
        %2588 = vdwg.mxu0
        %2589 = vrot.lane.b32.xlu0 %v994, 32
        %v2590 = vpop.permute.xlu0 %2589
        %2591 = vrot.lane.b32.xlu0 %v998, 32
        %v2592 = vpop.permute.xlu0 %2591
        %v2594 = vsel %vm1049, %v2590, 0
        %v2597 = vsel %vm1049, %v2592, 0
        %2599 = vmatprep.subr.bf16.mxu0 0
        %2600 = vmatpush1.bf16.xpose.msra.mxu0 %v2597
        %2601 = vmatprep.subr.bf16.mxu0 0
        %2602 = vmatpush1.bf16.xpose.msra.mxu0 0
        %2603 = vmatprep.subr.bf16.mxu0 0
        %2604 = vmatpush1.bf16.xpose.msra.mxu0 0
        %2605 = vmatprep.subr.bf16.mxu0 0
        %2606 = vmatpush1.bf16.xpose.msra.mxu0 0
        %2607 = vmatprep.subr.bf16.mxu0 0
        %2608 = vmatpush1.bf16.xpose.msra.mxu0 0
        %2609 = vmatprep.subr.bf16.mxu0 0
        %2610 = vmatpush1.bf16.xpose.msra.mxu0 0
        %2611 = vmatprep.subr.bf16.mxu0 0
        %2612 = vmatpush1.bf16.xpose.msra.mxu0 0
        %2613 = vmatprep.subr.bf16.mxu0 0
        %2614 = vmatpush1.bf16.xpose.msra.mxu0 0
        %2615 = vmatprep.subr.bf16.mxu0 0
        %2616 = vmatpush1.bf16.xpose.msra.mxu0 0
        %2617 = vmatprep.subr.bf16.mxu0 0
        %2618 = vmatpush1.bf16.xpose.msra.mxu0 0
        %2619 = vmatprep.subr.bf16.mxu0 0
        %2620 = vmatpush1.bf16.xpose.msra.mxu0 0
        %2621 = vmatprep.subr.bf16.mxu0 0
        %2622 = vmatpush1.bf16.xpose.msra.mxu0 0
        %2623 = vmatprep.subr.bf16.mxu0 0
        %2624 = vmatpush1.bf16.xpose.msra.mxu0 0
        %2625 = vmatprep.subr.bf16.mxu0 0
        %2626 = vmatpush1.bf16.xpose.msra.mxu0 0
        %2627 = vmatprep.subr.bf16.mxu0 0
        %2628 = vmatpush1.bf16.xpose.msra.mxu0 0
        %2629 = vmatprep.subr.bf16.mxu0 0
        %2630 = vmatpush1.bf16.xpose.msra.mxu0 0
        %2631 = vmatprep.mubr.bf16.mxu0 0
        %2632 = vmatmul.mubr.bf16.gmra.mrb[0].mxu0 %v2594
        %v2633 = vpop.f32.mrb[0].mxu0
        %v2634 = vadd.f32 %v1047, %v2633
        %v2635 = vpop.f32.mrb[0].mxu0
        %v2636 = vpop.f32.mrb[0].mxu0
        %v2637 = vadd.f32 %v1048, %v2636
        %v2638 = vpop.f32.mrb[0].mxu0
        %2639 = vdwg.mxu0
        %2640 = vrot.lane.b32.xlu0 %v995, 32
        %v2641 = vpop.permute.xlu0 %2640
        %2642 = vrot.lane.b32.xlu0 %v999, 32
        %v2643 = vpop.permute.xlu0 %2642
        %v2645 = vsel %vm1049, %v2641, 0
        %v2648 = vsel %vm1049, %v2643, 0
        %2650 = vmatprep.subr.bf16.mxu0 0
        %2651 = vmatpush1.bf16.xpose.msra.mxu0 %v2648
        %2652 = vmatprep.subr.bf16.mxu0 0
        %2653 = vmatpush1.bf16.xpose.msra.mxu0 0
        %2654 = vmatprep.subr.bf16.mxu0 0
        %2655 = vmatpush1.bf16.xpose.msra.mxu0 0
        %2656 = vmatprep.subr.bf16.mxu0 0
        %2657 = vmatpush1.bf16.xpose.msra.mxu0 0
        %2658 = vmatprep.subr.bf16.mxu0 0
        %2659 = vmatpush1.bf16.xpose.msra.mxu0 0
        %2660 = vmatprep.subr.bf16.mxu0 0
        %2661 = vmatpush1.bf16.xpose.msra.mxu0 0
        %2662 = vmatprep.subr.bf16.mxu0 0
        %2663 = vmatpush1.bf16.xpose.msra.mxu0 0
        %2664 = vmatprep.subr.bf16.mxu0 0
        %2665 = vmatpush1.bf16.xpose.msra.mxu0 0
        %2666 = vmatprep.subr.bf16.mxu0 0
        %2667 = vmatpush1.bf16.xpose.msra.mxu0 0
        %2668 = vmatprep.subr.bf16.mxu0 0
        %2669 = vmatpush1.bf16.xpose.msra.mxu0 0
        %2670 = vmatprep.subr.bf16.mxu0 0
        %2671 = vmatpush1.bf16.xpose.msra.mxu0 0
        %2672 = vmatprep.subr.bf16.mxu0 0
        %2673 = vmatpush1.bf16.xpose.msra.mxu0 0
        %2674 = vmatprep.subr.bf16.mxu0 0
        %2675 = vmatpush1.bf16.xpose.msra.mxu0 0
        %2676 = vmatprep.subr.bf16.mxu0 0
        %2677 = vmatpush1.bf16.xpose.msra.mxu0 0
        %2678 = vmatprep.subr.bf16.mxu0 0
        %2679 = vmatpush1.bf16.xpose.msra.mxu0 0
        %2680 = vmatprep.subr.bf16.mxu0 0
        %2681 = vmatpush1.bf16.xpose.msra.mxu0 0
        %2682 = vmatprep.mubr.bf16.mxu0 0
        %2683 = vmatmul.mubr.bf16.gmra.mrb[0].mxu0 %v2645
        %v2684 = vpop.f32.mrb[0].mxu0
        %v2685 = vadd.f32 %v1047, %v2684
        %v2686 = vpop.f32.mrb[0].mxu0
        %v2687 = vpop.f32.mrb[0].mxu0
        %v2688 = vadd.f32 %v1048, %v2687
        %v2689 = vpop.f32.mrb[0].mxu0
        %2690 = vdwg.mxu0
        %v2691 = vsel %vm1238, %v2532, -inf
        %2692 = vmax.xlane.f32.xlu0 %v2691
        %v2693 = vpop.xlane.xlu0 %2692
        %v2694 = vsel %vm1238, %v2535, -inf
        %2695 = vmax.xlane.f32.xlu0 %v2694
        %v2696 = vpop.xlane.xlu0 %2695
        %v2697 = vsel %vm1238, %v2583, -inf
        %2698 = vmax.xlane.f32.xlu0 %v2697
        %v2699 = vpop.xlane.xlu0 %2698
        %v2700 = vsel %vm1238, %v2586, -inf
        %2701 = vmax.xlane.f32.xlu0 %v2700
        %v2702 = vpop.xlane.xlu0 %2701
        %v2703 = vsel %vm1238, %v2634, -inf
        %2704 = vmax.xlane.f32.xlu0 %v2703
        %v2705 = vpop.xlane.xlu0 %2704
        %v2706 = vsel %vm1238, %v2637, -inf
        %2707 = vmax.xlane.f32.xlu0 %v2706
        %v2708 = vpop.xlane.xlu0 %2707
        %v2709 = vsel %vm1238, %v2685, -inf
        %2710 = vmax.xlane.f32.xlu0 %v2709
        %v2711 = vpop.xlane.xlu0 %2710
        %v2712 = vsel %vm1238, %v2688, -inf
        %2713 = vmax.xlane.f32.xlu0 %v2712
        %v2714 = vpop.xlane.xlu0 %2713
        %v2715 = vsub.f32 %v2532, %v2693
        %v2716 = vsub.f32 %v2535, %v2696
        %v2717 = vsub.f32 %v2583, %v2699
        %v2718 = vsub.f32 %v2586, %v2702
        %v2719 = vsub.f32 %v2634, %v2705
        %v2720 = vsub.f32 %v2637, %v2708
        %v2721 = vsub.f32 %v2685, %v2711
        %v2722 = vsub.f32 %v2688, %v2714
        %v2723 = vmul.f32 %v2715, 1.442695
        %v2724 = vpow.pop %v2723
        %v2725 = vmul.f32 %v2716, 1.442695
        %v2726 = vpow.pop %v2725
        %v2727 = vmul.f32 %v2717, 1.442695
        %v2728 = vpow.pop %v2727
        %v2729 = vmul.f32 %v2718, 1.442695
        %v2730 = vpow.pop %v2729
        %v2731 = vmul.f32 %v2719, 1.442695
        %v2732 = vpow.pop %v2731
        %v2733 = vmul.f32 %v2720, 1.442695
        %v2734 = vpow.pop %v2733
        %v2735 = vmul.f32 %v2721, 1.442695
        %v2736 = vpow.pop %v2735
        %v2737 = vmul.f32 %v2722, 1.442695
        %v2738 = vpow.pop %v2737
        %v2739 = vsel %vm1238, %v2724, 0.0
        %2740 = vadd.xlane.f32.xlu0 %v2739
        %v2741 = vpop.xlane.xlu0 %2740
        %v2742 = vsel %vm1238, %v2726, 0.0
        %2743 = vadd.xlane.f32.xlu0 %v2742
        %v2744 = vpop.xlane.xlu0 %2743
        %v2745 = vsel %vm1238, %v2728, 0.0
        %2746 = vadd.xlane.f32.xlu0 %v2745
        %v2747 = vpop.xlane.xlu0 %2746
        %v2748 = vsel %vm1238, %v2730, 0.0
        %2749 = vadd.xlane.f32.xlu0 %v2748
        %v2750 = vpop.xlane.xlu0 %2749
        %v2751 = vsel %vm1238, %v2732, 0.0
        %2752 = vadd.xlane.f32.xlu0 %v2751
        %v2753 = vpop.xlane.xlu0 %2752
        %v2754 = vsel %vm1238, %v2734, 0.0
        %2755 = vadd.xlane.f32.xlu0 %v2754
        %v2756 = vpop.xlane.xlu0 %2755
        %v2757 = vsel %vm1238, %v2736, 0.0
        %2758 = vadd.xlane.f32.xlu0 %v2757
        %v2759 = vpop.xlane.xlu0 %2758
        %v2760 = vsel %vm1238, %v2738, 0.0
        %2761 = vadd.xlane.f32.xlu0 %v2760
        %v2762 = vpop.xlane.xlu0 %2761
        %v2763 = vpack.c.bf16 %v2726, %v2724
        %v2764 = vpack.c.bf16 %v2730, %v2728
        %v2765 = vpack.c.bf16 %v2734, %v2732
        %v2766 = vpack.c.bf16 %v2738, %v2736
        %2767 = vrot.lane.b32.xlu0 %v1000, 32
        %v2768 = vpop.permute.xlu0 %2767
        %v2771 = vsel %vm1238, %v2763, 0
        %2773 = vmatprep.subr.bf16.mxu0 0
        %2774 = vmatpush1.bf16.msra.mxu0 %v2768
        %2775 = vmatprep.subr.bf16.mxu0 0
        %2776 = vmatpush1.bf16.msra.mxu0 0
        %2777 = vmatprep.subr.bf16.mxu0 0
        %2778 = vmatpush1.bf16.msra.mxu0 0
        %2779 = vmatprep.subr.bf16.mxu0 0
        %2780 = vmatpush1.bf16.msra.mxu0 0
        %2781 = vmatprep.subr.bf16.mxu0 0
        %2782 = vmatpush1.bf16.msra.mxu0 0
        %2783 = vmatprep.subr.bf16.mxu0 0
        %2784 = vmatpush1.bf16.msra.mxu0 0
        %2785 = vmatprep.subr.bf16.mxu0 0
        %2786 = vmatpush1.bf16.msra.mxu0 0
        %2787 = vmatprep.subr.bf16.mxu0 0
        %2788 = vmatpush1.bf16.msra.mxu0 0
        %2789 = vmatprep.subr.bf16.mxu0 0
        %2790 = vmatpush1.bf16.msra.mxu0 0
        %2791 = vmatprep.subr.bf16.mxu0 0
        %2792 = vmatpush1.bf16.msra.mxu0 0
        %2793 = vmatprep.subr.bf16.mxu0 0
        %2794 = vmatpush1.bf16.msra.mxu0 0
        %2795 = vmatprep.subr.bf16.mxu0 0
        %2796 = vmatpush1.bf16.msra.mxu0 0
        %2797 = vmatprep.subr.bf16.mxu0 0
        %2798 = vmatpush1.bf16.msra.mxu0 0
        %2799 = vmatprep.subr.bf16.mxu0 0
        %2800 = vmatpush1.bf16.msra.mxu0 0
        %2801 = vmatprep.subr.bf16.mxu0 0
        %2802 = vmatpush1.bf16.msra.mxu0 0
        %2803 = vmatprep.subr.bf16.mxu0 0
        %2804 = vmatpush1.bf16.msra.mxu0 0
        %2805 = vmatprep.mubr.bf16.mxu0 0
        %2806 = vmatmul.mubr.bf16.gmra.mrb[0].mxu0 %v2771
        %v2807 = vpop.f32.mrb[0].mxu0
        %v2808 = vadd.f32 0.0, %v2807
        %v2809 = vpop.f32.mrb[0].mxu0
        %v2810 = vpop.f32.mrb[0].mxu0
        %v2811 = vadd.f32 0.0, %v2810
        %v2812 = vpop.f32.mrb[0].mxu0
        %2813 = vdwg.mxu0
        %2814 = vrot.lane.b32.xlu0 %v1001, 32
        %v2815 = vpop.permute.xlu0 %2814
        %v2818 = vsel %vm1238, %v2764, 0
        %2820 = vmatprep.subr.bf16.mxu0 0
        %2821 = vmatpush1.bf16.msra.mxu0 %v2815
        %2822 = vmatprep.subr.bf16.mxu0 0
        %2823 = vmatpush1.bf16.msra.mxu0 0
        %2824 = vmatprep.subr.bf16.mxu0 0
        %2825 = vmatpush1.bf16.msra.mxu0 0
        %2826 = vmatprep.subr.bf16.mxu0 0
        %2827 = vmatpush1.bf16.msra.mxu0 0
        %2828 = vmatprep.subr.bf16.mxu0 0
        %2829 = vmatpush1.bf16.msra.mxu0 0
        %2830 = vmatprep.subr.bf16.mxu0 0
        %2831 = vmatpush1.bf16.msra.mxu0 0
        %2832 = vmatprep.subr.bf16.mxu0 0
        %2833 = vmatpush1.bf16.msra.mxu0 0
        %2834 = vmatprep.subr.bf16.mxu0 0
        %2835 = vmatpush1.bf16.msra.mxu0 0
        %2836 = vmatprep.subr.bf16.mxu0 0
        %2837 = vmatpush1.bf16.msra.mxu0 0
        %2838 = vmatprep.subr.bf16.mxu0 0
        %2839 = vmatpush1.bf16.msra.mxu0 0
        %2840 = vmatprep.subr.bf16.mxu0 0
        %2841 = vmatpush1.bf16.msra.mxu0 0
        %2842 = vmatprep.subr.bf16.mxu0 0
        %2843 = vmatpush1.bf16.msra.mxu0 0
        %2844 = vmatprep.subr.bf16.mxu0 0
        %2845 = vmatpush1.bf16.msra.mxu0 0
        %2846 = vmatprep.subr.bf16.mxu0 0
        %2847 = vmatpush1.bf16.msra.mxu0 0
        %2848 = vmatprep.subr.bf16.mxu0 0
        %2849 = vmatpush1.bf16.msra.mxu0 0
        %2850 = vmatprep.subr.bf16.mxu0 0
        %2851 = vmatpush1.bf16.msra.mxu0 0
        %2852 = vmatprep.mubr.bf16.mxu0 0
        %2853 = vmatmul.mubr.bf16.gmra.mrb[0].mxu0 %v2818
        %v2854 = vpop.f32.mrb[0].mxu0
        %v2855 = vadd.f32 0.0, %v2854
        %v2856 = vpop.f32.mrb[0].mxu0
        %v2857 = vpop.f32.mrb[0].mxu0
        %v2858 = vadd.f32 0.0, %v2857
        %v2859 = vpop.f32.mrb[0].mxu0
        %2860 = vdwg.mxu0
        %2861 = vrot.lane.b32.xlu0 %v1002, 32
        %v2862 = vpop.permute.xlu0 %2861
        %v2865 = vsel %vm1238, %v2765, 0
        %2867 = vmatprep.subr.bf16.mxu0 0
        %2868 = vmatpush1.bf16.msra.mxu0 %v2862
        %2869 = vmatprep.subr.bf16.mxu0 0
        %2870 = vmatpush1.bf16.msra.mxu0 0
        %2871 = vmatprep.subr.bf16.mxu0 0
        %2872 = vmatpush1.bf16.msra.mxu0 0
        %2873 = vmatprep.subr.bf16.mxu0 0
        %2874 = vmatpush1.bf16.msra.mxu0 0
        %2875 = vmatprep.subr.bf16.mxu0 0
        %2876 = vmatpush1.bf16.msra.mxu0 0
        %2877 = vmatprep.subr.bf16.mxu0 0
        %2878 = vmatpush1.bf16.msra.mxu0 0
        %2879 = vmatprep.subr.bf16.mxu0 0
        %2880 = vmatpush1.bf16.msra.mxu0 0
        %2881 = vmatprep.subr.bf16.mxu0 0
        %2882 = vmatpush1.bf16.msra.mxu0 0
        %2883 = vmatprep.subr.bf16.mxu0 0
        %2884 = vmatpush1.bf16.msra.mxu0 0
        %2885 = vmatprep.subr.bf16.mxu0 0
        %2886 = vmatpush1.bf16.msra.mxu0 0
        %2887 = vmatprep.subr.bf16.mxu0 0
        %2888 = vmatpush1.bf16.msra.mxu0 0
        %2889 = vmatprep.subr.bf16.mxu0 0
        %2890 = vmatpush1.bf16.msra.mxu0 0
        %2891 = vmatprep.subr.bf16.mxu0 0
        %2892 = vmatpush1.bf16.msra.mxu0 0
        %2893 = vmatprep.subr.bf16.mxu0 0
        %2894 = vmatpush1.bf16.msra.mxu0 0
        %2895 = vmatprep.subr.bf16.mxu0 0
        %2896 = vmatpush1.bf16.msra.mxu0 0
        %2897 = vmatprep.subr.bf16.mxu0 0
        %2898 = vmatpush1.bf16.msra.mxu0 0
        %2899 = vmatprep.mubr.bf16.mxu0 0
        %2900 = vmatmul.mubr.bf16.gmra.mrb[0].mxu0 %v2865
        %v2901 = vpop.f32.mrb[0].mxu0
        %v2902 = vadd.f32 0.0, %v2901
        %v2903 = vpop.f32.mrb[0].mxu0
        %v2904 = vpop.f32.mrb[0].mxu0
        %v2905 = vadd.f32 0.0, %v2904
        %v2906 = vpop.f32.mrb[0].mxu0
        %2907 = vdwg.mxu0
        %2908 = vrot.lane.b32.xlu0 %v1003, 32
        %v2909 = vpop.permute.xlu0 %2908
        %v2912 = vsel %vm1238, %v2766, 0
        %2914 = vmatprep.subr.bf16.mxu0 0
        %2915 = vmatpush1.bf16.msra.mxu0 %v2909
        %2916 = vmatprep.subr.bf16.mxu0 0
        %2917 = vmatpush1.bf16.msra.mxu0 0
        %2918 = vmatprep.subr.bf16.mxu0 0
        %2919 = vmatpush1.bf16.msra.mxu0 0
        %2920 = vmatprep.subr.bf16.mxu0 0
        %2921 = vmatpush1.bf16.msra.mxu0 0
        %2922 = vmatprep.subr.bf16.mxu0 0
        %2923 = vmatpush1.bf16.msra.mxu0 0
        %2924 = vmatprep.subr.bf16.mxu0 0
        %2925 = vmatpush1.bf16.msra.mxu0 0
        %2926 = vmatprep.subr.bf16.mxu0 0
        %2927 = vmatpush1.bf16.msra.mxu0 0
        %2928 = vmatprep.subr.bf16.mxu0 0
        %2929 = vmatpush1.bf16.msra.mxu0 0
        %2930 = vmatprep.subr.bf16.mxu0 0
        %2931 = vmatpush1.bf16.msra.mxu0 0
        %2932 = vmatprep.subr.bf16.mxu0 0
        %2933 = vmatpush1.bf16.msra.mxu0 0
        %2934 = vmatprep.subr.bf16.mxu0 0
        %2935 = vmatpush1.bf16.msra.mxu0 0
        %2936 = vmatprep.subr.bf16.mxu0 0
        %2937 = vmatpush1.bf16.msra.mxu0 0
        %2938 = vmatprep.subr.bf16.mxu0 0
        %2939 = vmatpush1.bf16.msra.mxu0 0
        %2940 = vmatprep.subr.bf16.mxu0 0
        %2941 = vmatpush1.bf16.msra.mxu0 0
        %2942 = vmatprep.subr.bf16.mxu0 0
        %2943 = vmatpush1.bf16.msra.mxu0 0
        %2944 = vmatprep.subr.bf16.mxu0 0
        %2945 = vmatpush1.bf16.msra.mxu0 0
        %2946 = vmatprep.mubr.bf16.mxu0 0
        %2947 = vmatmul.mubr.bf16.gmra.mrb[0].mxu0 %v2912
        %v2948 = vpop.f32.mrb[0].mxu0
        %v2949 = vadd.f32 0.0, %v2948
        %v2950 = vpop.f32.mrb[0].mxu0
        %v2951 = vpop.f32.mrb[0].mxu0
        %v2952 = vadd.f32 0.0, %v2951
        %v2953 = vpop.f32.mrb[0].mxu0
        %2954 = vdwg.mxu0
        %v2955 = vrcp.pop %v2741
        %v2956 = vrcp.pop %v2744
        %v2957 = vrcp.pop %v2747
        %v2958 = vrcp.pop %v2750
        %v2959 = vrcp.pop %v2753
        %v2960 = vrcp.pop %v2756
        %v2961 = vrcp.pop %v2759
        %v2962 = vrcp.pop %v2762
        %v2963 = vmul.f32 %v2808, %v2955
        %v2964 = vmul.f32 %v2811, %v2956
        %v2965 = vmul.f32 %v2855, %v2957
        %v2966 = vmul.f32 %v2858, %v2958
        %v2967 = vmul.f32 %v2902, %v2959
        %v2968 = vmul.f32 %v2905, %v2960
        %v2969 = vmul.f32 %v2949, %v2961
        %v2970 = vmul.f32 %v2952, %v2962
        %2979 = vrot.lane.b32.xlu0 %v1995, 32
        %v2980 = vpop.permute.xlu0 %2979
        %2981 = vrot.lane.b32.xlu0 %v1996, 32
        %v2982 = vpop.permute.xlu0 %2981
        %2983 = vrot.lane.b32.xlu0 %v1997, 32
        %v2984 = vpop.permute.xlu0 %2983
        %2985 = vrot.lane.b32.xlu0 %v1998, 32
        %v2986 = vpop.permute.xlu0 %2985
        %2987 = vrot.lane.b32.xlu0 %v1999, 32
        %v2988 = vpop.permute.xlu0 %2987
        %2989 = vrot.lane.b32.xlu0 %v2000, 32
        %v2990 = vpop.permute.xlu0 %2989
        %2991 = vrot.lane.b32.xlu0 %v2001, 32
        %v2992 = vpop.permute.xlu0 %2991
        %2993 = vrot.lane.b32.xlu0 %v2002, 32
        %v2994 = vpop.permute.xlu0 %2993
        %3011 = vrot.lane.b32.xlu0 %v2479, 64
        %v3012 = vpop.permute.xlu0 %3011
        %3013 = vrot.lane.b32.xlu0 %v2480, 64
        %v3014 = vpop.permute.xlu0 %3013
        %3015 = vrot.lane.b32.xlu0 %v2481, 64
        %v3016 = vpop.permute.xlu0 %3015
        %3017 = vrot.lane.b32.xlu0 %v2482, 64
        %v3018 = vpop.permute.xlu0 %3017
        %3019 = vrot.lane.b32.xlu0 %v2483, 64
        %v3020 = vpop.permute.xlu0 %3019
        %3021 = vrot.lane.b32.xlu0 %v2484, 64
        %v3022 = vpop.permute.xlu0 %3021
        %3023 = vrot.lane.b32.xlu0 %v2485, 64
        %v3024 = vpop.permute.xlu0 %3023
        %3025 = vrot.lane.b32.xlu0 %v2486, 64
        %v3026 = vpop.permute.xlu0 %3025
        %3043 = vrot.lane.b32.xlu0 %v2963, 96
        %v3044 = vpop.permute.xlu0 %3043
        %3045 = vrot.lane.b32.xlu0 %v2964, 96
        %v3046 = vpop.permute.xlu0 %3045
        %3047 = vrot.lane.b32.xlu0 %v2965, 96
        %v3048 = vpop.permute.xlu0 %3047
        %3049 = vrot.lane.b32.xlu0 %v2966, 96
        %v3050 = vpop.permute.xlu0 %3049
        %3051 = vrot.lane.b32.xlu0 %v2967, 96
        %v3052 = vpop.permute.xlu0 %3051
        %3053 = vrot.lane.b32.xlu0 %v2968, 96
        %v3054 = vpop.permute.xlu0 %3053
        %3055 = vrot.lane.b32.xlu0 %v2969, 96
        %v3056 = vpop.permute.xlu0 %3055
        %3057 = vrot.lane.b32.xlu0 %v2970, 96
        %v3058 = vpop.permute.xlu0 %3057
        %v3067 = vsel %vm1049, %v1499, %v2980
        %v3068 = vsel %vm1049, %v1500, %v2982
        %v3069 = vsel %vm1049, %v1501, %v2984
        %v3070 = vsel %vm1049, %v1502, %v2986
        %v3071 = vsel %vm1049, %v1503, %v2988
        %v3072 = vsel %vm1049, %v1504, %v2990
        %v3073 = vsel %vm1049, %v1505, %v2992
        %v3074 = vsel %vm1049, %v1506, %v2994
        %vm3075 = vcmask 523264
        %v3076 = vsel %vm3075, %v3067, %v3012
        %v3077 = vsel %vm3075, %v3068, %v3014
        %v3078 = vsel %vm3075, %v3069, %v3016
        %v3079 = vsel %vm3075, %v3070, %v3018
        %v3080 = vsel %vm3075, %v3071, %v3020
        %v3081 = vsel %vm3075, %v3072, %v3022
        %v3082 = vsel %vm3075, %v3073, %v3024
        %v3083 = vsel %vm3075, %v3074, %v3026
        %vm3084 = vcmask 785408
        %v3085 = vsel %vm3084, %v3076, %v3044
        %v3086 = vsel %vm3084, %v3077, %v3046
        %v3087 = vsel %vm3084, %v3078, %v3048
        %v3088 = vsel %vm3084, %v3079, %v3050
        %v3089 = vsel %vm3084, %v3080, %v3052
        %v3090 = vsel %vm3084, %v3081, %v3054
        %v3091 = vsel %vm3084, %v3082, %v3056
        %v3092 = vsel %vm3084, %v3083, %v3058
        %v3093 = vpack.c.bf16 %v3086, %v3085
        %v3094 = vpack.c.bf16 %v3088, %v3087
        %v3095 = vpack.c.bf16 %v3090, %v3089
        %v3096 = vpack.c.bf16 %v3092, %v3091
        %v3097 = vld [vmem:[#allocation10] sm:$0xf]
        %v3098 = vld [vmem:[#allocation10 + $0x4] sm:$0xf]
        %v3099 = vld [vmem:[#allocation10 + $0x8] sm:$0xf]
        %v3100 = vld [vmem:[#allocation10 + $0xc] sm:$0xf]
        %v3101 = vld [vmem:[#allocation10 + $0x10] sm:$0xf]
        %v3102 = vld [vmem:[#allocation10 + $0x14] sm:$0xf]
        %v3103 = vld [vmem:[#allocation10 + $0x18] sm:$0xf]
        %v3104 = vld [vmem:[#allocation10 + $0x1c] sm:$0xf]
        %v3105 = vld [vmem:[#allocation10 + $0x20] sm:$0xf]
        %v3106 = vld [vmem:[#allocation10 + $0x24] sm:$0xf]
        %v3107 = vld [vmem:[#allocation10 + $0x28] sm:$0xf]
        %v3108 = vld [vmem:[#allocation10 + $0x2c] sm:$0xf]
        %v3109 = vld [vmem:[#allocation10 + $0x30] sm:$0xf]
        %v3110 = vld [vmem:[#allocation10 + $0x34] sm:$0xf]
        %v3111 = vld [vmem:[#allocation10 + $0x38] sm:$0xf]
        %v3112 = vld [vmem:[#allocation10 + $0x3c] sm:$0xf]
        %v3129 = vunpack.c.l.b16 %v3097
        %v3130 = vunpack.c.l.b16 %v3098
        %v3131 = vunpack.c.l.b16 %v3099
        %v3132 = vunpack.c.l.b16 %v3100
        %v3133 = vunpack.c.l.b16 %v3101
        %v3134 = vunpack.c.l.b16 %v3102
        %v3135 = vunpack.c.l.b16 %v3103
        %v3136 = vunpack.c.l.b16 %v3104
        %v3137 = vunpack.c.l.b16 %v3105
        %v3138 = vunpack.c.l.b16 %v3106
        %v3139 = vunpack.c.l.b16 %v3107
        %v3140 = vunpack.c.l.b16 %v3108
        %v3141 = vunpack.c.l.b16 %v3109
        %v3142 = vunpack.c.l.b16 %v3110
        %v3143 = vunpack.c.l.b16 %v3111
        %v3144 = vunpack.c.l.b16 %v3112
        %v3145 = vpack.c.b16 %v3130, %v3129
        %v3146 = vpack.c.b16 %v3132, %v3131
        %v3147 = vpack.c.b16 %v3134, %v3133
        %v3148 = vpack.c.b16 %v3136, %v3135
        %v3149 = vpack.c.b16 %v3138, %v3137
        %v3150 = vpack.c.b16 %v3140, %v3139
        %v3151 = vpack.c.b16 %v3142, %v3141
        %v3152 = vpack.c.b16 %v3144, %v3143
        %3161 = vmatprep.subr.bf16.mxu0 0
        %3162 = vmatpush1.bf16.msra.mxu0 %v3145
        %3163 = vmatprep.subr.bf16.mxu0 0
        %3164 = vmatpush1.bf16.msra.mxu0 %v3146
        %3165 = vmatprep.subr.bf16.mxu0 0
        %3166 = vmatpush1.bf16.msra.mxu0 %v3147
        %3167 = vmatprep.subr.bf16.mxu0 0
        %3168 = vmatpush1.bf16.msra.mxu0 %v3148
        %3169 = vmatprep.subr.bf16.mxu0 0
        %3170 = vmatpush1.bf16.msra.mxu0 %v3149
        %3171 = vmatprep.subr.bf16.mxu0 0
        %3172 = vmatpush1.bf16.msra.mxu0 %v3150
        %3173 = vmatprep.subr.bf16.mxu0 0
        %3174 = vmatpush1.bf16.msra.mxu0 %v3151
        %3175 = vmatprep.subr.bf16.mxu0 0
        %3176 = vmatpush1.bf16.msra.mxu0 %v3152
        %3177 = vmatprep.subr.bf16.mxu0 0
        %3178 = vmatpush1.bf16.msra.mxu0 0
        %3179 = vmatprep.subr.bf16.mxu0 0
        %3180 = vmatpush1.bf16.msra.mxu0 0
        %3181 = vmatprep.subr.bf16.mxu0 0
        %3182 = vmatpush1.bf16.msra.mxu0 0
        %3183 = vmatprep.subr.bf16.mxu0 0
        %3184 = vmatpush1.bf16.msra.mxu0 0
        %3185 = vmatprep.subr.bf16.mxu0 0
        %3186 = vmatpush1.bf16.msra.mxu0 0
        %3187 = vmatprep.subr.bf16.mxu0 0
        %3188 = vmatpush1.bf16.msra.mxu0 0
        %3189 = vmatprep.subr.bf16.mxu0 0
        %3190 = vmatpush1.bf16.msra.mxu0 0
        %3191 = vmatprep.subr.bf16.mxu0 0
        %3192 = vmatpush1.bf16.msra.mxu0 0
        %3193 = vmatprep.mubr.bf16.mxu0 0
        %3194 = vmatmul.mubr.bf16.gmra.mrb[0].mxu0 %v3093
        %v3195 = vpop.f32.mrb[0].mxu0
        %v3196 = vadd.f32 0.0, %v3195
        %v3197 = vpop.f32.mrb[0].mxu0
        %v3198 = vpop.f32.mrb[0].mxu0
        %v3199 = vadd.f32 0.0, %v3198
        %v3200 = vpop.f32.mrb[0].mxu0
        %3201 = vmatprep.mubr.bf16.mxu0 0
        %3202 = vmatmul.mubr.bf16.gmra.mrb[0].mxu0 %v3094
        %v3203 = vpop.f32.mrb[0].mxu0
        %v3204 = vadd.f32 0.0, %v3203
        %v3205 = vpop.f32.mrb[0].mxu0
        %v3206 = vpop.f32.mrb[0].mxu0
        %v3207 = vadd.f32 0.0, %v3206
        %v3208 = vpop.f32.mrb[0].mxu0
        %3209 = vmatprep.mubr.bf16.mxu0 0
        %3210 = vmatmul.mubr.bf16.gmra.mrb[0].mxu0 %v3095
        %v3211 = vpop.f32.mrb[0].mxu0
        %v3212 = vadd.f32 0.0, %v3211
        %v3213 = vpop.f32.mrb[0].mxu0
        %v3214 = vpop.f32.mrb[0].mxu0
        %v3215 = vadd.f32 0.0, %v3214
        %v3216 = vpop.f32.mrb[0].mxu0
        %3217 = vmatprep.mubr.bf16.mxu0 0
        %3218 = vmatmul.mubr.bf16.gmra.mrb[0].mxu0 %v3096
        %v3219 = vpop.f32.mrb[0].mxu0
        %v3220 = vadd.f32 0.0, %v3219
        %v3221 = vpop.f32.mrb[0].mxu0
        %v3222 = vpop.f32.mrb[0].mxu0
        %v3223 = vadd.f32 0.0, %v3222
        %v3224 = vpop.f32.mrb[0].mxu0
        %3225 = vdwg.mxu0
        %v3226 = vadd.f32 %v546, %v3196
        %v3227 = vadd.f32 %v547, %v3199
        %v3228 = vadd.f32 %v548, %v3204
        %v3229 = vadd.f32 %v549, %v3207
        %v3230 = vadd.f32 %v550, %v3212
        %v3231 = vadd.f32 %v551, %v3215
        %v3232 = vadd.f32 %v552, %v3220
        %v3233 = vadd.f32 %v553, %v3223
        %v3234 = vld [vmem:[%s6] sm:$0x1]
        %v3236 = vlaneseq
        %v3237 = vshrl.u32 %v3236, 7
        %v3238 = vsub.s32 0, %v3237
        %v3239 = vrot.slane %v3234, %v3238
        %v3241 = vadd.f32 %v3226, %v3239
        %v3242 = vadd.f32 %v3227, %v3239
        %v3243 = vadd.f32 %v3228, %v3239
        %v3244 = vadd.f32 %v3229, %v3239
        %v3245 = vadd.f32 %v3230, %v3239
        %v3246 = vadd.f32 %v3231, %v3239
        %v3247 = vadd.f32 %v3232, %v3239
        %v3248 = vadd.f32 %v3233, %v3239
        %v3249 = vld [vmem:[%s7] sm:$0x1]
        %v3250 = vld [vmem:[%s8] sm:$0x1]
        %3251 = vadd.xlane.f32.xlu0 %v3241
        %v3252 = vpop.xlane.xlu0 %3251
        %3253 = vadd.xlane.f32.xlu0 %v3242
        %v3254 = vpop.xlane.xlu0 %3253
        %3255 = vadd.xlane.f32.xlu0 %v3243
        %v3256 = vpop.xlane.xlu0 %3255
        %3257 = vadd.xlane.f32.xlu0 %v3244
        %v3258 = vpop.xlane.xlu0 %3257
        %3259 = vadd.xlane.f32.xlu0 %v3245
        %v3260 = vpop.xlane.xlu0 %3259
        %3261 = vadd.xlane.f32.xlu0 %v3246
        %v3262 = vpop.xlane.xlu0 %3261
        %3263 = vadd.xlane.f32.xlu0 %v3247
        %v3264 = vpop.xlane.xlu0 %3263
        %3265 = vadd.xlane.f32.xlu0 %v3248
        %v3266 = vpop.xlane.xlu0 %3265
        %v3267 = vmul.f32 %v3252, %v572
        %v3268 = vmul.f32 %v3254, %v572
        %v3269 = vmul.f32 %v3256, %v572
        %v3270 = vmul.f32 %v3258, %v572
        %v3271 = vmul.f32 %v3260, %v572
        %v3272 = vmul.f32 %v3262, %v572
        %v3273 = vmul.f32 %v3264, %v572
        %v3274 = vmul.f32 %v3266, %v572
        %v3275 = vsub.f32 %v3241, %v3267
        %v3276 = vsub.f32 %v3242, %v3268
        %v3277 = vsub.f32 %v3243, %v3269
        %v3278 = vsub.f32 %v3244, %v3270
        %v3279 = vsub.f32 %v3245, %v3271
        %v3280 = vsub.f32 %v3246, %v3272
        %v3281 = vsub.f32 %v3247, %v3273
        %v3282 = vsub.f32 %v3248, %v3274
        %v3283 = vmul.f32 %v3275, %v3275
        %v3284 = vmul.f32 %v3276, %v3276
        %v3285 = vmul.f32 %v3277, %v3277
        %v3286 = vmul.f32 %v3278, %v3278
        %v3287 = vmul.f32 %v3279, %v3279
        %v3288 = vmul.f32 %v3280, %v3280
        %v3289 = vmul.f32 %v3281, %v3281
        %v3290 = vmul.f32 %v3282, %v3282
        %3291 = vadd.xlane.f32.xlu0 %v3283
        %v3292 = vpop.xlane.xlu0 %3291
        %3293 = vadd.xlane.f32.xlu0 %v3284
        %v3294 = vpop.xlane.xlu0 %3293
        %3295 = vadd.xlane.f32.xlu0 %v3285
        %v3296 = vpop.xlane.xlu0 %3295
        %3297 = vadd.xlane.f32.xlu0 %v3286
        %v3298 = vpop.xlane.xlu0 %3297
        %3299 = vadd.xlane.f32.xlu0 %v3287
        %v3300 = vpop.xlane.xlu0 %3299
        %3301 = vadd.xlane.f32.xlu0 %v3288
        %v3302 = vpop.xlane.xlu0 %3301
        %3303 = vadd.xlane.f32.xlu0 %v3289
        %v3304 = vpop.xlane.xlu0 %3303
        %3305 = vadd.xlane.f32.xlu0 %v3290
        %v3306 = vpop.xlane.xlu0 %3305
        %v3307 = vmul.f32 %v3292, %v572
        %v3308 = vmul.f32 %v3294, %v572
        %v3309 = vmul.f32 %v3296, %v572
        %v3310 = vmul.f32 %v3298, %v572
        %v3311 = vmul.f32 %v3300, %v572
        %v3312 = vmul.f32 %v3302, %v572
        %v3313 = vmul.f32 %v3304, %v572
        %v3314 = vmul.f32 %v3306, %v572
        %v3315 = vadd.f32 %v3307, 1e-05
        %v3316 = vadd.f32 %v3308, 1e-05
        %v3317 = vadd.f32 %v3309, 1e-05
        %v3318 = vadd.f32 %v3310, 1e-05
        %v3319 = vadd.f32 %v3311, 1e-05
        %v3320 = vadd.f32 %v3312, 1e-05
        %v3321 = vadd.f32 %v3313, 1e-05
        %v3322 = vadd.f32 %v3314, 1e-05
        %v3323 = vrsqrt.pop %v3315
        %v3324 = vrsqrt.pop %v3316
        %v3325 = vrsqrt.pop %v3317
        %v3326 = vrsqrt.pop %v3318
        %v3327 = vrsqrt.pop %v3319
        %v3328 = vrsqrt.pop %v3320
        %v3329 = vrsqrt.pop %v3321
        %v3330 = vrsqrt.pop %v3322
        %v3331 = vmul.f32 %v3275, %v3323
        %v3332 = vmul.f32 %v3276, %v3324
        %v3333 = vmul.f32 %v3277, %v3325
        %v3334 = vmul.f32 %v3278, %v3326
        %v3335 = vmul.f32 %v3279, %v3327
        %v3336 = vmul.f32 %v3280, %v3328
        %v3337 = vmul.f32 %v3281, %v3329
        %v3338 = vmul.f32 %v3282, %v3330
        %v3340 = vlaneseq
        %v3341 = vshrl.u32 %v3340, 7
        %v3342 = vsub.s32 0, %v3341
        %v3343 = vrot.slane %v3249, %v3342
        %v3345 = vmul.f32 %v3331, %v3343
        %v3346 = vmul.f32 %v3332, %v3343
        %v3347 = vmul.f32 %v3333, %v3343
        %v3348 = vmul.f32 %v3334, %v3343
        %v3349 = vmul.f32 %v3335, %v3343
        %v3350 = vmul.f32 %v3336, %v3343
        %v3351 = vmul.f32 %v3337, %v3343
        %v3352 = vmul.f32 %v3338, %v3343
        %v3354 = vlaneseq
        %v3355 = vshrl.u32 %v3354, 7
        %v3356 = vsub.s32 0, %v3355
        %v3357 = vrot.slane %v3250, %v3356
        %v3359 = vadd.f32 %v3345, %v3357
        %v3360 = vadd.f32 %v3346, %v3357
        %v3361 = vadd.f32 %v3347, %v3357
        %v3362 = vadd.f32 %v3348, %v3357
        %v3363 = vadd.f32 %v3349, %v3357
        %v3364 = vadd.f32 %v3350, %v3357
        %v3365 = vadd.f32 %v3351, %v3357
        %v3366 = vadd.f32 %v3352, %v3357
        %v3367 = vpack.c.bf16 %v3360, %v3359
        %v3368 = vpack.c.bf16 %v3362, %v3361
        %v3369 = vpack.c.bf16 %v3364, %v3363
        %v3370 = vpack.c.bf16 %v3366, %v3365
        %v3371 = vld [vmem:[#allocation11] sm:$0xff]
        %v3372 = vld [vmem:[#allocation11 + $0x8] sm:$0xff]
        %v3373 = vld [vmem:[#allocation11 + $0x10] sm:$0xff]
        %v3374 = vld [vmem:[#allocation11 + $0x18] sm:$0xff]
        %v3375 = vld [vmem:[#allocation11 + $0x20] sm:$0xff]
        %v3376 = vld [vmem:[#allocation11 + $0x28] sm:$0xff]
        %v3377 = vld [vmem:[#allocation11 + $0x30] sm:$0xff]
        %v3378 = vld [vmem:[#allocation11 + $0x38] sm:$0xff]
        %v3379 = vld [vmem:[#allocation11 + $0x40] sm:$0xff]
        %v3380 = vld [vmem:[#allocation11 + $0x48] sm:$0xff]
        %v3381 = vld [vmem:[#allocation11 + $0x50] sm:$0xff]
        %v3382 = vld [vmem:[#allocation11 + $0x58] sm:$0xff]
        %v3383 = vld [vmem:[#allocation11 + $0x60] sm:$0xff]
        %v3384 = vld [vmem:[#allocation11 + $0x68] sm:$0xff]
        %v3385 = vld [vmem:[#allocation11 + $0x70] sm:$0xff]
        %v3386 = vld [vmem:[#allocation11 + $0x78] sm:$0xff]
        %v3387 = vld [vmem:[#allocation11 + $0x80] sm:$0xff]
        %v3388 = vld [vmem:[#allocation11 + $0x88] sm:$0xff]
        %v3389 = vld [vmem:[#allocation11 + $0x90] sm:$0xff]
        %v3390 = vld [vmem:[#allocation11 + $0x98] sm:$0xff]
        %v3391 = vld [vmem:[#allocation11 + $0xa0] sm:$0xff]
        %v3392 = vld [vmem:[#allocation11 + $0xa8] sm:$0xff]
        %v3393 = vld [vmem:[#allocation11 + $0xb0] sm:$0xff]
        %v3394 = vld [vmem:[#allocation11 + $0xb8] sm:$0xff]
        %v3395 = vld [vmem:[#allocation11 + $0xc0] sm:$0xff]
        %v3396 = vld [vmem:[#allocation11 + $0xc8] sm:$0xff]
        %v3397 = vld [vmem:[#allocation11 + $0xd0] sm:$0xff]
        %v3398 = vld [vmem:[#allocation11 + $0xd8] sm:$0xff]
        %v3399 = vld [vmem:[#allocation11 + $0xe0] sm:$0xff]
        %v3400 = vld [vmem:[#allocation11 + $0xe8] sm:$0xff]
        %v3401 = vld [vmem:[#allocation11 + $0xf0] sm:$0xff]
        %v3402 = vld [vmem:[#allocation11 + $0xf8] sm:$0xff]
        %v3403 = vld [vmem:[%s10] sm:$0xf]
        %v3405 = vlaneseq
        %v3406 = vshrl.u32 %v3405, 7
        %v3407 = vsub.s32 0, %v3406
        %v3408 = vrot.slane %v3403, %v3407
        %v3409 = vlaneseq
        %v3410 = vshrl.u32 %v3409, 7
        %v3411 = vsub.s32 1, %v3410
        %v3412 = vrot.slane %v3403, %v3411
        %v3413 = vlaneseq
        %v3414 = vshrl.u32 %v3413, 7
        %v3415 = vsub.s32 2, %v3414
        %v3416 = vrot.slane %v3403, %v3415
        %v3417 = vlaneseq
        %v3418 = vshrl.u32 %v3417, 7
        %v3419 = vsub.s32 3, %v3418
        %v3420 = vrot.slane %v3403, %v3419
        %v3457 = vunpack.c.l.b16 %v3371
        %v3458 = vunpack.c.h.b16 %v3371
        %v3459 = vunpack.c.l.b16 %v3372
        %v3460 = vunpack.c.h.b16 %v3372
        %v3461 = vunpack.c.l.b16 %v3373
        %v3462 = vunpack.c.h.b16 %v3373
        %v3463 = vunpack.c.l.b16 %v3374
        %v3464 = vunpack.c.h.b16 %v3374
        %v3465 = vunpack.c.l.b16 %v3375
        %v3466 = vunpack.c.h.b16 %v3375
        %v3467 = vunpack.c.l.b16 %v3376
        %v3468 = vunpack.c.h.b16 %v3376
        %v3469 = vunpack.c.l.b16 %v3377
        %v3470 = vunpack.c.h.b16 %v3377
        %v3471 = vunpack.c.l.b16 %v3378
        %v3472 = vunpack.c.h.b16 %v3378
        %v3473 = vunpack.c.l.b16 %v3379
        %v3474 = vunpack.c.h.b16 %v3379
        %v3475 = vunpack.c.l.b16 %v3380
        %v3476 = vunpack.c.h.b16 %v3380
        %v3477 = vunpack.c.l.b16 %v3381
        %v3478 = vunpack.c.h.b16 %v3381
        %v3479 = vunpack.c.l.b16 %v3382
        %v3480 = vunpack.c.h.b16 %v3382
        %v3481 = vunpack.c.l.b16 %v3383
        %v3482 = vunpack.c.h.b16 %v3383
        %v3483 = vunpack.c.l.b16 %v3384
        %v3484 = vunpack.c.h.b16 %v3384
        %v3485 = vunpack.c.l.b16 %v3385
        %v3486 = vunpack.c.h.b16 %v3385
        %v3487 = vunpack.c.l.b16 %v3386
        %v3488 = vunpack.c.h.b16 %v3386
        %v3489 = vunpack.c.l.b16 %v3387
        %v3490 = vunpack.c.h.b16 %v3387
        %v3491 = vunpack.c.l.b16 %v3388
        %v3492 = vunpack.c.h.b16 %v3388
        %v3493 = vunpack.c.l.b16 %v3389
        %v3494 = vunpack.c.h.b16 %v3389
        %v3495 = vunpack.c.l.b16 %v3390
        %v3496 = vunpack.c.h.b16 %v3390
        %v3497 = vunpack.c.l.b16 %v3391
        %v3498 = vunpack.c.h.b16 %v3391
        %v3499 = vunpack.c.l.b16 %v3392
        %v3500 = vunpack.c.h.b16 %v3392
        %v3501 = vunpack.c.l.b16 %v3393
        %v3502 = vunpack.c.h.b16 %v3393
        %v3503 = vunpack.c.l.b16 %v3394
        %v3504 = vunpack.c.h.b16 %v3394
        %v3505 = vunpack.c.l.b16 %v3395
        %v3506 = vunpack.c.h.b16 %v3395
        %v3507 = vunpack.c.l.b16 %v3396
        %v3508 = vunpack.c.h.b16 %v3396
        %v3509 = vunpack.c.l.b16 %v3397
        %v3510 = vunpack.c.h.b16 %v3397
        %v3511 = vunpack.c.l.b16 %v3398
        %v3512 = vunpack.c.h.b16 %v3398
        %v3513 = vunpack.c.l.b16 %v3399
        %v3514 = vunpack.c.h.b16 %v3399
        %v3515 = vunpack.c.l.b16 %v3400
        %v3516 = vunpack.c.h.b16 %v3400
        %v3517 = vunpack.c.l.b16 %v3401
        %v3518 = vunpack.c.h.b16 %v3401
        %v3519 = vunpack.c.l.b16 %v3402
        %v3520 = vunpack.c.h.b16 %v3402
        %v3521 = vpack.c.b16 %v3461, %v3457
        %v3522 = vpack.c.b16 %v3462, %v3458
        %v3523 = vpack.c.b16 %v3463, %v3459
        %v3524 = vpack.c.b16 %v3464, %v3460
        %v3525 = vpack.c.b16 %v3469, %v3465
        %v3526 = vpack.c.b16 %v3470, %v3466
        %v3527 = vpack.c.b16 %v3471, %v3467
        %v3528 = vpack.c.b16 %v3472, %v3468
        %v3529 = vpack.c.b16 %v3477, %v3473
        %v3530 = vpack.c.b16 %v3478, %v3474
        %v3531 = vpack.c.b16 %v3479, %v3475
        %v3532 = vpack.c.b16 %v3480, %v3476
        %v3533 = vpack.c.b16 %v3485, %v3481
        %v3534 = vpack.c.b16 %v3486, %v3482
        %v3535 = vpack.c.b16 %v3487, %v3483
        %v3536 = vpack.c.b16 %v3488, %v3484
        %v3537 = vpack.c.b16 %v3493, %v3489
        %v3538 = vpack.c.b16 %v3494, %v3490
        %v3539 = vpack.c.b16 %v3495, %v3491
        %v3540 = vpack.c.b16 %v3496, %v3492
        %v3541 = vpack.c.b16 %v3501, %v3497
        %v3542 = vpack.c.b16 %v3502, %v3498
        %v3543 = vpack.c.b16 %v3503, %v3499
        %v3544 = vpack.c.b16 %v3504, %v3500
        %v3545 = vpack.c.b16 %v3509, %v3505
        %v3546 = vpack.c.b16 %v3510, %v3506
        %v3547 = vpack.c.b16 %v3511, %v3507
        %v3548 = vpack.c.b16 %v3512, %v3508
        %v3549 = vpack.c.b16 %v3517, %v3513
        %v3550 = vpack.c.b16 %v3518, %v3514
        %v3551 = vpack.c.b16 %v3519, %v3515
        %v3552 = vpack.c.b16 %v3520, %v3516
        %3585 = vmatprep.subr.bf16.mxu0 %v3522
        %3586 = vmatpush1.bf16.msra.mxu0 %v3521
        %3587 = vmatprep.subr.bf16.mxu0 %v3526
        %3588 = vmatpush1.bf16.msra.mxu0 %v3525
        %3589 = vmatprep.subr.bf16.mxu0 %v3530
        %3590 = vmatpush1.bf16.msra.mxu0 %v3529
        %3591 = vmatprep.subr.bf16.mxu0 %v3534
        %3592 = vmatpush1.bf16.msra.mxu0 %v3533
        %3593 = vmatprep.subr.bf16.mxu0 %v3538
        %3594 = vmatpush1.bf16.msra.mxu0 %v3537
        %3595 = vmatprep.subr.bf16.mxu0 %v3542
        %3596 = vmatpush1.bf16.msra.mxu0 %v3541
        %3597 = vmatprep.subr.bf16.mxu0 %v3546
        %3598 = vmatpush1.bf16.msra.mxu0 %v3545
        %3599 = vmatprep.subr.bf16.mxu0 %v3550
        %3600 = vmatpush1.bf16.msra.mxu0 %v3549
        %3601 = vmatprep.subr.bf16.mxu0 0
        %3602 = vmatpush1.bf16.msra.mxu0 0
        %3603 = vmatprep.subr.bf16.mxu0 0
        %3604 = vmatpush1.bf16.msra.mxu0 0
        %3605 = vmatprep.subr.bf16.mxu0 0
        %3606 = vmatpush1.bf16.msra.mxu0 0
        %3607 = vmatprep.subr.bf16.mxu0 0
        %3608 = vmatpush1.bf16.msra.mxu0 0
        %3609 = vmatprep.subr.bf16.mxu0 0
        %3610 = vmatpush1.bf16.msra.mxu0 0
        %3611 = vmatprep.subr.bf16.mxu0 0
        %3612 = vmatpush1.bf16.msra.mxu0 0
        %3613 = vmatprep.subr.bf16.mxu0 0
        %3614 = vmatpush1.bf16.msra.mxu0 0
        %3615 = vmatprep.subr.bf16.mxu0 0
        %3616 = vmatpush1.bf16.msra.mxu0 0
        %3617 = vmatprep.mubr.bf16.mxu0 0
        %3618 = vmatmul.mubr.bf16.gmra.mrb[0].mxu0 %v3367
        %v3619 = vpop.f32.mrb[0].mxu0
        %v3620 = vadd.f32 %v3408, %v3619
        %v3621 = vpop.f32.mrb[0].mxu0
        %v3622 = vadd.f32 %v3412, %v3621
        %v3623 = vpop.f32.mrb[0].mxu0
        %v3624 = vadd.f32 %v3408, %v3623
        %v3625 = vpop.f32.mrb[0].mxu0
        %v3626 = vadd.f32 %v3412, %v3625
        %3627 = vmatprep.mubr.bf16.mxu0 0
        %3628 = vmatmul.mubr.bf16.gmra.mrb[0].mxu0 %v3368
        %v3629 = vpop.f32.mrb[0].mxu0
        %v3630 = vadd.f32 %v3408, %v3629
        %v3631 = vpop.f32.mrb[0].mxu0
        %v3632 = vadd.f32 %v3412, %v3631
        %v3633 = vpop.f32.mrb[0].mxu0
        %v3634 = vadd.f32 %v3408, %v3633
        %v3635 = vpop.f32.mrb[0].mxu0
        %v3636 = vadd.f32 %v3412, %v3635
        %3637 = vmatprep.mubr.bf16.mxu0 0
        %3638 = vmatmul.mubr.bf16.gmra.mrb[0].mxu0 %v3369
        %v3639 = vpop.f32.mrb[0].mxu0
        %v3640 = vadd.f32 %v3408, %v3639
        %v3641 = vpop.f32.mrb[0].mxu0
        %v3642 = vadd.f32 %v3412, %v3641
        %v3643 = vpop.f32.mrb[0].mxu0
        %v3644 = vadd.f32 %v3408, %v3643
        %v3645 = vpop.f32.mrb[0].mxu0
        %v3646 = vadd.f32 %v3412, %v3645
        %3647 = vmatprep.mubr.bf16.mxu0 0
        %3648 = vmatmul.mubr.bf16.gmra.mrb[0].mxu0 %v3370
        %v3649 = vpop.f32.mrb[0].mxu0
        %v3650 = vadd.f32 %v3408, %v3649
        %v3651 = vpop.f32.mrb[0].mxu0
        %v3652 = vadd.f32 %v3412, %v3651
        %v3653 = vpop.f32.mrb[0].mxu0
        %v3654 = vadd.f32 %v3408, %v3653
        %v3655 = vpop.f32.mrb[0].mxu0
        %v3656 = vadd.f32 %v3412, %v3655
        %3657 = vdwg.mxu0
        %3658 = vmatprep.subr.bf16.mxu0 %v3524
        %3659 = vmatpush1.bf16.msra.mxu0 %v3523
        %3660 = vmatprep.subr.bf16.mxu0 %v3528
        %3661 = vmatpush1.bf16.msra.mxu0 %v3527
        %3662 = vmatprep.subr.bf16.mxu0 %v3532
        %3663 = vmatpush1.bf16.msra.mxu0 %v3531
        %3664 = vmatprep.subr.bf16.mxu0 %v3536
        %3665 = vmatpush1.bf16.msra.mxu0 %v3535
        %3666 = vmatprep.subr.bf16.mxu0 %v3540
        %3667 = vmatpush1.bf16.msra.mxu0 %v3539
        %3668 = vmatprep.subr.bf16.mxu0 %v3544
        %3669 = vmatpush1.bf16.msra.mxu0 %v3543
        %3670 = vmatprep.subr.bf16.mxu0 %v3548
        %3671 = vmatpush1.bf16.msra.mxu0 %v3547
        %3672 = vmatprep.subr.bf16.mxu0 %v3552
        %3673 = vmatpush1.bf16.msra.mxu0 %v3551
        %3674 = vmatprep.subr.bf16.mxu0 0
        %3675 = vmatpush1.bf16.msra.mxu0 0
        %3676 = vmatprep.subr.bf16.mxu0 0
        %3677 = vmatpush1.bf16.msra.mxu0 0
        %3678 = vmatprep.subr.bf16.mxu0 0
        %3679 = vmatpush1.bf16.msra.mxu0 0
        %3680 = vmatprep.subr.bf16.mxu0 0
        %3681 = vmatpush1.bf16.msra.mxu0 0
        %3682 = vmatprep.subr.bf16.mxu0 0
        %3683 = vmatpush1.bf16.msra.mxu0 0
        %3684 = vmatprep.subr.bf16.mxu0 0
        %3685 = vmatpush1.bf16.msra.mxu0 0
        %3686 = vmatprep.subr.bf16.mxu0 0
        %3687 = vmatpush1.bf16.msra.mxu0 0
        %3688 = vmatprep.subr.bf16.mxu0 0
        %3689 = vmatpush1.bf16.msra.mxu0 0
        %3690 = vmatprep.mubr.bf16.mxu0 0
        %3691 = vmatmul.mubr.bf16.gmra.mrb[0].mxu0 %v3367
        %v3692 = vpop.f32.mrb[0].mxu0
        %v3693 = vadd.f32 %v3416, %v3692
        %v3694 = vpop.f32.mrb[0].mxu0
        %v3695 = vadd.f32 %v3420, %v3694
        %v3696 = vpop.f32.mrb[0].mxu0
        %v3697 = vadd.f32 %v3416, %v3696
        %v3698 = vpop.f32.mrb[0].mxu0
        %v3699 = vadd.f32 %v3420, %v3698
        %3700 = vmatprep.mubr.bf16.mxu0 0
        %3701 = vmatmul.mubr.bf16.gmra.mrb[0].mxu0 %v3368
        %v3702 = vpop.f32.mrb[0].mxu0
        %v3703 = vadd.f32 %v3416, %v3702
        %v3704 = vpop.f32.mrb[0].mxu0
        %v3705 = vadd.f32 %v3420, %v3704
        %v3706 = vpop.f32.mrb[0].mxu0
        %v3707 = vadd.f32 %v3416, %v3706
        %v3708 = vpop.f32.mrb[0].mxu0
        %v3709 = vadd.f32 %v3420, %v3708
        %3710 = vmatprep.mubr.bf16.mxu0 0
        %3711 = vmatmul.mubr.bf16.gmra.mrb[0].mxu0 %v3369
        %v3712 = vpop.f32.mrb[0].mxu0
        %v3713 = vadd.f32 %v3416, %v3712
        %v3714 = vpop.f32.mrb[0].mxu0
        %v3715 = vadd.f32 %v3420, %v3714
        %v3716 = vpop.f32.mrb[0].mxu0
        %v3717 = vadd.f32 %v3416, %v3716
        %v3718 = vpop.f32.mrb[0].mxu0
        %v3719 = vadd.f32 %v3420, %v3718
        %3720 = vmatprep.mubr.bf16.mxu0 0
        %3721 = vmatmul.mubr.bf16.gmra.mrb[0].mxu0 %v3370
        %v3722 = vpop.f32.mrb[0].mxu0
        %v3723 = vadd.f32 %v3416, %v3722
        %v3724 = vpop.f32.mrb[0].mxu0
        %v3725 = vadd.f32 %v3420, %v3724
        %v3726 = vpop.f32.mrb[0].mxu0
        %v3727 = vadd.f32 %v3416, %v3726
        %v3728 = vpop.f32.mrb[0].mxu0
        %v3729 = vadd.f32 %v3420, %v3728
        %3730 = vdwg.mxu0
        %v3731 = vmul.f32 %v3620, 0.5
        %v3732 = vmul.f32 %v3622, 0.5
        %v3733 = vmul.f32 %v3693, 0.5
        %v3734 = vmul.f32 %v3695, 0.5
        %v3735 = vmul.f32 %v3624, 0.5
        %v3736 = vmul.f32 %v3626, 0.5
        %v3737 = vmul.f32 %v3697, 0.5
        %v3738 = vmul.f32 %v3699, 0.5
        %v3739 = vmul.f32 %v3630, 0.5
        %v3740 = vmul.f32 %v3632, 0.5
        %v3741 = vmul.f32 %v3703, 0.5
        %v3742 = vmul.f32 %v3705, 0.5
        %v3743 = vmul.f32 %v3634, 0.5
        %v3744 = vmul.f32 %v3636, 0.5
        %v3745 = vmul.f32 %v3707, 0.5
        %v3746 = vmul.f32 %v3709, 0.5
        %v3747 = vmul.f32 %v3640, 0.5
        %v3748 = vmul.f32 %v3642, 0.5
        %v3749 = vmul.f32 %v3713, 0.5
        %v3750 = vmul.f32 %v3715, 0.5
        %v3751 = vmul.f32 %v3644, 0.5
        %v3752 = vmul.f32 %v3646, 0.5
        %v3753 = vmul.f32 %v3717, 0.5
        %v3754 = vmul.f32 %v3719, 0.5
        %v3755 = vmul.f32 %v3650, 0.5
        %v3756 = vmul.f32 %v3652, 0.5
        %v3757 = vmul.f32 %v3723, 0.5
        %v3758 = vmul.f32 %v3725, 0.5
        %v3759 = vmul.f32 %v3654, 0.5
        %v3760 = vmul.f32 %v3656, 0.5
        %v3761 = vmul.f32 %v3727, 0.5
        %v3762 = vmul.f32 %v3729, 0.5
        %v3763 = vmul.f32 %v3620, 0.70710677
        %v3764 = vmul.f32 %v3622, 0.70710677
        %v3765 = vmul.f32 %v3693, 0.70710677
        %v3766 = vmul.f32 %v3695, 0.70710677
        %v3767 = vmul.f32 %v3624, 0.70710677
        %v3768 = vmul.f32 %v3626, 0.70710677
        %v3769 = vmul.f32 %v3697, 0.70710677
        %v3770 = vmul.f32 %v3699, 0.70710677
        %v3771 = vmul.f32 %v3630, 0.70710677
        %v3772 = vmul.f32 %v3632, 0.70710677
        %v3773 = vmul.f32 %v3703, 0.70710677
        %v3774 = vmul.f32 %v3705, 0.70710677
        %v3775 = vmul.f32 %v3634, 0.70710677
        %v3776 = vmul.f32 %v3636, 0.70710677
        %v3777 = vmul.f32 %v3707, 0.70710677
        %v3778 = vmul.f32 %v3709, 0.70710677
        %v3779 = vmul.f32 %v3640, 0.70710677
        %v3780 = vmul.f32 %v3642, 0.70710677
        %v3781 = vmul.f32 %v3713, 0.70710677
        %v3782 = vmul.f32 %v3715, 0.70710677
        %v3783 = vmul.f32 %v3644, 0.70710677
        %v3784 = vmul.f32 %v3646, 0.70710677
        %v3785 = vmul.f32 %v3717, 0.70710677
        %v3786 = vmul.f32 %v3719, 0.70710677
        %v3787 = vmul.f32 %v3650, 0.70710677
        %v3788 = vmul.f32 %v3652, 0.70710677
        %v3789 = vmul.f32 %v3723, 0.70710677
        %v3790 = vmul.f32 %v3725, 0.70710677
        %v3791 = vmul.f32 %v3654, 0.70710677
        %v3792 = vmul.f32 %v3656, 0.70710677
        %v3793 = vmul.f32 %v3727, 0.70710677
        %v3794 = vmul.f32 %v3729, 0.70710677
        %vm3795 = vcmp.ge.f32.partialorder %v3763, 0.0
        %vm3796 = vcmp.ge.f32.partialorder %v3764, 0.0
        %vm3797 = vcmp.ge.f32.partialorder %v3765, 0.0
        %vm3798 = vcmp.ge.f32.partialorder %v3766, 0.0
        %vm3799 = vcmp.ge.f32.partialorder %v3767, 0.0
        %vm3800 = vcmp.ge.f32.partialorder %v3768, 0.0
        %vm3801 = vcmp.ge.f32.partialorder %v3769, 0.0
        %vm3802 = vcmp.ge.f32.partialorder %v3770, 0.0
        %vm3803 = vcmp.ge.f32.partialorder %v3771, 0.0
        %vm3804 = vcmp.ge.f32.partialorder %v3772, 0.0
        %vm3805 = vcmp.ge.f32.partialorder %v3773, 0.0
        %vm3806 = vcmp.ge.f32.partialorder %v3774, 0.0
        %vm3807 = vcmp.ge.f32.partialorder %v3775, 0.0
        %vm3808 = vcmp.ge.f32.partialorder %v3776, 0.0
        %vm3809 = vcmp.ge.f32.partialorder %v3777, 0.0
        %vm3810 = vcmp.ge.f32.partialorder %v3778, 0.0
        %vm3811 = vcmp.ge.f32.partialorder %v3779, 0.0
        %vm3812 = vcmp.ge.f32.partialorder %v3780, 0.0
        %vm3813 = vcmp.ge.f32.partialorder %v3781, 0.0
        %vm3814 = vcmp.ge.f32.partialorder %v3782, 0.0
        %vm3815 = vcmp.ge.f32.partialorder %v3783, 0.0
        %vm3816 = vcmp.ge.f32.partialorder %v3784, 0.0
        %vm3817 = vcmp.ge.f32.partialorder %v3785, 0.0
        %vm3818 = vcmp.ge.f32.partialorder %v3786, 0.0
        %vm3819 = vcmp.ge.f32.partialorder %v3787, 0.0
        %vm3820 = vcmp.ge.f32.partialorder %v3788, 0.0
        %vm3821 = vcmp.ge.f32.partialorder %v3789, 0.0
        %vm3822 = vcmp.ge.f32.partialorder %v3790, 0.0
        %vm3823 = vcmp.ge.f32.partialorder %v3791, 0.0
        %vm3824 = vcmp.ge.f32.partialorder %v3792, 0.0
        %vm3825 = vcmp.ge.f32.partialorder %v3793, 0.0
        %vm3826 = vcmp.ge.f32.partialorder %v3794, 0.0
        %v3827 = vsel %vm3795, 1.0, -1.0
        %v3828 = vsel %vm3796, 1.0, -1.0
        %v3829 = vsel %vm3797, 1.0, -1.0
        %v3830 = vsel %vm3798, 1.0, -1.0
        %v3831 = vsel %vm3799, 1.0, -1.0
        %v3832 = vsel %vm3800, 1.0, -1.0
        %v3833 = vsel %vm3801, 1.0, -1.0
        %v3834 = vsel %vm3802, 1.0, -1.0
        %v3835 = vsel %vm3803, 1.0, -1.0
        %v3836 = vsel %vm3804, 1.0, -1.0
        %v3837 = vsel %vm3805, 1.0, -1.0
        %v3838 = vsel %vm3806, 1.0, -1.0
        %v3839 = vsel %vm3807, 1.0, -1.0
        %v3840 = vsel %vm3808, 1.0, -1.0
        %v3841 = vsel %vm3809, 1.0, -1.0
        %v3842 = vsel %vm3810, 1.0, -1.0
        %v3843 = vsel %vm3811, 1.0, -1.0
        %v3844 = vsel %vm3812, 1.0, -1.0
        %v3845 = vsel %vm3813, 1.0, -1.0
        %v3846 = vsel %vm3814, 1.0, -1.0
        %v3847 = vsel %vm3815, 1.0, -1.0
        %v3848 = vsel %vm3816, 1.0, -1.0
        %v3849 = vsel %vm3817, 1.0, -1.0
        %v3850 = vsel %vm3818, 1.0, -1.0
        %v3851 = vsel %vm3819, 1.0, -1.0
        %v3852 = vsel %vm3820, 1.0, -1.0
        %v3853 = vsel %vm3821, 1.0, -1.0
        %v3854 = vsel %vm3822, 1.0, -1.0
        %v3855 = vsel %vm3823, 1.0, -1.0
        %v3856 = vsel %vm3824, 1.0, -1.0
        %v3857 = vsel %vm3825, 1.0, -1.0
        %v3858 = vsel %vm3826, 1.0, -1.0
        %v3859 = vand.u32 2147483647, %v3763
        %v3860 = vand.u32 2147483647, %v3764
        %v3861 = vand.u32 2147483647, %v3765
        %v3862 = vand.u32 2147483647, %v3766
        %v3863 = vand.u32 2147483647, %v3767
        %v3864 = vand.u32 2147483647, %v3768
        %v3865 = vand.u32 2147483647, %v3769
        %v3866 = vand.u32 2147483647, %v3770
        %v3867 = vand.u32 2147483647, %v3771
        %v3868 = vand.u32 2147483647, %v3772
        %v3869 = vand.u32 2147483647, %v3773
        %v3870 = vand.u32 2147483647, %v3774
        %v3871 = vand.u32 2147483647, %v3775
        %v3872 = vand.u32 2147483647, %v3776
        %v3873 = vand.u32 2147483647, %v3777
        %v3874 = vand.u32 2147483647, %v3778
        %v3875 = vand.u32 2147483647, %v3779
        %v3876 = vand.u32 2147483647, %v3780
        %v3877 = vand.u32 2147483647, %v3781
        %v3878 = vand.u32 2147483647, %v3782
        %v3879 = vand.u32 2147483647, %v3783
        %v3880 = vand.u32 2147483647, %v3784
        %v3881 = vand.u32 2147483647, %v3785
        %v3882 = vand.u32 2147483647, %v3786
        %v3883 = vand.u32 2147483647, %v3787
        %v3884 = vand.u32 2147483647, %v3788
        %v3885 = vand.u32 2147483647, %v3789
        %v3886 = vand.u32 2147483647, %v3790
        %v3887 = vand.u32 2147483647, %v3791
        %v3888 = vand.u32 2147483647, %v3792
        %v3889 = vand.u32 2147483647, %v3793
        %v3890 = vand.u32 2147483647, %v3794
        %v3891 = vmul.f32 %v3859, 0.3275911
        %v3892 = vmul.f32 %v3860, 0.3275911
        %v3893 = vmul.f32 %v3861, 0.3275911
        %v3894 = vmul.f32 %v3862, 0.3275911
        %v3895 = vmul.f32 %v3863, 0.3275911
        %v3896 = vmul.f32 %v3864, 0.3275911
        %v3897 = vmul.f32 %v3865, 0.3275911
        %v3898 = vmul.f32 %v3866, 0.3275911
        %v3899 = vmul.f32 %v3867, 0.3275911
        %v3900 = vmul.f32 %v3868, 0.3275911
        %v3901 = vmul.f32 %v3869, 0.3275911
        %v3902 = vmul.f32 %v3870, 0.3275911
        %v3903 = vmul.f32 %v3871, 0.3275911
        %v3904 = vmul.f32 %v3872, 0.3275911
        %v3905 = vmul.f32 %v3873, 0.3275911
        %v3906 = vmul.f32 %v3874, 0.3275911
        %v3907 = vmul.f32 %v3875, 0.3275911
        %v3908 = vmul.f32 %v3876, 0.3275911
        %v3909 = vmul.f32 %v3877, 0.3275911
        %v3910 = vmul.f32 %v3878, 0.3275911
        %v3911 = vmul.f32 %v3879, 0.3275911
        %v3912 = vmul.f32 %v3880, 0.3275911
        %v3913 = vmul.f32 %v3881, 0.3275911
        %v3914 = vmul.f32 %v3882, 0.3275911
        %v3915 = vmul.f32 %v3883, 0.3275911
        %v3916 = vmul.f32 %v3884, 0.3275911
        %v3917 = vmul.f32 %v3885, 0.3275911
        %v3918 = vmul.f32 %v3886, 0.3275911
        %v3919 = vmul.f32 %v3887, 0.3275911
        %v3920 = vmul.f32 %v3888, 0.3275911
        %v3921 = vmul.f32 %v3889, 0.3275911
        %v3922 = vmul.f32 %v3890, 0.3275911
        %v3923 = vadd.f32 %v3891, 1.0
        %v3924 = vadd.f32 %v3892, 1.0
        %v3925 = vadd.f32 %v3893, 1.0
        %v3926 = vadd.f32 %v3894, 1.0
        %v3927 = vadd.f32 %v3895, 1.0
        %v3928 = vadd.f32 %v3896, 1.0
        %v3929 = vadd.f32 %v3897, 1.0
        %v3930 = vadd.f32 %v3898, 1.0
        %v3931 = vadd.f32 %v3899, 1.0
        %v3932 = vadd.f32 %v3900, 1.0
        %v3933 = vadd.f32 %v3901, 1.0
        %v3934 = vadd.f32 %v3902, 1.0
        %v3935 = vadd.f32 %v3903, 1.0
        %v3936 = vadd.f32 %v3904, 1.0
        %v3937 = vadd.f32 %v3905, 1.0
        %v3938 = vadd.f32 %v3906, 1.0
        %v3939 = vadd.f32 %v3907, 1.0
        %v3940 = vadd.f32 %v3908, 1.0
        %v3941 = vadd.f32 %v3909, 1.0
        %v3942 = vadd.f32 %v3910, 1.0
        %v3943 = vadd.f32 %v3911, 1.0
        %v3944 = vadd.f32 %v3912, 1.0
        %v3945 = vadd.f32 %v3913, 1.0
        %v3946 = vadd.f32 %v3914, 1.0
        %v3947 = vadd.f32 %v3915, 1.0
        %v3948 = vadd.f32 %v3916, 1.0
        %v3949 = vadd.f32 %v3917, 1.0
        %v3950 = vadd.f32 %v3918, 1.0
        %v3951 = vadd.f32 %v3919, 1.0
        %v3952 = vadd.f32 %v3920, 1.0
        %v3953 = vadd.f32 %v3921, 1.0
        %v3954 = vadd.f32 %v3922, 1.0
        %v3955 = vrcp.pop %v3923
        %v3956 = vmul.f32 1.0, %v3955
        %v3957 = vrcp.pop %v3924
        %v3958 = vmul.f32 1.0, %v3957
        %v3959 = vrcp.pop %v3925
        %v3960 = vmul.f32 1.0, %v3959
        %v3961 = vrcp.pop %v3926
        %v3962 = vmul.f32 1.0, %v3961
        %v3963 = vrcp.pop %v3927
        %v3964 = vmul.f32 1.0, %v3963
        %v3965 = vrcp.pop %v3928
        %v3966 = vmul.f32 1.0, %v3965
        %v3967 = vrcp.pop %v3929
        %v3968 = vmul.f32 1.0, %v3967
        %v3969 = vrcp.pop %v3930
        %v3970 = vmul.f32 1.0, %v3969
        %v3971 = vrcp.pop %v3931
        %v3972 = vmul.f32 1.0, %v3971
        %v3973 = vrcp.pop %v3932
        %v3974 = vmul.f32 1.0, %v3973
        %v3975 = vrcp.pop %v3933
        %v3976 = vmul.f32 1.0, %v3975
        %v3977 = vrcp.pop %v3934
        %v3978 = vmul.f32 1.0, %v3977
        %v3979 = vrcp.pop %v3935
        %v3980 = vmul.f32 1.0, %v3979
        %v3981 = vrcp.pop %v3936
        %v3982 = vmul.f32 1.0, %v3981
        %v3983 = vrcp.pop %v3937
        %v3984 = vmul.f32 1.0, %v3983
        %v3985 = vrcp.pop %v3938
        %v3986 = vmul.f32 1.0, %v3985
        %v3987 = vrcp.pop %v3939
        %v3988 = vmul.f32 1.0, %v3987
        %v3989 = vrcp.pop %v3940
        %v3990 = vmul.f32 1.0, %v3989
        %v3991 = vrcp.pop %v3941
        %v3992 = vmul.f32 1.0, %v3991
        %v3993 = vrcp.pop %v3942
        %v3994 = vmul.f32 1.0, %v3993
        %v3995 = vrcp.pop %v3943
        %v3996 = vmul.f32 1.0, %v3995
        %v3997 = vrcp.pop %v3944
        %v3998 = vmul.f32 1.0, %v3997
        %v3999 = vrcp.pop %v3945
        %v4000 = vmul.f32 1.0, %v3999
        %v4001 = vrcp.pop %v3946
        %v4002 = vmul.f32 1.0, %v4001
        %v4003 = vrcp.pop %v3947
        %v4004 = vmul.f32 1.0, %v4003
        %v4005 = vrcp.pop %v3948
        %v4006 = vmul.f32 1.0, %v4005
        %v4007 = vrcp.pop %v3949
        %v4008 = vmul.f32 1.0, %v4007
        %v4009 = vrcp.pop %v3950
        %v4010 = vmul.f32 1.0, %v4009
        %v4011 = vrcp.pop %v3951
        %v4012 = vmul.f32 1.0, %v4011
        %v4013 = vrcp.pop %v3952
        %v4014 = vmul.f32 1.0, %v4013
        %v4015 = vrcp.pop %v3953
        %v4016 = vmul.f32 1.0, %v4015
        %v4017 = vrcp.pop %v3954
        %v4018 = vmul.f32 1.0, %v4017
        %v4019 = vmul.f32 %v3956, 1.0614054
        %v4020 = vmul.f32 %v3958, 1.0614054
        %v4021 = vmul.f32 %v3960, 1.0614054
        %v4022 = vmul.f32 %v3962, 1.0614054
        %v4023 = vmul.f32 %v3964, 1.0614054
        %v4024 = vmul.f32 %v3966, 1.0614054
        %v4025 = vmul.f32 %v3968, 1.0614054
        %v4026 = vmul.f32 %v3970, 1.0614054
        %v4027 = vmul.f32 %v3972, 1.0614054
        %v4028 = vmul.f32 %v3974, 1.0614054
        %v4029 = vmul.f32 %v3976, 1.0614054
        %v4030 = vmul.f32 %v3978, 1.0614054
        %v4031 = vmul.f32 %v3980, 1.0614054
        %v4032 = vmul.f32 %v3982, 1.0614054
        %v4033 = vmul.f32 %v3984, 1.0614054
        %v4034 = vmul.f32 %v3986, 1.0614054
        %v4035 = vmul.f32 %v3988, 1.0614054
        %v4036 = vmul.f32 %v3990, 1.0614054
        %v4037 = vmul.f32 %v3992, 1.0614054
        %v4038 = vmul.f32 %v3994, 1.0614054
        %v4039 = vmul.f32 %v3996, 1.0614054
        %v4040 = vmul.f32 %v3998, 1.0614054
        %v4041 = vmul.f32 %v4000, 1.0614054
        %v4042 = vmul.f32 %v4002, 1.0614054
        %v4043 = vmul.f32 %v4004, 1.0614054
        %v4044 = vmul.f32 %v4006, 1.0614054
        %v4045 = vmul.f32 %v4008, 1.0614054
        %v4046 = vmul.f32 %v4010, 1.0614054
        %v4047 = vmul.f32 %v4012, 1.0614054
        %v4048 = vmul.f32 %v4014, 1.0614054
        %v4049 = vmul.f32 %v4016, 1.0614054
        %v4050 = vmul.f32 %v4018, 1.0614054
        %v4051 = vadd.f32 %v4019, -1.4531521
        %v4052 = vadd.f32 %v4020, -1.4531521
        %v4053 = vadd.f32 %v4021, -1.4531521
        %v4054 = vadd.f32 %v4022, -1.4531521
        %v4055 = vadd.f32 %v4023, -1.4531521
        %v4056 = vadd.f32 %v4024, -1.4531521
        %v4057 = vadd.f32 %v4025, -1.4531521
        %v4058 = vadd.f32 %v4026, -1.4531521
        %v4059 = vadd.f32 %v4027, -1.4531521
        %v4060 = vadd.f32 %v4028, -1.4531521
        %v4061 = vadd.f32 %v4029, -1.4531521
        %v4062 = vadd.f32 %v4030, -1.4531521
        %v4063 = vadd.f32 %v4031, -1.4531521
        %v4064 = vadd.f32 %v4032, -1.4531521
        %v4065 = vadd.f32 %v4033, -1.4531521
        %v4066 = vadd.f32 %v4034, -1.4531521
        %v4067 = vadd.f32 %v4035, -1.4531521
        %v4068 = vadd.f32 %v4036, -1.4531521
        %v4069 = vadd.f32 %v4037, -1.4531521
        %v4070 = vadd.f32 %v4038, -1.4531521
        %v4071 = vadd.f32 %v4039, -1.4531521
        %v4072 = vadd.f32 %v4040, -1.4531521
        %v4073 = vadd.f32 %v4041, -1.4531521
        %v4074 = vadd.f32 %v4042, -1.4531521
        %v4075 = vadd.f32 %v4043, -1.4531521
        %v4076 = vadd.f32 %v4044, -1.4531521
        %v4077 = vadd.f32 %v4045, -1.4531521
        %v4078 = vadd.f32 %v4046, -1.4531521
        %v4079 = vadd.f32 %v4047, -1.4531521
        %v4080 = vadd.f32 %v4048, -1.4531521
        %v4081 = vadd.f32 %v4049, -1.4531521
        %v4082 = vadd.f32 %v4050, -1.4531521
        %v4083 = vmul.f32 %v4051, %v3956
        %v4084 = vmul.f32 %v4052, %v3958
        %v4085 = vmul.f32 %v4053, %v3960
        %v4086 = vmul.f32 %v4054, %v3962
        %v4087 = vmul.f32 %v4055, %v3964
        %v4088 = vmul.f32 %v4056, %v3966
        %v4089 = vmul.f32 %v4057, %v3968
        %v4090 = vmul.f32 %v4058, %v3970
        %v4091 = vmul.f32 %v4059, %v3972
        %v4092 = vmul.f32 %v4060, %v3974
        %v4093 = vmul.f32 %v4061, %v3976
        %v4094 = vmul.f32 %v4062, %v3978
        %v4095 = vmul.f32 %v4063, %v3980
        %v4096 = vmul.f32 %v4064, %v3982
        %v4097 = vmul.f32 %v4065, %v3984
        %v4098 = vmul.f32 %v4066, %v3986
        %v4099 = vmul.f32 %v4067, %v3988
        %v4100 = vmul.f32 %v4068, %v3990
        %v4101 = vmul.f32 %v4069, %v3992
        %v4102 = vmul.f32 %v4070, %v3994
        %v4103 = vmul.f32 %v4071, %v3996
        %v4104 = vmul.f32 %v4072, %v3998
        %v4105 = vmul.f32 %v4073, %v4000
        %v4106 = vmul.f32 %v4074, %v4002
        %v4107 = vmul.f32 %v4075, %v4004
        %v4108 = vmul.f32 %v4076, %v4006
        %v4109 = vmul.f32 %v4077, %v4008
        %v4110 = vmul.f32 %v4078, %v4010
        %v4111 = vmul.f32 %v4079, %v4012
        %v4112 = vmul.f32 %v4080, %v4014
        %v4113 = vmul.f32 %v4081, %v4016
        %v4114 = vmul.f32 %v4082, %v4018
        %v4115 = vadd.f32 %v4083, 1.4214138
        %v4116 = vadd.f32 %v4084, 1.4214138
        %v4117 = vadd.f32 %v4085, 1.4214138
        %v4118 = vadd.f32 %v4086, 1.4214138
        %v4119 = vadd.f32 %v4087, 1.4214138
        %v4120 = vadd.f32 %v4088, 1.4214138
        %v4121 = vadd.f32 %v4089, 1.4214138
        %v4122 = vadd.f32 %v4090, 1.4214138
        %v4123 = vadd.f32 %v4091, 1.4214138
        %v4124 = vadd.f32 %v4092, 1.4214138
        %v4125 = vadd.f32 %v4093, 1.4214138
        %v4126 = vadd.f32 %v4094, 1.4214138
        %v4127 = vadd.f32 %v4095, 1.4214138
        %v4128 = vadd.f32 %v4096, 1.4214138
        %v4129 = vadd.f32 %v4097, 1.4214138
        %v4130 = vadd.f32 %v4098, 1.4214138
        %v4131 = vadd.f32 %v4099, 1.4214138
        %v4132 = vadd.f32 %v4100, 1.4214138
        %v4133 = vadd.f32 %v4101, 1.4214138
        %v4134 = vadd.f32 %v4102, 1.4214138
        %v4135 = vadd.f32 %v4103, 1.4214138
        %v4136 = vadd.f32 %v4104, 1.4214138
        %v4137 = vadd.f32 %v4105, 1.4214138
        %v4138 = vadd.f32 %v4106, 1.4214138
        %v4139 = vadd.f32 %v4107, 1.4214138
        %v4140 = vadd.f32 %v4108, 1.4214138
        %v4141 = vadd.f32 %v4109, 1.4214138
        %v4142 = vadd.f32 %v4110, 1.4214138
        %v4143 = vadd.f32 %v4111, 1.4214138
        %v4144 = vadd.f32 %v4112, 1.4214138
        %v4145 = vadd.f32 %v4113, 1.4214138
        %v4146 = vadd.f32 %v4114, 1.4214138
        %v4147 = vmul.f32 %v4115, %v3956
        %v4148 = vmul.f32 %v4116, %v3958
        %v4149 = vmul.f32 %v4117, %v3960
        %v4150 = vmul.f32 %v4118, %v3962
        %v4151 = vmul.f32 %v4119, %v3964
        %v4152 = vmul.f32 %v4120, %v3966
        %v4153 = vmul.f32 %v4121, %v3968
        %v4154 = vmul.f32 %v4122, %v3970
        %v4155 = vmul.f32 %v4123, %v3972
        %v4156 = vmul.f32 %v4124, %v3974
        %v4157 = vmul.f32 %v4125, %v3976
        %v4158 = vmul.f32 %v4126, %v3978
        %v4159 = vmul.f32 %v4127, %v3980
        %v4160 = vmul.f32 %v4128, %v3982
        %v4161 = vmul.f32 %v4129, %v3984
        %v4162 = vmul.f32 %v4130, %v3986
        %v4163 = vmul.f32 %v4131, %v3988
        %v4164 = vmul.f32 %v4132, %v3990
        %v4165 = vmul.f32 %v4133, %v3992
        %v4166 = vmul.f32 %v4134, %v3994
        %v4167 = vmul.f32 %v4135, %v3996
        %v4168 = vmul.f32 %v4136, %v3998
        %v4169 = vmul.f32 %v4137, %v4000
        %v4170 = vmul.f32 %v4138, %v4002
        %v4171 = vmul.f32 %v4139, %v4004
        %v4172 = vmul.f32 %v4140, %v4006
        %v4173 = vmul.f32 %v4141, %v4008
        %v4174 = vmul.f32 %v4142, %v4010
        %v4175 = vmul.f32 %v4143, %v4012
        %v4176 = vmul.f32 %v4144, %v4014
        %v4177 = vmul.f32 %v4145, %v4016
        %v4178 = vmul.f32 %v4146, %v4018
        %v4179 = vadd.f32 %v4147, -0.28449672
        %v4180 = vadd.f32 %v4148, -0.28449672
        %v4181 = vadd.f32 %v4149, -0.28449672
        %v4182 = vadd.f32 %v4150, -0.28449672
        %v4183 = vadd.f32 %v4151, -0.28449672
        %v4184 = vadd.f32 %v4152, -0.28449672
        %v4185 = vadd.f32 %v4153, -0.28449672
        %v4186 = vadd.f32 %v4154, -0.28449672
        %v4187 = vadd.f32 %v4155, -0.28449672
        %v4188 = vadd.f32 %v4156, -0.28449672
        %v4189 = vadd.f32 %v4157, -0.28449672
        %v4190 = vadd.f32 %v4158, -0.28449672
        %v4191 = vadd.f32 %v4159, -0.28449672
        %v4192 = vadd.f32 %v4160, -0.28449672
        %v4193 = vadd.f32 %v4161, -0.28449672
        %v4194 = vadd.f32 %v4162, -0.28449672
        %v4195 = vadd.f32 %v4163, -0.28449672
        %v4196 = vadd.f32 %v4164, -0.28449672
        %v4197 = vadd.f32 %v4165, -0.28449672
        %v4198 = vadd.f32 %v4166, -0.28449672
        %v4199 = vadd.f32 %v4167, -0.28449672
        %v4200 = vadd.f32 %v4168, -0.28449672
        %v4201 = vadd.f32 %v4169, -0.28449672
        %v4202 = vadd.f32 %v4170, -0.28449672
        %v4203 = vadd.f32 %v4171, -0.28449672
        %v4204 = vadd.f32 %v4172, -0.28449672
        %v4205 = vadd.f32 %v4173, -0.28449672
        %v4206 = vadd.f32 %v4174, -0.28449672
        %v4207 = vadd.f32 %v4175, -0.28449672
        %v4208 = vadd.f32 %v4176, -0.28449672
        %v4209 = vadd.f32 %v4177, -0.28449672
        %v4210 = vadd.f32 %v4178, -0.28449672
        %v4211 = vmul.f32 %v4179, %v3956
        %v4212 = vmul.f32 %v4180, %v3958
        %v4213 = vmul.f32 %v4181, %v3960
        %v4214 = vmul.f32 %v4182, %v3962
        %v4215 = vmul.f32 %v4183, %v3964
        %v4216 = vmul.f32 %v4184, %v3966
        %v4217 = vmul.f32 %v4185, %v3968
        %v4218 = vmul.f32 %v4186, %v3970
        %v4219 = vmul.f32 %v4187, %v3972
        %v4220 = vmul.f32 %v4188, %v3974
        %v4221 = vmul.f32 %v4189, %v3976
        %v4222 = vmul.f32 %v4190, %v3978
        %v4223 = vmul.f32 %v4191, %v3980
        %v4224 = vmul.f32 %v4192, %v3982
        %v4225 = vmul.f32 %v4193, %v3984
        %v4226 = vmul.f32 %v4194, %v3986
        %v4227 = vmul.f32 %v4195, %v3988
        %v4228 = vmul.f32 %v4196, %v3990
        %v4229 = vmul.f32 %v4197, %v3992
        %v4230 = vmul.f32 %v4198, %v3994
        %v4231 = vmul.f32 %v4199, %v3996
        %v4232 = vmul.f32 %v4200, %v3998
        %v4233 = vmul.f32 %v4201, %v4000
        %v4234 = vmul.f32 %v4202, %v4002
        %v4235 = vmul.f32 %v4203, %v4004
        %v4236 = vmul.f32 %v4204, %v4006
        %v4237 = vmul.f32 %v4205, %v4008
        %v4238 = vmul.f32 %v4206, %v4010
        %v4239 = vmul.f32 %v4207, %v4012
        %v4240 = vmul.f32 %v4208, %v4014
        %v4241 = vmul.f32 %v4209, %v4016
        %v4242 = vmul.f32 %v4210, %v4018
        %v4243 = vadd.f32 %v4211, 0.2548296
        %v4244 = vadd.f32 %v4212, 0.2548296
        %v4245 = vadd.f32 %v4213, 0.2548296
        %v4246 = vadd.f32 %v4214, 0.2548296
        %v4247 = vadd.f32 %v4215, 0.2548296
        %v4248 = vadd.f32 %v4216, 0.2548296
        %v4249 = vadd.f32 %v4217, 0.2548296
        %v4250 = vadd.f32 %v4218, 0.2548296
        %v4251 = vadd.f32 %v4219, 0.2548296
        %v4252 = vadd.f32 %v4220, 0.2548296
        %v4253 = vadd.f32 %v4221, 0.2548296
        %v4254 = vadd.f32 %v4222, 0.2548296
        %v4255 = vadd.f32 %v4223, 0.2548296
        %v4256 = vadd.f32 %v4224, 0.2548296
        %v4257 = vadd.f32 %v4225, 0.2548296
        %v4258 = vadd.f32 %v4226, 0.2548296
        %v4259 = vadd.f32 %v4227, 0.2548296
        %v4260 = vadd.f32 %v4228, 0.2548296
        %v4261 = vadd.f32 %v4229, 0.2548296
        %v4262 = vadd.f32 %v4230, 0.2548296
        %v4263 = vadd.f32 %v4231, 0.2548296
        %v4264 = vadd.f32 %v4232, 0.2548296
        %v4265 = vadd.f32 %v4233, 0.2548296
        %v4266 = vadd.f32 %v4234, 0.2548296
        %v4267 = vadd.f32 %v4235, 0.2548296
        %v4268 = vadd.f32 %v4236, 0.2548296
        %v4269 = vadd.f32 %v4237, 0.2548296
        %v4270 = vadd.f32 %v4238, 0.2548296
        %v4271 = vadd.f32 %v4239, 0.2548296
        %v4272 = vadd.f32 %v4240, 0.2548296
        %v4273 = vadd.f32 %v4241, 0.2548296
        %v4274 = vadd.f32 %v4242, 0.2548296
        %v4275 = vmul.f32 %v4243, %v3956
        %v4276 = vmul.f32 %v4244, %v3958
        %v4277 = vmul.f32 %v4245, %v3960
        %v4278 = vmul.f32 %v4246, %v3962
        %v4279 = vmul.f32 %v4247, %v3964
        %v4280 = vmul.f32 %v4248, %v3966
        %v4281 = vmul.f32 %v4249, %v3968
        %v4282 = vmul.f32 %v4250, %v3970
        %v4283 = vmul.f32 %v4251, %v3972
        %v4284 = vmul.f32 %v4252, %v3974
        %v4285 = vmul.f32 %v4253, %v3976
        %v4286 = vmul.f32 %v4254, %v3978
        %v4287 = vmul.f32 %v4255, %v3980
        %v4288 = vmul.f32 %v4256, %v3982
        %v4289 = vmul.f32 %v4257, %v3984
        %v4290 = vmul.f32 %v4258, %v3986
        %v4291 = vmul.f32 %v4259, %v3988
        %v4292 = vmul.f32 %v4260, %v3990
        %v4293 = vmul.f32 %v4261, %v3992
        %v4294 = vmul.f32 %v4262, %v3994
        %v4295 = vmul.f32 %v4263, %v3996
        %v4296 = vmul.f32 %v4264, %v3998
        %v4297 = vmul.f32 %v4265, %v4000
        %v4298 = vmul.f32 %v4266, %v4002
        %v4299 = vmul.f32 %v4267, %v4004
        %v4300 = vmul.f32 %v4268, %v4006
        %v4301 = vmul.f32 %v4269, %v4008
        %v4302 = vmul.f32 %v4270, %v4010
        %v4303 = vmul.f32 %v4271, %v4012
        %v4304 = vmul.f32 %v4272, %v4014
        %v4305 = vmul.f32 %v4273, %v4016
        %v4306 = vmul.f32 %v4274, %v4018
        %v4307 = vsub.f32 0.0, %v3859
        %v4308 = vsub.f32 0.0, %v3860
        %v4309 = vsub.f32 0.0, %v3861
        %v4310 = vsub.f32 0.0, %v3862
        %v4311 = vsub.f32 0.0, %v3863
        %v4312 = vsub.f32 0.0, %v3864
        %v4313 = vsub.f32 0.0, %v3865
        %v4314 = vsub.f32 0.0, %v3866
        %v4315 = vsub.f32 0.0, %v3867
        %v4316 = vsub.f32 0.0, %v3868
        %v4317 = vsub.f32 0.0, %v3869
        %v4318 = vsub.f32 0.0, %v3870
        %v4319 = vsub.f32 0.0, %v3871
        %v4320 = vsub.f32 0.0, %v3872
        %v4321 = vsub.f32 0.0, %v3873
        %v4322 = vsub.f32 0.0, %v3874
        %v4323 = vsub.f32 0.0, %v3875
        %v4324 = vsub.f32 0.0, %v3876
        %v4325 = vsub.f32 0.0, %v3877
        %v4326 = vsub.f32 0.0, %v3878
        %v4327 = vsub.f32 0.0, %v3879
        %v4328 = vsub.f32 0.0, %v3880
        %v4329 = vsub.f32 0.0, %v3881
        %v4330 = vsub.f32 0.0, %v3882
        %v4331 = vsub.f32 0.0, %v3883
        %v4332 = vsub.f32 0.0, %v3884
        %v4333 = vsub.f32 0.0, %v3885
        %v4334 = vsub.f32 0.0, %v3886
        %v4335 = vsub.f32 0.0, %v3887
        %v4336 = vsub.f32 0.0, %v3888
        %v4337 = vsub.f32 0.0, %v3889
        %v4338 = vsub.f32 0.0, %v3890
        %v4339 = vmul.f32 %v4307, %v3859
        %v4340 = vmul.f32 %v4308, %v3860
        %v4341 = vmul.f32 %v4309, %v3861
        %v4342 = vmul.f32 %v4310, %v3862
        %v4343 = vmul.f32 %v4311, %v3863
        %v4344 = vmul.f32 %v4312, %v3864
        %v4345 = vmul.f32 %v4313, %v3865
        %v4346 = vmul.f32 %v4314, %v3866
        %v4347 = vmul.f32 %v4315, %v3867
        %v4348 = vmul.f32 %v4316, %v3868
        %v4349 = vmul.f32 %v4317, %v3869
        %v4350 = vmul.f32 %v4318, %v3870
        %v4351 = vmul.f32 %v4319, %v3871
        %v4352 = vmul.f32 %v4320, %v3872
        %v4353 = vmul.f32 %v4321, %v3873
        %v4354 = vmul.f32 %v4322, %v3874
        %v4355 = vmul.f32 %v4323, %v3875
        %v4356 = vmul.f32 %v4324, %v3876
        %v4357 = vmul.f32 %v4325, %v3877
        %v4358 = vmul.f32 %v4326, %v3878
        %v4359 = vmul.f32 %v4327, %v3879
        %v4360 = vmul.f32 %v4328, %v3880
        %v4361 = vmul.f32 %v4329, %v3881
        %v4362 = vmul.f32 %v4330, %v3882
        %v4363 = vmul.f32 %v4331, %v3883
        %v4364 = vmul.f32 %v4332, %v3884
        %v4365 = vmul.f32 %v4333, %v3885
        %v4366 = vmul.f32 %v4334, %v3886
        %v4367 = vmul.f32 %v4335, %v3887
        %v4368 = vmul.f32 %v4336, %v3888
        %v4369 = vmul.f32 %v4337, %v3889
        %v4370 = vmul.f32 %v4338, %v3890
        %v4371 = vmul.f32 %v4339, 1.442695
        %v4372 = vpow.pop %v4371
        %v4373 = vmul.f32 %v4340, 1.442695
        %v4374 = vpow.pop %v4373
        %v4375 = vmul.f32 %v4341, 1.442695
        %v4376 = vpow.pop %v4375
        %v4377 = vmul.f32 %v4342, 1.442695
        %v4378 = vpow.pop %v4377
        %v4379 = vmul.f32 %v4343, 1.442695
        %v4380 = vpow.pop %v4379
        %v4381 = vmul.f32 %v4344, 1.442695
        %v4382 = vpow.pop %v4381
        %v4383 = vmul.f32 %v4345, 1.442695
        %v4384 = vpow.pop %v4383
        %v4385 = vmul.f32 %v4346, 1.442695
        %v4386 = vpow.pop %v4385
        %v4387 = vmul.f32 %v4347, 1.442695
        %v4388 = vpow.pop %v4387
        %v4389 = vmul.f32 %v4348, 1.442695
        %v4390 = vpow.pop %v4389
        %v4391 = vmul.f32 %v4349, 1.442695
        %v4392 = vpow.pop %v4391
        %v4393 = vmul.f32 %v4350, 1.442695
        %v4394 = vpow.pop %v4393
        %v4395 = vmul.f32 %v4351, 1.442695
        %v4396 = vpow.pop %v4395
        %v4397 = vmul.f32 %v4352, 1.442695
        %v4398 = vpow.pop %v4397
        %v4399 = vmul.f32 %v4353, 1.442695
        %v4400 = vpow.pop %v4399
        %v4401 = vmul.f32 %v4354, 1.442695
        %v4402 = vpow.pop %v4401
        %v4403 = vmul.f32 %v4355, 1.442695
        %v4404 = vpow.pop %v4403
        %v4405 = vmul.f32 %v4356, 1.442695
        %v4406 = vpow.pop %v4405
        %v4407 = vmul.f32 %v4357, 1.442695
        %v4408 = vpow.pop %v4407
        %v4409 = vmul.f32 %v4358, 1.442695
        %v4410 = vpow.pop %v4409
        %v4411 = vmul.f32 %v4359, 1.442695
        %v4412 = vpow.pop %v4411
        %v4413 = vmul.f32 %v4360, 1.442695
        %v4414 = vpow.pop %v4413
        %v4415 = vmul.f32 %v4361, 1.442695
        %v4416 = vpow.pop %v4415
        %v4417 = vmul.f32 %v4362, 1.442695
        %v4418 = vpow.pop %v4417
        %v4419 = vmul.f32 %v4363, 1.442695
        %v4420 = vpow.pop %v4419
        %v4421 = vmul.f32 %v4364, 1.442695
        %v4422 = vpow.pop %v4421
        %v4423 = vmul.f32 %v4365, 1.442695
        %v4424 = vpow.pop %v4423
        %v4425 = vmul.f32 %v4366, 1.442695
        %v4426 = vpow.pop %v4425
        %v4427 = vmul.f32 %v4367, 1.442695
        %v4428 = vpow.pop %v4427
        %v4429 = vmul.f32 %v4368, 1.442695
        %v4430 = vpow.pop %v4429
        %v4431 = vmul.f32 %v4369, 1.442695
        %v4432 = vpow.pop %v4431
        %v4433 = vmul.f32 %v4370, 1.442695
        %v4434 = vpow.pop %v4433
        %v4435 = vmul.f32 %v4275, %v4372
        %v4436 = vmul.f32 %v4276, %v4374
        %v4437 = vmul.f32 %v4277, %v4376
        %v4438 = vmul.f32 %v4278, %v4378
        %v4439 = vmul.f32 %v4279, %v4380
        %v4440 = vmul.f32 %v4280, %v4382
        %v4441 = vmul.f32 %v4281, %v4384
        %v4442 = vmul.f32 %v4282, %v4386
        %v4443 = vmul.f32 %v4283, %v4388
        %v4444 = vmul.f32 %v4284, %v4390
        %v4445 = vmul.f32 %v4285, %v4392
        %v4446 = vmul.f32 %v4286, %v4394
        %v4447 = vmul.f32 %v4287, %v4396
        %v4448 = vmul.f32 %v4288, %v4398
        %v4449 = vmul.f32 %v4289, %v4400
        %v4450 = vmul.f32 %v4290, %v4402
        %v4451 = vmul.f32 %v4291, %v4404
        %v4452 = vmul.f32 %v4292, %v4406
        %v4453 = vmul.f32 %v4293, %v4408
        %v4454 = vmul.f32 %v4294, %v4410
        %v4455 = vmul.f32 %v4295, %v4412
        %v4456 = vmul.f32 %v4296, %v4414
        %v4457 = vmul.f32 %v4297, %v4416
        %v4458 = vmul.f32 %v4298, %v4418
        %v4459 = vmul.f32 %v4299, %v4420
        %v4460 = vmul.f32 %v4300, %v4422
        %v4461 = vmul.f32 %v4301, %v4424
        %v4462 = vmul.f32 %v4302, %v4426
        %v4463 = vmul.f32 %v4303, %v4428
        %v4464 = vmul.f32 %v4304, %v4430
        %v4465 = vmul.f32 %v4305, %v4432
        %v4466 = vmul.f32 %v4306, %v4434
        %v4467 = vsub.f32 1.0, %v4435
        %v4468 = vsub.f32 1.0, %v4436
        %v4469 = vsub.f32 1.0, %v4437
        %v4470 = vsub.f32 1.0, %v4438
        %v4471 = vsub.f32 1.0, %v4439
        %v4472 = vsub.f32 1.0, %v4440
        %v4473 = vsub.f32 1.0, %v4441
        %v4474 = vsub.f32 1.0, %v4442
        %v4475 = vsub.f32 1.0, %v4443
        %v4476 = vsub.f32 1.0, %v4444
        %v4477 = vsub.f32 1.0, %v4445
        %v4478 = vsub.f32 1.0, %v4446
        %v4479 = vsub.f32 1.0, %v4447
        %v4480 = vsub.f32 1.0, %v4448
        %v4481 = vsub.f32 1.0, %v4449
        %v4482 = vsub.f32 1.0, %v4450
        %v4483 = vsub.f32 1.0, %v4451
        %v4484 = vsub.f32 1.0, %v4452
        %v4485 = vsub.f32 1.0, %v4453
        %v4486 = vsub.f32 1.0, %v4454
        %v4487 = vsub.f32 1.0, %v4455
        %v4488 = vsub.f32 1.0, %v4456
        %v4489 = vsub.f32 1.0, %v4457
        %v4490 = vsub.f32 1.0, %v4458
        %v4491 = vsub.f32 1.0, %v4459
        %v4492 = vsub.f32 1.0, %v4460
        %v4493 = vsub.f32 1.0, %v4461
        %v4494 = vsub.f32 1.0, %v4462
        %v4495 = vsub.f32 1.0, %v4463
        %v4496 = vsub.f32 1.0, %v4464
        %v4497 = vsub.f32 1.0, %v4465
        %v4498 = vsub.f32 1.0, %v4466
        %v4499 = vmul.f32 %v3827, %v4467
        %v4500 = vmul.f32 %v3828, %v4468
        %v4501 = vmul.f32 %v3829, %v4469
        %v4502 = vmul.f32 %v3830, %v4470
        %v4503 = vmul.f32 %v3831, %v4471
        %v4504 = vmul.f32 %v3832, %v4472
        %v4505 = vmul.f32 %v3833, %v4473
        %v4506 = vmul.f32 %v3834, %v4474
        %v4507 = vmul.f32 %v3835, %v4475
        %v4508 = vmul.f32 %v3836, %v4476
        %v4509 = vmul.f32 %v3837, %v4477
        %v4510 = vmul.f32 %v3838, %v4478
        %v4511 = vmul.f32 %v3839, %v4479
        %v4512 = vmul.f32 %v3840, %v4480
        %v4513 = vmul.f32 %v3841, %v4481
        %v4514 = vmul.f32 %v3842, %v4482
        %v4515 = vmul.f32 %v3843, %v4483
        %v4516 = vmul.f32 %v3844, %v4484
        %v4517 = vmul.f32 %v3845, %v4485
        %v4518 = vmul.f32 %v3846, %v4486
        %v4519 = vmul.f32 %v3847, %v4487
        %v4520 = vmul.f32 %v3848, %v4488
        %v4521 = vmul.f32 %v3849, %v4489
        %v4522 = vmul.f32 %v3850, %v4490
        %v4523 = vmul.f32 %v3851, %v4491
        %v4524 = vmul.f32 %v3852, %v4492
        %v4525 = vmul.f32 %v3853, %v4493
        %v4526 = vmul.f32 %v3854, %v4494
        %v4527 = vmul.f32 %v3855, %v4495
        %v4528 = vmul.f32 %v3856, %v4496
        %v4529 = vmul.f32 %v3857, %v4497
        %v4530 = vmul.f32 %v3858, %v4498
        %v4531 = vadd.f32 %v4499, 1.0
        %v4532 = vadd.f32 %v4500, 1.0
        %v4533 = vadd.f32 %v4501, 1.0
        %v4534 = vadd.f32 %v4502, 1.0
        %v4535 = vadd.f32 %v4503, 1.0
        %v4536 = vadd.f32 %v4504, 1.0
        %v4537 = vadd.f32 %v4505, 1.0
        %v4538 = vadd.f32 %v4506, 1.0
        %v4539 = vadd.f32 %v4507, 1.0
        %v4540 = vadd.f32 %v4508, 1.0
        %v4541 = vadd.f32 %v4509, 1.0
        %v4542 = vadd.f32 %v4510, 1.0
        %v4543 = vadd.f32 %v4511, 1.0
        %v4544 = vadd.f32 %v4512, 1.0
        %v4545 = vadd.f32 %v4513, 1.0
        %v4546 = vadd.f32 %v4514, 1.0
        %v4547 = vadd.f32 %v4515, 1.0
        %v4548 = vadd.f32 %v4516, 1.0
        %v4549 = vadd.f32 %v4517, 1.0
        %v4550 = vadd.f32 %v4518, 1.0
        %v4551 = vadd.f32 %v4519, 1.0
        %v4552 = vadd.f32 %v4520, 1.0
        %v4553 = vadd.f32 %v4521, 1.0
        %v4554 = vadd.f32 %v4522, 1.0
        %v4555 = vadd.f32 %v4523, 1.0
        %v4556 = vadd.f32 %v4524, 1.0
        %v4557 = vadd.f32 %v4525, 1.0
        %v4558 = vadd.f32 %v4526, 1.0
        %v4559 = vadd.f32 %v4527, 1.0
        %v4560 = vadd.f32 %v4528, 1.0
        %v4561 = vadd.f32 %v4529, 1.0
        %v4562 = vadd.f32 %v4530, 1.0
        %v4563 = vmul.f32 %v3731, %v4531
        %v4564 = vmul.f32 %v3732, %v4532
        %v4565 = vmul.f32 %v3733, %v4533
        %v4566 = vmul.f32 %v3734, %v4534
        %v4567 = vmul.f32 %v3735, %v4535
        %v4568 = vmul.f32 %v3736, %v4536
        %v4569 = vmul.f32 %v3737, %v4537
        %v4570 = vmul.f32 %v3738, %v4538
        %v4571 = vmul.f32 %v3739, %v4539
        %v4572 = vmul.f32 %v3740, %v4540
        %v4573 = vmul.f32 %v3741, %v4541
        %v4574 = vmul.f32 %v3742, %v4542
        %v4575 = vmul.f32 %v3743, %v4543
        %v4576 = vmul.f32 %v3744, %v4544
        %v4577 = vmul.f32 %v3745, %v4545
        %v4578 = vmul.f32 %v3746, %v4546
        %v4579 = vmul.f32 %v3747, %v4547
        %v4580 = vmul.f32 %v3748, %v4548
        %v4581 = vmul.f32 %v3749, %v4549
        %v4582 = vmul.f32 %v3750, %v4550
        %v4583 = vmul.f32 %v3751, %v4551
        %v4584 = vmul.f32 %v3752, %v4552
        %v4585 = vmul.f32 %v3753, %v4553
        %v4586 = vmul.f32 %v3754, %v4554
        %v4587 = vmul.f32 %v3755, %v4555
        %v4588 = vmul.f32 %v3756, %v4556
        %v4589 = vmul.f32 %v3757, %v4557
        %v4590 = vmul.f32 %v3758, %v4558
        %v4591 = vmul.f32 %v3759, %v4559
        %v4592 = vmul.f32 %v3760, %v4560
        %v4593 = vmul.f32 %v3761, %v4561
        %v4594 = vmul.f32 %v3762, %v4562
        %v4595 = vpack.c.bf16 %v4567, %v4563
        %v4596 = vpack.c.bf16 %v4568, %v4564
        %v4597 = vpack.c.bf16 %v4569, %v4565
        %v4598 = vpack.c.bf16 %v4570, %v4566
        %v4599 = vpack.c.bf16 %v4575, %v4571
        %v4600 = vpack.c.bf16 %v4576, %v4572
        %v4601 = vpack.c.bf16 %v4577, %v4573
        %v4602 = vpack.c.bf16 %v4578, %v4574
        %v4603 = vpack.c.bf16 %v4583, %v4579
        %v4604 = vpack.c.bf16 %v4584, %v4580
        %v4605 = vpack.c.bf16 %v4585, %v4581
        %v4606 = vpack.c.bf16 %v4586, %v4582
        %v4607 = vpack.c.bf16 %v4591, %v4587
        %v4608 = vpack.c.bf16 %v4592, %v4588
        %v4609 = vpack.c.bf16 %v4593, %v4589
        %v4610 = vpack.c.bf16 %v4594, %v4590
        %v4611 = vld [vmem:[#allocation13] sm:$0xf]
        %v4612 = vld [vmem:[#allocation13 + $0x4] sm:$0xf]
        %v4613 = vld [vmem:[#allocation13 + $0x8] sm:$0xf]
        %v4614 = vld [vmem:[#allocation13 + $0xc] sm:$0xf]
        %v4615 = vld [vmem:[#allocation13 + $0x10] sm:$0xf]
        %v4616 = vld [vmem:[#allocation13 + $0x14] sm:$0xf]
        %v4617 = vld [vmem:[#allocation13 + $0x18] sm:$0xf]
        %v4618 = vld [vmem:[#allocation13 + $0x1c] sm:$0xf]
        %v4619 = vld [vmem:[#allocation13 + $0x20] sm:$0xf]
        %v4620 = vld [vmem:[#allocation13 + $0x24] sm:$0xf]
        %v4621 = vld [vmem:[#allocation13 + $0x28] sm:$0xf]
        %v4622 = vld [vmem:[#allocation13 + $0x2c] sm:$0xf]
        %v4623 = vld [vmem:[#allocation13 + $0x30] sm:$0xf]
        %v4624 = vld [vmem:[#allocation13 + $0x34] sm:$0xf]
        %v4625 = vld [vmem:[#allocation13 + $0x38] sm:$0xf]
        %v4626 = vld [vmem:[#allocation13 + $0x3c] sm:$0xf]
        %v4627 = vld [vmem:[#allocation13 + $0x40] sm:$0xf]
        %v4628 = vld [vmem:[#allocation13 + $0x44] sm:$0xf]
        %v4629 = vld [vmem:[#allocation13 + $0x48] sm:$0xf]
        %v4630 = vld [vmem:[#allocation13 + $0x4c] sm:$0xf]
        %v4631 = vld [vmem:[#allocation13 + $0x50] sm:$0xf]
        %v4632 = vld [vmem:[#allocation13 + $0x54] sm:$0xf]
        %v4633 = vld [vmem:[#allocation13 + $0x58] sm:$0xf]
        %v4634 = vld [vmem:[#allocation13 + $0x5c] sm:$0xf]
        %v4635 = vld [vmem:[#allocation13 + $0x60] sm:$0xf]
        %v4636 = vld [vmem:[#allocation13 + $0x64] sm:$0xf]
        %v4637 = vld [vmem:[#allocation13 + $0x68] sm:$0xf]
        %v4638 = vld [vmem:[#allocation13 + $0x6c] sm:$0xf]
        %v4639 = vld [vmem:[#allocation13 + $0x70] sm:$0xf]
        %v4640 = vld [vmem:[#allocation13 + $0x74] sm:$0xf]
        %v4641 = vld [vmem:[#allocation13 + $0x78] sm:$0xf]
        %v4642 = vld [vmem:[#allocation13 + $0x7c] sm:$0xf]
        %v4643 = vld [vmem:[#allocation13 + $0x80] sm:$0xf]
        %v4644 = vld [vmem:[#allocation13 + $0x84] sm:$0xf]
        %v4645 = vld [vmem:[#allocation13 + $0x88] sm:$0xf]
        %v4646 = vld [vmem:[#allocation13 + $0x8c] sm:$0xf]
        %v4647 = vld [vmem:[#allocation13 + $0x90] sm:$0xf]
        %v4648 = vld [vmem:[#allocation13 + $0x94] sm:$0xf]
        %v4649 = vld [vmem:[#allocation13 + $0x98] sm:$0xf]
        %v4650 = vld [vmem:[#allocation13 + $0x9c] sm:$0xf]
        %v4651 = vld [vmem:[#allocation13 + $0xa0] sm:$0xf]
        %v4652 = vld [vmem:[#allocation13 + $0xa4] sm:$0xf]
        %v4653 = vld [vmem:[#allocation13 + $0xa8] sm:$0xf]
        %v4654 = vld [vmem:[#allocation13 + $0xac] sm:$0xf]
        %v4655 = vld [vmem:[#allocation13 + $0xb0] sm:$0xf]
        %v4656 = vld [vmem:[#allocation13 + $0xb4] sm:$0xf]
        %v4657 = vld [vmem:[#allocation13 + $0xb8] sm:$0xf]
        %v4658 = vld [vmem:[#allocation13 + $0xbc] sm:$0xf]
        %v4659 = vld [vmem:[#allocation13 + $0xc0] sm:$0xf]
        %v4660 = vld [vmem:[#allocation13 + $0xc4] sm:$0xf]
        %v4661 = vld [vmem:[#allocation13 + $0xc8] sm:$0xf]
        %v4662 = vld [vmem:[#allocation13 + $0xcc] sm:$0xf]
        %v4663 = vld [vmem:[#allocation13 + $0xd0] sm:$0xf]
        %v4664 = vld [vmem:[#allocation13 + $0xd4] sm:$0xf]
        %v4665 = vld [vmem:[#allocation13 + $0xd8] sm:$0xf]
        %v4666 = vld [vmem:[#allocation13 + $0xdc] sm:$0xf]
        %v4667 = vld [vmem:[#allocation13 + $0xe0] sm:$0xf]
        %v4668 = vld [vmem:[#allocation13 + $0xe4] sm:$0xf]
        %v4669 = vld [vmem:[#allocation13 + $0xe8] sm:$0xf]
        %v4670 = vld [vmem:[#allocation13 + $0xec] sm:$0xf]
        %v4671 = vld [vmem:[#allocation13 + $0xf0] sm:$0xf]
        %v4672 = vld [vmem:[#allocation13 + $0xf4] sm:$0xf]
        %v4673 = vld [vmem:[#allocation13 + $0xf8] sm:$0xf]
        %v4674 = vld [vmem:[#allocation13 + $0xfc] sm:$0xf]
        %v4675 = vld [vmem:[%s12] sm:$0x1]
        %v4677 = vlaneseq
        %v4678 = vshrl.u32 %v4677, 7
        %v4679 = vsub.s32 0, %v4678
        %v4680 = vrot.slane %v4675, %v4679
        %v4746 = vunpack.c.l.b16 %v4611
        %v4747 = vunpack.c.l.b16 %v4612
        %v4748 = vunpack.c.l.b16 %v4613
        %v4749 = vunpack.c.l.b16 %v4614
        %v4750 = vunpack.c.l.b16 %v4615
        %v4751 = vunpack.c.l.b16 %v4616
        %v4752 = vunpack.c.l.b16 %v4617
        %v4753 = vunpack.c.l.b16 %v4618
        %v4754 = vunpack.c.l.b16 %v4619
        %v4755 = vunpack.c.l.b16 %v4620
        %v4756 = vunpack.c.l.b16 %v4621
        %v4757 = vunpack.c.l.b16 %v4622
        %v4758 = vunpack.c.l.b16 %v4623
        %v4759 = vunpack.c.l.b16 %v4624
        %v4760 = vunpack.c.l.b16 %v4625
        %v4761 = vunpack.c.l.b16 %v4626
        %v4762 = vunpack.c.l.b16 %v4627
        %v4763 = vunpack.c.l.b16 %v4628
        %v4764 = vunpack.c.l.b16 %v4629
        %v4765 = vunpack.c.l.b16 %v4630
        %v4766 = vunpack.c.l.b16 %v4631
        %v4767 = vunpack.c.l.b16 %v4632
        %v4768 = vunpack.c.l.b16 %v4633
        %v4769 = vunpack.c.l.b16 %v4634
        %v4770 = vunpack.c.l.b16 %v4635
        %v4771 = vunpack.c.l.b16 %v4636
        %v4772 = vunpack.c.l.b16 %v4637
        %v4773 = vunpack.c.l.b16 %v4638
        %v4774 = vunpack.c.l.b16 %v4639
        %v4775 = vunpack.c.l.b16 %v4640
        %v4776 = vunpack.c.l.b16 %v4641
        %v4777 = vunpack.c.l.b16 %v4642
        %v4778 = vunpack.c.l.b16 %v4643
        %v4779 = vunpack.c.l.b16 %v4644
        %v4780 = vunpack.c.l.b16 %v4645
        %v4781 = vunpack.c.l.b16 %v4646
        %v4782 = vunpack.c.l.b16 %v4647
        %v4783 = vunpack.c.l.b16 %v4648
        %v4784 = vunpack.c.l.b16 %v4649
        %v4785 = vunpack.c.l.b16 %v4650
        %v4786 = vunpack.c.l.b16 %v4651
        %v4787 = vunpack.c.l.b16 %v4652
        %v4788 = vunpack.c.l.b16 %v4653
        %v4789 = vunpack.c.l.b16 %v4654
        %v4790 = vunpack.c.l.b16 %v4655
        %v4791 = vunpack.c.l.b16 %v4656
        %v4792 = vunpack.c.l.b16 %v4657
        %v4793 = vunpack.c.l.b16 %v4658
        %v4794 = vunpack.c.l.b16 %v4659
        %v4795 = vunpack.c.l.b16 %v4660
        %v4796 = vunpack.c.l.b16 %v4661
        %v4797 = vunpack.c.l.b16 %v4662
        %v4798 = vunpack.c.l.b16 %v4663
        %v4799 = vunpack.c.l.b16 %v4664
        %v4800 = vunpack.c.l.b16 %v4665
        %v4801 = vunpack.c.l.b16 %v4666
        %v4802 = vunpack.c.l.b16 %v4667
        %v4803 = vunpack.c.l.b16 %v4668
        %v4804 = vunpack.c.l.b16 %v4669
        %v4805 = vunpack.c.l.b16 %v4670
        %v4806 = vunpack.c.l.b16 %v4671
        %v4807 = vunpack.c.l.b16 %v4672
        %v4808 = vunpack.c.l.b16 %v4673
        %v4809 = vunpack.c.l.b16 %v4674
        %v4810 = vpack.c.b16 %v4747, %v4746
        %v4811 = vpack.c.b16 %v4749, %v4748
        %v4812 = vpack.c.b16 %v4751, %v4750
        %v4813 = vpack.c.b16 %v4753, %v4752
        %v4814 = vpack.c.b16 %v4755, %v4754
        %v4815 = vpack.c.b16 %v4757, %v4756
        %v4816 = vpack.c.b16 %v4759, %v4758
        %v4817 = vpack.c.b16 %v4761, %v4760
        %v4818 = vpack.c.b16 %v4763, %v4762
        %v4819 = vpack.c.b16 %v4765, %v4764
        %v4820 = vpack.c.b16 %v4767, %v4766
        %v4821 = vpack.c.b16 %v4769, %v4768
        %v4822 = vpack.c.b16 %v4771, %v4770
        %v4823 = vpack.c.b16 %v4773, %v4772
        %v4824 = vpack.c.b16 %v4775, %v4774
        %v4825 = vpack.c.b16 %v4777, %v4776
        %v4826 = vpack.c.b16 %v4779, %v4778
        %v4827 = vpack.c.b16 %v4781, %v4780
        %v4828 = vpack.c.b16 %v4783, %v4782
        %v4829 = vpack.c.b16 %v4785, %v4784
        %v4830 = vpack.c.b16 %v4787, %v4786
        %v4831 = vpack.c.b16 %v4789, %v4788
        %v4832 = vpack.c.b16 %v4791, %v4790
        %v4833 = vpack.c.b16 %v4793, %v4792
        %v4834 = vpack.c.b16 %v4795, %v4794
        %v4835 = vpack.c.b16 %v4797, %v4796
        %v4836 = vpack.c.b16 %v4799, %v4798
        %v4837 = vpack.c.b16 %v4801, %v4800
        %v4838 = vpack.c.b16 %v4803, %v4802
        %v4839 = vpack.c.b16 %v4805, %v4804
        %v4840 = vpack.c.b16 %v4807, %v4806
        %v4841 = vpack.c.b16 %v4809, %v4808
        %4874 = vmatprep.subr.bf16.mxu0 0
        %4875 = vmatpush1.bf16.msra.mxu0 %v4810
        %4876 = vmatprep.subr.bf16.mxu0 0
        %4877 = vmatpush1.bf16.msra.mxu0 %v4811
        %4878 = vmatprep.subr.bf16.mxu0 0
        %4879 = vmatpush1.bf16.msra.mxu0 %v4812
        %4880 = vmatprep.subr.bf16.mxu0 0
        %4881 = vmatpush1.bf16.msra.mxu0 %v4813
        %4882 = vmatprep.subr.bf16.mxu0 0
        %4883 = vmatpush1.bf16.msra.mxu0 %v4814
        %4884 = vmatprep.subr.bf16.mxu0 0
        %4885 = vmatpush1.bf16.msra.mxu0 %v4815
        %4886 = vmatprep.subr.bf16.mxu0 0
        %4887 = vmatpush1.bf16.msra.mxu0 %v4816
        %4888 = vmatprep.subr.bf16.mxu0 0
        %4889 = vmatpush1.bf16.msra.mxu0 %v4817
        %4890 = vmatprep.subr.bf16.mxu0 0
        %4891 = vmatpush1.bf16.msra.mxu0 %v4818
        %4892 = vmatprep.subr.bf16.mxu0 0
        %4893 = vmatpush1.bf16.msra.mxu0 %v4819
        %4894 = vmatprep.subr.bf16.mxu0 0
        %4895 = vmatpush1.bf16.msra.mxu0 %v4820
        %4896 = vmatprep.subr.bf16.mxu0 0
        %4897 = vmatpush1.bf16.msra.mxu0 %v4821
        %4898 = vmatprep.subr.bf16.mxu0 0
        %4899 = vmatpush1.bf16.msra.mxu0 %v4822
        %4900 = vmatprep.subr.bf16.mxu0 0
        %4901 = vmatpush1.bf16.msra.mxu0 %v4823
        %4902 = vmatprep.subr.bf16.mxu0 0
        %4903 = vmatpush1.bf16.msra.mxu0 %v4824
        %4904 = vmatprep.subr.bf16.mxu0 0
        %4905 = vmatpush1.bf16.msra.mxu0 %v4825
        %4906 = vmatprep.mubr.bf16.mxu0 %v4596
        %4907 = vmatmul.mubr.bf16.gmra.mrb[0].mxu0 %v4595
        %v4908 = vpop.f32.mrb[0].mxu0
        %v4909 = vadd.f32 %v4680, %v4908
        %v4910 = vpop.f32.mrb[0].mxu0
        %v4911 = vpop.f32.mrb[0].mxu0
        %v4912 = vadd.f32 %v4680, %v4911
        %v4913 = vpop.f32.mrb[0].mxu0
        %4914 = vmatprep.mubr.bf16.mxu0 %v4600
        %4915 = vmatmul.mubr.bf16.gmra.mrb[0].mxu0 %v4599
        %v4916 = vpop.f32.mrb[0].mxu0
        %v4917 = vadd.f32 %v4680, %v4916
        %v4918 = vpop.f32.mrb[0].mxu0
        %v4919 = vpop.f32.mrb[0].mxu0
        %v4920 = vadd.f32 %v4680, %v4919
        %v4921 = vpop.f32.mrb[0].mxu0
        %4922 = vmatprep.mubr.bf16.mxu0 %v4604
        %4923 = vmatmul.mubr.bf16.gmra.mrb[0].mxu0 %v4603
        %v4924 = vpop.f32.mrb[0].mxu0
        %v4925 = vadd.f32 %v4680, %v4924
        %v4926 = vpop.f32.mrb[0].mxu0
        %v4927 = vpop.f32.mrb[0].mxu0
        %v4928 = vadd.f32 %v4680, %v4927
        %v4929 = vpop.f32.mrb[0].mxu0
        %4930 = vmatprep.mubr.bf16.mxu0 %v4608
        %4931 = vmatmul.mubr.bf16.gmra.mrb[0].mxu0 %v4607
        %v4932 = vpop.f32.mrb[0].mxu0
        %v4933 = vadd.f32 %v4680, %v4932
        %v4934 = vpop.f32.mrb[0].mxu0
        %v4935 = vpop.f32.mrb[0].mxu0
        %v4936 = vadd.f32 %v4680, %v4935
        %v4937 = vpop.f32.mrb[0].mxu0
        %4938 = vdwg.mxu0
        %4939 = vmatprep.subr.bf16.mxu0 0
        %4940 = vmatpush1.bf16.msra.mxu0 %v4826
        %4941 = vmatprep.subr.bf16.mxu0 0
        %4942 = vmatpush1.bf16.msra.mxu0 %v4827
        %4943 = vmatprep.subr.bf16.mxu0 0
        %4944 = vmatpush1.bf16.msra.mxu0 %v4828
        %4945 = vmatprep.subr.bf16.mxu0 0
        %4946 = vmatpush1.bf16.msra.mxu0 %v4829
        %4947 = vmatprep.subr.bf16.mxu0 0
        %4948 = vmatpush1.bf16.msra.mxu0 %v4830
        %4949 = vmatprep.subr.bf16.mxu0 0
        %4950 = vmatpush1.bf16.msra.mxu0 %v4831
        %4951 = vmatprep.subr.bf16.mxu0 0
        %4952 = vmatpush1.bf16.msra.mxu0 %v4832
        %4953 = vmatprep.subr.bf16.mxu0 0
        %4954 = vmatpush1.bf16.msra.mxu0 %v4833
        %4955 = vmatprep.subr.bf16.mxu0 0
        %4956 = vmatpush1.bf16.msra.mxu0 %v4834
        %4957 = vmatprep.subr.bf16.mxu0 0
        %4958 = vmatpush1.bf16.msra.mxu0 %v4835
        %4959 = vmatprep.subr.bf16.mxu0 0
        %4960 = vmatpush1.bf16.msra.mxu0 %v4836
        %4961 = vmatprep.subr.bf16.mxu0 0
        %4962 = vmatpush1.bf16.msra.mxu0 %v4837
        %4963 = vmatprep.subr.bf16.mxu0 0
        %4964 = vmatpush1.bf16.msra.mxu0 %v4838
        %4965 = vmatprep.subr.bf16.mxu0 0
        %4966 = vmatpush1.bf16.msra.mxu0 %v4839
        %4967 = vmatprep.subr.bf16.mxu0 0
        %4968 = vmatpush1.bf16.msra.mxu0 %v4840
        %4969 = vmatprep.subr.bf16.mxu0 0
        %4970 = vmatpush1.bf16.msra.mxu0 %v4841
        %4971 = vmatprep.mubr.bf16.mxu0 %v4598
        %4972 = vmatmul.mubr.bf16.gmra.mrb[0].mxu0 %v4597
        %v4973 = vpop.f32.mrb[0].mxu0
        %v4974 = vadd.f32 %v4909, %v4973
        %v4975 = vpop.f32.mrb[0].mxu0
        %v4976 = vpop.f32.mrb[0].mxu0
        %v4977 = vadd.f32 %v4912, %v4976
        %v4978 = vpop.f32.mrb[0].mxu0
        %4979 = vmatprep.mubr.bf16.mxu0 %v4602
        %4980 = vmatmul.mubr.bf16.gmra.mrb[0].mxu0 %v4601
        %v4981 = vpop.f32.mrb[0].mxu0
        %v4982 = vadd.f32 %v4917, %v4981
        %v4983 = vpop.f32.mrb[0].mxu0
        %v4984 = vpop.f32.mrb[0].mxu0
        %v4985 = vadd.f32 %v4920, %v4984
        %v4986 = vpop.f32.mrb[0].mxu0
        %4987 = vmatprep.mubr.bf16.mxu0 %v4606
        %4988 = vmatmul.mubr.bf16.gmra.mrb[0].mxu0 %v4605
        %v4989 = vpop.f32.mrb[0].mxu0
        %v4990 = vadd.f32 %v4925, %v4989
        %v4991 = vpop.f32.mrb[0].mxu0
        %v4992 = vpop.f32.mrb[0].mxu0
        %v4993 = vadd.f32 %v4928, %v4992
        %v4994 = vpop.f32.mrb[0].mxu0
        %4995 = vmatprep.mubr.bf16.mxu0 %v4610
        %4996 = vmatmul.mubr.bf16.gmra.mrb[0].mxu0 %v4609
        %v4997 = vpop.f32.mrb[0].mxu0
        %v4998 = vadd.f32 %v4933, %v4997
        %v4999 = vpop.f32.mrb[0].mxu0
        %v5000 = vpop.f32.mrb[0].mxu0
        %v5001 = vadd.f32 %v4936, %v5000
        %v5002 = vpop.f32.mrb[0].mxu0
        %5003 = vdwg.mxu0
        %v5004 = vadd.f32 %v3241, %v4974
        %v5005 = vadd.f32 %v3242, %v4977
        %v5006 = vadd.f32 %v3243, %v4982
        %v5007 = vadd.f32 %v3244, %v4985
        %v5008 = vadd.f32 %v3245, %v4990
        %v5009 = vadd.f32 %v3246, %v4993
        %v5010 = vadd.f32 %v3247, %v4998
        %v5011 = vadd.f32 %v3248, %v5001
        %5012 = vst [vmem:[%s542] sm:$0xff] %v5004
        %5013 = vst [vmem:[%s542 + $0x8] sm:$0xff] %v5005
        %5014 = vst [vmem:[%s542 + $0x10] sm:$0xff] %v5006
        %5015 = vst [vmem:[%s542 + $0x18] sm:$0xff] %v5007
        %5016 = vst [vmem:[%s542 + $0x20] sm:$0xff] %v5008
        %5017 = vst [vmem:[%s542 + $0x28] sm:$0xff] %v5009
        %5018 = vst [vmem:[%s542 + $0x30] sm:$0xff] %v5010
        %5019 = vst [vmem:[%s542 + $0x38] sm:$0xff] %v5011
        %s5020 = sand.u32 %s319, 1
        %s5021 = scalar_lea.sflag [#allocation4], %s5020
        %s5022 = sand.u32 %s319, 1
        %s5023 = smul.addr %s5022, 64
        %s5024 = scalar_lea.vmem [#allocation14], %s5023
        // Predicated region
        $region101: #{tpu_custom_call.1} parent=71 // pred_check
          %p5025 = pneg %p329
        $region102: #{tpu_custom_call.1} parent=71 // pred_check_branch
          %5027 = sbr.rel (%p5025) target = $region104
        $region103: #{tpu_custom_call.1} parent=71 // pred_region
          %s5028 = smul.u32 4, %s33
          %s5030 = ssub.s32 1024, 1024
          %5031 = vsyncadd %s5021, %s5030
          %s5032 = smul.addr %s5028, 2
          %s5033 = smul.addr %s5032, 128
          %s5034 = scalar_lea.hbm %s13, %s5033
          %s5035 = sshll.u32 %s5024, 4
          %s5036 = int_to_ptr.vmem [resolvable:$true] %s5035
          %5041 = dma.vmem_to_hbm [thread:$0]  %s5036, 1024, %s5034, %s5021, 128, 128, 8
        $region104: #{tpu_custom_call.1} parent=71 // pred_fallthru
          _
      $region72: #{tpu_custom_call.1} parent=5 // pred_fallthru
        _
      %p5042 = scmp.le.s32.totalorder 2, %s28
      // Predicated region
      $region105: #{tpu_custom_call.1} parent=5 // pred_check
        %p5043 = pneg %p5042
      $region106: #{tpu_custom_call.1} parent=5 // pred_check_branch
        %5045 = sbr.rel (%p5043) target = $region108
      $region107: #{tpu_custom_call.1} parent=5 // pred_region
        %s5046 = ssub.s32 %s28, 2
        // Predicated region
        $region109: #{tpu_custom_call.1} parent=107 // pred_check
          %p5047 = pneg %p335
        $region110: #{tpu_custom_call.1} parent=107 // pred_check_branch
          %5049 = sbr.rel (%p5047) target = $region112
        $region111: #{tpu_custom_call.1} parent=107 // pred_region
          %s5050 = sand.u32 %s320, 1
          %s5051 = scalar_lea.sflag [#allocation4], %s5050
          %s5052 = sand.u32 %s320, 1
          %s5053 = smul.addr %s5052, 64
          %s5054 = scalar_lea.vmem [#allocation14], %s5053
          %5055 = dma.done %s5051, 1024
        $region112: #{tpu_custom_call.1} parent=107 // pred_fallthru
          _
      $region108: #{tpu_custom_call.1} parent=5 // pred_fallthru
        _
    $region6: #{tpu_custom_call.1} parent=1 // loop_footer
      %s32 = sadd.s32 1, %s28
    $region7: #{tpu_custom_call.1} parent=1 // loop_footer_branch
      %27 = sbr.rel target = $region3
    $region8: #{tpu_custom_call.1} parent=1 // loop_exit
      _
    %5056 = vsyncpa [#allocation3], 1
    %s5057 = scalar_lea.sflag [#allocation3], 1
    %5058 = vsyncpa %s5057, 1
    %5059 = vsyncpa [#allocation6], 1
    %5060 = vsyncpa [#allocation9], 1
    %5061 = vsyncpa [#allocation12], 1
    %5062 = vsyncpa [#allocation4], 1
    %s5063 = scalar_lea.sflag [#allocation4], 1
    %5064 = vsyncpa %s5063, 1

// kernel: tpu_custom_call.1
$region0: #{tpu_custom_call.1}
  #allocation0 [shape = 'u32[]', space=smem, size = 0x4, offset = 0x4, fixed_abs, tag = 'smem constant byte address 0x4 - core index']
  #allocation1 [shape = 'u32[144,128]{1,0:T(1,128)}', space=vmem, size = 0x12000, scoped, tag = 'internal scratch']
  %s0 = inlined_call_operand.hbm [shape: f32[8,16,128], index: 0, kind: input, shape index: {}]
  %s1 = inlined_call_operand.hbm [shape: f32[1,128], index: 1, kind: input, shape index: {}]
  %s2 = inlined_call_operand.hbm [shape: f32[1,128], index: 2, kind: input, shape index: {}]
  %s3 = inlined_call_operand.hbm [shape: bf16[128,384], index: 3, kind: input, shape index: {}]
  %s4 = inlined_call_operand.vmem [shape: f32[1,384], index: 4, kind: input, shape index: {}]
  %s5 = inlined_call_operand.hbm [shape: bf16[128,128], index: 5, kind: input, shape index: {}]
  %s6 = inlined_call_operand.vmem [shape: f32[1,128], index: 6, kind: input, shape index: {}]
  %s7 = inlined_call_operand.vmem [shape: f32[1,128], index: 7, kind: input, shape index: {}]
  %s8 = inlined_call_operand.vmem [shape: f32[1,128], index: 8, kind: input, shape index: {}]
  %s9 = inlined_call_operand.hbm [shape: bf16[128,512], index: 9, kind: input, shape index: {}]
  %s10 = inlined_call_operand.vmem [shape: f32[1,512], index: 10, kind: input, shape index: {}]
  %s11 = inlined_call_operand.hbm [shape: bf16[512,128], index: 11, kind: input, shape index: {}]
  %s12 = inlined_call_operand.vmem [shape: f32[1,128], index: 12, kind: input, shape index: {}]
  %s13 = inlined_call_operand.hbm [shape: f32[8,16,128], index: 13, kind: output, shape index: {}]
  %s14 = sld [smem:[#allocation0]]
  $region113: #{tpu_custom_call.1} parent=0
    _
  %s16 = ssub.s32 1, %s14
  %s17 = scalar_select 0, %s16, %s14
  $region1: #{tpu_custom_call.1} parent=0
    #allocation2 [shape = 'u8[65536]{0}', space=vmem, size = 0x10000, scoped, tag = 'input window, operand 0']
    #allocation3 [shape = 's32[2]{0}', space=sflag, size = 0x8, scoped, tag = 'scoped memory for tpu_custom_call.1']
    #allocation4 [shape = 's32[2]{0}', space=sflag, size = 0x8, scoped, tag = 'scoped memory for tpu_custom_call.1']
    #allocation5 [shape = 'u8[512]{0}', space=vmem, size = 0x400, scoped, tag = 'input window, operand 1, single buffered']
    #allocation6 [shape = 's32[1]{0}', space=sflag, size = 0x4, scoped, tag = 'scoped memory for tpu_custom_call.1']
    #allocation7 [shape = 'u8[512]{0}', space=vmem, size = 0x400, scoped, tag = 'input window, operand 2, single buffered']
    #allocation8 [shape = 'u8[98304]{0}', space=vmem, size = 0x18000, scoped, tag = 'input window, operand 3, single buffered']
    #allocation9 [shape = 's32[1]{0}', space=sflag, size = 0x4, scoped, tag = 'scoped memory for tpu_custom_call.1']
    #allocation10 [shape = 'u8[32768]{0}', space=vmem, size = 0x8000, scoped, tag = 'input window, operand 5, single buffered']
    #allocation11 [shape = 'u8[131072]{0}', space=vmem, size = 0x20000, scoped, tag = 'input window, operand 9, single buffered']
    #allocation12 [shape = 's32[1]{0}', space=sflag, size = 0x4, scoped, tag = 'scoped memory for tpu_custom_call.1']
    #allocation13 [shape = 'u8[131072]{0}', space=vmem, size = 0x20000, scoped, tag = 'input window, operand 11, single buffered']
    #allocation14 [shape = 'u8[65536]{0}', space=vmem, size = 0x10000, scoped, tag = 'output window, operand 0']
    %18 = vsyncpa [#allocation3], 0
    %s19 = scalar_lea.sflag [#allocation3], 1
    %20 = vsyncpa %s19, 0
    %21 = vsyncpa [#allocation6], 0
    %22 = vsyncpa [#allocation9], 0
    %23 = vsyncpa [#allocation12], 0
    %24 = vsyncpa [#allocation4], 0
    %s25 = scalar_lea.sflag [#allocation4], 1
    %26 = vsyncpa %s25, 0
    loop: start=0, step=1, limit=4
    $region2: #{tpu_custom_call.1} parent=1 // loop_pre_header
      _
    $region3: #{tpu_custom_call.1} parent=1 // loop_header
      %s28 = sphi 0, %s32
      %p29 = scmp.ge.s32.totalorder %s28, 4
      %s38 = sphi 0, %s40
      %s41 = sphi 0, %s38
      %s42 = sphi 0, %s41
      %s58 = sphi 0, %s42
      %s62 = sphi 0, %s62
      %s64 = sphi 0, %s62
      %s65 = sphi 0, %s64
      %s79 = sphi 0, %s65
      %s83 = sphi 0, %s83
      %s85 = sphi 0, %s83
      %s86 = sphi 0, %s85
      %s100 = sphi 0, %s86
      %s104 = sphi 0, %s104
      %s106 = sphi 0, %s104
      %s107 = sphi 0, %s106
      %s121 = sphi 0, %s107
      %s125 = sphi 0, %s125
      %s127 = sphi 0, %s125
      %s128 = sphi 0, %s127
      %s142 = sphi 0, %s128
      %s146 = sphi 0, %s146
      %s148 = sphi 0, %s146
      %s149 = sphi 0, %s148
      %s163 = sphi 0, %s149
      %s167 = sphi 0, %s167
      %s169 = sphi 0, %s167
      %s170 = sphi 0, %s169
      %s184 = sphi 0, %s170
      %s188 = sphi 0, %s188
      %s190 = sphi 0, %s188
      %s191 = sphi 0, %s190
      %s205 = sphi 0, %s191
      %s209 = sphi 0, %s209
      %s211 = sphi 0, %s209
      %s212 = sphi 0, %s211
      %s226 = sphi 0, %s212
      %s230 = sphi 0, %s230
      %s232 = sphi 0, %s230
      %s233 = sphi 0, %s232
      %s247 = sphi 0, %s233
      %s251 = sphi 0, %s251
      %s253 = sphi 0, %s251
      %s254 = sphi 0, %s253
      %s268 = sphi 0, %s254
      %s272 = sphi 0, %s272
      %s274 = sphi 0, %s272
      %s275 = sphi 0, %s274
      %s289 = sphi 0, %s275
      %s293 = sphi 0, %s293
      %s295 = sphi 0, %s293
      %s296 = sphi 0, %s295
      %s310 = sphi 0, %s296
      %s316 = sphi 0, %s318
      %s319 = sphi 0, %s316
      %s320 = sphi 0, %s319
      %s336 = sphi 0, %s320
    $region4: #{tpu_custom_call.1} parent=1 // loop_header_branch
      %31 = sbr.rel (%p29) target = $region8
    $region5: #{tpu_custom_call.1} parent=1 // loop_body
      %s33 = ssub.s32 %s28, 1
      %s34 = ssub.s32 %s28, 2
      %s35 = sadd.s32 %s28, 1
      %s36 = ssub.s32 %s28, %s35
      %p37 = scmp.eq.s32.totalorder %s36, 0
      %s39 = sadd.s32 %s38, 1
      %s40 = scalar_select %p37, %s38, %s39
      %p43 = pneg %p37
      %p44 = scmp.eq.s32.totalorder %s28, 1
      %p45 = por %p43, %p44
      %p46 = scmp.ne.s32.totalorder %s38, %s41
      %p47 = scmp.eq.s32.totalorder %s28, 0
      %p48 = por %p46, %p47
      %p49 = scmp.ne.s32.totalorder %s38, %s41
      %p50 = scmp.eq.s32.totalorder %s33, 1
      %p51 = por %p49, %p50
      %p52 = scmp.ne.s32.totalorder %s41, %s42
      %p53 = scmp.eq.s32.totalorder %s33, 0
      %p54 = por %p52, %p53
      %p55 = scmp.ne.s32.totalorder %s41, %s42
      %p56 = scmp.eq.s32.totalorder %s34, 1
      %p57 = por %p55, %p56
      %p59 = scmp.ne.s32.totalorder %s42, %s58
      %p60 = scmp.eq.s32.totalorder %s34, 0
      %p61 = por %p59, %p60
      %s63 = sadd.s32 %s62, 1
      %p66 = scmp.eq.s32.totalorder %s28, 1
      %p67 = scmp.ne.s32.totalorder %s62, %s64
      %p68 = scmp.eq.s32.totalorder %s28, 0
      %p69 = por %p67, %p68
      %p70 = scmp.ne.s32.totalorder %s62, %s64
      %p71 = scmp.eq.s32.totalorder %s33, 1
      %p72 = por %p70, %p71
      %p73 = scmp.ne.s32.totalorder %s64, %s65
      %p74 = scmp.eq.s32.totalorder %s33, 0
      %p75 = por %p73, %p74
      %p76 = scmp.ne.s32.totalorder %s64, %s65
      %p77 = scmp.eq.s32.totalorder %s34, 1
      %p78 = por %p76, %p77
      %p80 = scmp.ne.s32.totalorder %s65, %s79
      %p81 = scmp.eq.s32.totalorder %s34, 0
      %p82 = por %p80, %p81
      %s84 = sadd.s32 %s83, 1
      %p87 = scmp.eq.s32.totalorder %s28, 1
      %p88 = scmp.ne.s32.totalorder %s83, %s85
      %p89 = scmp.eq.s32.totalorder %s28, 0
      %p90 = por %p88, %p89
      %p91 = scmp.ne.s32.totalorder %s83, %s85
      %p92 = scmp.eq.s32.totalorder %s33, 1
      %p93 = por %p91, %p92
      %p94 = scmp.ne.s32.totalorder %s85, %s86
      %p95 = scmp.eq.s32.totalorder %s33, 0
      %p96 = por %p94, %p95
      %p97 = scmp.ne.s32.totalorder %s85, %s86
      %p98 = scmp.eq.s32.totalorder %s34, 1
      %p99 = por %p97, %p98
      %p101 = scmp.ne.s32.totalorder %s86, %s100
      %p102 = scmp.eq.s32.totalorder %s34, 0
      %p103 = por %p101, %p102
      %s105 = sadd.s32 %s104, 1
      %p108 = scmp.eq.s32.totalorder %s28, 1
      %p109 = scmp.ne.s32.totalorder %s104, %s106
      %p110 = scmp.eq.s32.totalorder %s28, 0
      %p111 = por %p109, %p110
      %p112 = scmp.ne.s32.totalorder %s104, %s106
      %p113 = scmp.eq.s32.totalorder %s33, 1
      %p114 = por %p112, %p113
      %p115 = scmp.ne.s32.totalorder %s106, %s107
      %p116 = scmp.eq.s32.totalorder %s33, 0
      %p117 = por %p115, %p116
      %p118 = scmp.ne.s32.totalorder %s106, %s107
      %p119 = scmp.eq.s32.totalorder %s34, 1
      %p120 = por %p118, %p119
      %p122 = scmp.ne.s32.totalorder %s107, %s121
      %p123 = scmp.eq.s32.totalorder %s34, 0
      %p124 = por %p122, %p123
      %s126 = sadd.s32 %s125, 1
      %p129 = scmp.eq.s32.totalorder %s28, 1
      %p130 = scmp.ne.s32.totalorder %s125, %s127
      %p131 = scmp.eq.s32.totalorder %s28, 0
      %p132 = por %p130, %p131
      %p133 = scmp.ne.s32.totalorder %s125, %s127
      %p134 = scmp.eq.s32.totalorder %s33, 1
      %p135 = por %p133, %p134
      %p136 = scmp.ne.s32.totalorder %s127, %s128
      %p137 = scmp.eq.s32.totalorder %s33, 0
      %p138 = por %p136, %p137
      %p139 = scmp.ne.s32.totalorder %s127, %s128
      %p140 = scmp.eq.s32.totalorder %s34, 1
      %p141 = por %p139, %p140
      %p143 = scmp.ne.s32.totalorder %s128, %s142
      %p144 = scmp.eq.s32.totalorder %s34, 0
      %p145 = por %p143, %p144
      %s147 = sadd.s32 %s146, 1
      %p150 = scmp.eq.s32.totalorder %s28, 1
      %p151 = scmp.ne.s32.totalorder %s146, %s148
      %p152 = scmp.eq.s32.totalorder %s28, 0
      %p153 = por %p151, %p152
      %p154 = scmp.ne.s32.totalorder %s146, %s148
      %p155 = scmp.eq.s32.totalorder %s33, 1
      %p156 = por %p154, %p155
      %p157 = scmp.ne.s32.totalorder %s148, %s149
      %p158 = scmp.eq.s32.totalorder %s33, 0
      %p159 = por %p157, %p158
      %p160 = scmp.ne.s32.totalorder %s148, %s149
      %p161 = scmp.eq.s32.totalorder %s34, 1
      %p162 = por %p160, %p161
      %p164 = scmp.ne.s32.totalorder %s149, %s163
      %p165 = scmp.eq.s32.totalorder %s34, 0
      %p166 = por %p164, %p165
      %s168 = sadd.s32 %s167, 1
      %p171 = scmp.eq.s32.totalorder %s28, 1
      %p172 = scmp.ne.s32.totalorder %s167, %s169
      %p173 = scmp.eq.s32.totalorder %s28, 0
      %p174 = por %p172, %p173
      %p175 = scmp.ne.s32.totalorder %s167, %s169
      %p176 = scmp.eq.s32.totalorder %s33, 1
      %p177 = por %p175, %p176
      %p178 = scmp.ne.s32.totalorder %s169, %s170
      %p179 = scmp.eq.s32.totalorder %s33, 0
      %p180 = por %p178, %p179
      %p181 = scmp.ne.s32.totalorder %s169, %s170
      %p182 = scmp.eq.s32.totalorder %s34, 1
      %p183 = por %p181, %p182
      %p185 = scmp.ne.s32.totalorder %s170, %s184
      %p186 = scmp.eq.s32.totalorder %s34, 0
      %p187 = por %p185, %p186
      %s189 = sadd.s32 %s188, 1
      %p192 = scmp.eq.s32.totalorder %s28, 1
      %p193 = scmp.ne.s32.totalorder %s188, %s190
      %p194 = scmp.eq.s32.totalorder %s28, 0
      %p195 = por %p193, %p194
      %p196 = scmp.ne.s32.totalorder %s188, %s190
      %p197 = scmp.eq.s32.totalorder %s33, 1
      %p198 = por %p196, %p197
      %p199 = scmp.ne.s32.totalorder %s190, %s191
      %p200 = scmp.eq.s32.totalorder %s33, 0
      %p201 = por %p199, %p200
      %p202 = scmp.ne.s32.totalorder %s190, %s191
      %p203 = scmp.eq.s32.totalorder %s34, 1
      %p204 = por %p202, %p203
      %p206 = scmp.ne.s32.totalorder %s191, %s205
      %p207 = scmp.eq.s32.totalorder %s34, 0
      %p208 = por %p206, %p207
      %s210 = sadd.s32 %s209, 1
      %p213 = scmp.eq.s32.totalorder %s28, 1
      %p214 = scmp.ne.s32.totalorder %s209, %s211
      %p215 = scmp.eq.s32.totalorder %s28, 0
      %p216 = por %p214, %p215
      %p217 = scmp.ne.s32.totalorder %s209, %s211
      %p218 = scmp.eq.s32.totalorder %s33, 1
      %p219 = por %p217, %p218
      %p220 = scmp.ne.s32.totalorder %s211, %s212
      %p221 = scmp.eq.s32.totalorder %s33, 0
      %p222 = por %p220, %p221
      %p223 = scmp.ne.s32.totalorder %s211, %s212
      %p224 = scmp.eq.s32.totalorder %s34, 1
      %p225 = por %p223, %p224
      %p227 = scmp.ne.s32.totalorder %s212, %s226
      %p228 = scmp.eq.s32.totalorder %s34, 0
      %p229 = por %p227, %p228
      %s231 = sadd.s32 %s230, 1
      %p234 = scmp.eq.s32.totalorder %s28, 1
      %p235 = scmp.ne.s32.totalorder %s230, %s232
      %p236 = scmp.eq.s32.totalorder %s28, 0
      %p237 = por %p235, %p236
      %p238 = scmp.ne.s32.totalorder %s230, %s232
      %p239 = scmp.eq.s32.totalorder %s33, 1
      %p240 = por %p238, %p239
      %p241 = scmp.ne.s32.totalorder %s232, %s233
      %p242 = scmp.eq.s32.totalorder %s33, 0
      %p243 = por %p241, %p242
      %p244 = scmp.ne.s32.totalorder %s232, %s233
      %p245 = scmp.eq.s32.totalorder %s34, 1
      %p246 = por %p244, %p245
      %p248 = scmp.ne.s32.totalorder %s233, %s247
      %p249 = scmp.eq.s32.totalorder %s34, 0
      %p250 = por %p248, %p249
      %s252 = sadd.s32 %s251, 1
      %p255 = scmp.eq.s32.totalorder %s28, 1
      %p256 = scmp.ne.s32.totalorder %s251, %s253
      %p257 = scmp.eq.s32.totalorder %s28, 0
      %p258 = por %p256, %p257
      %p259 = scmp.ne.s32.totalorder %s251, %s253
      %p260 = scmp.eq.s32.totalorder %s33, 1
      %p261 = por %p259, %p260
      %p262 = scmp.ne.s32.totalorder %s253, %s254
      %p263 = scmp.eq.s32.totalorder %s33, 0
      %p264 = por %p262, %p263
      %p265 = scmp.ne.s32.totalorder %s253, %s254
      %p266 = scmp.eq.s32.totalorder %s34, 1
      %p267 = por %p265, %p266
      %p269 = scmp.ne.s32.totalorder %s254, %s268
      %p270 = scmp.eq.s32.totalorder %s34, 0
      %p271 = por %p269, %p270
      %s273 = sadd.s32 %s272, 1
      %p276 = scmp.eq.s32.totalorder %s28, 1
      %p277 = scmp.ne.s32.totalorder %s272, %s274
      %p278 = scmp.eq.s32.totalorder %s28, 0
      %p279 = por %p277, %p278
      %p280 = scmp.ne.s32.totalorder %s272, %s274
      %p281 = scmp.eq.s32.totalorder %s33, 1
      %p282 = por %p280, %p281
      %p283 = scmp.ne.s32.totalorder %s274, %s275
      %p284 = scmp.eq.s32.totalorder %s33, 0
      %p285 = por %p283, %p284
      %p286 = scmp.ne.s32.totalorder %s274, %s275
      %p287 = scmp.eq.s32.totalorder %s34, 1
      %p288 = por %p286, %p287
      %p290 = scmp.ne.s32.totalorder %s275, %s289
      %p291 = scmp.eq.s32.totalorder %s34, 0
      %p292 = por %p290, %p291
      %s294 = sadd.s32 %s293, 1
      %p297 = scmp.eq.s32.totalorder %s28, 1
      %p298 = scmp.ne.s32.totalorder %s293, %s295
      %p299 = scmp.eq.s32.totalorder %s28, 0
      %p300 = por %p298, %p299
      %p301 = scmp.ne.s32.totalorder %s293, %s295
      %p302 = scmp.eq.s32.totalorder %s33, 1
      %p303 = por %p301, %p302
      %p304 = scmp.ne.s32.totalorder %s295, %s296
      %p305 = scmp.eq.s32.totalorder %s33, 0
      %p306 = por %p304, %p305
      %p307 = scmp.ne.s32.totalorder %s295, %s296
      %p308 = scmp.eq.s32.totalorder %s34, 1
      %p309 = por %p307, %p308
      %p311 = scmp.ne.s32.totalorder %s296, %s310
      %p312 = scmp.eq.s32.totalorder %s34, 0
      %p313 = por %p311, %p312
      %s314 = ssub.s32 %s28, %s35
      %p315 = scmp.eq.s32.totalorder %s314, 0
      %s317 = sadd.s32 %s316, 1
      %s318 = scalar_select %p315, %s316, %s317
      %p321 = pneg %p315
      %p322 = scmp.eq.s32.totalorder %s28, 1
      %p323 = por %p321, %p322
      %p324 = scmp.ne.s32.totalorder %s316, %s319
      %p325 = scmp.eq.s32.totalorder %s28, 0
      %p326 = por %p324, %p325
      %p327 = scmp.ne.s32.totalorder %s316, %s319
      %p328 = scmp.eq.s32.totalorder %s33, 1
      %p329 = por %p327, %p328
      %p330 = scmp.ne.s32.totalorder %s319, %s320
      %p331 = scmp.eq.s32.totalorder %s33, 0
      %p332 = por %p330, %p331
      %p333 = scmp.ne.s32.totalorder %s319, %s320
      %p334 = scmp.eq.s32.totalorder %s34, 1
      %p335 = por %p333, %p334
      %p337 = scmp.ne.s32.totalorder %s320, %s336
      %p338 = scmp.eq.s32.totalorder %s34, 0
      %p339 = por %p337, %p338
      %p340 = scmp.le.s32.totalorder 1, %s28
      %p341 = scmp.lt.s32.totalorder %s28, 3
      %p342 = pnand %p340, %p341
      %p343 = pneg %p342
      // Predicated region
      $region9: #{tpu_custom_call.1} parent=5 // pred_check
        _
      $region10: #{tpu_custom_call.1} parent=5 // pred_check_branch
        %345 = sbr.rel (%p342) target = $region12
      $region11: #{tpu_custom_call.1} parent=5 // pred_region
        %s346 = ssub.s32 %s28, 1
        // Predicated region
        $region13: #{tpu_custom_call.1} parent=11 // pred_check
          %p347 = pneg %p75
        $region14: #{tpu_custom_call.1} parent=11 // pred_check_branch
          %349 = sbr.rel (%p347) target = $region16
        $region15: #{tpu_custom_call.1} parent=11 // pred_region
          %s351 = ssub.s32 16, 16
          %352 = vsyncadd [#allocation6], %s351
          %s354 = sshll.u32 [#allocation5], 4
          %s355 = int_to_ptr.vmem [resolvable:$true] %s354
          %357 = dma.hbm_to_vmem [thread:$0]  %s1, 16, %s355, [#allocation6]
        $region16: #{tpu_custom_call.1} parent=11 // pred_fallthru
          _
        // Predicated region
        $region17: #{tpu_custom_call.1} parent=11 // pred_check
          %p358 = pneg %p96
        $region18: #{tpu_custom_call.1} parent=11 // pred_check_branch
          %360 = sbr.rel (%p358) target = $region20
        $region19: #{tpu_custom_call.1} parent=11 // pred_region
          %s362 = ssub.s32 16, 16
          %363 = vsyncadd [#allocation6], %s362
          %s365 = sshll.u32 [#allocation7], 4
          %s366 = int_to_ptr.vmem [resolvable:$true] %s365
          %368 = dma.hbm_to_vmem [thread:$0]  %s2, 16, %s366, [#allocation6]
        $region20: #{tpu_custom_call.1} parent=11 // pred_fallthru
          _
        // Predicated region
        $region21: #{tpu_custom_call.1} parent=11 // pred_check
          %p369 = pneg %p117
        $region22: #{tpu_custom_call.1} parent=11 // pred_check_branch
          %371 = sbr.rel (%p369) target = $region24
        $region23: #{tpu_custom_call.1} parent=11 // pred_region
          %s373 = ssub.s32 3072, 3072
          %374 = vsyncadd [#allocation9], %s373
          %s375 = sshll.u32 [#allocation8], 4
          %s376 = int_to_ptr.vmem [resolvable:$true] %s375
          %381 = dma.hbm_to_vmem [thread:$0]  %s3, 3072, %s376, [#allocation9], 192, 192, 12
        $region24: #{tpu_custom_call.1} parent=11 // pred_fallthru
          _
        // Predicated region
        $region25: #{tpu_custom_call.1} parent=11 // pred_check
          %p382 = pneg %p138
        $region26: #{tpu_custom_call.1} parent=11 // pred_check_branch
          %384 = sbr.rel (%p382) target = $region28
        $region27: #{tpu_custom_call.1} parent=11 // pred_region
          _
        $region28: #{tpu_custom_call.1} parent=11 // pred_fallthru
          _
        // Predicated region
        $region29: #{tpu_custom_call.1} parent=11 // pred_check
          %p385 = pneg %p159
        $region30: #{tpu_custom_call.1} parent=11 // pred_check_branch
          %387 = sbr.rel (%p385) target = $region32
        $region31: #{tpu_custom_call.1} parent=11 // pred_region
          %s389 = ssub.s32 1024, 1024
          %390 = vsyncadd [#allocation9], %s389
          %s391 = sshll.u32 [#allocation10], 4
          %s392 = int_to_ptr.vmem [resolvable:$true] %s391
          %397 = dma.hbm_to_vmem [thread:$0]  %s5, 1024, %s392, [#allocation9], 64, 64, 4
        $region32: #{tpu_custom_call.1} parent=11 // pred_fallthru
          _
        // Predicated region
        $region33: #{tpu_custom_call.1} parent=11 // pred_check
          %p398 = pneg %p180
        $region34: #{tpu_custom_call.1} parent=11 // pred_check_branch
          %400 = sbr.rel (%p398) target = $region36
        $region35: #{tpu_custom_call.1} parent=11 // pred_region
          _
        $region36: #{tpu_custom_call.1} parent=11 // pred_fallthru
          _
        // Predicated region
        $region37: #{tpu_custom_call.1} parent=11 // pred_check
          %p401 = pneg %p201
        $region38: #{tpu_custom_call.1} parent=11 // pred_check_branch
          %403 = sbr.rel (%p401) target = $region40
        $region39: #{tpu_custom_call.1} parent=11 // pred_region
          _
        $region40: #{tpu_custom_call.1} parent=11 // pred_fallthru
          _
        // Predicated region
        $region41: #{tpu_custom_call.1} parent=11 // pred_check
          %p404 = pneg %p222
        $region42: #{tpu_custom_call.1} parent=11 // pred_check_branch
          %406 = sbr.rel (%p404) target = $region44
        $region43: #{tpu_custom_call.1} parent=11 // pred_region
          _
        $region44: #{tpu_custom_call.1} parent=11 // pred_fallthru
          _
        // Predicated region
        $region45: #{tpu_custom_call.1} parent=11 // pred_check
          %p407 = pneg %p243
        $region46: #{tpu_custom_call.1} parent=11 // pred_check_branch
          %409 = sbr.rel (%p407) target = $region48
        $region47: #{tpu_custom_call.1} parent=11 // pred_region
          %s411 = ssub.s32 4096, 4096
          %412 = vsyncadd [#allocation12], %s411
          %s413 = sshll.u32 [#allocation11], 4
          %s414 = int_to_ptr.vmem [resolvable:$true] %s413
          %419 = dma.hbm_to_vmem [thread:$0]  %s9, 4096, %s414, [#allocation12], 256, 256, 16
        $region48: #{tpu_custom_call.1} parent=11 // pred_fallthru
          _
        // Predicated region
        $region49: #{tpu_custom_call.1} parent=11 // pred_check
          %p420 = pneg %p264
        $region50: #{tpu_custom_call.1} parent=11 // pred_check_branch
          %422 = sbr.rel (%p420) target = $region52
        $region51: #{tpu_custom_call.1} parent=11 // pred_region
          _
        $region52: #{tpu_custom_call.1} parent=11 // pred_fallthru
          _
        // Predicated region
        $region53: #{tpu_custom_call.1} parent=11 // pred_check
          %p423 = pneg %p285
        $region54: #{tpu_custom_call.1} parent=11 // pred_check_branch
          %425 = sbr.rel (%p423) target = $region56
        $region55: #{tpu_custom_call.1} parent=11 // pred_region
          %s427 = ssub.s32 4096, 4096
          %428 = vsyncadd [#allocation12], %s427
          %s429 = sshll.u32 [#allocation13], 4
          %s430 = int_to_ptr.vmem [resolvable:$true] %s429
          %435 = dma.hbm_to_vmem [thread:$0]  %s11, 4096, %s430, [#allocation12], 64, 64, 4
        $region56: #{tpu_custom_call.1} parent=11 // pred_fallthru
          _
        // Predicated region
        $region57: #{tpu_custom_call.1} parent=11 // pred_check
          %p436 = pneg %p306
        $region58: #{tpu_custom_call.1} parent=11 // pred_check_branch
          %438 = sbr.rel (%p436) target = $region60
        $region59: #{tpu_custom_call.1} parent=11 // pred_region
          _
        $region60: #{tpu_custom_call.1} parent=11 // pred_fallthru
          _
      $region12: #{tpu_custom_call.1} parent=5 // pred_fallthru
        _
      %p439 = scmp.lt.s32.totalorder %s28, 2
      // Predicated region
      $region61: #{tpu_custom_call.1} parent=5 // pred_check
        %p440 = pneg %p439
      $region62: #{tpu_custom_call.1} parent=5 // pred_check_branch
        %442 = sbr.rel (%p440) target = $region64
      $region63: #{tpu_custom_call.1} parent=5 // pred_region
        // Predicated region
        $region65: #{tpu_custom_call.1} parent=63 // pred_check
          %p443 = pneg %p48
        $region66: #{tpu_custom_call.1} parent=63 // pred_check_branch
          %445 = sbr.rel (%p443) target = $region68
        $region67: #{tpu_custom_call.1} parent=63 // pred_region
          %s446 = sand.u32 %s38, 1
          %s447 = scalar_lea.sflag [#allocation3], %s446
          %s448 = sand.u32 %s38, 1
          %s449 = smul.addr %s448, 64
          %s450 = scalar_lea.vmem [#allocation2], %s449
          %s451 = smul.u32 4, %s28
          %s453 = ssub.s32 1024, 1024
          %454 = vsyncadd %s447, %s453
          %s455 = smul.addr %s451, 2
          %s456 = smul.addr %s455, 128
          %s457 = scalar_lea.hbm %s0, %s456
          %s458 = sshll.u32 %s450, 4
          %s459 = int_to_ptr.vmem [resolvable:$true] %s458
          %464 = dma.hbm_to_vmem [thread:$0]  %s457, 1024, %s459, %s447, 128, 128, 8
        $region68: #{tpu_custom_call.1} parent=63 // pred_fallthru
          _
      $region64: #{tpu_custom_call.1} parent=5 // pred_fallthru
        _
      %p465 = scmp.le.s32.totalorder 1, %s28
      %p466 = scmp.lt.s32.totalorder %s28, 3
      %p467 = pnand %p465, %p466
      %p468 = pneg %p467
      // Predicated region
      $region69: #{tpu_custom_call.1} parent=5 // pred_check
        _
      $region70: #{tpu_custom_call.1} parent=5 // pred_check_branch
        %470 = sbr.rel (%p467) target = $region72
      $region71: #{tpu_custom_call.1} parent=5 // pred_region
        %s471 = ssub.s32 %s28, 1
        %s472 = sand.u32 %s41, 1
        %s473 = scalar_lea.sflag [#allocation3], %s472
        %s474 = sand.u32 %s41, 1
        %s475 = smul.addr %s474, 64
        %s476 = scalar_lea.vmem [#allocation2], %s475
        // Predicated region
        $region73: #{tpu_custom_call.1} parent=71 // pred_check
          %p477 = pneg %p54
        $region74: #{tpu_custom_call.1} parent=71 // pred_check_branch
          %479 = sbr.rel (%p477) target = $region76
        $region75: #{tpu_custom_call.1} parent=71 // pred_region
          %480 = dma.done %s473, 1024
        $region76: #{tpu_custom_call.1} parent=71 // pred_fallthru
          _
        // Predicated region
        $region77: #{tpu_custom_call.1} parent=71 // pred_check
          %p481 = pneg %p75
        $region78: #{tpu_custom_call.1} parent=71 // pred_check_branch
          %483 = sbr.rel (%p481) target = $region80
        $region79: #{tpu_custom_call.1} parent=71 // pred_region
          %484 = dma.done [#allocation6], 16
        $region80: #{tpu_custom_call.1} parent=71 // pred_fallthru
          _
        // Predicated region
        $region81: #{tpu_custom_call.1} parent=71 // pred_check
          %p485 = pneg %p96
        $region82: #{tpu_custom_call.1} parent=71 // pred_check_branch
          %487 = sbr.rel (%p485) target = $region84
        $region83: #{tpu_custom_call.1} parent=71 // pred_region
          %488 = dma.done [#allocation6], 16
        $region84: #{tpu_custom_call.1} parent=71 // pred_fallthru
          _
        // Predicated region
        $region85: #{tpu_custom_call.1} parent=71 // pred_check
          %p489 = pneg %p117
        $region86: #{tpu_custom_call.1} parent=71 // pred_check_branch
          %491 = sbr.rel (%p489) target = $region88
        $region87: #{tpu_custom_call.1} parent=71 // pred_region
          %492 = dma.done [#allocation9], 3072
        $region88: #{tpu_custom_call.1} parent=71 // pred_fallthru
          _
        // Predicated region
        $region89: #{tpu_custom_call.1} parent=71 // pred_check
          %p493 = pneg %p159
        $region90: #{tpu_custom_call.1} parent=71 // pred_check_branch
          %495 = sbr.rel (%p493) target = $region92
        $region91: #{tpu_custom_call.1} parent=71 // pred_region
          %496 = dma.done [#allocation9], 1024
        $region92: #{tpu_custom_call.1} parent=71 // pred_fallthru
          _
        // Predicated region
        $region93: #{tpu_custom_call.1} parent=71 // pred_check
          %p497 = pneg %p243
        $region94: #{tpu_custom_call.1} parent=71 // pred_check_branch
          %499 = sbr.rel (%p497) target = $region96
        $region95: #{tpu_custom_call.1} parent=71 // pred_region
          %500 = dma.done [#allocation12], 4096
        $region96: #{tpu_custom_call.1} parent=71 // pred_fallthru
          _
        // Predicated region
        $region97: #{tpu_custom_call.1} parent=71 // pred_check
          %p501 = pneg %p285
        $region98: #{tpu_custom_call.1} parent=71 // pred_check_branch
          %503 = sbr.rel (%p501) target = $region100
        $region99: #{tpu_custom_call.1} parent=71 // pred_region
          %504 = dma.done [#allocation12], 4096
        $region100: #{tpu_custom_call.1} parent=71 // pred_fallthru
          _
        %s505 = sand.u32 %s41, 1
        %s506 = scalar_lea.sflag [#allocation3], %s505
        %s507 = sand.u32 %s41, 1
        %s508 = smul.addr %s507, 64
        %s509 = scalar_lea.vmem [#allocation2], %s508
        %p510 = pneg %p54
        %p511 = pneg %p51
        %p512 = pneg %p75
        %p513 = pneg %p72
        %p514 = pneg %p96
        %p515 = pneg %p93
        %p516 = pneg %p117
        %p517 = pneg %p114
        %p518 = pneg %p138
        %p519 = pneg %p135
        %p520 = pneg %p159
        %p521 = pneg %p156
        %p522 = pneg %p180
        %p523 = pneg %p177
        %p524 = pneg %p201
        %p525 = pneg %p198
        %p526 = pneg %p222
        %p527 = pneg %p219
        %p528 = pneg %p243
        %p529 = pneg %p240
        %p530 = pneg %p264
        %p531 = pneg %p261
        %p532 = pneg %p285
        %p533 = pneg %p282
        %p534 = pneg %p306
        %p535 = pneg %p303
        %p536 = pneg %p332
        %p537 = pneg %p329
        %s538 = sand.u32 %s319, 1
        %s539 = scalar_lea.sflag [#allocation4], %s538
        %s540 = sand.u32 %s319, 1
        %s541 = smul.addr %s540, 64
        %s542 = scalar_lea.vmem [#allocation14], %s541
        %s543 = smul.u32 4, %s33
        %s544 = smul.u32 4, %s33
        %v546 = vld [vmem:[%s476] sm:$0xff]
        %v547 = vld [vmem:[%s476 + $0x8] sm:$0xff]
        %v548 = vld [vmem:[%s476 + $0x10] sm:$0xff]
        %v549 = vld [vmem:[%s476 + $0x18] sm:$0xff]
        %v550 = vld [vmem:[%s476 + $0x20] sm:$0xff]
        %v551 = vld [vmem:[%s476 + $0x28] sm:$0xff]
        %v552 = vld [vmem:[%s476 + $0x30] sm:$0xff]
        %v553 = vld [vmem:[%s476 + $0x38] sm:$0xff]
        %v554 = vld [vmem:[#allocation5] sm:$0x1]
        %v555 = vld [vmem:[#allocation7] sm:$0x1]
        %556 = vadd.xlane.f32.xlu0 %v546
        %v557 = vpop.xlane.xlu0 %556
        %558 = vadd.xlane.f32.xlu0 %v547
        %v559 = vpop.xlane.xlu0 %558
        %560 = vadd.xlane.f32.xlu0 %v548
        %v561 = vpop.xlane.xlu0 %560
        %562 = vadd.xlane.f32.xlu0 %v549
        %v563 = vpop.xlane.xlu0 %562
        %564 = vadd.xlane.f32.xlu0 %v550
        %v565 = vpop.xlane.xlu0 %564
        %566 = vadd.xlane.f32.xlu0 %v551
        %v567 = vpop.xlane.xlu0 %566
        %568 = vadd.xlane.f32.xlu0 %v552
        %v569 = vpop.xlane.xlu0 %568
        %570 = vadd.xlane.f32.xlu0 %v553
        %v571 = vpop.xlane.xlu0 %570
        %v572 = vrcp.pop 128.0
        %v573 = vmul.f32 %v557, %v572
        %v574 = vmul.f32 %v559, %v572
        %v575 = vmul.f32 %v561, %v572
        %v576 = vmul.f32 %v563, %v572
        %v577 = vmul.f32 %v565, %v572
        %v578 = vmul.f32 %v567, %v572
        %v579 = vmul.f32 %v569, %v572
        %v580 = vmul.f32 %v571, %v572
        %v581 = vsub.f32 %v546, %v573
        %v582 = vsub.f32 %v547, %v574
        %v583 = vsub.f32 %v548, %v575
        %v584 = vsub.f32 %v549, %v576
        %v585 = vsub.f32 %v550, %v577
        %v586 = vsub.f32 %v551, %v578
        %v587 = vsub.f32 %v552, %v579
        %v588 = vsub.f32 %v553, %v580
        %v589 = vmul.f32 %v581, %v581
        %v590 = vmul.f32 %v582, %v582
        %v591 = vmul.f32 %v583, %v583
        %v592 = vmul.f32 %v584, %v584
        %v593 = vmul.f32 %v585, %v585
        %v594 = vmul.f32 %v586, %v586
        %v595 = vmul.f32 %v587, %v587
        %v596 = vmul.f32 %v588, %v588
        %597 = vadd.xlane.f32.xlu0 %v589
        %v598 = vpop.xlane.xlu0 %597
        %599 = vadd.xlane.f32.xlu0 %v590
        %v600 = vpop.xlane.xlu0 %599
        %601 = vadd.xlane.f32.xlu0 %v591
        %v602 = vpop.xlane.xlu0 %601
        %603 = vadd.xlane.f32.xlu0 %v592
        %v604 = vpop.xlane.xlu0 %603
        %605 = vadd.xlane.f32.xlu0 %v593
        %v606 = vpop.xlane.xlu0 %605
        %607 = vadd.xlane.f32.xlu0 %v594
        %v608 = vpop.xlane.xlu0 %607
        %609 = vadd.xlane.f32.xlu0 %v595
        %v610 = vpop.xlane.xlu0 %609
        %611 = vadd.xlane.f32.xlu0 %v596
        %v612 = vpop.xlane.xlu0 %611
        %v613 = vmul.f32 %v598, %v572
        %v614 = vmul.f32 %v600, %v572
        %v615 = vmul.f32 %v602, %v572
        %v616 = vmul.f32 %v604, %v572
        %v617 = vmul.f32 %v606, %v572
        %v618 = vmul.f32 %v608, %v572
        %v619 = vmul.f32 %v610, %v572
        %v620 = vmul.f32 %v612, %v572
        %v621 = vadd.f32 %v613, 1e-05
        %v622 = vadd.f32 %v614, 1e-05
        %v623 = vadd.f32 %v615, 1e-05
        %v624 = vadd.f32 %v616, 1e-05
        %v625 = vadd.f32 %v617, 1e-05
        %v626 = vadd.f32 %v618, 1e-05
        %v627 = vadd.f32 %v619, 1e-05
        %v628 = vadd.f32 %v620, 1e-05
        %v629 = vrsqrt.pop %v621
        %v630 = vrsqrt.pop %v622
        %v631 = vrsqrt.pop %v623
        %v632 = vrsqrt.pop %v624
        %v633 = vrsqrt.pop %v625
        %v634 = vrsqrt.pop %v626
        %v635 = vrsqrt.pop %v627
        %v636 = vrsqrt.pop %v628
        %v637 = vmul.f32 %v581, %v629
        %v638 = vmul.f32 %v582, %v630
        %v639 = vmul.f32 %v583, %v631
        %v640 = vmul.f32 %v584, %v632
        %v641 = vmul.f32 %v585, %v633
        %v642 = vmul.f32 %v586, %v634
        %v643 = vmul.f32 %v587, %v635
        %v644 = vmul.f32 %v588, %v636
        %v646 = vlaneseq
        %v647 = vshrl.u32 %v646, 7
        %v648 = vsub.s32 0, %v647
        %v649 = vrot.slane %v554, %v648
        %v651 = vmul.f32 %v637, %v649
        %v652 = vmul.f32 %v638, %v649
        %v653 = vmul.f32 %v639, %v649
        %v654 = vmul.f32 %v640, %v649
        %v655 = vmul.f32 %v641, %v649
        %v656 = vmul.f32 %v642, %v649
        %v657 = vmul.f32 %v643, %v649
        %v658 = vmul.f32 %v644, %v649
        %v660 = vlaneseq
        %v661 = vshrl.u32 %v660, 7
        %v662 = vsub.s32 0, %v661
        %v663 = vrot.slane %v555, %v662
        %v665 = vadd.f32 %v651, %v663
        %v666 = vadd.f32 %v652, %v663
        %v667 = vadd.f32 %v653, %v663
        %v668 = vadd.f32 %v654, %v663
        %v669 = vadd.f32 %v655, %v663
        %v670 = vadd.f32 %v656, %v663
        %v671 = vadd.f32 %v657, %v663
        %v672 = vadd.f32 %v658, %v663
        %v673 = vpack.c.bf16 %v666, %v665
        %v674 = vpack.c.bf16 %v668, %v667
        %v675 = vpack.c.bf16 %v670, %v669
        %v676 = vpack.c.bf16 %v672, %v671
        %v677 = vld [vmem:[#allocation8] sm:$0xff]
        %v678 = vld [vmem:[#allocation8 + $0x8] sm:$0xf]
        %v679 = vld [vmem:[#allocation8 + $0xc] sm:$0xff]
        %v680 = vld [vmem:[#allocation8 + $0x14] sm:$0xf]
        %v681 = vld [vmem:[#allocation8 + $0x18] sm:$0xff]
        %v682 = vld [vmem:[#allocation8 + $0x20] sm:$0xf]
        %v683 = vld [vmem:[#allocation8 + $0x24] sm:$0xff]
        %v684 = vld [vmem:[#allocation8 + $0x2c] sm:$0xf]
        %v685 = vld [vmem:[#allocation8 + $0x30] sm:$0xff]
        %v686 = vld [vmem:[#allocation8 + $0x38] sm:$0xf]
        %v687 = vld [vmem:[#allocation8 + $0x3c] sm:$0xff]
        %v688 = vld [vmem:[#allocation8 + $0x44] sm:$0xf]
        %v689 = vld [vmem:[#allocation8 + $0x48] sm:$0xff]
        %v690 = vld [vmem:[#allocation8 + $0x50] sm:$0xf]
        %v691 = vld [vmem:[#allocation8 + $0x54] sm:$0xff]
        %v692 = vld [vmem:[#allocation8 + $0x5c] sm:$0xf]
        %v693 = vld [vmem:[#allocation8 + $0x60] sm:$0xff]
        %v694 = vld [vmem:[#allocation8 + $0x68] sm:$0xf]
        %v695 = vld [vmem:[#allocation8 + $0x6c] sm:$0xff]
        %v696 = vld [vmem:[#allocation8 + $0x74] sm:$0xf]
        %v697 = vld [vmem:[#allocation8 + $0x78] sm:$0xff]
        %v698 = vld [vmem:[#allocation8 + $0x80] sm:$0xf]
        %v699 = vld [vmem:[#allocation8 + $0x84] sm:$0xff]
        %v700 = vld [vmem:[#allocation8 + $0x8c] sm:$0xf]
        %v701 = vld [vmem:[#allocation8 + $0x90] sm:$0xff]
        %v702 = vld [vmem:[#allocation8 + $0x98] sm:$0xf]
        %v703 = vld [vmem:[#allocation8 + $0x9c] sm:$0xff]
        %v704 = vld [vmem:[#allocation8 + $0xa4] sm:$0xf]
        %v705 = vld [vmem:[#allocation8 + $0xa8] sm:$0xff]
        %v706 = vld [vmem:[#allocation8 + $0xb0] sm:$0xf]
        %v707 = vld [vmem:[#allocation8 + $0xb4] sm:$0xff]
        %v708 = vld [vmem:[#allocation8 + $0xbc] sm:$0xf]
        %v709 = vld [vmem:[%s4] sm:$0x7]
        %v711 = vlaneseq
        %v712 = vshrl.u32 %v711, 7
        %v713 = vsub.s32 0, %v712
        %v714 = vrot.slane %v709, %v713
        %v715 = vlaneseq
        %v716 = vshrl.u32 %v715, 7
        %v717 = vsub.s32 1, %v716
        %v718 = vrot.slane %v709, %v717
        %v719 = vlaneseq
        %v720 = vshrl.u32 %v719, 7
        %v721 = vsub.s32 2, %v720
        %v722 = vrot.slane %v709, %v721
        %v758 = vunpack.c.l.b16 %v677
        %v759 = vunpack.c.h.b16 %v677
        %v760 = vunpack.c.l.b16 %v678
        %v761 = vunpack.c.l.b16 %v679
        %v762 = vunpack.c.h.b16 %v679
        %v763 = vunpack.c.l.b16 %v680
        %v764 = vunpack.c.l.b16 %v681
        %v765 = vunpack.c.h.b16 %v681
        %v766 = vunpack.c.l.b16 %v682
        %v767 = vunpack.c.l.b16 %v683
        %v768 = vunpack.c.h.b16 %v683
        %v769 = vunpack.c.l.b16 %v684
        %v770 = vunpack.c.l.b16 %v685
        %v771 = vunpack.c.h.b16 %v685
        %v772 = vunpack.c.l.b16 %v686
        %v773 = vunpack.c.l.b16 %v687
        %v774 = vunpack.c.h.b16 %v687
        %v775 = vunpack.c.l.b16 %v688
        %v776 = vunpack.c.l.b16 %v689
        %v777 = vunpack.c.h.b16 %v689
        %v778 = vunpack.c.l.b16 %v690
        %v779 = vunpack.c.l.b16 %v691
        %v780 = vunpack.c.h.b16 %v691
        %v781 = vunpack.c.l.b16 %v692
        %v782 = vunpack.c.l.b16 %v693
        %v783 = vunpack.c.h.b16 %v693
        %v784 = vunpack.c.l.b16 %v694
        %v785 = vunpack.c.l.b16 %v695
        %v786 = vunpack.c.h.b16 %v695
        %v787 = vunpack.c.l.b16 %v696
        %v788 = vunpack.c.l.b16 %v697
        %v789 = vunpack.c.h.b16 %v697
        %v790 = vunpack.c.l.b16 %v698
        %v791 = vunpack.c.l.b16 %v699
        %v792 = vunpack.c.h.b16 %v699
        %v793 = vunpack.c.l.b16 %v700
        %v794 = vunpack.c.l.b16 %v701
        %v795 = vunpack.c.h.b16 %v701
        %v796 = vunpack.c.l.b16 %v702
        %v797 = vunpack.c.l.b16 %v703
        %v798 = vunpack.c.h.b16 %v703
        %v799 = vunpack.c.l.b16 %v704
        %v800 = vunpack.c.l.b16 %v705
        %v801 = vunpack.c.h.b16 %v705
        %v802 = vunpack.c.l.b16 %v706
        %v803 = vunpack.c.l.b16 %v707
        %v804 = vunpack.c.h.b16 %v707
        %v805 = vunpack.c.l.b16 %v708
        %v806 = vpack.c.b16 %v761, %v758
        %v807 = vpack.c.b16 %v762, %v759
        %v808 = vpack.c.b16 %v763, %v760
        %v809 = vpack.c.b16 %v767, %v764
        %v810 = vpack.c.b16 %v768, %v765
        %v811 = vpack.c.b16 %v769, %v766
        %v812 = vpack.c.b16 %v773, %v770
        %v813 = vpack.c.b16 %v774, %v771
        %v814 = vpack.c.b16 %v775, %v772
        %v815 = vpack.c.b16 %v779, %v776
        %v816 = vpack.c.b16 %v780, %v777
        %v817 = vpack.c.b16 %v781, %v778
        %v818 = vpack.c.b16 %v785, %v782
        %v819 = vpack.c.b16 %v786, %v783
        %v820 = vpack.c.b16 %v787, %v784
        %v821 = vpack.c.b16 %v791, %v788
        %v822 = vpack.c.b16 %v792, %v789
        %v823 = vpack.c.b16 %v793, %v790
        %v824 = vpack.c.b16 %v797, %v794
        %v825 = vpack.c.b16 %v798, %v795
        %v826 = vpack.c.b16 %v799, %v796
        %v827 = vpack.c.b16 %v803, %v800
        %v828 = vpack.c.b16 %v804, %v801
        %v829 = vpack.c.b16 %v805, %v802
        %854 = vmatprep.subr.bf16.mxu0 %v807
        %855 = vmatpush1.bf16.msra.mxu0 %v806
        %856 = vmatprep.subr.bf16.mxu0 %v810
        %857 = vmatpush1.bf16.msra.mxu0 %v809
        %858 = vmatprep.subr.bf16.mxu0 %v813
        %859 = vmatpush1.bf16.msra.mxu0 %v812
        %860 = vmatprep.subr.bf16.mxu0 %v816
        %861 = vmatpush1.bf16.msra.mxu0 %v815
        %862 = vmatprep.subr.bf16.mxu0 %v819
        %863 = vmatpush1.bf16.msra.mxu0 %v818
        %864 = vmatprep.subr.bf16.mxu0 %v822
        %865 = vmatpush1.bf16.msra.mxu0 %v821
        %866 = vmatprep.subr.bf16.mxu0 %v825
        %867 = vmatpush1.bf16.msra.mxu0 %v824
        %868 = vmatprep.subr.bf16.mxu0 %v828
        %869 = vmatpush1.bf16.msra.mxu0 %v827
        %870 = vmatprep.subr.bf16.mxu0 0
        %871 = vmatpush1.bf16.msra.mxu0 0
        %872 = vmatprep.subr.bf16.mxu0 0
        %873 = vmatpush1.bf16.msra.mxu0 0
        %874 = vmatprep.subr.bf16.mxu0 0
        %875 = vmatpush1.bf16.msra.mxu0 0
        %876 = vmatprep.subr.bf16.mxu0 0
        %877 = vmatpush1.bf16.msra.mxu0 0
        %878 = vmatprep.subr.bf16.mxu0 0
        %879 = vmatpush1.bf16.msra.mxu0 0
        %880 = vmatprep.subr.bf16.mxu0 0
        %881 = vmatpush1.bf16.msra.mxu0 0
        %882 = vmatprep.subr.bf16.mxu0 0
        %883 = vmatpush1.bf16.msra.mxu0 0
        %884 = vmatprep.subr.bf16.mxu0 0
        %885 = vmatpush1.bf16.msra.mxu0 0
        %886 = vmatprep.mubr.bf16.mxu0 0
        %887 = vmatmul.mubr.bf16.gmra.mrb[0].mxu0 %v673
        %v888 = vpop.f32.mrb[0].mxu0
        %v889 = vadd.f32 %v714, %v888
        %v890 = vpop.f32.mrb[0].mxu0
        %v891 = vadd.f32 %v718, %v890
        %v892 = vpop.f32.mrb[0].mxu0
        %v893 = vadd.f32 %v714, %v892
        %v894 = vpop.f32.mrb[0].mxu0
        %v895 = vadd.f32 %v718, %v894
        %896 = vmatprep.mubr.bf16.mxu0 0
        %897 = vmatmul.mubr.bf16.gmra.mrb[0].mxu0 %v674
        %v898 = vpop.f32.mrb[0].mxu0
        %v899 = vadd.f32 %v714, %v898
        %v900 = vpop.f32.mrb[0].mxu0
        %v901 = vadd.f32 %v718, %v900
        %v902 = vpop.f32.mrb[0].mxu0
        %v903 = vadd.f32 %v714, %v902
        %v904 = vpop.f32.mrb[0].mxu0
        %v905 = vadd.f32 %v718, %v904
        %906 = vmatprep.mubr.bf16.mxu0 0
        %907 = vmatmul.mubr.bf16.gmra.mrb[0].mxu0 %v675
        %v908 = vpop.f32.mrb[0].mxu0
        %v909 = vadd.f32 %v714, %v908
        %v910 = vpop.f32.mrb[0].mxu0
        %v911 = vadd.f32 %v718, %v910
        %v912 = vpop.f32.mrb[0].mxu0
        %v913 = vadd.f32 %v714, %v912
        %v914 = vpop.f32.mrb[0].mxu0
        %v915 = vadd.f32 %v718, %v914
        %916 = vmatprep.mubr.bf16.mxu0 0
        %917 = vmatmul.mubr.bf16.gmra.mrb[0].mxu0 %v676
        %v918 = vpop.f32.mrb[0].mxu0
        %v919 = vadd.f32 %v714, %v918
        %v920 = vpop.f32.mrb[0].mxu0
        %v921 = vadd.f32 %v718, %v920
        %v922 = vpop.f32.mrb[0].mxu0
        %v923 = vadd.f32 %v714, %v922
        %v924 = vpop.f32.mrb[0].mxu0
        %v925 = vadd.f32 %v718, %v924
        %926 = vdwg.mxu0
        %927 = vmatprep.subr.bf16.mxu0 0
        %928 = vmatpush1.bf16.msra.mxu0 %v808
        %929 = vmatprep.subr.bf16.mxu0 0
        %930 = vmatpush1.bf16.msra.mxu0 %v811
        %931 = vmatprep.subr.bf16.mxu0 0
        %932 = vmatpush1.bf16.msra.mxu0 %v814
        %933 = vmatprep.subr.bf16.mxu0 0
        %934 = vmatpush1.bf16.msra.mxu0 %v817
        %935 = vmatprep.subr.bf16.mxu0 0
        %936 = vmatpush1.bf16.msra.mxu0 %v820
        %937 = vmatprep.subr.bf16.mxu0 0
        %938 = vmatpush1.bf16.msra.mxu0 %v823
        %939 = vmatprep.subr.bf16.mxu0 0
        %940 = vmatpush1.bf16.msra.mxu0 %v826
        %941 = vmatprep.subr.bf16.mxu0 0
        %942 = vmatpush1.bf16.msra.mxu0 %v829
        %943 = vmatprep.subr.bf16.mxu0 0
        %944 = vmatpush1.bf16.msra.mxu0 0
        %945 = vmatprep.subr.bf16.mxu0 0
        %946 = vmatpush1.bf16.msra.mxu0 0
        %947 = vmatprep.subr.bf16.mxu0 0
        %948 = vmatpush1.bf16.msra.mxu0 0
        %949 = vmatprep.subr.bf16.mxu0 0
        %950 = vmatpush1.bf16.msra.mxu0 0
        %951 = vmatprep.subr.bf16.mxu0 0
        %952 = vmatpush1.bf16.msra.mxu0 0
        %953 = vmatprep.subr.bf16.mxu0 0
        %954 = vmatpush1.bf16.msra.mxu0 0
        %955 = vmatprep.subr.bf16.mxu0 0
        %956 = vmatpush1.bf16.msra.mxu0 0
        %957 = vmatprep.subr.bf16.mxu0 0
        %958 = vmatpush1.bf16.msra.mxu0 0
        %959 = vmatprep.mubr.bf16.mxu0 0
        %960 = vmatmul.mubr.bf16.gmra.mrb[0].mxu0 %v673
        %v961 = vpop.f32.mrb[0].mxu0
        %v962 = vadd.f32 %v722, %v961
        %v963 = vpop.f32.mrb[0].mxu0
        %v964 = vpop.f32.mrb[0].mxu0
        %v965 = vadd.f32 %v722, %v964
        %v966 = vpop.f32.mrb[0].mxu0
        %967 = vmatprep.mubr.bf16.mxu0 0
        %968 = vmatmul.mubr.bf16.gmra.mrb[0].mxu0 %v674
        %v969 = vpop.f32.mrb[0].mxu0
        %v970 = vadd.f32 %v722, %v969
        %v971 = vpop.f32.mrb[0].mxu0
        %v972 = vpop.f32.mrb[0].mxu0
        %v973 = vadd.f32 %v722, %v972
        %v974 = vpop.f32.mrb[0].mxu0
        %975 = vmatprep.mubr.bf16.mxu0 0
        %976 = vmatmul.mubr.bf16.gmra.mrb[0].mxu0 %v675
        %v977 = vpop.f32.mrb[0].mxu0
        %v978 = vadd.f32 %v722, %v977
        %v979 = vpop.f32.mrb[0].mxu0
        %v980 = vpop.f32.mrb[0].mxu0
        %v981 = vadd.f32 %v722, %v980
        %v982 = vpop.f32.mrb[0].mxu0
        %983 = vmatprep.mubr.bf16.mxu0 0
        %984 = vmatmul.mubr.bf16.gmra.mrb[0].mxu0 %v676
        %v985 = vpop.f32.mrb[0].mxu0
        %v986 = vadd.f32 %v722, %v985
        %v987 = vpop.f32.mrb[0].mxu0
        %v988 = vpop.f32.mrb[0].mxu0
        %v989 = vadd.f32 %v722, %v988
        %v990 = vpop.f32.mrb[0].mxu0
        %991 = vdwg.mxu0
        %v992 = vpack.c.bf16 %v893, %v889
        %v993 = vpack.c.bf16 %v903, %v899
        %v994 = vpack.c.bf16 %v913, %v909
        %v995 = vpack.c.bf16 %v923, %v919
        %v996 = vpack.c.bf16 %v895, %v891
        %v997 = vpack.c.bf16 %v905, %v901
        %v998 = vpack.c.bf16 %v915, %v911
        %v999 = vpack.c.bf16 %v925, %v921
        %v1000 = vpack.c.bf16 %v965, %v962
        %v1001 = vpack.c.bf16 %v973, %v970
        %v1002 = vpack.c.bf16 %v981, %v978
        %v1003 = vpack.c.bf16 %v989, %v986
        %v1004 = vlaneseq
        %v1005 = vshrl.u32 %v1004, 7
        %v1006 = vadd.s32 %v1005, 8
        %vm1007 = vcmp.lt.s32.totalorder %v1005, 0
        %v1008 = vsub.s32 0, %v1005
        %v1009 = vsel %vm1007, %v1008, %v1005
        %v1010 = vshrl.u32 %v1009, 3
        %v1011 = vand.u32 %v1009, 7
        %v1012 = vsub.s32 0, %v1011
        %v1013 = vsel %vm1007, %v1012, %v1011
        %vm1014 = vcmp.lt.s32.totalorder %v1006, 0
        %v1015 = vsub.s32 0, %v1006
        %v1016 = vsel %vm1014, %v1015, %v1006
        %v1017 = vshrl.u32 %v1016, 3
        %v1018 = vand.u32 %v1016, 7
        %v1019 = vsub.s32 0, %v1018
        %v1020 = vsel %vm1014, %v1019, %v1018
        %vm1021 = vcmp.ne.s32.totalorder %v1013, 0
        %vm1022 = vcmp.ne.s32.totalorder %v1020, 0
        %vm1023 = vcmp.lt.s32.totalorder %v1013, 0
        %vm1024 = vcmp.lt.s32.totalorder %v1020, 0
        %vm1025 = vmand %vm1023, %vm1021
        %vm1026 = vmand %vm1024, %vm1022
        %v1027 = vadd.s32 %v1013, 8
        %v1028 = vadd.s32 %v1020, 8
        %v1029 = vsel %vm1025, %v1027, %v1013
        %v1030 = vsel %vm1026, %v1028, %v1020
        %v1031 = vlaneseq
        %v1032 = vand.u32 %v1031, 127
        %vm1033 = vcmp.lt.s32.totalorder %v1032, 0
        %v1034 = vsub.s32 0, %v1032
        %v1035 = vsel %vm1033, %v1034, %v1032
        %v1036 = vshrl.u32 %v1035, 3
        %v1037 = vand.u32 %v1035, 7
        %v1038 = vsub.s32 0, %v1037
        %v1039 = vsel %vm1033, %v1038, %v1037
        %vm1040 = vcmp.ne.s32.totalorder %v1039, 0
        %vm1041 = vcmp.lt.s32.totalorder %v1039, 0
        %vm1042 = vmand %vm1041, %vm1040
        %v1043 = vadd.s32 %v1039, 8
        %v1044 = vsel %vm1042, %v1043, %v1039
        %vm1045 = vcmp.le.s32.totalorder %v1044, %v1029
        %vm1046 = vcmp.le.s32.totalorder %v1044, %v1030
        %v1047 = vsel %vm1045, 0.0, -1e+30
        %v1048 = vsel %vm1046, 0.0, -1e+30
        %vm1049 = vcmask 261120
        %v1051 = vsel %vm1049, %v992, 0
        %v1054 = vsel %vm1049, %v996, 0
        %1056 = vmatprep.subr.bf16.mxu0 0
        %1057 = vmatpush1.bf16.xpose.msra.mxu0 %v1054
        %1058 = vmatprep.subr.bf16.mxu0 0
        %1059 = vmatpush1.bf16.xpose.msra.mxu0 0
        %1060 = vmatprep.subr.bf16.mxu0 0
        %1061 = vmatpush1.bf16.xpose.msra.mxu0 0
        %1062 = vmatprep.subr.bf16.mxu0 0
        %1063 = vmatpush1.bf16.xpose.msra.mxu0 0
        %1064 = vmatprep.subr.bf16.mxu0 0
        %1065 = vmatpush1.bf16.xpose.msra.mxu0 0
        %1066 = vmatprep.subr.bf16.mxu0 0
        %1067 = vmatpush1.bf16.xpose.msra.mxu0 0
        %1068 = vmatprep.subr.bf16.mxu0 0
        %1069 = vmatpush1.bf16.xpose.msra.mxu0 0
        %1070 = vmatprep.subr.bf16.mxu0 0
        %1071 = vmatpush1.bf16.xpose.msra.mxu0 0
        %1072 = vmatprep.subr.bf16.mxu0 0
        %1073 = vmatpush1.bf16.xpose.msra.mxu0 0
        %1074 = vmatprep.subr.bf16.mxu0 0
        %1075 = vmatpush1.bf16.xpose.msra.mxu0 0
        %1076 = vmatprep.subr.bf16.mxu0 0
        %1077 = vmatpush1.bf16.xpose.msra.mxu0 0
        %1078 = vmatprep.subr.bf16.mxu0 0
        %1079 = vmatpush1.bf16.xpose.msra.mxu0 0
        %1080 = vmatprep.subr.bf16.mxu0 0
        %1081 = vmatpush1.bf16.xpose.msra.mxu0 0
        %1082 = vmatprep.subr.bf16.mxu0 0
        %1083 = vmatpush1.bf16.xpose.msra.mxu0 0
        %1084 = vmatprep.subr.bf16.mxu0 0
        %1085 = vmatpush1.bf16.xpose.msra.mxu0 0
        %1086 = vmatprep.subr.bf16.mxu0 0
        %1087 = vmatpush1.bf16.xpose.msra.mxu0 0
        %1088 = vmatprep.mubr.bf16.mxu0 0
        %1089 = vmatmul.mubr.bf16.gmra.mrb[0].mxu0 %v1051
        %v1090 = vpop.f32.mrb[0].mxu0
        %v1091 = vadd.f32 %v1047, %v1090
        %v1092 = vpop.f32.mrb[0].mxu0
        %v1093 = vpop.f32.mrb[0].mxu0
        %v1094 = vadd.f32 %v1048, %v1093
        %v1095 = vpop.f32.mrb[0].mxu0
        %1096 = vdwg.mxu0
        %v1098 = vsel %vm1049, %v993, 0
        %v1101 = vsel %vm1049, %v997, 0
        %1103 = vmatprep.subr.bf16.mxu0 0
        %1104 = vmatpush1.bf16.xpose.msra.mxu0 %v1101
        %1105 = vmatprep.subr.bf16.mxu0 0
        %1106 = vmatpush1.bf16.xpose.msra.mxu0 0
        %1107 = vmatprep.subr.bf16.mxu0 0
        %1108 = vmatpush1.bf16.xpose.msra.mxu0 0
        %1109 = vmatprep.subr.bf16.mxu0 0
        %1110 = vmatpush1.bf16.xpose.msra.mxu0 0
        %1111 = vmatprep.subr.bf16.mxu0 0
        %1112 = vmatpush1.bf16.xpose.msra.mxu0 0
        %1113 = vmatprep.subr.bf16.mxu0 0
        %1114 = vmatpush1.bf16.xpose.msra.mxu0 0
        %1115 = vmatprep.subr.bf16.mxu0 0
        %1116 = vmatpush1.bf16.xpose.msra.mxu0 0
        %1117 = vmatprep.subr.bf16.mxu0 0
        %1118 = vmatpush1.bf16.xpose.msra.mxu0 0
        %1119 = vmatprep.subr.bf16.mxu0 0
        %1120 = vmatpush1.bf16.xpose.msra.mxu0 0
        %1121 = vmatprep.subr.bf16.mxu0 0
        %1122 = vmatpush1.bf16.xpose.msra.mxu0 0
        %1123 = vmatprep.subr.bf16.mxu0 0
        %1124 = vmatpush1.bf16.xpose.msra.mxu0 0
        %1125 = vmatprep.subr.bf16.mxu0 0
        %1126 = vmatpush1.bf16.xpose.msra.mxu0 0
        %1127 = vmatprep.subr.bf16.mxu0 0
        %1128 = vmatpush1.bf16.xpose.msra.mxu0 0
        %1129 = vmatprep.subr.bf16.mxu0 0
        %1130 = vmatpush1.bf16.xpose.msra.mxu0 0
        %1131 = vmatprep.subr.bf16.mxu0 0
        %1132 = vmatpush1.bf16.xpose.msra.mxu0 0
        %1133 = vmatprep.subr.bf16.mxu0 0
        %1134 = vmatpush1.bf16.xpose.msra.mxu0 0
        %1135 = vmatprep.mubr.bf16.mxu0 0
        %1136 = vmatmul.mubr.bf16.gmra.mrb[0].mxu0 %v1098
        %v1137 = vpop.f32.mrb[0].mxu0
        %v1138 = vadd.f32 %v1047, %v1137
        %v1139 = vpop.f32.mrb[0].mxu0
        %v1140 = vpop.f32.mrb[0].mxu0
        %v1141 = vadd.f32 %v1048, %v1140
        %v1142 = vpop.f32.mrb[0].mxu0
        %1143 = vdwg.mxu0
        %v1145 = vsel %vm1049, %v994, 0
        %v1148 = vsel %vm1049, %v998, 0
        %1150 = vmatprep.subr.bf16.mxu0 0
        %1151 = vmatpush1.bf16.xpose.msra.mxu0 %v1148
        %1152 = vmatprep.subr.bf16.mxu0 0
        %1153 = vmatpush1.bf16.xpose.msra.mxu0 0
        %1154 = vmatprep.subr.bf16.mxu0 0
        %1155 = vmatpush1.bf16.xpose.msra.mxu0 0
        %1156 = vmatprep.subr.bf16.mxu0 0
        %1157 = vmatpush1.bf16.xpose.msra.mxu0 0
        %1158 = vmatprep.subr.bf16.mxu0 0
        %1159 = vmatpush1.bf16.xpose.msra.mxu0 0
        %1160 = vmatprep.subr.bf16.mxu0 0
        %1161 = vmatpush1.bf16.xpose.msra.mxu0 0
        %1162 = vmatprep.subr.bf16.mxu0 0
        %1163 = vmatpush1.bf16.xpose.msra.mxu0 0
        %1164 = vmatprep.subr.bf16.mxu0 0
        %1165 = vmatpush1.bf16.xpose.msra.mxu0 0
        %1166 = vmatprep.subr.bf16.mxu0 0
        %1167 = vmatpush1.bf16.xpose.msra.mxu0 0
        %1168 = vmatprep.subr.bf16.mxu0 0
        %1169 = vmatpush1.bf16.xpose.msra.mxu0 0
        %1170 = vmatprep.subr.bf16.mxu0 0
        %1171 = vmatpush1.bf16.xpose.msra.mxu0 0
        %1172 = vmatprep.subr.bf16.mxu0 0
        %1173 = vmatpush1.bf16.xpose.msra.mxu0 0
        %1174 = vmatprep.subr.bf16.mxu0 0
        %1175 = vmatpush1.bf16.xpose.msra.mxu0 0
        %1176 = vmatprep.subr.bf16.mxu0 0
        %1177 = vmatpush1.bf16.xpose.msra.mxu0 0
        %1178 = vmatprep.subr.bf16.mxu0 0
        %1179 = vmatpush1.bf16.xpose.msra.mxu0 0
        %1180 = vmatprep.subr.bf16.mxu0 0
        %1181 = vmatpush1.bf16.xpose.msra.mxu0 0
        %1182 = vmatprep.mubr.bf16.mxu0 0
        %1183 = vmatmul.mubr.bf16.gmra.mrb[0].mxu0 %v1145
        %v1184 = vpop.f32.mrb[0].mxu0
        %v1185 = vadd.f32 %v1047, %v1184
        %v1186 = vpop.f32.mrb[0].mxu0
        %v1187 = vpop.f32.mrb[0].mxu0
        %v1188 = vadd.f32 %v1048, %v1187
        %v1189 = vpop.f32.mrb[0].mxu0
        %1190 = vdwg.mxu0
        %v1192 = vsel %vm1049, %v995, 0
        %v1195 = vsel %vm1049, %v999, 0
        %1197 = vmatprep.subr.bf16.mxu0 0
        %1198 = vmatpush1.bf16.xpose.msra.mxu0 %v1195
        %1199 = vmatprep.subr.bf16.mxu0 0
        %1200 = vmatpush1.bf16.xpose.msra.mxu0 0
        %1201 = vmatprep.subr.bf16.mxu0 0
        %1202 = vmatpush1.bf16.xpose.msra.mxu0 0
        %1203 = vmatprep.subr.bf16.mxu0 0
        %1204 = vmatpush1.bf16.xpose.msra.mxu0 0
        %1205 = vmatprep.subr.bf16.mxu0 0
        %1206 = vmatpush1.bf16.xpose.msra.mxu0 0
        %1207 = vmatprep.subr.bf16.mxu0 0
        %1208 = vmatpush1.bf16.xpose.msra.mxu0 0
        %1209 = vmatprep.subr.bf16.mxu0 0
        %1210 = vmatpush1.bf16.xpose.msra.mxu0 0
        %1211 = vmatprep.subr.bf16.mxu0 0
        %1212 = vmatpush1.bf16.xpose.msra.mxu0 0
        %1213 = vmatprep.subr.bf16.mxu0 0
        %1214 = vmatpush1.bf16.xpose.msra.mxu0 0
        %1215 = vmatprep.subr.bf16.mxu0 0
        %1216 = vmatpush1.bf16.xpose.msra.mxu0 0
        %1217 = vmatprep.subr.bf16.mxu0 0
        %1218 = vmatpush1.bf16.xpose.msra.mxu0 0
        %1219 = vmatprep.subr.bf16.mxu0 0
        %1220 = vmatpush1.bf16.xpose.msra.mxu0 0
        %1221 = vmatprep.subr.bf16.mxu0 0
        %1222 = vmatpush1.bf16.xpose.msra.mxu0 0
        %1223 = vmatprep.subr.bf16.mxu0 0
        %1224 = vmatpush1.bf16.xpose.msra.mxu0 0
        %1225 = vmatprep.subr.bf16.mxu0 0
        %1226 = vmatpush1.bf16.xpose.msra.mxu0 0
        %1227 = vmatprep.subr.bf16.mxu0 0
        %1228 = vmatpush1.bf16.xpose.msra.mxu0 0
        %1229 = vmatprep.mubr.bf16.mxu0 0
        %1230 = vmatmul.mubr.bf16.gmra.mrb[0].mxu0 %v1192
        %v1231 = vpop.f32.mrb[0].mxu0
        %v1232 = vadd.f32 %v1047, %v1231
        %v1233 = vpop.f32.mrb[0].mxu0
        %v1234 = vpop.f32.mrb[0].mxu0
        %v1235 = vadd.f32 %v1048, %v1234
        %v1236 = vpop.f32.mrb[0].mxu0
        %1237 = vdwg.mxu0
        %vm1238 = vcmask 130048
        %v1239 = vsel %vm1238, %v1091, -inf
        %1240 = vmax.xlane.f32.xlu0 %v1239
        %v1241 = vpop.xlane.xlu0 %1240
        %v1242 = vsel %vm1238, %v1094, -inf
        %1243 = vmax.xlane.f32.xlu0 %v1242
        %v1244 = vpop.xlane.xlu0 %1243
        %v1245 = vsel %vm1238, %v1138, -inf
        %1246 = vmax.xlane.f32.xlu0 %v1245
        %v1247 = vpop.xlane.xlu0 %1246
        %v1248 = vsel %vm1238, %v1141, -inf
        %1249 = vmax.xlane.f32.xlu0 %v1248
        %v1250 = vpop.xlane.xlu0 %1249
        %v1251 = vsel %vm1238, %v1185, -inf
        %1252 = vmax.xlane.f32.xlu0 %v1251
        %v1253 = vpop.xlane.xlu0 %1252
        %v1254 = vsel %vm1238, %v1188, -inf
        %1255 = vmax.xlane.f32.xlu0 %v1254
        %v1256 = vpop.xlane.xlu0 %1255
        %v1257 = vsel %vm1238, %v1232, -inf
        %1258 = vmax.xlane.f32.xlu0 %v1257
        %v1259 = vpop.xlane.xlu0 %1258
        %v1260 = vsel %vm1238, %v1235, -inf
        %1261 = vmax.xlane.f32.xlu0 %v1260
        %v1262 = vpop.xlane.xlu0 %1261
        %v1263 = vsub.f32 %v1091, %v1241
        %v1264 = vsub.f32 %v1094, %v1244
        %v1265 = vsub.f32 %v1138, %v1247
        %v1266 = vsub.f32 %v1141, %v1250
        %v1267 = vsub.f32 %v1185, %v1253
        %v1268 = vsub.f32 %v1188, %v1256
        %v1269 = vsub.f32 %v1232, %v1259
        %v1270 = vsub.f32 %v1235, %v1262
        %v1271 = vmul.f32 %v1263, 1.442695
        %v1272 = vpow.pop %v1271
        %v1273 = vmul.f32 %v1264, 1.442695
        %v1274 = vpow.pop %v1273
        %v1275 = vmul.f32 %v1265, 1.442695
        %v1276 = vpow.pop %v1275
        %v1277 = vmul.f32 %v1266, 1.442695
        %v1278 = vpow.pop %v1277
        %v1279 = vmul.f32 %v1267, 1.442695
        %v1280 = vpow.pop %v1279
        %v1281 = vmul.f32 %v1268, 1.442695
        %v1282 = vpow.pop %v1281
        %v1283 = vmul.f32 %v1269, 1.442695
        %v1284 = vpow.pop %v1283
        %v1285 = vmul.f32 %v1270, 1.442695
        %v1286 = vpow.pop %v1285
        %v1287 = vsel %vm1238, %v1272, 0.0
        %1288 = vadd.xlane.f32.xlu0 %v1287
        %v1289 = vpop.xlane.xlu0 %1288
        %v1290 = vsel %vm1238, %v1274, 0.0
        %1291 = vadd.xlane.f32.xlu0 %v1290
        %v1292 = vpop.xlane.xlu0 %1291
        %v1293 = vsel %vm1238, %v1276, 0.0
        %1294 = vadd.xlane.f32.xlu0 %v1293
        %v1295 = vpop.xlane.xlu0 %1294
        %v1296 = vsel %vm1238, %v1278, 0.0
        %1297 = vadd.xlane.f32.xlu0 %v1296
        %v1298 = vpop.xlane.xlu0 %1297
        %v1299 = vsel %vm1238, %v1280, 0.0
        %1300 = vadd.xlane.f32.xlu0 %v1299
        %v1301 = vpop.xlane.xlu0 %1300
        %v1302 = vsel %vm1238, %v1282, 0.0
        %1303 = vadd.xlane.f32.xlu0 %v1302
        %v1304 = vpop.xlane.xlu0 %1303
        %v1305 = vsel %vm1238, %v1284, 0.0
        %1306 = vadd.xlane.f32.xlu0 %v1305
        %v1307 = vpop.xlane.xlu0 %1306
        %v1308 = vsel %vm1238, %v1286, 0.0
        %1309 = vadd.xlane.f32.xlu0 %v1308
        %v1310 = vpop.xlane.xlu0 %1309
        %v1311 = vpack.c.bf16 %v1274, %v1272
        %v1312 = vpack.c.bf16 %v1278, %v1276
        %v1313 = vpack.c.bf16 %v1282, %v1280
        %v1314 = vpack.c.bf16 %v1286, %v1284
        %v1316 = vsel %vm1238, %v1311, 0
        %1318 = vmatprep.subr.bf16.mxu0 0
        %1319 = vmatpush1.bf16.msra.mxu0 %v1000
        %1320 = vmatprep.subr.bf16.mxu0 0
        %1321 = vmatpush1.bf16.msra.mxu0 0
        %1322 = vmatprep.subr.bf16.mxu0 0
        %1323 = vmatpush1.bf16.msra.mxu0 0
        %1324 = vmatprep.subr.bf16.mxu0 0
        %1325 = vmatpush1.bf16.msra.mxu0 0
        %1326 = vmatprep.subr.bf16.mxu0 0
        %1327 = vmatpush1.bf16.msra.mxu0 0
        %1328 = vmatprep.subr.bf16.mxu0 0
        %1329 = vmatpush1.bf16.msra.mxu0 0
        %1330 = vmatprep.subr.bf16.mxu0 0
        %1331 = vmatpush1.bf16.msra.mxu0 0
        %1332 = vmatprep.subr.bf16.mxu0 0
        %1333 = vmatpush1.bf16.msra.mxu0 0
        %1334 = vmatprep.subr.bf16.mxu0 0
        %1335 = vmatpush1.bf16.msra.mxu0 0
        %1336 = vmatprep.subr.bf16.mxu0 0
        %1337 = vmatpush1.bf16.msra.mxu0 0
        %1338 = vmatprep.subr.bf16.mxu0 0
        %1339 = vmatpush1.bf16.msra.mxu0 0
        %1340 = vmatprep.subr.bf16.mxu0 0
        %1341 = vmatpush1.bf16.msra.mxu0 0
        %1342 = vmatprep.subr.bf16.mxu0 0
        %1343 = vmatpush1.bf16.msra.mxu0 0
        %1344 = vmatprep.subr.bf16.mxu0 0
        %1345 = vmatpush1.bf16.msra.mxu0 0
        %1346 = vmatprep.subr.bf16.mxu0 0
        %1347 = vmatpush1.bf16.msra.mxu0 0
        %1348 = vmatprep.subr.bf16.mxu0 0
        %1349 = vmatpush1.bf16.msra.mxu0 0
        %1350 = vmatprep.mubr.bf16.mxu0 0
        %1351 = vmatmul.mubr.bf16.gmra.mrb[0].mxu0 %v1316
        %v1352 = vpop.f32.mrb[0].mxu0
        %v1353 = vadd.f32 0.0, %v1352
        %v1354 = vpop.f32.mrb[0].mxu0
        %v1355 = vpop.f32.mrb[0].mxu0
        %v1356 = vadd.f32 0.0, %v1355
        %v1357 = vpop.f32.mrb[0].mxu0
        %1358 = vdwg.mxu0
        %v1360 = vsel %vm1238, %v1312, 0
        %1362 = vmatprep.subr.bf16.mxu0 0
        %1363 = vmatpush1.bf16.msra.mxu0 %v1001
        %1364 = vmatprep.subr.bf16.mxu0 0
        %1365 = vmatpush1.bf16.msra.mxu0 0
        %1366 = vmatprep.subr.bf16.mxu0 0
        %1367 = vmatpush1.bf16.msra.mxu0 0
        %1368 = vmatprep.subr.bf16.mxu0 0
        %1369 = vmatpush1.bf16.msra.mxu0 0
        %1370 = vmatprep.subr.bf16.mxu0 0
        %1371 = vmatpush1.bf16.msra.mxu0 0
        %1372 = vmatprep.subr.bf16.mxu0 0
        %1373 = vmatpush1.bf16.msra.mxu0 0
        %1374 = vmatprep.subr.bf16.mxu0 0
        %1375 = vmatpush1.bf16.msra.mxu0 0
        %1376 = vmatprep.subr.bf16.mxu0 0
        %1377 = vmatpush1.bf16.msra.mxu0 0
        %1378 = vmatprep.subr.bf16.mxu0 0
        %1379 = vmatpush1.bf16.msra.mxu0 0
        %1380 = vmatprep.subr.bf16.mxu0 0
        %1381 = vmatpush1.bf16.msra.mxu0 0
        %1382 = vmatprep.subr.bf16.mxu0 0
        %1383 = vmatpush1.bf16.msra.mxu0 0
        %1384 = vmatprep.subr.bf16.mxu0 0
        %1385 = vmatpush1.bf16.msra.mxu0 0
        %1386 = vmatprep.subr.bf16.mxu0 0
        %1387 = vmatpush1.bf16.msra.mxu0 0
        %1388 = vmatprep.subr.bf16.mxu0 0
        %1389 = vmatpush1.bf16.msra.mxu0 0
        %1390 = vmatprep.subr.bf16.mxu0 0
        %1391 = vmatpush1.bf16.msra.mxu0 0
        %1392 = vmatprep.subr.bf16.mxu0 0
        %1393 = vmatpush1.bf16.msra.mxu0 0
        %1394 = vmatprep.mubr.bf16.mxu0 0
        %1395 = vmatmul.mubr.bf16.gmra.mrb[0].mxu0 %v1360
        %v1396 = vpop.f32.mrb[0].mxu0
        %v1397 = vadd.f32 0.0, %v1396
        %v1398 = vpop.f32.mrb[0].mxu0
        %v1399 = vpop.f32.mrb[0].mxu0
        %v1400 = vadd.f32 0.0, %v1399
        %v1401 = vpop.f32.mrb[0].mxu0
        %1402 = vdwg.mxu0
        %v1404 = vsel %vm1238, %v1313, 0
        %1406 = vmatprep.subr.bf16.mxu0 0
        %1407 = vmatpush1.bf16.msra.mxu0 %v1002
        %1408 = vmatprep.subr.bf16.mxu0 0
        %1409 = vmatpush1.bf16.msra.mxu0 0
        %1410 = vmatprep.subr.bf16.mxu0 0
        %1411 = vmatpush1.bf16.msra.mxu0 0
        %1412 = vmatprep.subr.bf16.mxu0 0
        %1413 = vmatpush1.bf16.msra.mxu0 0
        %1414 = vmatprep.subr.bf16.mxu0 0
        %1415 = vmatpush1.bf16.msra.mxu0 0
        %1416 = vmatprep.subr.bf16.mxu0 0
        %1417 = vmatpush1.bf16.msra.mxu0 0
        %1418 = vmatprep.subr.bf16.mxu0 0
        %1419 = vmatpush1.bf16.msra.mxu0 0
        %1420 = vmatprep.subr.bf16.mxu0 0
        %1421 = vmatpush1.bf16.msra.mxu0 0
        %1422 = vmatprep.subr.bf16.mxu0 0
        %1423 = vmatpush1.bf16.msra.mxu0 0
        %1424 = vmatprep.subr.bf16.mxu0 0
        %1425 = vmatpush1.bf16.msra.mxu0 0
        %1426 = vmatprep.subr.bf16.mxu0 0
        %1427 = vmatpush1.bf16.msra.mxu0 0
        %1428 = vmatprep.subr.bf16.mxu0 0
        %1429 = vmatpush1.bf16.msra.mxu0 0
        %1430 = vmatprep.subr.bf16.mxu0 0
        %1431 = vmatpush1.bf16.msra.mxu0 0
        %1432 = vmatprep.subr.bf16.mxu0 0
        %1433 = vmatpush1.bf16.msra.mxu0 0
        %1434 = vmatprep.subr.bf16.mxu0 0
        %1435 = vmatpush1.bf16.msra.mxu0 0
        %1436 = vmatprep.subr.bf16.mxu0 0
        %1437 = vmatpush1.bf16.msra.mxu0 0
        %1438 = vmatprep.mubr.bf16.mxu0 0
        %1439 = vmatmul.mubr.bf16.gmra.mrb[0].mxu0 %v1404
        %v1440 = vpop.f32.mrb[0].mxu0
        %v1441 = vadd.f32 0.0, %v1440
        %v1442 = vpop.f32.mrb[0].mxu0
        %v1443 = vpop.f32.mrb[0].mxu0
        %v1444 = vadd.f32 0.0, %v1443
        %v1445 = vpop.f32.mrb[0].mxu0
        %1446 = vdwg.mxu0
        %v1448 = vsel %vm1238, %v1314, 0
        %1450 = vmatprep.subr.bf16.mxu0 0
        %1451 = vmatpush1.bf16.msra.mxu0 %v1003
        %1452 = vmatprep.subr.bf16.mxu0 0
        %1453 = vmatpush1.bf16.msra.mxu0 0
        %1454 = vmatprep.subr.bf16.mxu0 0
        %1455 = vmatpush1.bf16.msra.mxu0 0
        %1456 = vmatprep.subr.bf16.mxu0 0
        %1457 = vmatpush1.bf16.msra.mxu0 0
        %1458 = vmatprep.subr.bf16.mxu0 0
        %1459 = vmatpush1.bf16.msra.mxu0 0
        %1460 = vmatprep.subr.bf16.mxu0 0
        %1461 = vmatpush1.bf16.msra.mxu0 0
        %1462 = vmatprep.subr.bf16.mxu0 0
        %1463 = vmatpush1.bf16.msra.mxu0 0
        %1464 = vmatprep.subr.bf16.mxu0 0
        %1465 = vmatpush1.bf16.msra.mxu0 0
        %1466 = vmatprep.subr.bf16.mxu0 0
        %1467 = vmatpush1.bf16.msra.mxu0 0
        %1468 = vmatprep.subr.bf16.mxu0 0
        %1469 = vmatpush1.bf16.msra.mxu0 0
        %1470 = vmatprep.subr.bf16.mxu0 0
        %1471 = vmatpush1.bf16.msra.mxu0 0
        %1472 = vmatprep.subr.bf16.mxu0 0
        %1473 = vmatpush1.bf16.msra.mxu0 0
        %1474 = vmatprep.subr.bf16.mxu0 0
        %1475 = vmatpush1.bf16.msra.mxu0 0
        %1476 = vmatprep.subr.bf16.mxu0 0
        %1477 = vmatpush1.bf16.msra.mxu0 0
        %1478 = vmatprep.subr.bf16.mxu0 0
        %1479 = vmatpush1.bf16.msra.mxu0 0
        %1480 = vmatprep.subr.bf16.mxu0 0
        %1481 = vmatpush1.bf16.msra.mxu0 0
        %1482 = vmatprep.mubr.bf16.mxu0 0
        %1483 = vmatmul.mubr.bf16.gmra.mrb[0].mxu0 %v1448
        %v1484 = vpop.f32.mrb[0].mxu0
        %v1485 = vadd.f32 0.0, %v1484
        %v1486 = vpop.f32.mrb[0].mxu0
        %v1487 = vpop.f32.mrb[0].mxu0
        %v1488 = vadd.f32 0.0, %v1487
        %v1489 = vpop.f32.mrb[0].mxu0
        %1490 = vdwg.mxu0
        %v1491 = vrcp.pop %v1289
        %v1492 = vrcp.pop %v1292
        %v1493 = vrcp.pop %v1295
        %v1494 = vrcp.pop %v1298
        %v1495 = vrcp.pop %v1301
        %v1496 = vrcp.pop %v1304
        %v1497 = vrcp.pop %v1307
        %v1498 = vrcp.pop %v1310
        %v1499 = vmul.f32 %v1353, %v1491
        %v1500 = vmul.f32 %v1356, %v1492
        %v1501 = vmul.f32 %v1397, %v1493
        %v1502 = vmul.f32 %v1400, %v1494
        %v1503 = vmul.f32 %v1441, %v1495
        %v1504 = vmul.f32 %v1444, %v1496
        %v1505 = vmul.f32 %v1485, %v1497
        %v1506 = vmul.f32 %v1488, %v1498
        %1508 = vrot.lane.b32.xlu0 %v992, 96
        %v1509 = vpop.permute.xlu0 %1508
        %1511 = vrot.lane.b32.xlu0 %v996, 96
        %v1512 = vpop.permute.xlu0 %1511
        %v1514 = vsel %vm1049, %v1509, 0
        %v1517 = vsel %vm1049, %v1512, 0
        %1519 = vmatprep.subr.bf16.mxu0 0
        %1520 = vmatpush1.bf16.xpose.msra.mxu0 %v1517
        %1521 = vmatprep.subr.bf16.mxu0 0
        %1522 = vmatpush1.bf16.xpose.msra.mxu0 0
        %1523 = vmatprep.subr.bf16.mxu0 0
        %1524 = vmatpush1.bf16.xpose.msra.mxu0 0
        %1525 = vmatprep.subr.bf16.mxu0 0
        %1526 = vmatpush1.bf16.xpose.msra.mxu0 0
        %1527 = vmatprep.subr.bf16.mxu0 0
        %1528 = vmatpush1.bf16.xpose.msra.mxu0 0
        %1529 = vmatprep.subr.bf16.mxu0 0
        %1530 = vmatpush1.bf16.xpose.msra.mxu0 0
        %1531 = vmatprep.subr.bf16.mxu0 0
        %1532 = vmatpush1.bf16.xpose.msra.mxu0 0
        %1533 = vmatprep.subr.bf16.mxu0 0
        %1534 = vmatpush1.bf16.xpose.msra.mxu0 0
        %1535 = vmatprep.subr.bf16.mxu0 0
        %1536 = vmatpush1.bf16.xpose.msra.mxu0 0
        %1537 = vmatprep.subr.bf16.mxu0 0
        %1538 = vmatpush1.bf16.xpose.msra.mxu0 0
        %1539 = vmatprep.subr.bf16.mxu0 0
        %1540 = vmatpush1.bf16.xpose.msra.mxu0 0
        %1541 = vmatprep.subr.bf16.mxu0 0
        %1542 = vmatpush1.bf16.xpose.msra.mxu0 0
        %1543 = vmatprep.subr.bf16.mxu0 0
        %1544 = vmatpush1.bf16.xpose.msra.mxu0 0
        %1545 = vmatprep.subr.bf16.mxu0 0
        %1546 = vmatpush1.bf16.xpose.msra.mxu0 0
        %1547 = vmatprep.subr.bf16.mxu0 0
        %1548 = vmatpush1.bf16.xpose.msra.mxu0 0
        %1549 = vmatprep.subr.bf16.mxu0 0
        %1550 = vmatpush1.bf16.xpose.msra.mxu0 0
        %1551 = vmatprep.mubr.bf16.mxu0 0
        %1552 = vmatmul.mubr.bf16.gmra.mrb[0].mxu0 %v1514
        %v1553 = vpop.f32.mrb[0].mxu0
        %v1554 = vadd.f32 %v1047, %v1553
        %v1555 = vpop.f32.mrb[0].mxu0
        %v1556 = vpop.f32.mrb[0].mxu0
        %v1557 = vadd.f32 %v1048, %v1556
        %v1558 = vpop.f32.mrb[0].mxu0
        %1559 = vdwg.mxu0
        %1561 = vrot.lane.b32.xlu0 %v993, 96
        %v1562 = vpop.permute.xlu0 %1561
        %1564 = vrot.lane.b32.xlu0 %v997, 96
        %v1565 = vpop.permute.xlu0 %1564
        %v1567 = vsel %vm1049, %v1562, 0
        %v1570 = vsel %vm1049, %v1565, 0
        %1572 = vmatprep.subr.bf16.mxu0 0
        %1573 = vmatpush1.bf16.xpose.msra.mxu0 %v1570
        %1574 = vmatprep.subr.bf16.mxu0 0
        %1575 = vmatpush1.bf16.xpose.msra.mxu0 0
        %1576 = vmatprep.subr.bf16.mxu0 0
        %1577 = vmatpush1.bf16.xpose.msra.mxu0 0
        %1578 = vmatprep.subr.bf16.mxu0 0
        %1579 = vmatpush1.bf16.xpose.msra.mxu0 0
        %1580 = vmatprep.subr.bf16.mxu0 0
        %1581 = vmatpush1.bf16.xpose.msra.mxu0 0
        %1582 = vmatprep.subr.bf16.mxu0 0
        %1583 = vmatpush1.bf16.xpose.msra.mxu0 0
        %1584 = vmatprep.subr.bf16.mxu0 0
        %1585 = vmatpush1.bf16.xpose.msra.mxu0 0
        %1586 = vmatprep.subr.bf16.mxu0 0
        %1587 = vmatpush1.bf16.xpose.msra.mxu0 0
        %1588 = vmatprep.subr.bf16.mxu0 0
        %1589 = vmatpush1.bf16.xpose.msra.mxu0 0
        %1590 = vmatprep.subr.bf16.mxu0 0
        %1591 = vmatpush1.bf16.xpose.msra.mxu0 0
        %1592 = vmatprep.subr.bf16.mxu0 0
        %1593 = vmatpush1.bf16.xpose.msra.mxu0 0
        %1594 = vmatprep.subr.bf16.mxu0 0
        %1595 = vmatpush1.bf16.xpose.msra.mxu0 0
        %1596 = vmatprep.subr.bf16.mxu0 0
        %1597 = vmatpush1.bf16.xpose.msra.mxu0 0
        %1598 = vmatprep.subr.bf16.mxu0 0
        %1599 = vmatpush1.bf16.xpose.msra.mxu0 0
        %1600 = vmatprep.subr.bf16.mxu0 0
        %1601 = vmatpush1.bf16.xpose.msra.mxu0 0
        %1602 = vmatprep.subr.bf16.mxu0 0
        %1603 = vmatpush1.bf16.xpose.msra.mxu0 0
        %1604 = vmatprep.mubr.bf16.mxu0 0
        %1605 = vmatmul.mubr.bf16.gmra.mrb[0].mxu0 %v1567
        %v1606 = vpop.f32.mrb[0].mxu0
        %v1607 = vadd.f32 %v1047, %v1606
        %v1608 = vpop.f32.mrb[0].mxu0
        %v1609 = vpop.f32.mrb[0].mxu0
        %v1610 = vadd.f32 %v1048, %v1609
        %v1611 = vpop.f32.mrb[0].mxu0
        %1612 = vdwg.mxu0
        %1614 = vrot.lane.b32.xlu0 %v994, 96
        %v1615 = vpop.permute.xlu0 %1614
        %1617 = vrot.lane.b32.xlu0 %v998, 96
        %v1618 = vpop.permute.xlu0 %1617
        %v1620 = vsel %vm1049, %v1615, 0
        %v1623 = vsel %vm1049, %v1618, 0
        %1625 = vmatprep.subr.bf16.mxu0 0
        %1626 = vmatpush1.bf16.xpose.msra.mxu0 %v1623
        %1627 = vmatprep.subr.bf16.mxu0 0
        %1628 = vmatpush1.bf16.xpose.msra.mxu0 0
        %1629 = vmatprep.subr.bf16.mxu0 0
        %1630 = vmatpush1.bf16.xpose.msra.mxu0 0
        %1631 = vmatprep.subr.bf16.mxu0 0
        %1632 = vmatpush1.bf16.xpose.msra.mxu0 0
        %1633 = vmatprep.subr.bf16.mxu0 0
        %1634 = vmatpush1.bf16.xpose.msra.mxu0 0
        %1635 = vmatprep.subr.bf16.mxu0 0
        %1636 = vmatpush1.bf16.xpose.msra.mxu0 0
        %1637 = vmatprep.subr.bf16.mxu0 0
        %1638 = vmatpush1.bf16.xpose.msra.mxu0 0
        %1639 = vmatprep.subr.bf16.mxu0 0
        %1640 = vmatpush1.bf16.xpose.msra.mxu0 0
        %1641 = vmatprep.subr.bf16.mxu0 0
        %1642 = vmatpush1.bf16.xpose.msra.mxu0 0
        %1643 = vmatprep.subr.bf16.mxu0 0
        %1644 = vmatpush1.bf16.xpose.msra.mxu0 0
        %1645 = vmatprep.subr.bf16.mxu0 0
        %1646 = vmatpush1.bf16.xpose.msra.mxu0 0
        %1647 = vmatprep.subr.bf16.mxu0 0
        %1648 = vmatpush1.bf16.xpose.msra.mxu0 0
        %1649 = vmatprep.subr.bf16.mxu0 0
        %1650 = vmatpush1.bf16.xpose.msra.mxu0 0
        %1651 = vmatprep.subr.bf16.mxu0 0
        %1652 = vmatpush1.bf16.xpose.msra.mxu0 0
        %1653 = vmatprep.subr.bf16.mxu0 0
        %1654 = vmatpush1.bf16.xpose.msra.mxu0 0
        %1655 = vmatprep.subr.bf16.mxu0 0
        %1656 = vmatpush1.bf16.xpose.msra.mxu0 0
        %1657 = vmatprep.mubr.bf16.mxu0 0
        %1658 = vmatmul.mubr.bf16.gmra.mrb[0].mxu0 %v1620
        %v1659 = vpop.f32.mrb[0].mxu0
        %v1660 = vadd.f32 %v1047, %v1659
        %v1661 = vpop.f32.mrb[0].mxu0
        %v1662 = vpop.f32.mrb[0].mxu0
        %v1663 = vadd.f32 %v1048, %v1662
        %v1664 = vpop.f32.mrb[0].mxu0
        %1665 = vdwg.mxu0
        %1667 = vrot.lane.b32.xlu0 %v995, 96
        %v1668 = vpop.permute.xlu0 %1667
        %1670 = vrot.lane.b32.xlu0 %v999, 96
        %v1671 = vpop.permute.xlu0 %1670
        %v1673 = vsel %vm1049, %v1668, 0
        %v1676 = vsel %vm1049, %v1671, 0
        %1678 = vmatprep.subr.bf16.mxu0 0
        %1679 = vmatpush1.bf16.xpose.msra.mxu0 %v1676
        %1680 = vmatprep.subr.bf16.mxu0 0
        %1681 = vmatpush1.bf16.xpose.msra.mxu0 0
        %1682 = vmatprep.subr.bf16.mxu0 0
        %1683 = vmatpush1.bf16.xpose.msra.mxu0 0
        %1684 = vmatprep.subr.bf16.mxu0 0
        %1685 = vmatpush1.bf16.xpose.msra.mxu0 0
        %1686 = vmatprep.subr.bf16.mxu0 0
        %1687 = vmatpush1.bf16.xpose.msra.mxu0 0
        %1688 = vmatprep.subr.bf16.mxu0 0
        %1689 = vmatpush1.bf16.xpose.msra.mxu0 0
        %1690 = vmatprep.subr.bf16.mxu0 0
        %1691 = vmatpush1.bf16.xpose.msra.mxu0 0
        %1692 = vmatprep.subr.bf16.mxu0 0
        %1693 = vmatpush1.bf16.xpose.msra.mxu0 0
        %1694 = vmatprep.subr.bf16.mxu0 0
        %1695 = vmatpush1.bf16.xpose.msra.mxu0 0
        %1696 = vmatprep.subr.bf16.mxu0 0
        %1697 = vmatpush1.bf16.xpose.msra.mxu0 0
        %1698 = vmatprep.subr.bf16.mxu0 0
        %1699 = vmatpush1.bf16.xpose.msra.mxu0 0
        %1700 = vmatprep.subr.bf16.mxu0 0
        %1701 = vmatpush1.bf16.xpose.msra.mxu0 0
        %1702 = vmatprep.subr.bf16.mxu0 0
        %1703 = vmatpush1.bf16.xpose.msra.mxu0 0
        %1704 = vmatprep.subr.bf16.mxu0 0
        %1705 = vmatpush1.bf16.xpose.msra.mxu0 0
        %1706 = vmatprep.subr.bf16.mxu0 0
        %1707 = vmatpush1.bf16.xpose.msra.mxu0 0
        %1708 = vmatprep.subr.bf16.mxu0 0
        %1709 = vmatpush1.bf16.xpose.msra.mxu0 0
        %1710 = vmatprep.mubr.bf16.mxu0 0
        %1711 = vmatmul.mubr.bf16.gmra.mrb[0].mxu0 %v1673
        %v1712 = vpop.f32.mrb[0].mxu0
        %v1713 = vadd.f32 %v1047, %v1712
        %v1714 = vpop.f32.mrb[0].mxu0
        %v1715 = vpop.f32.mrb[0].mxu0
        %v1716 = vadd.f32 %v1048, %v1715
        %v1717 = vpop.f32.mrb[0].mxu0
        %1718 = vdwg.mxu0
        %v1719 = vsel %vm1238, %v1554, -inf
        %1720 = vmax.xlane.f32.xlu0 %v1719
        %v1721 = vpop.xlane.xlu0 %1720
        %v1722 = vsel %vm1238, %v1557, -inf
        %1723 = vmax.xlane.f32.xlu0 %v1722
        %v1724 = vpop.xlane.xlu0 %1723
        %v1725 = vsel %vm1238, %v1607, -inf
        %1726 = vmax.xlane.f32.xlu0 %v1725
        %v1727 = vpop.xlane.xlu0 %1726
        %v1728 = vsel %vm1238, %v1610, -inf
        %1729 = vmax.xlane.f32.xlu0 %v1728
        %v1730 = vpop.xlane.xlu0 %1729
        %v1731 = vsel %vm1238, %v1660, -inf
        %1732 = vmax.xlane.f32.xlu0 %v1731
        %v1733 = vpop.xlane.xlu0 %1732
        %v1734 = vsel %vm1238, %v1663, -inf
        %1735 = vmax.xlane.f32.xlu0 %v1734
        %v1736 = vpop.xlane.xlu0 %1735
        %v1737 = vsel %vm1238, %v1713, -inf
        %1738 = vmax.xlane.f32.xlu0 %v1737
        %v1739 = vpop.xlane.xlu0 %1738
        %v1740 = vsel %vm1238, %v1716, -inf
        %1741 = vmax.xlane.f32.xlu0 %v1740
        %v1742 = vpop.xlane.xlu0 %1741
        %v1743 = vsub.f32 %v1554, %v1721
        %v1744 = vsub.f32 %v1557, %v1724
        %v1745 = vsub.f32 %v1607, %v1727
        %v1746 = vsub.f32 %v1610, %v1730
        %v1747 = vsub.f32 %v1660, %v1733
        %v1748 = vsub.f32 %v1663, %v1736
        %v1749 = vsub.f32 %v1713, %v1739
        %v1750 = vsub.f32 %v1716, %v1742
        %v1751 = vmul.f32 %v1743, 1.442695
        %v1752 = vpow.pop %v1751
        %v1753 = vmul.f32 %v1744, 1.442695
        %v1754 = vpow.pop %v1753
        %v1755 = vmul.f32 %v1745, 1.442695
        %v1756 = vpow.pop %v1755
        %v1757 = vmul.f32 %v1746, 1.442695
        %v1758 = vpow.pop %v1757
        %v1759 = vmul.f32 %v1747, 1.442695
        %v1760 = vpow.pop %v1759
        %v1761 = vmul.f32 %v1748, 1.442695
        %v1762 = vpow.pop %v1761
        %v1763 = vmul.f32 %v1749, 1.442695
        %v1764 = vpow.pop %v1763
        %v1765 = vmul.f32 %v1750, 1.442695
        %v1766 = vpow.pop %v1765
        %v1767 = vsel %vm1238, %v1752, 0.0
        %1768 = vadd.xlane.f32.xlu0 %v1767
        %v1769 = vpop.xlane.xlu0 %1768
        %v1770 = vsel %vm1238, %v1754, 0.0
        %1771 = vadd.xlane.f32.xlu0 %v1770
        %v1772 = vpop.xlane.xlu0 %1771
        %v1773 = vsel %vm1238, %v1756, 0.0
        %1774 = vadd.xlane.f32.xlu0 %v1773
        %v1775 = vpop.xlane.xlu0 %1774
        %v1776 = vsel %vm1238, %v1758, 0.0
        %1777 = vadd.xlane.f32.xlu0 %v1776
        %v1778 = vpop.xlane.xlu0 %1777
        %v1779 = vsel %vm1238, %v1760, 0.0
        %1780 = vadd.xlane.f32.xlu0 %v1779
        %v1781 = vpop.xlane.xlu0 %1780
        %v1782 = vsel %vm1238, %v1762, 0.0
        %1783 = vadd.xlane.f32.xlu0 %v1782
        %v1784 = vpop.xlane.xlu0 %1783
        %v1785 = vsel %vm1238, %v1764, 0.0
        %1786 = vadd.xlane.f32.xlu0 %v1785
        %v1787 = vpop.xlane.xlu0 %1786
        %v1788 = vsel %vm1238, %v1766, 0.0
        %1789 = vadd.xlane.f32.xlu0 %v1788
        %v1790 = vpop.xlane.xlu0 %1789
        %v1791 = vpack.c.bf16 %v1754, %v1752
        %v1792 = vpack.c.bf16 %v1758, %v1756
        %v1793 = vpack.c.bf16 %v1762, %v1760
        %v1794 = vpack.c.bf16 %v1766, %v1764
        %1796 = vrot.lane.b32.xlu0 %v1000, 96
        %v1797 = vpop.permute.xlu0 %1796
        %v1800 = vsel %vm1238, %v1791, 0
        %1802 = vmatprep.subr.bf16.mxu0 0
        %1803 = vmatpush1.bf16.msra.mxu0 %v1797
        %1804 = vmatprep.subr.bf16.mxu0 0
        %1805 = vmatpush1.bf16.msra.mxu0 0
        %1806 = vmatprep.subr.bf16.mxu0 0
        %1807 = vmatpush1.bf16.msra.mxu0 0
        %1808 = vmatprep.subr.bf16.mxu0 0
        %1809 = vmatpush1.bf16.msra.mxu0 0
        %1810 = vmatprep.subr.bf16.mxu0 0
        %1811 = vmatpush1.bf16.msra.mxu0 0
        %1812 = vmatprep.subr.bf16.mxu0 0
        %1813 = vmatpush1.bf16.msra.mxu0 0
        %1814 = vmatprep.subr.bf16.mxu0 0
        %1815 = vmatpush1.bf16.msra.mxu0 0
        %1816 = vmatprep.subr.bf16.mxu0 0
        %1817 = vmatpush1.bf16.msra.mxu0 0
        %1818 = vmatprep.subr.bf16.mxu0 0
        %1819 = vmatpush1.bf16.msra.mxu0 0
        %1820 = vmatprep.subr.bf16.mxu0 0
        %1821 = vmatpush1.bf16.msra.mxu0 0
        %1822 = vmatprep.subr.bf16.mxu0 0
        %1823 = vmatpush1.bf16.msra.mxu0 0
        %1824 = vmatprep.subr.bf16.mxu0 0
        %1825 = vmatpush1.bf16.msra.mxu0 0
        %1826 = vmatprep.subr.bf16.mxu0 0
        %1827 = vmatpush1.bf16.msra.mxu0 0
        %1828 = vmatprep.subr.bf16.mxu0 0
        %1829 = vmatpush1.bf16.msra.mxu0 0
        %1830 = vmatprep.subr.bf16.mxu0 0
        %1831 = vmatpush1.bf16.msra.mxu0 0
        %1832 = vmatprep.subr.bf16.mxu0 0
        %1833 = vmatpush1.bf16.msra.mxu0 0
        %1834 = vmatprep.mubr.bf16.mxu0 0
        %1835 = vmatmul.mubr.bf16.gmra.mrb[0].mxu0 %v1800
        %v1836 = vpop.f32.mrb[0].mxu0
        %v1837 = vadd.f32 0.0, %v1836
        %v1838 = vpop.f32.mrb[0].mxu0
        %v1839 = vpop.f32.mrb[0].mxu0
        %v1840 = vadd.f32 0.0, %v1839
        %v1841 = vpop.f32.mrb[0].mxu0
        %1842 = vdwg.mxu0
        %1844 = vrot.lane.b32.xlu0 %v1001, 96
        %v1845 = vpop.permute.xlu0 %1844
        %v1848 = vsel %vm1238, %v1792, 0
        %1850 = vmatprep.subr.bf16.mxu0 0
        %1851 = vmatpush1.bf16.msra.mxu0 %v1845
        %1852 = vmatprep.subr.bf16.mxu0 0
        %1853 = vmatpush1.bf16.msra.mxu0 0
        %1854 = vmatprep.subr.bf16.mxu0 0
        %1855 = vmatpush1.bf16.msra.mxu0 0
        %1856 = vmatprep.subr.bf16.mxu0 0
        %1857 = vmatpush1.bf16.msra.mxu0 0
        %1858 = vmatprep.subr.bf16.mxu0 0
        %1859 = vmatpush1.bf16.msra.mxu0 0
        %1860 = vmatprep.subr.bf16.mxu0 0
        %1861 = vmatpush1.bf16.msra.mxu0 0
        %1862 = vmatprep.subr.bf16.mxu0 0
        %1863 = vmatpush1.bf16.msra.mxu0 0
        %1864 = vmatprep.subr.bf16.mxu0 0
        %1865 = vmatpush1.bf16.msra.mxu0 0
        %1866 = vmatprep.subr.bf16.mxu0 0
        %1867 = vmatpush1.bf16.msra.mxu0 0
        %1868 = vmatprep.subr.bf16.mxu0 0
        %1869 = vmatpush1.bf16.msra.mxu0 0
        %1870 = vmatprep.subr.bf16.mxu0 0
        %1871 = vmatpush1.bf16.msra.mxu0 0
        %1872 = vmatprep.subr.bf16.mxu0 0
        %1873 = vmatpush1.bf16.msra.mxu0 0
        %1874 = vmatprep.subr.bf16.mxu0 0
        %1875 = vmatpush1.bf16.msra.mxu0 0
        %1876 = vmatprep.subr.bf16.mxu0 0
        %1877 = vmatpush1.bf16.msra.mxu0 0
        %1878 = vmatprep.subr.bf16.mxu0 0
        %1879 = vmatpush1.bf16.msra.mxu0 0
        %1880 = vmatprep.subr.bf16.mxu0 0
        %1881 = vmatpush1.bf16.msra.mxu0 0
        %1882 = vmatprep.mubr.bf16.mxu0 0
        %1883 = vmatmul.mubr.bf16.gmra.mrb[0].mxu0 %v1848
        %v1884 = vpop.f32.mrb[0].mxu0
        %v1885 = vadd.f32 0.0, %v1884
        %v1886 = vpop.f32.mrb[0].mxu0
        %v1887 = vpop.f32.mrb[0].mxu0
        %v1888 = vadd.f32 0.0, %v1887
        %v1889 = vpop.f32.mrb[0].mxu0
        %1890 = vdwg.mxu0
        %1892 = vrot.lane.b32.xlu0 %v1002, 96
        %v1893 = vpop.permute.xlu0 %1892
        %v1896 = vsel %vm1238, %v1793, 0
        %1898 = vmatprep.subr.bf16.mxu0 0
        %1899 = vmatpush1.bf16.msra.mxu0 %v1893
        %1900 = vmatprep.subr.bf16.mxu0 0
        %1901 = vmatpush1.bf16.msra.mxu0 0
        %1902 = vmatprep.subr.bf16.mxu0 0
        %1903 = vmatpush1.bf16.msra.mxu0 0
        %1904 = vmatprep.subr.bf16.mxu0 0
        %1905 = vmatpush1.bf16.msra.mxu0 0
        %1906 = vmatprep.subr.bf16.mxu0 0
        %1907 = vmatpush1.bf16.msra.mxu0 0
        %1908 = vmatprep.subr.bf16.mxu0 0
        %1909 = vmatpush1.bf16.msra.mxu0 0
        %1910 = vmatprep.subr.bf16.mxu0 0
        %1911 = vmatpush1.bf16.msra.mxu0 0
        %1912 = vmatprep.subr.bf16.mxu0 0
        %1913 = vmatpush1.bf16.msra.mxu0 0
        %1914 = vmatprep.subr.bf16.mxu0 0
        %1915 = vmatpush1.bf16.msra.mxu0 0
        %1916 = vmatprep.subr.bf16.mxu0 0
        %1917 = vmatpush1.bf16.msra.mxu0 0
        %1918 = vmatprep.subr.bf16.mxu0 0
        %1919 = vmatpush1.bf16.msra.mxu0 0
        %1920 = vmatprep.subr.bf16.mxu0 0
        %1921 = vmatpush1.bf16.msra.mxu0 0
        %1922 = vmatprep.subr.bf16.mxu0 0
        %1923 = vmatpush1.bf16.msra.mxu0 0
        %1924 = vmatprep.subr.bf16.mxu0 0
        %1925 = vmatpush1.bf16.msra.mxu0 0
        %1926 = vmatprep.subr.bf16.mxu0 0
        %1927 = vmatpush1.bf16.msra.mxu0 0
        %1928 = vmatprep.subr.bf16.mxu0 0
        %1929 = vmatpush1.bf16.msra.mxu0 0
        %1930 = vmatprep.mubr.bf16.mxu0 0
        %1931 = vmatmul.mubr.bf16.gmra.mrb[0].mxu0 %v1896
        %v1932 = vpop.f32.mrb[0].mxu0
        %v1933 = vadd.f32 0.0, %v1932
        %v1934 = vpop.f32.mrb[0].mxu0
        %v1935 = vpop.f32.mrb[0].mxu0
        %v1936 = vadd.f32 0.0, %v1935
        %v1937 = vpop.f32.mrb[0].mxu0
        %1938 = vdwg.mxu0
        %1940 = vrot.lane.b32.xlu0 %v1003, 96
        %v1941 = vpop.permute.xlu0 %1940
        %v1944 = vsel %vm1238, %v1794, 0
        %1946 = vmatprep.subr.bf16.mxu0 0
        %1947 = vmatpush1.bf16.msra.mxu0 %v1941
        %1948 = vmatprep.subr.bf16.mxu0 0
        %1949 = vmatpush1.bf16.msra.mxu0 0
        %1950 = vmatprep.subr.bf16.mxu0 0
        %1951 = vmatpush1.bf16.msra.mxu0 0
        %1952 = vmatprep.subr.bf16.mxu0 0
        %1953 = vmatpush1.bf16.msra.mxu0 0
        %1954 = vmatprep.subr.bf16.mxu0 0
        %1955 = vmatpush1.bf16.msra.mxu0 0
        %1956 = vmatprep.subr.bf16.mxu0 0
        %1957 = vmatpush1.bf16.msra.mxu0 0
        %1958 = vmatprep.subr.bf16.mxu0 0
        %1959 = vmatpush1.bf16.msra.mxu0 0
        %1960 = vmatprep.subr.bf16.mxu0 0
        %1961 = vmatpush1.bf16.msra.mxu0 0
        %1962 = vmatprep.subr.bf16.mxu0 0
        %1963 = vmatpush1.bf16.msra.mxu0 0
        %1964 = vmatprep.subr.bf16.mxu0 0
        %1965 = vmatpush1.bf16.msra.mxu0 0
        %1966 = vmatprep.subr.bf16.mxu0 0
        %1967 = vmatpush1.bf16.msra.mxu0 0
        %1968 = vmatprep.subr.bf16.mxu0 0
        %1969 = vmatpush1.bf16.msra.mxu0 0
        %1970 = vmatprep.subr.bf16.mxu0 0
        %1971 = vmatpush1.bf16.msra.mxu0 0
        %1972 = vmatprep.subr.bf16.mxu0 0
        %1973 = vmatpush1.bf16.msra.mxu0 0
        %1974 = vmatprep.subr.bf16.mxu0 0
        %1975 = vmatpush1.bf16.msra.mxu0 0
        %1976 = vmatprep.subr.bf16.mxu0 0
        %1977 = vmatpush1.bf16.msra.mxu0 0
        %1978 = vmatprep.mubr.bf16.mxu0 0
        %1979 = vmatmul.mubr.bf16.gmra.mrb[0].mxu0 %v1944
        %v1980 = vpop.f32.mrb[0].mxu0
        %v1981 = vadd.f32 0.0, %v1980
        %v1982 = vpop.f32.mrb[0].mxu0
        %v1983 = vpop.f32.mrb[0].mxu0
        %v1984 = vadd.f32 0.0, %v1983
        %v1985 = vpop.f32.mrb[0].mxu0
        %1986 = vdwg.mxu0
        %v1987 = vrcp.pop %v1769
        %v1988 = vrcp.pop %v1772
        %v1989 = vrcp.pop %v1775
        %v1990 = vrcp.pop %v1778
        %v1991 = vrcp.pop %v1781
        %v1992 = vrcp.pop %v1784
        %v1993 = vrcp.pop %v1787
        %v1994 = vrcp.pop %v1790
        %v1995 = vmul.f32 %v1837, %v1987
        %v1996 = vmul.f32 %v1840, %v1988
        %v1997 = vmul.f32 %v1885, %v1989
        %v1998 = vmul.f32 %v1888, %v1990
        %v1999 = vmul.f32 %v1933, %v1991
        %v2000 = vmul.f32 %v1936, %v1992
        %v2001 = vmul.f32 %v1981, %v1993
        %v2002 = vmul.f32 %v1984, %v1994
        %2003 = vrot.lane.b32.xlu0 %v992, 64
        %v2004 = vpop.permute.xlu0 %2003
        %2005 = vrot.lane.b32.xlu0 %v996, 64
        %v2006 = vpop.permute.xlu0 %2005
        %v2008 = vsel %vm1049, %v2004, 0
        %v2011 = vsel %vm1049, %v2006, 0
        %2013 = vmatprep.subr.bf16.mxu0 0
        %2014 = vmatpush1.bf16.xpose.msra.mxu0 %v2011
        %2015 = vmatprep.subr.bf16.mxu0 0
        %2016 = vmatpush1.bf16.xpose.msra.mxu0 0
        %2017 = vmatprep.subr.bf16.mxu0 0
        %2018 = vmatpush1.bf16.xpose.msra.mxu0 0
        %2019 = vmatprep.subr.bf16.mxu0 0
        %2020 = vmatpush1.bf16.xpose.msra.mxu0 0
        %2021 = vmatprep.subr.bf16.mxu0 0
        %2022 = vmatpush1.bf16.xpose.msra.mxu0 0
        %2023 = vmatprep.subr.bf16.mxu0 0
        %2024 = vmatpush1.bf16.xpose.msra.mxu0 0
        %2025 = vmatprep.subr.bf16.mxu0 0
        %2026 = vmatpush1.bf16.xpose.msra.mxu0 0
        %2027 = vmatprep.subr.bf16.mxu0 0
        %2028 = vmatpush1.bf16.xpose.msra.mxu0 0
        %2029 = vmatprep.subr.bf16.mxu0 0
        %2030 = vmatpush1.bf16.xpose.msra.mxu0 0
        %2031 = vmatprep.subr.bf16.mxu0 0
        %2032 = vmatpush1.bf16.xpose.msra.mxu0 0
        %2033 = vmatprep.subr.bf16.mxu0 0
        %2034 = vmatpush1.bf16.xpose.msra.mxu0 0
        %2035 = vmatprep.subr.bf16.mxu0 0
        %2036 = vmatpush1.bf16.xpose.msra.mxu0 0
        %2037 = vmatprep.subr.bf16.mxu0 0
        %2038 = vmatpush1.bf16.xpose.msra.mxu0 0
        %2039 = vmatprep.subr.bf16.mxu0 0
        %2040 = vmatpush1.bf16.xpose.msra.mxu0 0
        %2041 = vmatprep.subr.bf16.mxu0 0
        %2042 = vmatpush1.bf16.xpose.msra.mxu0 0
        %2043 = vmatprep.subr.bf16.mxu0 0
        %2044 = vmatpush1.bf16.xpose.msra.mxu0 0
        %2045 = vmatprep.mubr.bf16.mxu0 0
        %2046 = vmatmul.mubr.bf16.gmra.mrb[0].mxu0 %v2008
        %v2047 = vpop.f32.mrb[0].mxu0
        %v2048 = vadd.f32 %v1047, %v2047
        %v2049 = vpop.f32.mrb[0].mxu0
        %v2050 = vpop.f32.mrb[0].mxu0
        %v2051 = vadd.f32 %v1048, %v2050
        %v2052 = vpop.f32.mrb[0].mxu0
        %2053 = vdwg.mxu0
        %2054 = vrot.lane.b32.xlu0 %v993, 64
        %v2055 = vpop.permute.xlu0 %2054
        %2056 = vrot.lane.b32.xlu0 %v997, 64
        %v2057 = vpop.permute.xlu0 %2056
        %v2059 = vsel %vm1049, %v2055, 0
        %v2062 = vsel %vm1049, %v2057, 0
        %2064 = vmatprep.subr.bf16.mxu0 0
        %2065 = vmatpush1.bf16.xpose.msra.mxu0 %v2062
        %2066 = vmatprep.subr.bf16.mxu0 0
        %2067 = vmatpush1.bf16.xpose.msra.mxu0 0
        %2068 = vmatprep.subr.bf16.mxu0 0
        %2069 = vmatpush1.bf16.xpose.msra.mxu0 0
        %2070 = vmatprep.subr.bf16.mxu0 0
        %2071 = vmatpush1.bf16.xpose.msra.mxu0 0
        %2072 = vmatprep.subr.bf16.mxu0 0
        %2073 = vmatpush1.bf16.xpose.msra.mxu0 0
        %2074 = vmatprep.subr.bf16.mxu0 0
        %2075 = vmatpush1.bf16.xpose.msra.mxu0 0
        %2076 = vmatprep.subr.bf16.mxu0 0
        %2077 = vmatpush1.bf16.xpose.msra.mxu0 0
        %2078 = vmatprep.subr.bf16.mxu0 0
        %2079 = vmatpush1.bf16.xpose.msra.mxu0 0
        %2080 = vmatprep.subr.bf16.mxu0 0
        %2081 = vmatpush1.bf16.xpose.msra.mxu0 0
        %2082 = vmatprep.subr.bf16.mxu0 0
        %2083 = vmatpush1.bf16.xpose.msra.mxu0 0
        %2084 = vmatprep.subr.bf16.mxu0 0
        %2085 = vmatpush1.bf16.xpose.msra.mxu0 0
        %2086 = vmatprep.subr.bf16.mxu0 0
        %2087 = vmatpush1.bf16.xpose.msra.mxu0 0
        %2088 = vmatprep.subr.bf16.mxu0 0
        %2089 = vmatpush1.bf16.xpose.msra.mxu0 0
        %2090 = vmatprep.subr.bf16.mxu0 0
        %2091 = vmatpush1.bf16.xpose.msra.mxu0 0
        %2092 = vmatprep.subr.bf16.mxu0 0
        %2093 = vmatpush1.bf16.xpose.msra.mxu0 0
        %2094 = vmatprep.subr.bf16.mxu0 0
        %2095 = vmatpush1.bf16.xpose.msra.mxu0 0
        %2096 = vmatprep.mubr.bf16.mxu0 0
        %2097 = vmatmul.mubr.bf16.gmra.mrb[0].mxu0 %v2059
        %v2098 = vpop.f32.mrb[0].mxu0
        %v2099 = vadd.f32 %v1047, %v2098
        %v2100 = vpop.f32.mrb[0].mxu0
        %v2101 = vpop.f32.mrb[0].mxu0
        %v2102 = vadd.f32 %v1048, %v2101
        %v2103 = vpop.f32.mrb[0].mxu0
        %2104 = vdwg.mxu0
        %2105 = vrot.lane.b32.xlu0 %v994, 64
        %v2106 = vpop.permute.xlu0 %2105
        %2107 = vrot.lane.b32.xlu0 %v998, 64
        %v2108 = vpop.permute.xlu0 %2107
        %v2110 = vsel %vm1049, %v2106, 0
        %v2113 = vsel %vm1049, %v2108, 0
        %2115 = vmatprep.subr.bf16.mxu0 0
        %2116 = vmatpush1.bf16.xpose.msra.mxu0 %v2113
        %2117 = vmatprep.subr.bf16.mxu0 0
        %2118 = vmatpush1.bf16.xpose.msra.mxu0 0
        %2119 = vmatprep.subr.bf16.mxu0 0
        %2120 = vmatpush1.bf16.xpose.msra.mxu0 0
        %2121 = vmatprep.subr.bf16.mxu0 0
        %2122 = vmatpush1.bf16.xpose.msra.mxu0 0
        %2123 = vmatprep.subr.bf16.mxu0 0
        %2124 = vmatpush1.bf16.xpose.msra.mxu0 0
        %2125 = vmatprep.subr.bf16.mxu0 0
        %2126 = vmatpush1.bf16.xpose.msra.mxu0 0
        %2127 = vmatprep.subr.bf16.mxu0 0
        %2128 = vmatpush1.bf16.xpose.msra.mxu0 0
        %2129 = vmatprep.subr.bf16.mxu0 0
        %2130 = vmatpush1.bf16.xpose.msra.mxu0 0
        %2131 = vmatprep.subr.bf16.mxu0 0
        %2132 = vmatpush1.bf16.xpose.msra.mxu0 0
        %2133 = vmatprep.subr.bf16.mxu0 0
        %2134 = vmatpush1.bf16.xpose.msra.mxu0 0
        %2135 = vmatprep.subr.bf16.mxu0 0
        %2136 = vmatpush1.bf16.xpose.msra.mxu0 0
        %2137 = vmatprep.subr.bf16.mxu0 0
        %2138 = vmatpush1.bf16.xpose.msra.mxu0 0
        %2139 = vmatprep.subr.bf16.mxu0 0
        %2140 = vmatpush1.bf16.xpose.msra.mxu0 0
        %2141 = vmatprep.subr.bf16.mxu0 0
        %2142 = vmatpush1.bf16.xpose.msra.mxu0 0
        %2143 = vmatprep.subr.bf16.mxu0 0
        %2144 = vmatpush1.bf16.xpose.msra.mxu0 0
        %2145 = vmatprep.subr.bf16.mxu0 0
        %2146 = vmatpush1.bf16.xpose.msra.mxu0 0
        %2147 = vmatprep.mubr.bf16.mxu0 0
        %2148 = vmatmul.mubr.bf16.gmra.mrb[0].mxu0 %v2110
        %v2149 = vpop.f32.mrb[0].mxu0
        %v2150 = vadd.f32 %v1047, %v2149
        %v2151 = vpop.f32.mrb[0].mxu0
        %v2152 = vpop.f32.mrb[0].mxu0
        %v2153 = vadd.f32 %v1048, %v2152
        %v2154 = vpop.f32.mrb[0].mxu0
        %2155 = vdwg.mxu0
        %2156 = vrot.lane.b32.xlu0 %v995, 64
        %v2157 = vpop.permute.xlu0 %2156
        %2158 = vrot.lane.b32.xlu0 %v999, 64
        %v2159 = vpop.permute.xlu0 %2158
        %v2161 = vsel %vm1049, %v2157, 0
        %v2164 = vsel %vm1049, %v2159, 0
        %2166 = vmatprep.subr.bf16.mxu0 0
        %2167 = vmatpush1.bf16.xpose.msra.mxu0 %v2164
        %2168 = vmatprep.subr.bf16.mxu0 0
        %2169 = vmatpush1.bf16.xpose.msra.mxu0 0
        %2170 = vmatprep.subr.bf16.mxu0 0
        %2171 = vmatpush1.bf16.xpose.msra.mxu0 0
        %2172 = vmatprep.subr.bf16.mxu0 0
        %2173 = vmatpush1.bf16.xpose.msra.mxu0 0
        %2174 = vmatprep.subr.bf16.mxu0 0
        %2175 = vmatpush1.bf16.xpose.msra.mxu0 0
        %2176 = vmatprep.subr.bf16.mxu0 0
        %2177 = vmatpush1.bf16.xpose.msra.mxu0 0
        %2178 = vmatprep.subr.bf16.mxu0 0
        %2179 = vmatpush1.bf16.xpose.msra.mxu0 0
        %2180 = vmatprep.subr.bf16.mxu0 0
        %2181 = vmatpush1.bf16.xpose.msra.mxu0 0
        %2182 = vmatprep.subr.bf16.mxu0 0
        %2183 = vmatpush1.bf16.xpose.msra.mxu0 0
        %2184 = vmatprep.subr.bf16.mxu0 0
        %2185 = vmatpush1.bf16.xpose.msra.mxu0 0
        %2186 = vmatprep.subr.bf16.mxu0 0
        %2187 = vmatpush1.bf16.xpose.msra.mxu0 0
        %2188 = vmatprep.subr.bf16.mxu0 0
        %2189 = vmatpush1.bf16.xpose.msra.mxu0 0
        %2190 = vmatprep.subr.bf16.mxu0 0
        %2191 = vmatpush1.bf16.xpose.msra.mxu0 0
        %2192 = vmatprep.subr.bf16.mxu0 0
        %2193 = vmatpush1.bf16.xpose.msra.mxu0 0
        %2194 = vmatprep.subr.bf16.mxu0 0
        %2195 = vmatpush1.bf16.xpose.msra.mxu0 0
        %2196 = vmatprep.subr.bf16.mxu0 0
        %2197 = vmatpush1.bf16.xpose.msra.mxu0 0
        %2198 = vmatprep.mubr.bf16.mxu0 0
        %2199 = vmatmul.mubr.bf16.gmra.mrb[0].mxu0 %v2161
        %v2200 = vpop.f32.mrb[0].mxu0
        %v2201 = vadd.f32 %v1047, %v2200
        %v2202 = vpop.f32.mrb[0].mxu0
        %v2203 = vpop.f32.mrb[0].mxu0
        %v2204 = vadd.f32 %v1048, %v2203
        %v2205 = vpop.f32.mrb[0].mxu0
        %2206 = vdwg.mxu0
        %v2207 = vsel %vm1238, %v2048, -inf
        %2208 = vmax.xlane.f32.xlu0 %v2207
        %v2209 = vpop.xlane.xlu0 %2208
        %v2210 = vsel %vm1238, %v2051, -inf
        %2211 = vmax.xlane.f32.xlu0 %v2210
        %v2212 = vpop.xlane.xlu0 %2211
        %v2213 = vsel %vm1238, %v2099, -inf
        %2214 = vmax.xlane.f32.xlu0 %v2213
        %v2215 = vpop.xlane.xlu0 %2214
        %v2216 = vsel %vm1238, %v2102, -inf
        %2217 = vmax.xlane.f32.xlu0 %v2216
        %v2218 = vpop.xlane.xlu0 %2217
        %v2219 = vsel %vm1238, %v2150, -inf
        %2220 = vmax.xlane.f32.xlu0 %v2219
        %v2221 = vpop.xlane.xlu0 %2220
        %v2222 = vsel %vm1238, %v2153, -inf
        %2223 = vmax.xlane.f32.xlu0 %v2222
        %v2224 = vpop.xlane.xlu0 %2223
        %v2225 = vsel %vm1238, %v2201, -inf
        %2226 = vmax.xlane.f32.xlu0 %v2225
        %v2227 = vpop.xlane.xlu0 %2226
        %v2228 = vsel %vm1238, %v2204, -inf
        %2229 = vmax.xlane.f32.xlu0 %v2228
        %v2230 = vpop.xlane.xlu0 %2229
        %v2231 = vsub.f32 %v2048, %v2209
        %v2232 = vsub.f32 %v2051, %v2212
        %v2233 = vsub.f32 %v2099, %v2215
        %v2234 = vsub.f32 %v2102, %v2218
        %v2235 = vsub.f32 %v2150, %v2221
        %v2236 = vsub.f32 %v2153, %v2224
        %v2237 = vsub.f32 %v2201, %v2227
        %v2238 = vsub.f32 %v2204, %v2230
        %v2239 = vmul.f32 %v2231, 1.442695
        %v2240 = vpow.pop %v2239
        %v2241 = vmul.f32 %v2232, 1.442695
        %v2242 = vpow.pop %v2241
        %v2243 = vmul.f32 %v2233, 1.442695
        %v2244 = vpow.pop %v2243
        %v2245 = vmul.f32 %v2234, 1.442695
        %v2246 = vpow.pop %v2245
        %v2247 = vmul.f32 %v2235, 1.442695
        %v2248 = vpow.pop %v2247
        %v2249 = vmul.f32 %v2236, 1.442695
        %v2250 = vpow.pop %v2249
        %v2251 = vmul.f32 %v2237, 1.442695
        %v2252 = vpow.pop %v2251
        %v2253 = vmul.f32 %v2238, 1.442695
        %v2254 = vpow.pop %v2253
        %v2255 = vsel %vm1238, %v2240, 0.0
        %2256 = vadd.xlane.f32.xlu0 %v2255
        %v2257 = vpop.xlane.xlu0 %2256
        %v2258 = vsel %vm1238, %v2242, 0.0
        %2259 = vadd.xlane.f32.xlu0 %v2258
        %v2260 = vpop.xlane.xlu0 %2259
        %v2261 = vsel %vm1238, %v2244, 0.0
        %2262 = vadd.xlane.f32.xlu0 %v2261
        %v2263 = vpop.xlane.xlu0 %2262
        %v2264 = vsel %vm1238, %v2246, 0.0
        %2265 = vadd.xlane.f32.xlu0 %v2264
        %v2266 = vpop.xlane.xlu0 %2265
        %v2267 = vsel %vm1238, %v2248, 0.0
        %2268 = vadd.xlane.f32.xlu0 %v2267
        %v2269 = vpop.xlane.xlu0 %2268
        %v2270 = vsel %vm1238, %v2250, 0.0
        %2271 = vadd.xlane.f32.xlu0 %v2270
        %v2272 = vpop.xlane.xlu0 %2271
        %v2273 = vsel %vm1238, %v2252, 0.0
        %2274 = vadd.xlane.f32.xlu0 %v2273
        %v2275 = vpop.xlane.xlu0 %2274
        %v2276 = vsel %vm1238, %v2254, 0.0
        %2277 = vadd.xlane.f32.xlu0 %v2276
        %v2278 = vpop.xlane.xlu0 %2277
        %v2279 = vpack.c.bf16 %v2242, %v2240
        %v2280 = vpack.c.bf16 %v2246, %v2244
        %v2281 = vpack.c.bf16 %v2250, %v2248
        %v2282 = vpack.c.bf16 %v2254, %v2252
        %2283 = vrot.lane.b32.xlu0 %v1000, 64
        %v2284 = vpop.permute.xlu0 %2283
        %v2287 = vsel %vm1238, %v2279, 0
        %2289 = vmatprep.subr.bf16.mxu0 0
        %2290 = vmatpush1.bf16.msra.mxu0 %v2284
        %2291 = vmatprep.subr.bf16.mxu0 0
        %2292 = vmatpush1.bf16.msra.mxu0 0
        %2293 = vmatprep.subr.bf16.mxu0 0
        %2294 = vmatpush1.bf16.msra.mxu0 0
        %2295 = vmatprep.subr.bf16.mxu0 0
        %2296 = vmatpush1.bf16.msra.mxu0 0
        %2297 = vmatprep.subr.bf16.mxu0 0
        %2298 = vmatpush1.bf16.msra.mxu0 0
        %2299 = vmatprep.subr.bf16.mxu0 0
        %2300 = vmatpush1.bf16.msra.mxu0 0
        %2301 = vmatprep.subr.bf16.mxu0 0
        %2302 = vmatpush1.bf16.msra.mxu0 0
        %2303 = vmatprep.subr.bf16.mxu0 0
        %2304 = vmatpush1.bf16.msra.mxu0 0
        %2305 = vmatprep.subr.bf16.mxu0 0
        %2306 = vmatpush1.bf16.msra.mxu0 0
        %2307 = vmatprep.subr.bf16.mxu0 0
        %2308 = vmatpush1.bf16.msra.mxu0 0
        %2309 = vmatprep.subr.bf16.mxu0 0
        %2310 = vmatpush1.bf16.msra.mxu0 0
        %2311 = vmatprep.subr.bf16.mxu0 0
        %2312 = vmatpush1.bf16.msra.mxu0 0
        %2313 = vmatprep.subr.bf16.mxu0 0
        %2314 = vmatpush1.bf16.msra.mxu0 0
        %2315 = vmatprep.subr.bf16.mxu0 0
        %2316 = vmatpush1.bf16.msra.mxu0 0
        %2317 = vmatprep.subr.bf16.mxu0 0
        %2318 = vmatpush1.bf16.msra.mxu0 0
        %2319 = vmatprep.subr.bf16.mxu0 0
        %2320 = vmatpush1.bf16.msra.mxu0 0
        %2321 = vmatprep.mubr.bf16.mxu0 0
        %2322 = vmatmul.mubr.bf16.gmra.mrb[0].mxu0 %v2287
        %v2323 = vpop.f32.mrb[0].mxu0
        %v2324 = vadd.f32 0.0, %v2323
        %v2325 = vpop.f32.mrb[0].mxu0
        %v2326 = vpop.f32.mrb[0].mxu0
        %v2327 = vadd.f32 0.0, %v2326
        %v2328 = vpop.f32.mrb[0].mxu0
        %2329 = vdwg.mxu0
        %2330 = vrot.lane.b32.xlu0 %v1001, 64
        %v2331 = vpop.permute.xlu0 %2330
        %v2334 = vsel %vm1238, %v2280, 0
        %2336 = vmatprep.subr.bf16.mxu0 0
        %2337 = vmatpush1.bf16.msra.mxu0 %v2331
        %2338 = vmatprep.subr.bf16.mxu0 0
        %2339 = vmatpush1.bf16.msra.mxu0 0
        %2340 = vmatprep.subr.bf16.mxu0 0
        %2341 = vmatpush1.bf16.msra.mxu0 0
        %2342 = vmatprep.subr.bf16.mxu0 0
        %2343 = vmatpush1.bf16.msra.mxu0 0
        %2344 = vmatprep.subr.bf16.mxu0 0
        %2345 = vmatpush1.bf16.msra.mxu0 0
        %2346 = vmatprep.subr.bf16.mxu0 0
        %2347 = vmatpush1.bf16.msra.mxu0 0
        %2348 = vmatprep.subr.bf16.mxu0 0
        %2349 = vmatpush1.bf16.msra.mxu0 0
        %2350 = vmatprep.subr.bf16.mxu0 0
        %2351 = vmatpush1.bf16.msra.mxu0 0
        %2352 = vmatprep.subr.bf16.mxu0 0
        %2353 = vmatpush1.bf16.msra.mxu0 0
        %2354 = vmatprep.subr.bf16.mxu0 0
        %2355 = vmatpush1.bf16.msra.mxu0 0
        %2356 = vmatprep.subr.bf16.mxu0 0
        %2357 = vmatpush1.bf16.msra.mxu0 0
        %2358 = vmatprep.subr.bf16.mxu0 0
        %2359 = vmatpush1.bf16.msra.mxu0 0
        %2360 = vmatprep.subr.bf16.mxu0 0
        %2361 = vmatpush1.bf16.msra.mxu0 0
        %2362 = vmatprep.subr.bf16.mxu0 0
        %2363 = vmatpush1.bf16.msra.mxu0 0
        %2364 = vmatprep.subr.bf16.mxu0 0
        %2365 = vmatpush1.bf16.msra.mxu0 0
        %2366 = vmatprep.subr.bf16.mxu0 0
        %2367 = vmatpush1.bf16.msra.mxu0 0
        %2368 = vmatprep.mubr.bf16.mxu0 0
        %2369 = vmatmul.mubr.bf16.gmra.mrb[0].mxu0 %v2334
        %v2370 = vpop.f32.mrb[0].mxu0
        %v2371 = vadd.f32 0.0, %v2370
        %v2372 = vpop.f32.mrb[0].mxu0
        %v2373 = vpop.f32.mrb[0].mxu0
        %v2374 = vadd.f32 0.0, %v2373
        %v2375 = vpop.f32.mrb[0].mxu0
        %2376 = vdwg.mxu0
        %2377 = vrot.lane.b32.xlu0 %v1002, 64
        %v2378 = vpop.permute.xlu0 %2377
        %v2381 = vsel %vm1238, %v2281, 0
        %2383 = vmatprep.subr.bf16.mxu0 0
        %2384 = vmatpush1.bf16.msra.mxu0 %v2378
        %2385 = vmatprep.subr.bf16.mxu0 0
        %2386 = vmatpush1.bf16.msra.mxu0 0
        %2387 = vmatprep.subr.bf16.mxu0 0
        %2388 = vmatpush1.bf16.msra.mxu0 0
        %2389 = vmatprep.subr.bf16.mxu0 0
        %2390 = vmatpush1.bf16.msra.mxu0 0
        %2391 = vmatprep.subr.bf16.mxu0 0
        %2392 = vmatpush1.bf16.msra.mxu0 0
        %2393 = vmatprep.subr.bf16.mxu0 0
        %2394 = vmatpush1.bf16.msra.mxu0 0
        %2395 = vmatprep.subr.bf16.mxu0 0
        %2396 = vmatpush1.bf16.msra.mxu0 0
        %2397 = vmatprep.subr.bf16.mxu0 0
        %2398 = vmatpush1.bf16.msra.mxu0 0
        %2399 = vmatprep.subr.bf16.mxu0 0
        %2400 = vmatpush1.bf16.msra.mxu0 0
        %2401 = vmatprep.subr.bf16.mxu0 0
        %2402 = vmatpush1.bf16.msra.mxu0 0
        %2403 = vmatprep.subr.bf16.mxu0 0
        %2404 = vmatpush1.bf16.msra.mxu0 0
        %2405 = vmatprep.subr.bf16.mxu0 0
        %2406 = vmatpush1.bf16.msra.mxu0 0
        %2407 = vmatprep.subr.bf16.mxu0 0
        %2408 = vmatpush1.bf16.msra.mxu0 0
        %2409 = vmatprep.subr.bf16.mxu0 0
        %2410 = vmatpush1.bf16.msra.mxu0 0
        %2411 = vmatprep.subr.bf16.mxu0 0
        %2412 = vmatpush1.bf16.msra.mxu0 0
        %2413 = vmatprep.subr.bf16.mxu0 0
        %2414 = vmatpush1.bf16.msra.mxu0 0
        %2415 = vmatprep.mubr.bf16.mxu0 0
        %2416 = vmatmul.mubr.bf16.gmra.mrb[0].mxu0 %v2381
        %v2417 = vpop.f32.mrb[0].mxu0
        %v2418 = vadd.f32 0.0, %v2417
        %v2419 = vpop.f32.mrb[0].mxu0
        %v2420 = vpop.f32.mrb[0].mxu0
        %v2421 = vadd.f32 0.0, %v2420
        %v2422 = vpop.f32.mrb[0].mxu0
        %2423 = vdwg.mxu0
        %2424 = vrot.lane.b32.xlu0 %v1003, 64
        %v2425 = vpop.permute.xlu0 %2424
        %v2428 = vsel %vm1238, %v2282, 0
        %2430 = vmatprep.subr.bf16.mxu0 0
        %2431 = vmatpush1.bf16.msra.mxu0 %v2425
        %2432 = vmatprep.subr.bf16.mxu0 0
        %2433 = vmatpush1.bf16.msra.mxu0 0
        %2434 = vmatprep.subr.bf16.mxu0 0
        %2435 = vmatpush1.bf16.msra.mxu0 0
        %2436 = vmatprep.subr.bf16.mxu0 0
        %2437 = vmatpush1.bf16.msra.mxu0 0
        %2438 = vmatprep.subr.bf16.mxu0 0
        %2439 = vmatpush1.bf16.msra.mxu0 0
        %2440 = vmatprep.subr.bf16.mxu0 0
        %2441 = vmatpush1.bf16.msra.mxu0 0
        %2442 = vmatprep.subr.bf16.mxu0 0
        %2443 = vmatpush1.bf16.msra.mxu0 0
        %2444 = vmatprep.subr.bf16.mxu0 0
        %2445 = vmatpush1.bf16.msra.mxu0 0
        %2446 = vmatprep.subr.bf16.mxu0 0
        %2447 = vmatpush1.bf16.msra.mxu0 0
        %2448 = vmatprep.subr.bf16.mxu0 0
        %2449 = vmatpush1.bf16.msra.mxu0 0
        %2450 = vmatprep.subr.bf16.mxu0 0
        %2451 = vmatpush1.bf16.msra.mxu0 0
        %2452 = vmatprep.subr.bf16.mxu0 0
        %2453 = vmatpush1.bf16.msra.mxu0 0
        %2454 = vmatprep.subr.bf16.mxu0 0
        %2455 = vmatpush1.bf16.msra.mxu0 0
        %2456 = vmatprep.subr.bf16.mxu0 0
        %2457 = vmatpush1.bf16.msra.mxu0 0
        %2458 = vmatprep.subr.bf16.mxu0 0
        %2459 = vmatpush1.bf16.msra.mxu0 0
        %2460 = vmatprep.subr.bf16.mxu0 0
        %2461 = vmatpush1.bf16.msra.mxu0 0
        %2462 = vmatprep.mubr.bf16.mxu0 0
        %2463 = vmatmul.mubr.bf16.gmra.mrb[0].mxu0 %v2428
        %v2464 = vpop.f32.mrb[0].mxu0
        %v2465 = vadd.f32 0.0, %v2464
        %v2466 = vpop.f32.mrb[0].mxu0
        %v2467 = vpop.f32.mrb[0].mxu0
        %v2468 = vadd.f32 0.0, %v2467
        %v2469 = vpop.f32.mrb[0].mxu0
        %2470 = vdwg.mxu0
        %v2471 = vrcp.pop %v2257
        %v2472 = vrcp.pop %v2260
        %v2473 = vrcp.pop %v2263
        %v2474 = vrcp.pop %v2266
        %v2475 = vrcp.pop %v2269
        %v2476 = vrcp.pop %v2272
        %v2477 = vrcp.pop %v2275
        %v2478 = vrcp.pop %v2278
        %v2479 = vmul.f32 %v2324, %v2471
        %v2480 = vmul.f32 %v2327, %v2472
        %v2481 = vmul.f32 %v2371, %v2473
        %v2482 = vmul.f32 %v2374, %v2474
        %v2483 = vmul.f32 %v2418, %v2475
        %v2484 = vmul.f32 %v2421, %v2476
        %v2485 = vmul.f32 %v2465, %v2477
        %v2486 = vmul.f32 %v2468, %v2478
        %2487 = vrot.lane.b32.xlu0 %v992, 32
        %v2488 = vpop.permute.xlu0 %2487
        %2489 = vrot.lane.b32.xlu0 %v996, 32
        %v2490 = vpop.permute.xlu0 %2489
        %v2492 = vsel %vm1049, %v2488, 0
        %v2495 = vsel %vm1049, %v2490, 0
        %2497 = vmatprep.subr.bf16.mxu0 0
        %2498 = vmatpush1.bf16.xpose.msra.mxu0 %v2495
        %2499 = vmatprep.subr.bf16.mxu0 0
        %2500 = vmatpush1.bf16.xpose.msra.mxu0 0
        %2501 = vmatprep.subr.bf16.mxu0 0
        %2502 = vmatpush1.bf16.xpose.msra.mxu0 0
        %2503 = vmatprep.subr.bf16.mxu0 0
        %2504 = vmatpush1.bf16.xpose.msra.mxu0 0
        %2505 = vmatprep.subr.bf16.mxu0 0
        %2506 = vmatpush1.bf16.xpose.msra.mxu0 0
        %2507 = vmatprep.subr.bf16.mxu0 0
        %2508 = vmatpush1.bf16.xpose.msra.mxu0 0
        %2509 = vmatprep.subr.bf16.mxu0 0
        %2510 = vmatpush1.bf16.xpose.msra.mxu0 0
        %2511 = vmatprep.subr.bf16.mxu0 0
        %2512 = vmatpush1.bf16.xpose.msra.mxu0 0
        %2513 = vmatprep.subr.bf16.mxu0 0
        %2514 = vmatpush1.bf16.xpose.msra.mxu0 0
        %2515 = vmatprep.subr.bf16.mxu0 0
        %2516 = vmatpush1.bf16.xpose.msra.mxu0 0
        %2517 = vmatprep.subr.bf16.mxu0 0
        %2518 = vmatpush1.bf16.xpose.msra.mxu0 0
        %2519 = vmatprep.subr.bf16.mxu0 0
        %2520 = vmatpush1.bf16.xpose.msra.mxu0 0
        %2521 = vmatprep.subr.bf16.mxu0 0
        %2522 = vmatpush1.bf16.xpose.msra.mxu0 0
        %2523 = vmatprep.subr.bf16.mxu0 0
        %2524 = vmatpush1.bf16.xpose.msra.mxu0 0
        %2525 = vmatprep.subr.bf16.mxu0 0
        %2526 = vmatpush1.bf16.xpose.msra.mxu0 0
        %2527 = vmatprep.subr.bf16.mxu0 0
        %2528 = vmatpush1.bf16.xpose.msra.mxu0 0
        %2529 = vmatprep.mubr.bf16.mxu0 0
        %2530 = vmatmul.mubr.bf16.gmra.mrb[0].mxu0 %v2492
        %v2531 = vpop.f32.mrb[0].mxu0
        %v2532 = vadd.f32 %v1047, %v2531
        %v2533 = vpop.f32.mrb[0].mxu0
        %v2534 = vpop.f32.mrb[0].mxu0
        %v2535 = vadd.f32 %v1048, %v2534
        %v2536 = vpop.f32.mrb[0].mxu0
        %2537 = vdwg.mxu0
        %2538 = vrot.lane.b32.xlu0 %v993, 32
        %v2539 = vpop.permute.xlu0 %2538
        %2540 = vrot.lane.b32.xlu0 %v997, 32
        %v2541 = vpop.permute.xlu0 %2540
        %v2543 = vsel %vm1049, %v2539, 0
        %v2546 = vsel %vm1049, %v2541, 0
        %2548 = vmatprep.subr.bf16.mxu0 0
        %2549 = vmatpush1.bf16.xpose.msra.mxu0 %v2546
        %2550 = vmatprep.subr.bf16.mxu0 0
        %2551 = vmatpush1.bf16.xpose.msra.mxu0 0
        %2552 = vmatprep.subr.bf16.mxu0 0
        %2553 = vmatpush1.bf16.xpose.msra.mxu0 0
        %2554 = vmatprep.subr.bf16.mxu0 0
        %2555 = vmatpush1.bf16.xpose.msra.mxu0 0
        %2556 = vmatprep.subr.bf16.mxu0 0
        %2557 = vmatpush1.bf16.xpose.msra.mxu0 0
        %2558 = vmatprep.subr.bf16.mxu0 0
        %2559 = vmatpush1.bf16.xpose.msra.mxu0 0
        %2560 = vmatprep.subr.bf16.mxu0 0
        %2561 = vmatpush1.bf16.xpose.msra.mxu0 0
        %2562 = vmatprep.subr.bf16.mxu0 0
        %2563 = vmatpush1.bf16.xpose.msra.mxu0 0
        %2564 = vmatprep.subr.bf16.mxu0 0
        %2565 = vmatpush1.bf16.xpose.msra.mxu0 0
        %2566 = vmatprep.subr.bf16.mxu0 0
        %2567 = vmatpush1.bf16.xpose.msra.mxu0 0
        %2568 = vmatprep.subr.bf16.mxu0 0
        %2569 = vmatpush1.bf16.xpose.msra.mxu0 0
        %2570 = vmatprep.subr.bf16.mxu0 0
        %2571 = vmatpush1.bf16.xpose.msra.mxu0 0
        %2572 = vmatprep.subr.bf16.mxu0 0
        %2573 = vmatpush1.bf16.xpose.msra.mxu0 0
        %2574 = vmatprep.subr.bf16.mxu0 0
        %2575 = vmatpush1.bf16.xpose.msra.mxu0 0
        %2576 = vmatprep.subr.bf16.mxu0 0
        %2577 = vmatpush1.bf16.xpose.msra.mxu0 0
        %2578 = vmatprep.subr.bf16.mxu0 0
        %2579 = vmatpush1.bf16.xpose.msra.mxu0 0
        %2580 = vmatprep.mubr.bf16.mxu0 0
        %2581 = vmatmul.mubr.bf16.gmra.mrb[0].mxu0 %v2543
        %v2582 = vpop.f32.mrb[0].mxu0
        %v2583 = vadd.f32 %v1047, %v2582
        %v2584 = vpop.f32.mrb[0].mxu0
        %v2585 = vpop.f32.mrb[0].mxu0
        %v2586 = vadd.f32 %v1048, %v2585
        %v2587 = vpop.f32.mrb[0].mxu0
        %2588 = vdwg.mxu0
        %2589 = vrot.lane.b32.xlu0 %v994, 32
        %v2590 = vpop.permute.xlu0 %2589
        %2591 = vrot.lane.b32.xlu0 %v998, 32
        %v2592 = vpop.permute.xlu0 %2591
        %v2594 = vsel %vm1049, %v2590, 0
        %v2597 = vsel %vm1049, %v2592, 0
        %2599 = vmatprep.subr.bf16.mxu0 0
        %2600 = vmatpush1.bf16.xpose.msra.mxu0 %v2597
        %2601 = vmatprep.subr.bf16.mxu0 0
        %2602 = vmatpush1.bf16.xpose.msra.mxu0 0
        %2603 = vmatprep.subr.bf16.mxu0 0
        %2604 = vmatpush1.bf16.xpose.msra.mxu0 0
        %2605 = vmatprep.subr.bf16.mxu0 0
        %2606 = vmatpush1.bf16.xpose.msra.mxu0 0
        %2607 = vmatprep.subr.bf16.mxu0 0
        %2608 = vmatpush1.bf16.xpose.msra.mxu0 0
        %2609 = vmatprep.subr.bf16.mxu0 0
        %2610 = vmatpush1.bf16.xpose.msra.mxu0 0
        %2611 = vmatprep.subr.bf16.mxu0 0
        %2612 = vmatpush1.bf16.xpose.msra.mxu0 0
        %2613 = vmatprep.subr.bf16.mxu0 0
        %2614 = vmatpush1.bf16.xpose.msra.mxu0 0
        %2615 = vmatprep.subr.bf16.mxu0 0
        %2616 = vmatpush1.bf16.xpose.msra.mxu0 0
        %2617 = vmatprep.subr.bf16.mxu0 0
        %2618 = vmatpush1.bf16.xpose.msra.mxu0 0
        %2619 = vmatprep.subr.bf16.mxu0 0
        %2620 = vmatpush1.bf16.xpose.msra.mxu0 0
        %2621 = vmatprep.subr.bf16.mxu0 0
        %2622 = vmatpush1.bf16.xpose.msra.mxu0 0
        %2623 = vmatprep.subr.bf16.mxu0 0
        %2624 = vmatpush1.bf16.xpose.msra.mxu0 0
        %2625 = vmatprep.subr.bf16.mxu0 0
        %2626 = vmatpush1.bf16.xpose.msra.mxu0 0
        %2627 = vmatprep.subr.bf16.mxu0 0
        %2628 = vmatpush1.bf16.xpose.msra.mxu0 0
        %2629 = vmatprep.subr.bf16.mxu0 0
        %2630 = vmatpush1.bf16.xpose.msra.mxu0 0
        %2631 = vmatprep.mubr.bf16.mxu0 0
        %2632 = vmatmul.mubr.bf16.gmra.mrb[0].mxu0 %v2594
        %v2633 = vpop.f32.mrb[0].mxu0
        %v2634 = vadd.f32 %v1047, %v2633
        %v2635 = vpop.f32.mrb[0].mxu0
        %v2636 = vpop.f32.mrb[0].mxu0
        %v2637 = vadd.f32 %v1048, %v2636
        %v2638 = vpop.f32.mrb[0].mxu0
        %2639 = vdwg.mxu0
        %2640 = vrot.lane.b32.xlu0 %v995, 32
        %v2641 = vpop.permute.xlu0 %2640
        %2642 = vrot.lane.b32.xlu0 %v999, 32
        %v2643 = vpop.permute.xlu0 %2642
        %v2645 = vsel %vm1049, %v2641, 0
        %v2648 = vsel %vm1049, %v2643, 0
        %2650 = vmatprep.subr.bf16.mxu0 0
        %2651 = vmatpush1.bf16.xpose.msra.mxu0 %v2648
        %2652 = vmatprep.subr.bf16.mxu0 0
        %2653 = vmatpush1.bf16.xpose.msra.mxu0 0
        %2654 = vmatprep.subr.bf16.mxu0 0
        %2655 = vmatpush1.bf16.xpose.msra.mxu0 0
        %2656 = vmatprep.subr.bf16.mxu0 0
        %2657 = vmatpush1.bf16.xpose.msra.mxu0 0
        %2658 = vmatprep.subr.bf16.mxu0 0
        %2659 = vmatpush1.bf16.xpose.msra.mxu0 0
        %2660 = vmatprep.subr.bf16.mxu0 0
        %2661 = vmatpush1.bf16.xpose.msra.mxu0 0
        %2662 = vmatprep.subr.bf16.mxu0 0
        %2663 = vmatpush1.bf16.xpose.msra.mxu0 0
        %2664 = vmatprep.subr.bf16.mxu0 0
        %2665 = vmatpush1.bf16.xpose.msra.mxu0 0
        %2666 = vmatprep.subr.bf16.mxu0 0
        %2667 = vmatpush1.bf16.xpose.msra.mxu0 0
        %2668 = vmatprep.subr.bf16.mxu0 0
        %2669 = vmatpush1.bf16.xpose.msra.mxu0 0
        %2670 = vmatprep.subr.bf16.mxu0 0
        %2671 = vmatpush1.bf16.xpose.msra.mxu0 0
        %2672 = vmatprep.subr.bf16.mxu0 0
        %2673 = vmatpush1.bf16.xpose.msra.mxu0 0
        %2674 = vmatprep.subr.bf16.mxu0 0
        %2675 = vmatpush1.bf16.xpose.msra.mxu0 0
        %2676 = vmatprep.subr.bf16.mxu0 0
        %2677 = vmatpush1.bf16.xpose.msra.mxu0 0
        %2678 = vmatprep.subr.bf16.mxu0 0
        %2679 = vmatpush1.bf16.xpose.msra.mxu0 0
        %2680 = vmatprep.subr.bf16.mxu0 0
        %2681 = vmatpush1.bf16.xpose.msra.mxu0 0
        %2682 = vmatprep.mubr.bf16.mxu0 0
        %2683 = vmatmul.mubr.bf16.gmra.mrb[0].mxu0 %v2645
        %v2684 = vpop.f32.mrb[0].mxu0
        %v2685 = vadd.f32 %v1047, %v2684
        %v2686 = vpop.f32.mrb[0].mxu0
        %v2687 = vpop.f32.mrb[0].mxu0
        %v2688 = vadd.f32 %v1048, %v2687
        %v2689 = vpop.f32.mrb[0].mxu0
        %2690 = vdwg.mxu0
        %v2691 = vsel %vm1238, %v2532, -inf
        %2692 = vmax.xlane.f32.xlu0 %v2691
        %v2693 = vpop.xlane.xlu0 %2692
        %v2694 = vsel %vm1238, %v2535, -inf
        %2695 = vmax.xlane.f32.xlu0 %v2694
        %v2696 = vpop.xlane.xlu0 %2695
        %v2697 = vsel %vm1238, %v2583, -inf
        %2698 = vmax.xlane.f32.xlu0 %v2697
        %v2699 = vpop.xlane.xlu0 %2698
        %v2700 = vsel %vm1238, %v2586, -inf
        %2701 = vmax.xlane.f32.xlu0 %v2700
        %v2702 = vpop.xlane.xlu0 %2701
        %v2703 = vsel %vm1238, %v2634, -inf
        %2704 = vmax.xlane.f32.xlu0 %v2703
        %v2705 = vpop.xlane.xlu0 %2704
        %v2706 = vsel %vm1238, %v2637, -inf
        %2707 = vmax.xlane.f32.xlu0 %v2706
        %v2708 = vpop.xlane.xlu0 %2707
        %v2709 = vsel %vm1238, %v2685, -inf
        %2710 = vmax.xlane.f32.xlu0 %v2709
        %v2711 = vpop.xlane.xlu0 %2710
        %v2712 = vsel %vm1238, %v2688, -inf
        %2713 = vmax.xlane.f32.xlu0 %v2712
        %v2714 = vpop.xlane.xlu0 %2713
        %v2715 = vsub.f32 %v2532, %v2693
        %v2716 = vsub.f32 %v2535, %v2696
        %v2717 = vsub.f32 %v2583, %v2699
        %v2718 = vsub.f32 %v2586, %v2702
        %v2719 = vsub.f32 %v2634, %v2705
        %v2720 = vsub.f32 %v2637, %v2708
        %v2721 = vsub.f32 %v2685, %v2711
        %v2722 = vsub.f32 %v2688, %v2714
        %v2723 = vmul.f32 %v2715, 1.442695
        %v2724 = vpow.pop %v2723
        %v2725 = vmul.f32 %v2716, 1.442695
        %v2726 = vpow.pop %v2725
        %v2727 = vmul.f32 %v2717, 1.442695
        %v2728 = vpow.pop %v2727
        %v2729 = vmul.f32 %v2718, 1.442695
        %v2730 = vpow.pop %v2729
        %v2731 = vmul.f32 %v2719, 1.442695
        %v2732 = vpow.pop %v2731
        %v2733 = vmul.f32 %v2720, 1.442695
        %v2734 = vpow.pop %v2733
        %v2735 = vmul.f32 %v2721, 1.442695
        %v2736 = vpow.pop %v2735
        %v2737 = vmul.f32 %v2722, 1.442695
        %v2738 = vpow.pop %v2737
        %v2739 = vsel %vm1238, %v2724, 0.0
        %2740 = vadd.xlane.f32.xlu0 %v2739
        %v2741 = vpop.xlane.xlu0 %2740
        %v2742 = vsel %vm1238, %v2726, 0.0
        %2743 = vadd.xlane.f32.xlu0 %v2742
        %v2744 = vpop.xlane.xlu0 %2743
        %v2745 = vsel %vm1238, %v2728, 0.0
        %2746 = vadd.xlane.f32.xlu0 %v2745
        %v2747 = vpop.xlane.xlu0 %2746
        %v2748 = vsel %vm1238, %v2730, 0.0
        %2749 = vadd.xlane.f32.xlu0 %v2748
        %v2750 = vpop.xlane.xlu0 %2749
        %v2751 = vsel %vm1238, %v2732, 0.0
        %2752 = vadd.xlane.f32.xlu0 %v2751
        %v2753 = vpop.xlane.xlu0 %2752
        %v2754 = vsel %vm1238, %v2734, 0.0
        %2755 = vadd.xlane.f32.xlu0 %v2754
        %v2756 = vpop.xlane.xlu0 %2755
        %v2757 = vsel %vm1238, %v2736, 0.0
        %2758 = vadd.xlane.f32.xlu0 %v2757
        %v2759 = vpop.xlane.xlu0 %2758
        %v2760 = vsel %vm1238, %v2738, 0.0
        %2761 = vadd.xlane.f32.xlu0 %v2760
        %v2762 = vpop.xlane.xlu0 %2761
        %v2763 = vpack.c.bf16 %v2726, %v2724
        %v2764 = vpack.c.bf16 %v2730, %v2728
        %v2765 = vpack.c.bf16 %v2734, %v2732
        %v2766 = vpack.c.bf16 %v2738, %v2736
        %2767 = vrot.lane.b32.xlu0 %v1000, 32
        %v2768 = vpop.permute.xlu0 %2767
        %v2771 = vsel %vm1238, %v2763, 0
        %2773 = vmatprep.subr.bf16.mxu0 0
        %2774 = vmatpush1.bf16.msra.mxu0 %v2768
        %2775 = vmatprep.subr.bf16.mxu0 0
        %2776 = vmatpush1.bf16.msra.mxu0 0
        %2777 = vmatprep.subr.bf16.mxu0 0
        %2778 = vmatpush1.bf16.msra.mxu0 0
        %2779 = vmatprep.subr.bf16.mxu0 0
        %2780 = vmatpush1.bf16.msra.mxu0 0
        %2781 = vmatprep.subr.bf16.mxu0 0
        %2782 = vmatpush1.bf16.msra.mxu0 0
        %2783 = vmatprep.subr.bf16.mxu0 0
        %2784 = vmatpush1.bf16.msra.mxu0 0
        %2785 = vmatprep.subr.bf16.mxu0 0
        %2786 = vmatpush1.bf16.msra.mxu0 0
        %2787 = vmatprep.subr.bf16.mxu0 0
        %2788 = vmatpush1.bf16.msra.mxu0 0
        %2789 = vmatprep.subr.bf16.mxu0 0
        %2790 = vmatpush1.bf16.msra.mxu0 0
        %2791 = vmatprep.subr.bf16.mxu0 0
        %2792 = vmatpush1.bf16.msra.mxu0 0
        %2793 = vmatprep.subr.bf16.mxu0 0
        %2794 = vmatpush1.bf16.msra.mxu0 0
        %2795 = vmatprep.subr.bf16.mxu0 0
        %2796 = vmatpush1.bf16.msra.mxu0 0
        %2797 = vmatprep.subr.bf16.mxu0 0
        %2798 = vmatpush1.bf16.msra.mxu0 0
        %2799 = vmatprep.subr.bf16.mxu0 0
        %2800 = vmatpush1.bf16.msra.mxu0 0
        %2801 = vmatprep.subr.bf16.mxu0 0
        %2802 = vmatpush1.bf16.msra.mxu0 0
        %2803 = vmatprep.subr.bf16.mxu0 0
        %2804 = vmatpush1.bf16.msra.mxu0 0
        %2805 = vmatprep.mubr.bf16.mxu0 0
        %2806 = vmatmul.mubr.bf16.gmra.mrb[0].mxu0 %v2771
        %v2807 = vpop.f32.mrb[0].mxu0
        %v2808 = vadd.f32 0.0, %v2807
        %v2809 = vpop.f32.mrb[0].mxu0
        %v2810 = vpop.f32.mrb[0].mxu0
        %v2811 = vadd.f32 0.0, %v2810
        %v2812 = vpop.f32.mrb[0].mxu0
        %2813 = vdwg.mxu0
        %2814 = vrot.lane.b32.xlu0 %v1001, 32
        %v2815 = vpop.permute.xlu0 %2814
        %v2818 = vsel %vm1238, %v2764, 0
        %2820 = vmatprep.subr.bf16.mxu0 0
        %2821 = vmatpush1.bf16.msra.mxu0 %v2815
        %2822 = vmatprep.subr.bf16.mxu0 0
        %2823 = vmatpush1.bf16.msra.mxu0 0
        %2824 = vmatprep.subr.bf16.mxu0 0
        %2825 = vmatpush1.bf16.msra.mxu0 0
        %2826 = vmatprep.subr.bf16.mxu0 0
        %2827 = vmatpush1.bf16.msra.mxu0 0
        %2828 = vmatprep.subr.bf16.mxu0 0
        %2829 = vmatpush1.bf16.msra.mxu0 0
        %2830 = vmatprep.subr.bf16.mxu0 0
        %2831 = vmatpush1.bf16.msra.mxu0 0
        %2832 = vmatprep.subr.bf16.mxu0 0
        %2833 = vmatpush1.bf16.msra.mxu0 0
        %2834 = vmatprep.subr.bf16.mxu0 0
        %2835 = vmatpush1.bf16.msra.mxu0 0
        %2836 = vmatprep.subr.bf16.mxu0 0
        %2837 = vmatpush1.bf16.msra.mxu0 0
        %2838 = vmatprep.subr.bf16.mxu0 0
        %2839 = vmatpush1.bf16.msra.mxu0 0
        %2840 = vmatprep.subr.bf16.mxu0 0
        %2841 = vmatpush1.bf16.msra.mxu0 0
        %2842 = vmatprep.subr.bf16.mxu0 0
        %2843 = vmatpush1.bf16.msra.mxu0 0
        %2844 = vmatprep.subr.bf16.mxu0 0
        %2845 = vmatpush1.bf16.msra.mxu0 0
        %2846 = vmatprep.subr.bf16.mxu0 0
        %2847 = vmatpush1.bf16.msra.mxu0 0
        %2848 = vmatprep.subr.bf16.mxu0 0
        %2849 = vmatpush1.bf16.msra.mxu0 0
        %2850 = vmatprep.subr.bf16.mxu0 0
        %2851 = vmatpush1.bf16.msra.mxu0 0
        %2852 = vmatprep.mubr.bf16.mxu0 0
        %2853 = vmatmul.mubr.bf16.gmra.mrb[0].mxu0 %v2818
        %v2854 = vpop.f32.mrb[0].mxu0
        %v2855 = vadd.f32 0.0, %v2854
        %v2856 = vpop.f32.mrb[0].mxu0
        %v2857 = vpop.f32.mrb[0].mxu0
        %v2858 = vadd.f32 0.0, %v2857
        %v2859 = vpop.f32.mrb[0].mxu0
        %2860 = vdwg.mxu0
        %2861 = vrot.lane.b32.xlu0 %v1002, 32
        %v2862 = vpop.permute.xlu0 %2861
        %v2865 = vsel %vm1238, %v2765, 0
        %2867 = vmatprep.subr.bf16.mxu0 0
        %2868 = vmatpush1.bf16.msra.mxu0 %v2862
        %2869 = vmatprep.subr.bf16.mxu0 0
        %2870 = vmatpush1.bf16.msra.mxu0 0
        %2871 = vmatprep.subr.bf16.mxu0 0
        %2872 = vmatpush1.bf16.msra.mxu0 0
        %2873 = vmatprep.subr.bf16.mxu0 0
        %2874 = vmatpush1.bf16.msra.mxu0 0
        %2875 = vmatprep.subr.bf16.mxu0 0
        %2876 = vmatpush1.bf16.msra.mxu0 0
        %2877 = vmatprep.subr.bf16.mxu0 0
        %2878 = vmatpush1.bf16.msra.mxu0 0
        %2879 = vmatprep.subr.bf16.mxu0 0
        %2880 = vmatpush1.bf16.msra.mxu0 0
        %2881 = vmatprep.subr.bf16.mxu0 0
        %2882 = vmatpush1.bf16.msra.mxu0 0
        %2883 = vmatprep.subr.bf16.mxu0 0
        %2884 = vmatpush1.bf16.msra.mxu0 0
        %2885 = vmatprep.subr.bf16.mxu0 0
        %2886 = vmatpush1.bf16.msra.mxu0 0
        %2887 = vmatprep.subr.bf16.mxu0 0
        %2888 = vmatpush1.bf16.msra.mxu0 0
        %2889 = vmatprep.subr.bf16.mxu0 0
        %2890 = vmatpush1.bf16.msra.mxu0 0
        %2891 = vmatprep.subr.bf16.mxu0 0
        %2892 = vmatpush1.bf16.msra.mxu0 0
        %2893 = vmatprep.subr.bf16.mxu0 0
        %2894 = vmatpush1.bf16.msra.mxu0 0
        %2895 = vmatprep.subr.bf16.mxu0 0
        %2896 = vmatpush1.bf16.msra.mxu0 0
        %2897 = vmatprep.subr.bf16.mxu0 0
        %2898 = vmatpush1.bf16.msra.mxu0 0
        %2899 = vmatprep.mubr.bf16.mxu0 0
        %2900 = vmatmul.mubr.bf16.gmra.mrb[0].mxu0 %v2865
        %v2901 = vpop.f32.mrb[0].mxu0
        %v2902 = vadd.f32 0.0, %v2901
        %v2903 = vpop.f32.mrb[0].mxu0
        %v2904 = vpop.f32.mrb[0].mxu0
        %v2905 = vadd.f32 0.0, %v2904
        %v2906 = vpop.f32.mrb[0].mxu0
        %2907 = vdwg.mxu0
        %2908 = vrot.lane.b32.xlu0 %v1003, 32
        %v2909 = vpop.permute.xlu0 %2908
        %v2912 = vsel %vm1238, %v2766, 0
        %2914 = vmatprep.subr.bf16.mxu0 0
        %2915 = vmatpush1.bf16.msra.mxu0 %v2909
        %2916 = vmatprep.subr.bf16.mxu0 0
        %2917 = vmatpush1.bf16.msra.mxu0 0
        %2918 = vmatprep.subr.bf16.mxu0 0
        %2919 = vmatpush1.bf16.msra.mxu0 0
        %2920 = vmatprep.subr.bf16.mxu0 0
        %2921 = vmatpush1.bf16.msra.mxu0 0
        %2922 = vmatprep.subr.bf16.mxu0 0
        %2923 = vmatpush1.bf16.msra.mxu0 0
        %2924 = vmatprep.subr.bf16.mxu0 0
        %2925 = vmatpush1.bf16.msra.mxu0 0
        %2926 = vmatprep.subr.bf16.mxu0 0
        %2927 = vmatpush1.bf16.msra.mxu0 0
        %2928 = vmatprep.subr.bf16.mxu0 0
        %2929 = vmatpush1.bf16.msra.mxu0 0
        %2930 = vmatprep.subr.bf16.mxu0 0
        %2931 = vmatpush1.bf16.msra.mxu0 0
        %2932 = vmatprep.subr.bf16.mxu0 0
        %2933 = vmatpush1.bf16.msra.mxu0 0
        %2934 = vmatprep.subr.bf16.mxu0 0
        %2935 = vmatpush1.bf16.msra.mxu0 0
        %2936 = vmatprep.subr.bf16.mxu0 0
        %2937 = vmatpush1.bf16.msra.mxu0 0
        %2938 = vmatprep.subr.bf16.mxu0 0
        %2939 = vmatpush1.bf16.msra.mxu0 0
        %2940 = vmatprep.subr.bf16.mxu0 0
        %2941 = vmatpush1.bf16.msra.mxu0 0
        %2942 = vmatprep.subr.bf16.mxu0 0
        %2943 = vmatpush1.bf16.msra.mxu0 0
        %2944 = vmatprep.subr.bf16.mxu0 0
        %2945 = vmatpush1.bf16.msra.mxu0 0
        %2946 = vmatprep.mubr.bf16.mxu0 0
        %2947 = vmatmul.mubr.bf16.gmra.mrb[0].mxu0 %v2912
        %v2948 = vpop.f32.mrb[0].mxu0
        %v2949 = vadd.f32 0.0, %v2948
        %v2950 = vpop.f32.mrb[0].mxu0
        %v2951 = vpop.f32.mrb[0].mxu0
        %v2952 = vadd.f32 0.0, %v2951
        %v2953 = vpop.f32.mrb[0].mxu0
        %2954 = vdwg.mxu0
        %v2955 = vrcp.pop %v2741
        %v2956 = vrcp.pop %v2744
        %v2957 = vrcp.pop %v2747
        %v2958 = vrcp.pop %v2750
        %v2959 = vrcp.pop %v2753
        %v2960 = vrcp.pop %v2756
        %v2961 = vrcp.pop %v2759
        %v2962 = vrcp.pop %v2762
        %v2963 = vmul.f32 %v2808, %v2955
        %v2964 = vmul.f32 %v2811, %v2956
        %v2965 = vmul.f32 %v2855, %v2957
        %v2966 = vmul.f32 %v2858, %v2958
        %v2967 = vmul.f32 %v2902, %v2959
        %v2968 = vmul.f32 %v2905, %v2960
        %v2969 = vmul.f32 %v2949, %v2961
        %v2970 = vmul.f32 %v2952, %v2962
        %2979 = vrot.lane.b32.xlu0 %v1995, 32
        %v2980 = vpop.permute.xlu0 %2979
        %2981 = vrot.lane.b32.xlu0 %v1996, 32
        %v2982 = vpop.permute.xlu0 %2981
        %2983 = vrot.lane.b32.xlu0 %v1997, 32
        %v2984 = vpop.permute.xlu0 %2983
        %2985 = vrot.lane.b32.xlu0 %v1998, 32
        %v2986 = vpop.permute.xlu0 %2985
        %2987 = vrot.lane.b32.xlu0 %v1999, 32
        %v2988 = vpop.permute.xlu0 %2987
        %2989 = vrot.lane.b32.xlu0 %v2000, 32
        %v2990 = vpop.permute.xlu0 %2989
        %2991 = vrot.lane.b32.xlu0 %v2001, 32
        %v2992 = vpop.permute.xlu0 %2991
        %2993 = vrot.lane.b32.xlu0 %v2002, 32
        %v2994 = vpop.permute.xlu0 %2993
        %3011 = vrot.lane.b32.xlu0 %v2479, 64
        %v3012 = vpop.permute.xlu0 %3011
        %3013 = vrot.lane.b32.xlu0 %v2480, 64
        %v3014 = vpop.permute.xlu0 %3013
        %3015 = vrot.lane.b32.xlu0 %v2481, 64
        %v3016 = vpop.permute.xlu0 %3015
        %3017 = vrot.lane.b32.xlu0 %v2482, 64
        %v3018 = vpop.permute.xlu0 %3017
        %3019 = vrot.lane.b32.xlu0 %v2483, 64
        %v3020 = vpop.permute.xlu0 %3019
        %3021 = vrot.lane.b32.xlu0 %v2484, 64
        %v3022 = vpop.permute.xlu0 %3021
        %3023 = vrot.lane.b32.xlu0 %v2485, 64
        %v3024 = vpop.permute.xlu0 %3023
        %3025 = vrot.lane.b32.xlu0 %v2486, 64
        %v3026 = vpop.permute.xlu0 %3025
        %3043 = vrot.lane.b32.xlu0 %v2963, 96
        %v3044 = vpop.permute.xlu0 %3043
        %3045 = vrot.lane.b32.xlu0 %v2964, 96
        %v3046 = vpop.permute.xlu0 %3045
        %3047 = vrot.lane.b32.xlu0 %v2965, 96
        %v3048 = vpop.permute.xlu0 %3047
        %3049 = vrot.lane.b32.xlu0 %v2966, 96
        %v3050 = vpop.permute.xlu0 %3049
        %3051 = vrot.lane.b32.xlu0 %v2967, 96
        %v3052 = vpop.permute.xlu0 %3051
        %3053 = vrot.lane.b32.xlu0 %v2968, 96
        %v3054 = vpop.permute.xlu0 %3053
        %3055 = vrot.lane.b32.xlu0 %v2969, 96
        %v3056 = vpop.permute.xlu0 %3055
        %3057 = vrot.lane.b32.xlu0 %v2970, 96
        %v3058 = vpop.permute.xlu0 %3057
        %v3067 = vsel %vm1049, %v1499, %v2980
        %v3068 = vsel %vm1049, %v1500, %v2982
        %v3069 = vsel %vm1049, %v1501, %v2984
        %v3070 = vsel %vm1049, %v1502, %v2986
        %v3071 = vsel %vm1049, %v1503, %v2988
        %v3072 = vsel %vm1049, %v1504, %v2990
        %v3073 = vsel %vm1049, %v1505, %v2992
        %v3074 = vsel %vm1049, %v1506, %v2994
        %vm3075 = vcmask 523264
        %v3076 = vsel %vm3075, %v3067, %v3012
        %v3077 = vsel %vm3075, %v3068, %v3014
        %v3078 = vsel %vm3075, %v3069, %v3016
        %v3079 = vsel %vm3075, %v3070, %v3018
        %v3080 = vsel %vm3075, %v3071, %v3020
        %v3081 = vsel %vm3075, %v3072, %v3022
        %v3082 = vsel %vm3075, %v3073, %v3024
        %v3083 = vsel %vm3075, %v3074, %v3026
        %vm3084 = vcmask 785408
        %v3085 = vsel %vm3084, %v3076, %v3044
        %v3086 = vsel %vm3084, %v3077, %v3046
        %v3087 = vsel %vm3084, %v3078, %v3048
        %v3088 = vsel %vm3084, %v3079, %v3050
        %v3089 = vsel %vm3084, %v3080, %v3052
        %v3090 = vsel %vm3084, %v3081, %v3054
        %v3091 = vsel %vm3084, %v3082, %v3056
        %v3092 = vsel %vm3084, %v3083, %v3058
        %v3093 = vpack.c.bf16 %v3086, %v3085
        %v3094 = vpack.c.bf16 %v3088, %v3087
        %v3095 = vpack.c.bf16 %v3090, %v3089
        %v3096 = vpack.c.bf16 %v3092, %v3091
        %v3097 = vld [vmem:[#allocation10] sm:$0xf]
        %v3098 = vld [vmem:[#allocation10 + $0x4] sm:$0xf]
        %v3099 = vld [vmem:[#allocation10 + $0x8] sm:$0xf]
        %v3100 = vld [vmem:[#allocation10 + $0xc] sm:$0xf]
        %v3101 = vld [vmem:[#allocation10 + $0x10] sm:$0xf]
        %v3102 = vld [vmem:[#allocation10 + $0x14] sm:$0xf]
        %v3103 = vld [vmem:[#allocation10 + $0x18] sm:$0xf]
        %v3104 = vld [vmem:[#allocation10 + $0x1c] sm:$0xf]
        %v3105 = vld [vmem:[#allocation10 + $0x20] sm:$0xf]
        %v3106 = vld [vmem:[#allocation10 + $0x24] sm:$0xf]
        %v3107 = vld [vmem:[#allocation10 + $0x28] sm:$0xf]
        %v3108 = vld [vmem:[#allocation10 + $0x2c] sm:$0xf]
        %v3109 = vld [vmem:[#allocation10 + $0x30] sm:$0xf]
        %v3110 = vld [vmem:[#allocation10 + $0x34] sm:$0xf]
        %v3111 = vld [vmem:[#allocation10 + $0x38] sm:$0xf]
        %v3112 = vld [vmem:[#allocation10 + $0x3c] sm:$0xf]
        %v3129 = vunpack.c.l.b16 %v3097
        %v3130 = vunpack.c.l.b16 %v3098
        %v3131 = vunpack.c.l.b16 %v3099
        %v3132 = vunpack.c.l.b16 %v3100
        %v3133 = vunpack.c.l.b16 %v3101
        %v3134 = vunpack.c.l.b16 %v3102
        %v3135 = vunpack.c.l.b16 %v3103
        %v3136 = vunpack.c.l.b16 %v3104
        %v3137 = vunpack.c.l.b16 %v3105
        %v3138 = vunpack.c.l.b16 %v3106
        %v3139 = vunpack.c.l.b16 %v3107
        %v3140 = vunpack.c.l.b16 %v3108
        %v3141 = vunpack.c.l.b16 %v3109
        %v3142 = vunpack.c.l.b16 %v3110
        %v3143 = vunpack.c.l.b16 %v3111
        %v3144 = vunpack.c.l.b16 %v3112
        %v3145 = vpack.c.b16 %v3130, %v3129
        %v3146 = vpack.c.b16 %v3132, %v3131
        %v3147 = vpack.c.b16 %v3134, %v3133
        %v3148 = vpack.c.b16 %v3136, %v3135
        %v3149 = vpack.c.b16 %v3138, %v3137
        %v3150 = vpack.c.b16 %v3140, %v3139
        %v3151 = vpack.c.b16 %v3142, %v3141
        %v3152 = vpack.c.b16 %v3144, %v3143
        %3161 = vmatprep.subr.bf16.mxu0 0
        %3162 = vmatpush1.bf16.msra.mxu0 %v3145
        %3163 = vmatprep.subr.bf16.mxu0 0
        %3164 = vmatpush1.bf16.msra.mxu0 %v3146
        %3165 = vmatprep.subr.bf16.mxu0 0
        %3166 = vmatpush1.bf16.msra.mxu0 %v3147
        %3167 = vmatprep.subr.bf16.mxu0 0
        %3168 = vmatpush1.bf16.msra.mxu0 %v3148
        %3169 = vmatprep.subr.bf16.mxu0 0
        %3170 = vmatpush1.bf16.msra.mxu0 %v3149
        %3171 = vmatprep.subr.bf16.mxu0 0
        %3172 = vmatpush1.bf16.msra.mxu0 %v3150
        %3173 = vmatprep.subr.bf16.mxu0 0
        %3174 = vmatpush1.bf16.msra.mxu0 %v3151
        %3175 = vmatprep.subr.bf16.mxu0 0
        %3176 = vmatpush1.bf16.msra.mxu0 %v3152
        %3177 = vmatprep.subr.bf16.mxu0 0
        %3178 = vmatpush1.bf16.msra.mxu0 0
        %3179 = vmatprep.subr.bf16.mxu0 0
        %3180 = vmatpush1.bf16.msra.mxu0 0
        %3181 = vmatprep.subr.bf16.mxu0 0
        %3182 = vmatpush1.bf16.msra.mxu0 0
        %3183 = vmatprep.subr.bf16.mxu0 0
        %3184 = vmatpush1.bf16.msra.mxu0 0
        %3185 = vmatprep.subr.bf16.mxu0 0
        %3186 = vmatpush1.bf16.msra.mxu0 0
        %3187 = vmatprep.subr.bf16.mxu0 0
        %3188 = vmatpush1.bf16.msra.mxu0 0
        %3189 = vmatprep.subr.bf16.mxu0 0
        %3190 = vmatpush1.bf16.msra.mxu0 0
        %3191 = vmatprep.subr.bf16.mxu0 0
        %3192 = vmatpush1.bf16.msra.mxu0 0
        %3193 = vmatprep.mubr.bf16.mxu0 0
        %3194 = vmatmul.mubr.bf16.gmra.mrb[0].mxu0 %v3093
        %v3195 = vpop.f32.mrb[0].mxu0
        %v3196 = vadd.f32 0.0, %v3195
        %v3197 = vpop.f32.mrb[0].mxu0
        %v3198 = vpop.f32.mrb[0].mxu0
        %v3199 = vadd.f32 0.0, %v3198
        %v3200 = vpop.f32.mrb[0].mxu0
        %3201 = vmatprep.mubr.bf16.mxu0 0
        %3202 = vmatmul.mubr.bf16.gmra.mrb[0].mxu0 %v3094
        %v3203 = vpop.f32.mrb[0].mxu0
        %v3204 = vadd.f32 0.0, %v3203
        %v3205 = vpop.f32.mrb[0].mxu0
        %v3206 = vpop.f32.mrb[0].mxu0
        %v3207 = vadd.f32 0.0, %v3206
        %v3208 = vpop.f32.mrb[0].mxu0
        %3209 = vmatprep.mubr.bf16.mxu0 0
        %3210 = vmatmul.mubr.bf16.gmra.mrb[0].mxu0 %v3095
        %v3211 = vpop.f32.mrb[0].mxu0
        %v3212 = vadd.f32 0.0, %v3211
        %v3213 = vpop.f32.mrb[0].mxu0
        %v3214 = vpop.f32.mrb[0].mxu0
        %v3215 = vadd.f32 0.0, %v3214
        %v3216 = vpop.f32.mrb[0].mxu0
        %3217 = vmatprep.mubr.bf16.mxu0 0
        %3218 = vmatmul.mubr.bf16.gmra.mrb[0].mxu0 %v3096
        %v3219 = vpop.f32.mrb[0].mxu0
        %v3220 = vadd.f32 0.0, %v3219
        %v3221 = vpop.f32.mrb[0].mxu0
        %v3222 = vpop.f32.mrb[0].mxu0
        %v3223 = vadd.f32 0.0, %v3222
        %v3224 = vpop.f32.mrb[0].mxu0
        %3225 = vdwg.mxu0
        %v3226 = vadd.f32 %v546, %v3196
        %v3227 = vadd.f32 %v547, %v3199
        %v3228 = vadd.f32 %v548, %v3204
        %v3229 = vadd.f32 %v549, %v3207
        %v3230 = vadd.f32 %v550, %v3212
        %v3231 = vadd.f32 %v551, %v3215
        %v3232 = vadd.f32 %v552, %v3220
        %v3233 = vadd.f32 %v553, %v3223
        %v3234 = vld [vmem:[%s6] sm:$0x1]
        %v3236 = vlaneseq
        %v3237 = vshrl.u32 %v3236, 7
        %v3238 = vsub.s32 0, %v3237
        %v3239 = vrot.slane %v3234, %v3238
        %v3241 = vadd.f32 %v3226, %v3239
        %v3242 = vadd.f32 %v3227, %v3239
        %v3243 = vadd.f32 %v3228, %v3239
        %v3244 = vadd.f32 %v3229, %v3239
        %v3245 = vadd.f32 %v3230, %v3239
        %v3246 = vadd.f32 %v3231, %v3239
        %v3247 = vadd.f32 %v3232, %v3239
        %v3248 = vadd.f32 %v3233, %v3239
        %v3249 = vld [vmem:[%s7] sm:$0x1]
        %v3250 = vld [vmem:[%s8] sm:$0x1]
        %3251 = vadd.xlane.f32.xlu0 %v3241
        %v3252 = vpop.xlane.xlu0 %3251
        %3253 = vadd.xlane.f32.xlu0 %v3242
        %v3254 = vpop.xlane.xlu0 %3253
        %3255 = vadd.xlane.f32.xlu0 %v3243
        %v3256 = vpop.xlane.xlu0 %3255
        %3257 = vadd.xlane.f32.xlu0 %v3244
        %v3258 = vpop.xlane.xlu0 %3257
        %3259 = vadd.xlane.f32.xlu0 %v3245
        %v3260 = vpop.xlane.xlu0 %3259
        %3261 = vadd.xlane.f32.xlu0 %v3246
        %v3262 = vpop.xlane.xlu0 %3261
        %3263 = vadd.xlane.f32.xlu0 %v3247
        %v3264 = vpop.xlane.xlu0 %3263
        %3265 = vadd.xlane.f32.xlu0 %v3248
        %v3266 = vpop.xlane.xlu0 %3265
        %v3267 = vmul.f32 %v3252, %v572
        %v3268 = vmul.f32 %v3254, %v572
        %v3269 = vmul.f32 %v3256, %v572
        %v3270 = vmul.f32 %v3258, %v572
        %v3271 = vmul.f32 %v3260, %v572
        %v3272 = vmul.f32 %v3262, %v572
        %v3273 = vmul.f32 %v3264, %v572
        %v3274 = vmul.f32 %v3266, %v572
        %v3275 = vsub.f32 %v3241, %v3267
        %v3276 = vsub.f32 %v3242, %v3268
        %v3277 = vsub.f32 %v3243, %v3269
        %v3278 = vsub.f32 %v3244, %v3270
        %v3279 = vsub.f32 %v3245, %v3271
        %v3280 = vsub.f32 %v3246, %v3272
        %v3281 = vsub.f32 %v3247, %v3273
        %v3282 = vsub.f32 %v3248, %v3274
        %v3283 = vmul.f32 %v3275, %v3275
        %v3284 = vmul.f32 %v3276, %v3276
        %v3285 = vmul.f32 %v3277, %v3277
        %v3286 = vmul.f32 %v3278, %v3278
        %v3287 = vmul.f32 %v3279, %v3279
        %v3288 = vmul.f32 %v3280, %v3280
        %v3289 = vmul.f32 %v3281, %v3281
        %v3290 = vmul.f32 %v3282, %v3282
        %3291 = vadd.xlane.f32.xlu0 %v3283
        %v3292 = vpop.xlane.xlu0 %3291
        %3293 = vadd.xlane.f32.xlu0 %v3284
        %v3294 = vpop.xlane.xlu0 %3293
        %3295 = vadd.xlane.f32.xlu0 %v3285
        %v3296 = vpop.xlane.xlu0 %3295
        %3297 = vadd.xlane.f32.xlu0 %v3286
        %v3298 = vpop.xlane.xlu0 %3297
        %3299 = vadd.xlane.f32.xlu0 %v3287
        %v3300 = vpop.xlane.xlu0 %3299
        %3301 = vadd.xlane.f32.xlu0 %v3288
        %v3302 = vpop.xlane.xlu0 %3301
        %3303 = vadd.xlane.f32.xlu0 %v3289
        %v3304 = vpop.xlane.xlu0 %3303
        %3305 = vadd.xlane.f32.xlu0 %v3290
        %v3306 = vpop.xlane.xlu0 %3305
        %v3307 = vmul.f32 %v3292, %v572
        %v3308 = vmul.f32 %v3294, %v572
        %v3309 = vmul.f32 %v3296, %v572
        %v3310 = vmul.f32 %v3298, %v572
        %v3311 = vmul.f32 %v3300, %v572
        %v3312 = vmul.f32 %v3302, %v572
        %v3313 = vmul.f32 %v3304, %v572
        %v3314 = vmul.f32 %v3306, %v572
        %v3315 = vadd.f32 %v3307, 1e-05
        %v3316 = vadd.f32 %v3308, 1e-05
        %v3317 = vadd.f32 %v3309, 1e-05
        %v3318 = vadd.f32 %v3310, 1e-05
        %v3319 = vadd.f32 %v3311, 1e-05
        %v3320 = vadd.f32 %v3312, 1e-05
        %v3321 = vadd.f32 %v3313, 1e-05
        %v3322 = vadd.f32 %v3314, 1e-05
        %v3323 = vrsqrt.pop %v3315
        %v3324 = vrsqrt.pop %v3316
        %v3325 = vrsqrt.pop %v3317
        %v3326 = vrsqrt.pop %v3318
        %v3327 = vrsqrt.pop %v3319
        %v3328 = vrsqrt.pop %v3320
        %v3329 = vrsqrt.pop %v3321
        %v3330 = vrsqrt.pop %v3322
        %v3331 = vmul.f32 %v3275, %v3323
        %v3332 = vmul.f32 %v3276, %v3324
        %v3333 = vmul.f32 %v3277, %v3325
        %v3334 = vmul.f32 %v3278, %v3326
        %v3335 = vmul.f32 %v3279, %v3327
        %v3336 = vmul.f32 %v3280, %v3328
        %v3337 = vmul.f32 %v3281, %v3329
        %v3338 = vmul.f32 %v3282, %v3330
        %v3340 = vlaneseq
        %v3341 = vshrl.u32 %v3340, 7
        %v3342 = vsub.s32 0, %v3341
        %v3343 = vrot.slane %v3249, %v3342
        %v3345 = vmul.f32 %v3331, %v3343
        %v3346 = vmul.f32 %v3332, %v3343
        %v3347 = vmul.f32 %v3333, %v3343
        %v3348 = vmul.f32 %v3334, %v3343
        %v3349 = vmul.f32 %v3335, %v3343
        %v3350 = vmul.f32 %v3336, %v3343
        %v3351 = vmul.f32 %v3337, %v3343
        %v3352 = vmul.f32 %v3338, %v3343
        %v3354 = vlaneseq
        %v3355 = vshrl.u32 %v3354, 7
        %v3356 = vsub.s32 0, %v3355
        %v3357 = vrot.slane %v3250, %v3356
        %v3359 = vadd.f32 %v3345, %v3357
        %v3360 = vadd.f32 %v3346, %v3357
        %v3361 = vadd.f32 %v3347, %v3357
        %v3362 = vadd.f32 %v3348, %v3357
        %v3363 = vadd.f32 %v3349, %v3357
        %v3364 = vadd.f32 %v3350, %v3357
        %v3365 = vadd.f32 %v3351, %v3357
        %v3366 = vadd.f32 %v3352, %v3357
        %v3367 = vpack.c.bf16 %v3360, %v3359
        %v3368 = vpack.c.bf16 %v3362, %v3361
        %v3369 = vpack.c.bf16 %v3364, %v3363
        %v3370 = vpack.c.bf16 %v3366, %v3365
        %v3371 = vld [vmem:[#allocation11] sm:$0xff]
        %v3372 = vld [vmem:[#allocation11 + $0x8] sm:$0xff]
        %v3373 = vld [vmem:[#allocation11 + $0x10] sm:$0xff]
        %v3374 = vld [vmem:[#allocation11 + $0x18] sm:$0xff]
        %v3375 = vld [vmem:[#allocation11 + $0x20] sm:$0xff]
        %v3376 = vld [vmem:[#allocation11 + $0x28] sm:$0xff]
        %v3377 = vld [vmem:[#allocation11 + $0x30] sm:$0xff]
        %v3378 = vld [vmem:[#allocation11 + $0x38] sm:$0xff]
        %v3379 = vld [vmem:[#allocation11 + $0x40] sm:$0xff]
        %v3380 = vld [vmem:[#allocation11 + $0x48] sm:$0xff]
        %v3381 = vld [vmem:[#allocation11 + $0x50] sm:$0xff]
        %v3382 = vld [vmem:[#allocation11 + $0x58] sm:$0xff]
        %v3383 = vld [vmem:[#allocation11 + $0x60] sm:$0xff]
        %v3384 = vld [vmem:[#allocation11 + $0x68] sm:$0xff]
        %v3385 = vld [vmem:[#allocation11 + $0x70] sm:$0xff]
        %v3386 = vld [vmem:[#allocation11 + $0x78] sm:$0xff]
        %v3387 = vld [vmem:[#allocation11 + $0x80] sm:$0xff]
        %v3388 = vld [vmem:[#allocation11 + $0x88] sm:$0xff]
        %v3389 = vld [vmem:[#allocation11 + $0x90] sm:$0xff]
        %v3390 = vld [vmem:[#allocation11 + $0x98] sm:$0xff]
        %v3391 = vld [vmem:[#allocation11 + $0xa0] sm:$0xff]
        %v3392 = vld [vmem:[#allocation11 + $0xa8] sm:$0xff]
        %v3393 = vld [vmem:[#allocation11 + $0xb0] sm:$0xff]
        %v3394 = vld [vmem:[#allocation11 + $0xb8] sm:$0xff]
        %v3395 = vld [vmem:[#allocation11 + $0xc0] sm:$0xff]
        %v3396 = vld [vmem:[#allocation11 + $0xc8] sm:$0xff]
        %v3397 = vld [vmem:[#allocation11 + $0xd0] sm:$0xff]
        %v3398 = vld [vmem:[#allocation11 + $0xd8] sm:$0xff]
        %v3399 = vld [vmem:[#allocation11 + $0xe0] sm:$0xff]
        %v3400 = vld [vmem:[#allocation11 + $0xe8] sm:$0xff]
        %v3401 = vld [vmem:[#allocation11 + $0xf0] sm:$0xff]
        %v3402 = vld [vmem:[#allocation11 + $0xf8] sm:$0xff]
        %v3403 = vld [vmem:[%s10] sm:$0xf]
        %v3405 = vlaneseq
        %v3406 = vshrl.u32 %v3405, 7
        %v3407 = vsub.s32 0, %v3406
        %v3408 = vrot.slane %v3403, %v3407
        %v3409 = vlaneseq
        %v3410 = vshrl.u32 %v3409, 7
        %v3411 = vsub.s32 1, %v3410
        %v3412 = vrot.slane %v3403, %v3411
        %v3413 = vlaneseq
        %v3414 = vshrl.u32 %v3413, 7
        %v3415 = vsub.s32 2, %v3414
        %v3416 = vrot.slane %v3403, %v3415
        %v3417 = vlaneseq
        %v3418 = vshrl.u32 %v3417, 7
        %v3419 = vsub.s32 3, %v3418
        %v3420 = vrot.slane %v3403, %v3419
        %v3457 = vunpack.c.l.b16 %v3371
        %v3458 = vunpack.c.h.b16 %v3371
        %v3459 = vunpack.c.l.b16 %v3372
        %v3460 = vunpack.c.h.b16 %v3372
        %v3461 = vunpack.c.l.b16 %v3373
        %v3462 = vunpack.c.h.b16 %v3373
        %v3463 = vunpack.c.l.b16 %v3374
        %v3464 = vunpack.c.h.b16 %v3374
        %v3465 = vunpack.c.l.b16 %v3375
        %v3466 = vunpack.c.h.b16 %v3375
        %v3467 = vunpack.c.l.b16 %v3376
        %v3468 = vunpack.c.h.b16 %v3376
        %v3469 = vunpack.c.l.b16 %v3377
        %v3470 = vunpack.c.h.b16 %v3377
        %v3471 = vunpack.c.l.b16 %v3378
        %v3472 = vunpack.c.h.b16 %v3378
        %v3473 = vunpack.c.l.b16 %v3379
        %v3474 = vunpack.c.h.b16 %v3379
        %v3475 = vunpack.c.l.b16 %v3380
        %v3476 = vunpack.c.h.b16 %v3380
        %v3477 = vunpack.c.l.b16 %v3381
        %v3478 = vunpack.c.h.b16 %v3381
        %v3479 = vunpack.c.l.b16 %v3382
        %v3480 = vunpack.c.h.b16 %v3382
        %v3481 = vunpack.c.l.b16 %v3383
        %v3482 = vunpack.c.h.b16 %v3383
        %v3483 = vunpack.c.l.b16 %v3384
        %v3484 = vunpack.c.h.b16 %v3384
        %v3485 = vunpack.c.l.b16 %v3385
        %v3486 = vunpack.c.h.b16 %v3385
        %v3487 = vunpack.c.l.b16 %v3386
        %v3488 = vunpack.c.h.b16 %v3386
        %v3489 = vunpack.c.l.b16 %v3387
        %v3490 = vunpack.c.h.b16 %v3387
        %v3491 = vunpack.c.l.b16 %v3388
        %v3492 = vunpack.c.h.b16 %v3388
        %v3493 = vunpack.c.l.b16 %v3389
        %v3494 = vunpack.c.h.b16 %v3389
        %v3495 = vunpack.c.l.b16 %v3390
        %v3496 = vunpack.c.h.b16 %v3390
        %v3497 = vunpack.c.l.b16 %v3391
        %v3498 = vunpack.c.h.b16 %v3391
        %v3499 = vunpack.c.l.b16 %v3392
        %v3500 = vunpack.c.h.b16 %v3392
        %v3501 = vunpack.c.l.b16 %v3393
        %v3502 = vunpack.c.h.b16 %v3393
        %v3503 = vunpack.c.l.b16 %v3394
        %v3504 = vunpack.c.h.b16 %v3394
        %v3505 = vunpack.c.l.b16 %v3395
        %v3506 = vunpack.c.h.b16 %v3395
        %v3507 = vunpack.c.l.b16 %v3396
        %v3508 = vunpack.c.h.b16 %v3396
        %v3509 = vunpack.c.l.b16 %v3397
        %v3510 = vunpack.c.h.b16 %v3397
        %v3511 = vunpack.c.l.b16 %v3398
        %v3512 = vunpack.c.h.b16 %v3398
        %v3513 = vunpack.c.l.b16 %v3399
        %v3514 = vunpack.c.h.b16 %v3399
        %v3515 = vunpack.c.l.b16 %v3400
        %v3516 = vunpack.c.h.b16 %v3400
        %v3517 = vunpack.c.l.b16 %v3401
        %v3518 = vunpack.c.h.b16 %v3401
        %v3519 = vunpack.c.l.b16 %v3402
        %v3520 = vunpack.c.h.b16 %v3402
        %v3521 = vpack.c.b16 %v3461, %v3457
        %v3522 = vpack.c.b16 %v3462, %v3458
        %v3523 = vpack.c.b16 %v3463, %v3459
        %v3524 = vpack.c.b16 %v3464, %v3460
        %v3525 = vpack.c.b16 %v3469, %v3465
        %v3526 = vpack.c.b16 %v3470, %v3466
        %v3527 = vpack.c.b16 %v3471, %v3467
        %v3528 = vpack.c.b16 %v3472, %v3468
        %v3529 = vpack.c.b16 %v3477, %v3473
        %v3530 = vpack.c.b16 %v3478, %v3474
        %v3531 = vpack.c.b16 %v3479, %v3475
        %v3532 = vpack.c.b16 %v3480, %v3476
        %v3533 = vpack.c.b16 %v3485, %v3481
        %v3534 = vpack.c.b16 %v3486, %v3482
        %v3535 = vpack.c.b16 %v3487, %v3483
        %v3536 = vpack.c.b16 %v3488, %v3484
        %v3537 = vpack.c.b16 %v3493, %v3489
        %v3538 = vpack.c.b16 %v3494, %v3490
        %v3539 = vpack.c.b16 %v3495, %v3491
        %v3540 = vpack.c.b16 %v3496, %v3492
        %v3541 = vpack.c.b16 %v3501, %v3497
        %v3542 = vpack.c.b16 %v3502, %v3498
        %v3543 = vpack.c.b16 %v3503, %v3499
        %v3544 = vpack.c.b16 %v3504, %v3500
        %v3545 = vpack.c.b16 %v3509, %v3505
        %v3546 = vpack.c.b16 %v3510, %v3506
        %v3547 = vpack.c.b16 %v3511, %v3507
        %v3548 = vpack.c.b16 %v3512, %v3508
        %v3549 = vpack.c.b16 %v3517, %v3513
        %v3550 = vpack.c.b16 %v3518, %v3514
        %v3551 = vpack.c.b16 %v3519, %v3515
        %v3552 = vpack.c.b16 %v3520, %v3516
        %3585 = vmatprep.subr.bf16.mxu0 %v3522
        %3586 = vmatpush1.bf16.msra.mxu0 %v3521
        %3587 = vmatprep.subr.bf16.mxu0 %v3526
        %3588 = vmatpush1.bf16.msra.mxu0 %v3525
        %3589 = vmatprep.subr.bf16.mxu0 %v3530
        %3590 = vmatpush1.bf16.msra.mxu0 %v3529
        %3591 = vmatprep.subr.bf16.mxu0 %v3534
        %3592 = vmatpush1.bf16.msra.mxu0 %v3533
        %3593 = vmatprep.subr.bf16.mxu0 %v3538
        %3594 = vmatpush1.bf16.msra.mxu0 %v3537
        %3595 = vmatprep.subr.bf16.mxu0 %v3542
        %3596 = vmatpush1.bf16.msra.mxu0 %v3541
        %3597 = vmatprep.subr.bf16.mxu0 %v3546
        %3598 = vmatpush1.bf16.msra.mxu0 %v3545
        %3599 = vmatprep.subr.bf16.mxu0 %v3550
        %3600 = vmatpush1.bf16.msra.mxu0 %v3549
        %3601 = vmatprep.subr.bf16.mxu0 0
        %3602 = vmatpush1.bf16.msra.mxu0 0
        %3603 = vmatprep.subr.bf16.mxu0 0
        %3604 = vmatpush1.bf16.msra.mxu0 0
        %3605 = vmatprep.subr.bf16.mxu0 0
        %3606 = vmatpush1.bf16.msra.mxu0 0
        %3607 = vmatprep.subr.bf16.mxu0 0
        %3608 = vmatpush1.bf16.msra.mxu0 0
        %3609 = vmatprep.subr.bf16.mxu0 0
        %3610 = vmatpush1.bf16.msra.mxu0 0
        %3611 = vmatprep.subr.bf16.mxu0 0
        %3612 = vmatpush1.bf16.msra.mxu0 0
        %3613 = vmatprep.subr.bf16.mxu0 0
        %3614 = vmatpush1.bf16.msra.mxu0 0
        %3615 = vmatprep.subr.bf16.mxu0 0
        %3616 = vmatpush1.bf16.msra.mxu0 0
        %3617 = vmatprep.mubr.bf16.mxu0 0
        %3618 = vmatmul.mubr.bf16.gmra.mrb[0].mxu0 %v3367
        %v3619 = vpop.f32.mrb[0].mxu0
        %v3620 = vadd.f32 %v3408, %v3619
        %v3621 = vpop.f32.mrb[0].mxu0
        %v3622 = vadd.f32 %v3412, %v3621
        %v3623 = vpop.f32.mrb[0].mxu0
        %v3624 = vadd.f32 %v3408, %v3623
        %v3625 = vpop.f32.mrb[0].mxu0
        %v3626 = vadd.f32 %v3412, %v3625
        %3627 = vmatprep.mubr.bf16.mxu0 0
        %3628 = vmatmul.mubr.bf16.gmra.mrb[0].mxu0 %v3368
        %v3629 = vpop.f32.mrb[0].mxu0
        %v3630 = vadd.f32 %v3408, %v3629
        %v3631 = vpop.f32.mrb[0].mxu0
        %v3632 = vadd.f32 %v3412, %v3631
        %v3633 = vpop.f32.mrb[0].mxu0
        %v3634 = vadd.f32 %v3408, %v3633
        %v3635 = vpop.f32.mrb[0].mxu0
        %v3636 = vadd.f32 %v3412, %v3635
        %3637 = vmatprep.mubr.bf16.mxu0 0
        %3638 = vmatmul.mubr.bf16.gmra.mrb[0].mxu0 %v3369
        %v3639 = vpop.f32.mrb[0].mxu0
        %v3640 = vadd.f32 %v3408, %v3639
        %v3641 = vpop.f32.mrb[0].mxu0
        %v3642 = vadd.f32 %v3412, %v3641
        %v3643 = vpop.f32.mrb[0].mxu0
        %v3644 = vadd.f32 %v3408, %v3643
        %v3645 = vpop.f32.mrb[0].mxu0
        %v3646 = vadd.f32 %v3412, %v3645
        %3647 = vmatprep.mubr.bf16.mxu0 0
        %3648 = vmatmul.mubr.bf16.gmra.mrb[0].mxu0 %v3370
        %v3649 = vpop.f32.mrb[0].mxu0
        %v3650 = vadd.f32 %v3408, %v3649
        %v3651 = vpop.f32.mrb[0].mxu0
        %v3652 = vadd.f32 %v3412, %v3651
        %v3653 = vpop.f32.mrb[0].mxu0
        %v3654 = vadd.f32 %v3408, %v3653
        %v3655 = vpop.f32.mrb[0].mxu0
        %v3656 = vadd.f32 %v3412, %v3655
        %3657 = vdwg.mxu0
        %3658 = vmatprep.subr.bf16.mxu0 %v3524
        %3659 = vmatpush1.bf16.msra.mxu0 %v3523
        %3660 = vmatprep.subr.bf16.mxu0 %v3528
        %3661 = vmatpush1.bf16.msra.mxu0 %v3527
        %3662 = vmatprep.subr.bf16.mxu0 %v3532
        %3663 = vmatpush1.bf16.msra.mxu0 %v3531
        %3664 = vmatprep.subr.bf16.mxu0 %v3536
        %3665 = vmatpush1.bf16.msra.mxu0 %v3535
        %3666 = vmatprep.subr.bf16.mxu0 %v3540
        %3667 = vmatpush1.bf16.msra.mxu0 %v3539
        %3668 = vmatprep.subr.bf16.mxu0 %v3544
        %3669 = vmatpush1.bf16.msra.mxu0 %v3543
        %3670 = vmatprep.subr.bf16.mxu0 %v3548
        %3671 = vmatpush1.bf16.msra.mxu0 %v3547
        %3672 = vmatprep.subr.bf16.mxu0 %v3552
        %3673 = vmatpush1.bf16.msra.mxu0 %v3551
        %3674 = vmatprep.subr.bf16.mxu0 0
        %3675 = vmatpush1.bf16.msra.mxu0 0
        %3676 = vmatprep.subr.bf16.mxu0 0
        %3677 = vmatpush1.bf16.msra.mxu0 0
        %3678 = vmatprep.subr.bf16.mxu0 0
        %3679 = vmatpush1.bf16.msra.mxu0 0
        %3680 = vmatprep.subr.bf16.mxu0 0
        %3681 = vmatpush1.bf16.msra.mxu0 0
        %3682 = vmatprep.subr.bf16.mxu0 0
        %3683 = vmatpush1.bf16.msra.mxu0 0
        %3684 = vmatprep.subr.bf16.mxu0 0
        %3685 = vmatpush1.bf16.msra.mxu0 0
        %3686 = vmatprep.subr.bf16.mxu0 0
        %3687 = vmatpush1.bf16.msra.mxu0 0
        %3688 = vmatprep.subr.bf16.mxu0 0
        %3689 = vmatpush1.bf16.msra.mxu0 0
        %3690 = vmatprep.mubr.bf16.mxu0 0
        %3691 = vmatmul.mubr.bf16.gmra.mrb[0].mxu0 %v3367
        %v3692 = vpop.f32.mrb[0].mxu0
        %v3693 = vadd.f32 %v3416, %v3692
        %v3694 = vpop.f32.mrb[0].mxu0
        %v3695 = vadd.f32 %v3420, %v3694
        %v3696 = vpop.f32.mrb[0].mxu0
        %v3697 = vadd.f32 %v3416, %v3696
        %v3698 = vpop.f32.mrb[0].mxu0
        %v3699 = vadd.f32 %v3420, %v3698
        %3700 = vmatprep.mubr.bf16.mxu0 0
        %3701 = vmatmul.mubr.bf16.gmra.mrb[0].mxu0 %v3368
        %v3702 = vpop.f32.mrb[0].mxu0
        %v3703 = vadd.f32 %v3416, %v3702
        %v3704 = vpop.f32.mrb[0].mxu0
        %v3705 = vadd.f32 %v3420, %v3704
        %v3706 = vpop.f32.mrb[0].mxu0
        %v3707 = vadd.f32 %v3416, %v3706
        %v3708 = vpop.f32.mrb[0].mxu0
        %v3709 = vadd.f32 %v3420, %v3708
        %3710 = vmatprep.mubr.bf16.mxu0 0
        %3711 = vmatmul.mubr.bf16.gmra.mrb[0].mxu0 %v3369
        %v3712 = vpop.f32.mrb[0].mxu0
        %v3713 = vadd.f32 %v3416, %v3712
        %v3714 = vpop.f32.mrb[0].mxu0
        %v3715 = vadd.f32 %v3420, %v3714
        %v3716 = vpop.f32.mrb[0].mxu0
        %v3717 = vadd.f32 %v3416, %v3716
        %v3718 = vpop.f32.mrb[0].mxu0
        %v3719 = vadd.f32 %v3420, %v3718
        %3720 = vmatprep.mubr.bf16.mxu0 0
        %3721 = vmatmul.mubr.bf16.gmra.mrb[0].mxu0 %v3370
        %v3722 = vpop.f32.mrb[0].mxu0
        %v3723 = vadd.f32 %v3416, %v3722
        %v3724 = vpop.f32.mrb[0].mxu0
        %v3725 = vadd.f32 %v3420, %v3724
        %v3726 = vpop.f32.mrb[0].mxu0
        %v3727 = vadd.f32 %v3416, %v3726
        %v3728 = vpop.f32.mrb[0].mxu0
        %v3729 = vadd.f32 %v3420, %v3728
        %3730 = vdwg.mxu0
        %v3731 = vmul.f32 %v3620, 0.5
        %v3732 = vmul.f32 %v3622, 0.5
        %v3733 = vmul.f32 %v3693, 0.5
        %v3734 = vmul.f32 %v3695, 0.5
        %v3735 = vmul.f32 %v3624, 0.5
        %v3736 = vmul.f32 %v3626, 0.5
        %v3737 = vmul.f32 %v3697, 0.5
        %v3738 = vmul.f32 %v3699, 0.5
        %v3739 = vmul.f32 %v3630, 0.5
        %v3740 = vmul.f32 %v3632, 0.5
        %v3741 = vmul.f32 %v3703, 0.5
        %v3742 = vmul.f32 %v3705, 0.5
        %v3743 = vmul.f32 %v3634, 0.5
        %v3744 = vmul.f32 %v3636, 0.5
        %v3745 = vmul.f32 %v3707, 0.5
        %v3746 = vmul.f32 %v3709, 0.5
        %v3747 = vmul.f32 %v3640, 0.5
        %v3748 = vmul.f32 %v3642, 0.5
        %v3749 = vmul.f32 %v3713, 0.5
        %v3750 = vmul.f32 %v3715, 0.5
        %v3751 = vmul.f32 %v3644, 0.5
        %v3752 = vmul.f32 %v3646, 0.5
        %v3753 = vmul.f32 %v3717, 0.5
        %v3754 = vmul.f32 %v3719, 0.5
        %v3755 = vmul.f32 %v3650, 0.5
        %v3756 = vmul.f32 %v3652, 0.5
        %v3757 = vmul.f32 %v3723, 0.5
        %v3758 = vmul.f32 %v3725, 0.5
        %v3759 = vmul.f32 %v3654, 0.5
        %v3760 = vmul.f32 %v3656, 0.5
        %v3761 = vmul.f32 %v3727, 0.5
        %v3762 = vmul.f32 %v3729, 0.5
        %v3763 = vmul.f32 %v3620, 0.70710677
        %v3764 = vmul.f32 %v3622, 0.70710677
        %v3765 = vmul.f32 %v3693, 0.70710677
        %v3766 = vmul.f32 %v3695, 0.70710677
        %v3767 = vmul.f32 %v3624, 0.70710677
        %v3768 = vmul.f32 %v3626, 0.70710677
        %v3769 = vmul.f32 %v3697, 0.70710677
        %v3770 = vmul.f32 %v3699, 0.70710677
        %v3771 = vmul.f32 %v3630, 0.70710677
        %v3772 = vmul.f32 %v3632, 0.70710677
        %v3773 = vmul.f32 %v3703, 0.70710677
        %v3774 = vmul.f32 %v3705, 0.70710677
        %v3775 = vmul.f32 %v3634, 0.70710677
        %v3776 = vmul.f32 %v3636, 0.70710677
        %v3777 = vmul.f32 %v3707, 0.70710677
        %v3778 = vmul.f32 %v3709, 0.70710677
        %v3779 = vmul.f32 %v3640, 0.70710677
        %v3780 = vmul.f32 %v3642, 0.70710677
        %v3781 = vmul.f32 %v3713, 0.70710677
        %v3782 = vmul.f32 %v3715, 0.70710677
        %v3783 = vmul.f32 %v3644, 0.70710677
        %v3784 = vmul.f32 %v3646, 0.70710677
        %v3785 = vmul.f32 %v3717, 0.70710677
        %v3786 = vmul.f32 %v3719, 0.70710677
        %v3787 = vmul.f32 %v3650, 0.70710677
        %v3788 = vmul.f32 %v3652, 0.70710677
        %v3789 = vmul.f32 %v3723, 0.70710677
        %v3790 = vmul.f32 %v3725, 0.70710677
        %v3791 = vmul.f32 %v3654, 0.70710677
        %v3792 = vmul.f32 %v3656, 0.70710677
        %v3793 = vmul.f32 %v3727, 0.70710677
        %v3794 = vmul.f32 %v3729, 0.70710677
        %vm3795 = vcmp.ge.f32.partialorder %v3763, 0.0
        %vm3796 = vcmp.ge.f32.partialorder %v3764, 0.0
        %vm3797 = vcmp.ge.f32.partialorder %v3765, 0.0
        %vm3798 = vcmp.ge.f32.partialorder %v3766, 0.0
        %vm3799 = vcmp.ge.f32.partialorder %v3767, 0.0
        %vm3800 = vcmp.ge.f32.partialorder %v3768, 0.0
        %vm3801 = vcmp.ge.f32.partialorder %v3769, 0.0
        %vm3802 = vcmp.ge.f32.partialorder %v3770, 0.0
        %vm3803 = vcmp.ge.f32.partialorder %v3771, 0.0
        %vm3804 = vcmp.ge.f32.partialorder %v3772, 0.0
        %vm3805 = vcmp.ge.f32.partialorder %v3773, 0.0
        %vm3806 = vcmp.ge.f32.partialorder %v3774, 0.0
        %vm3807 = vcmp.ge.f32.partialorder %v3775, 0.0
        %vm3808 = vcmp.ge.f32.partialorder %v3776, 0.0
        %vm3809 = vcmp.ge.f32.partialorder %v3777, 0.0
        %vm3810 = vcmp.ge.f32.partialorder %v3778, 0.0
        %vm3811 = vcmp.ge.f32.partialorder %v3779, 0.0
        %vm3812 = vcmp.ge.f32.partialorder %v3780, 0.0
        %vm3813 = vcmp.ge.f32.partialorder %v3781, 0.0
        %vm3814 = vcmp.ge.f32.partialorder %v3782, 0.0
        %vm3815 = vcmp.ge.f32.partialorder %v3783, 0.0
        %vm3816 = vcmp.ge.f32.partialorder %v3784, 0.0
        %vm3817 = vcmp.ge.f32.partialorder %v3785, 0.0
        %vm3818 = vcmp.ge.f32.partialorder %v3786, 0.0
        %vm3819 = vcmp.ge.f32.partialorder %v3787, 0.0
        %vm3820 = vcmp.ge.f32.partialorder %v3788, 0.0
        %vm3821 = vcmp.ge.f32.partialorder %v3789, 0.0
        %vm3822 = vcmp.ge.f32.partialorder %v3790, 0.0
        %vm3823 = vcmp.ge.f32.partialorder %v3791, 0.0
        %vm3824 = vcmp.ge.f32.partialorder %v3792, 0.0
        %vm3825 = vcmp.ge.f32.partialorder %v3793, 0.0
        %vm3826 = vcmp.ge.f32.partialorder %v3794, 0.0
        %v3827 = vsel %vm3795, 1.0, -1.0
        %v3828 = vsel %vm3796, 1.0, -1.0
        %v3829 = vsel %vm3797, 1.0, -1.0
        %v3830 = vsel %vm3798, 1.0, -1.0
        %v3831 = vsel %vm3799, 1.0, -1.0
        %v3832 = vsel %vm3800, 1.0, -1.0
        %v3833 = vsel %vm3801, 1.0, -1.0
        %v3834 = vsel %vm3802, 1.0, -1.0
        %v3835 = vsel %vm3803, 1.0, -1.0
        %v3836 = vsel %vm3804, 1.0, -1.0
        %v3837 = vsel %vm3805, 1.0, -1.0
        %v3838 = vsel %vm3806, 1.0, -1.0
        %v3839 = vsel %vm3807, 1.0, -1.0
        %v3840 = vsel %vm3808, 1.0, -1.0
        %v3841 = vsel %vm3809, 1.0, -1.0
        %v3842 = vsel %vm3810, 1.0, -1.0
        %v3843 = vsel %vm3811, 1.0, -1.0
        %v3844 = vsel %vm3812, 1.0, -1.0
        %v3845 = vsel %vm3813, 1.0, -1.0
        %v3846 = vsel %vm3814, 1.0, -1.0
        %v3847 = vsel %vm3815, 1.0, -1.0
        %v3848 = vsel %vm3816, 1.0, -1.0
        %v3849 = vsel %vm3817, 1.0, -1.0
        %v3850 = vsel %vm3818, 1.0, -1.0
        %v3851 = vsel %vm3819, 1.0, -1.0
        %v3852 = vsel %vm3820, 1.0, -1.0
        %v3853 = vsel %vm3821, 1.0, -1.0
        %v3854 = vsel %vm3822, 1.0, -1.0
        %v3855 = vsel %vm3823, 1.0, -1.0
        %v3856 = vsel %vm3824, 1.0, -1.0
        %v3857 = vsel %vm3825, 1.0, -1.0
        %v3858 = vsel %vm3826, 1.0, -1.0
        %v3859 = vand.u32 2147483647, %v3763
        %v3860 = vand.u32 2147483647, %v3764
        %v3861 = vand.u32 2147483647, %v3765
        %v3862 = vand.u32 2147483647, %v3766
        %v3863 = vand.u32 2147483647, %v3767
        %v3864 = vand.u32 2147483647, %v3768
        %v3865 = vand.u32 2147483647, %v3769
        %v3866 = vand.u32 2147483647, %v3770
        %v3867 = vand.u32 2147483647, %v3771
        %v3868 = vand.u32 2147483647, %v3772
        %v3869 = vand.u32 2147483647, %v3773
        %v3870 = vand.u32 2147483647, %v3774
        %v3871 = vand.u32 2147483647, %v3775
        %v3872 = vand.u32 2147483647, %v3776
        %v3873 = vand.u32 2147483647, %v3777
        %v3874 = vand.u32 2147483647, %v3778
        %v3875 = vand.u32 2147483647, %v3779
        %v3876 = vand.u32 2147483647, %v3780
        %v3877 = vand.u32 2147483647, %v3781
        %v3878 = vand.u32 2147483647, %v3782
        %v3879 = vand.u32 2147483647, %v3783
        %v3880 = vand.u32 2147483647, %v3784
        %v3881 = vand.u32 2147483647, %v3785
        %v3882 = vand.u32 2147483647, %v3786
        %v3883 = vand.u32 2147483647, %v3787
        %v3884 = vand.u32 2147483647, %v3788
        %v3885 = vand.u32 2147483647, %v3789
        %v3886 = vand.u32 2147483647, %v3790
        %v3887 = vand.u32 2147483647, %v3791
        %v3888 = vand.u32 2147483647, %v3792
        %v3889 = vand.u32 2147483647, %v3793
        %v3890 = vand.u32 2147483647, %v3794
        %v3891 = vmul.f32 %v3859, 0.3275911
        %v3892 = vmul.f32 %v3860, 0.3275911
        %v3893 = vmul.f32 %v3861, 0.3275911
        %v3894 = vmul.f32 %v3862, 0.3275911
        %v3895 = vmul.f32 %v3863, 0.3275911
        %v3896 = vmul.f32 %v3864, 0.3275911
        %v3897 = vmul.f32 %v3865, 0.3275911
        %v3898 = vmul.f32 %v3866, 0.3275911
        %v3899 = vmul.f32 %v3867, 0.3275911
        %v3900 = vmul.f32 %v3868, 0.3275911
        %v3901 = vmul.f32 %v3869, 0.3275911
        %v3902 = vmul.f32 %v3870, 0.3275911
        %v3903 = vmul.f32 %v3871, 0.3275911
        %v3904 = vmul.f32 %v3872, 0.3275911
        %v3905 = vmul.f32 %v3873, 0.3275911
        %v3906 = vmul.f32 %v3874, 0.3275911
        %v3907 = vmul.f32 %v3875, 0.3275911
        %v3908 = vmul.f32 %v3876, 0.3275911
        %v3909 = vmul.f32 %v3877, 0.3275911
        %v3910 = vmul.f32 %v3878, 0.3275911
        %v3911 = vmul.f32 %v3879, 0.3275911
        %v3912 = vmul.f32 %v3880, 0.3275911
        %v3913 = vmul.f32 %v3881, 0.3275911
        %v3914 = vmul.f32 %v3882, 0.3275911
        %v3915 = vmul.f32 %v3883, 0.3275911
        %v3916 = vmul.f32 %v3884, 0.3275911
        %v3917 = vmul.f32 %v3885, 0.3275911
        %v3918 = vmul.f32 %v3886, 0.3275911
        %v3919 = vmul.f32 %v3887, 0.3275911
        %v3920 = vmul.f32 %v3888, 0.3275911
        %v3921 = vmul.f32 %v3889, 0.3275911
        %v3922 = vmul.f32 %v3890, 0.3275911
        %v3923 = vadd.f32 %v3891, 1.0
        %v3924 = vadd.f32 %v3892, 1.0
        %v3925 = vadd.f32 %v3893, 1.0
        %v3926 = vadd.f32 %v3894, 1.0
        %v3927 = vadd.f32 %v3895, 1.0
        %v3928 = vadd.f32 %v3896, 1.0
        %v3929 = vadd.f32 %v3897, 1.0
        %v3930 = vadd.f32 %v3898, 1.0
        %v3931 = vadd.f32 %v3899, 1.0
        %v3932 = vadd.f32 %v3900, 1.0
        %v3933 = vadd.f32 %v3901, 1.0
        %v3934 = vadd.f32 %v3902, 1.0
        %v3935 = vadd.f32 %v3903, 1.0
        %v3936 = vadd.f32 %v3904, 1.0
        %v3937 = vadd.f32 %v3905, 1.0
        %v3938 = vadd.f32 %v3906, 1.0
        %v3939 = vadd.f32 %v3907, 1.0
        %v3940 = vadd.f32 %v3908, 1.0
        %v3941 = vadd.f32 %v3909, 1.0
        %v3942 = vadd.f32 %v3910, 1.0
        %v3943 = vadd.f32 %v3911, 1.0
        %v3944 = vadd.f32 %v3912, 1.0
        %v3945 = vadd.f32 %v3913, 1.0
        %v3946 = vadd.f32 %v3914, 1.0
        %v3947 = vadd.f32 %v3915, 1.0
        %v3948 = vadd.f32 %v3916, 1.0
        %v3949 = vadd.f32 %v3917, 1.0
        %v3950 = vadd.f32 %v3918, 1.0
        %v3951 = vadd.f32 %v3919, 1.0
        %v3952 = vadd.f32 %v3920, 1.0
        %v3953 = vadd.f32 %v3921, 1.0
        %v3954 = vadd.f32 %v3922, 1.0
        %v3955 = vrcp.pop %v3923
        %v3956 = vmul.f32 1.0, %v3955
        %v3957 = vrcp.pop %v3924
        %v3958 = vmul.f32 1.0, %v3957
        %v3959 = vrcp.pop %v3925
        %v3960 = vmul.f32 1.0, %v3959
        %v3961 = vrcp.pop %v3926
        %v3962 = vmul.f32 1.0, %v3961
        %v3963 = vrcp.pop %v3927
        %v3964 = vmul.f32 1.0, %v3963
        %v3965 = vrcp.pop %v3928
        %v3966 = vmul.f32 1.0, %v3965
        %v3967 = vrcp.pop %v3929
        %v3968 = vmul.f32 1.0, %v3967
        %v3969 = vrcp.pop %v3930
        %v3970 = vmul.f32 1.0, %v3969
        %v3971 = vrcp.pop %v3931
        %v3972 = vmul.f32 1.0, %v3971
        %v3973 = vrcp.pop %v3932
        %v3974 = vmul.f32 1.0, %v3973
        %v3975 = vrcp.pop %v3933
        %v3976 = vmul.f32 1.0, %v3975
        %v3977 = vrcp.pop %v3934
        %v3978 = vmul.f32 1.0, %v3977
        %v3979 = vrcp.pop %v3935
        %v3980 = vmul.f32 1.0, %v3979
        %v3981 = vrcp.pop %v3936
        %v3982 = vmul.f32 1.0, %v3981
        %v3983 = vrcp.pop %v3937
        %v3984 = vmul.f32 1.0, %v3983
        %v3985 = vrcp.pop %v3938
        %v3986 = vmul.f32 1.0, %v3985
        %v3987 = vrcp.pop %v3939
        %v3988 = vmul.f32 1.0, %v3987
        %v3989 = vrcp.pop %v3940
        %v3990 = vmul.f32 1.0, %v3989
        %v3991 = vrcp.pop %v3941
        %v3992 = vmul.f32 1.0, %v3991
        %v3993 = vrcp.pop %v3942
        %v3994 = vmul.f32 1.0, %v3993
        %v3995 = vrcp.pop %v3943
        %v3996 = vmul.f32 1.0, %v3995
        %v3997 = vrcp.pop %v3944
        %v3998 = vmul.f32 1.0, %v3997
        %v3999 = vrcp.pop %v3945
        %v4000 = vmul.f32 1.0, %v3999
        %v4001 = vrcp.pop %v3946
        %v4002 = vmul.f32 1.0, %v4001
        %v4003 = vrcp.pop %v3947
        %v4004 = vmul.f32 1.0, %v4003
        %v4005 = vrcp.pop %v3948
        %v4006 = vmul.f32 1.0, %v4005
        %v4007 = vrcp.pop %v3949
        %v4008 = vmul.f32 1.0, %v4007
        %v4009 = vrcp.pop %v3950
        %v4010 = vmul.f32 1.0, %v4009
        %v4011 = vrcp.pop %v3951
        %v4012 = vmul.f32 1.0, %v4011
        %v4013 = vrcp.pop %v3952
        %v4014 = vmul.f32 1.0, %v4013
        %v4015 = vrcp.pop %v3953
        %v4016 = vmul.f32 1.0, %v4015
        %v4017 = vrcp.pop %v3954
        %v4018 = vmul.f32 1.0, %v4017
        %v4019 = vmul.f32 %v3956, 1.0614054
        %v4020 = vmul.f32 %v3958, 1.0614054
        %v4021 = vmul.f32 %v3960, 1.0614054
        %v4022 = vmul.f32 %v3962, 1.0614054
        %v4023 = vmul.f32 %v3964, 1.0614054
        %v4024 = vmul.f32 %v3966, 1.0614054
        %v4025 = vmul.f32 %v3968, 1.0614054
        %v4026 = vmul.f32 %v3970, 1.0614054
        %v4027 = vmul.f32 %v3972, 1.0614054
        %v4028 = vmul.f32 %v3974, 1.0614054
        %v4029 = vmul.f32 %v3976, 1.0614054
        %v4030 = vmul.f32 %v3978, 1.0614054
        %v4031 = vmul.f32 %v3980, 1.0614054
        %v4032 = vmul.f32 %v3982, 1.0614054
        %v4033 = vmul.f32 %v3984, 1.0614054
        %v4034 = vmul.f32 %v3986, 1.0614054
        %v4035 = vmul.f32 %v3988, 1.0614054
        %v4036 = vmul.f32 %v3990, 1.0614054
        %v4037 = vmul.f32 %v3992, 1.0614054
        %v4038 = vmul.f32 %v3994, 1.0614054
        %v4039 = vmul.f32 %v3996, 1.0614054
        %v4040 = vmul.f32 %v3998, 1.0614054
        %v4041 = vmul.f32 %v4000, 1.0614054
        %v4042 = vmul.f32 %v4002, 1.0614054
        %v4043 = vmul.f32 %v4004, 1.0614054
        %v4044 = vmul.f32 %v4006, 1.0614054
        %v4045 = vmul.f32 %v4008, 1.0614054
        %v4046 = vmul.f32 %v4010, 1.0614054
        %v4047 = vmul.f32 %v4012, 1.0614054
        %v4048 = vmul.f32 %v4014, 1.0614054
        %v4049 = vmul.f32 %v4016, 1.0614054
        %v4050 = vmul.f32 %v4018, 1.0614054
        %v4051 = vadd.f32 %v4019, -1.4531521
        %v4052 = vadd.f32 %v4020, -1.4531521
        %v4053 = vadd.f32 %v4021, -1.4531521
        %v4054 = vadd.f32 %v4022, -1.4531521
        %v4055 = vadd.f32 %v4023, -1.4531521
        %v4056 = vadd.f32 %v4024, -1.4531521
        %v4057 = vadd.f32 %v4025, -1.4531521
        %v4058 = vadd.f32 %v4026, -1.4531521
        %v4059 = vadd.f32 %v4027, -1.4531521
        %v4060 = vadd.f32 %v4028, -1.4531521
        %v4061 = vadd.f32 %v4029, -1.4531521
        %v4062 = vadd.f32 %v4030, -1.4531521
        %v4063 = vadd.f32 %v4031, -1.4531521
        %v4064 = vadd.f32 %v4032, -1.4531521
        %v4065 = vadd.f32 %v4033, -1.4531521
        %v4066 = vadd.f32 %v4034, -1.4531521
        %v4067 = vadd.f32 %v4035, -1.4531521
        %v4068 = vadd.f32 %v4036, -1.4531521
        %v4069 = vadd.f32 %v4037, -1.4531521
        %v4070 = vadd.f32 %v4038, -1.4531521
        %v4071 = vadd.f32 %v4039, -1.4531521
        %v4072 = vadd.f32 %v4040, -1.4531521
        %v4073 = vadd.f32 %v4041, -1.4531521
        %v4074 = vadd.f32 %v4042, -1.4531521
        %v4075 = vadd.f32 %v4043, -1.4531521
        %v4076 = vadd.f32 %v4044, -1.4531521
        %v4077 = vadd.f32 %v4045, -1.4531521
        %v4078 = vadd.f32 %v4046, -1.4531521
        %v4079 = vadd.f32 %v4047, -1.4531521
        %v4080 = vadd.f32 %v4048, -1.4531521
        %v4081 = vadd.f32 %v4049, -1.4531521
        %v4082 = vadd.f32 %v4050, -1.4531521
        %v4083 = vmul.f32 %v4051, %v3956
        %v4084 = vmul.f32 %v4052, %v3958
        %v4085 = vmul.f32 %v4053, %v3960
        %v4086 = vmul.f32 %v4054, %v3962
        %v4087 = vmul.f32 %v4055, %v3964
        %v4088 = vmul.f32 %v4056, %v3966
        %v4089 = vmul.f32 %v4057, %v3968
        %v4090 = vmul.f32 %v4058, %v3970
        %v4091 = vmul.f32 %v4059, %v3972
        %v4092 = vmul.f32 %v4060, %v3974
        %v4093 = vmul.f32 %v4061, %v3976
        %v4094 = vmul.f32 %v4062, %v3978
        %v4095 = vmul.f32 %v4063, %v3980
        %v4096 = vmul.f32 %v4064, %v3982
        %v4097 = vmul.f32 %v4065, %v3984
        %v4098 = vmul.f32 %v4066, %v3986
        %v4099 = vmul.f32 %v4067, %v3988
        %v4100 = vmul.f32 %v4068, %v3990
        %v4101 = vmul.f32 %v4069, %v3992
        %v4102 = vmul.f32 %v4070, %v3994
        %v4103 = vmul.f32 %v4071, %v3996
        %v4104 = vmul.f32 %v4072, %v3998
        %v4105 = vmul.f32 %v4073, %v4000
        %v4106 = vmul.f32 %v4074, %v4002
        %v4107 = vmul.f32 %v4075, %v4004
        %v4108 = vmul.f32 %v4076, %v4006
        %v4109 = vmul.f32 %v4077, %v4008
        %v4110 = vmul.f32 %v4078, %v4010
        %v4111 = vmul.f32 %v4079, %v4012
        %v4112 = vmul.f32 %v4080, %v4014
        %v4113 = vmul.f32 %v4081, %v4016
        %v4114 = vmul.f32 %v4082, %v4018
        %v4115 = vadd.f32 %v4083, 1.4214138
        %v4116 = vadd.f32 %v4084, 1.4214138
        %v4117 = vadd.f32 %v4085, 1.4214138
        %v4118 = vadd.f32 %v4086, 1.4214138
        %v4119 = vadd.f32 %v4087, 1.4214138
        %v4120 = vadd.f32 %v4088, 1.4214138
        %v4121 = vadd.f32 %v4089, 1.4214138
        %v4122 = vadd.f32 %v4090, 1.4214138
        %v4123 = vadd.f32 %v4091, 1.4214138
        %v4124 = vadd.f32 %v4092, 1.4214138
        %v4125 = vadd.f32 %v4093, 1.4214138
        %v4126 = vadd.f32 %v4094, 1.4214138
        %v4127 = vadd.f32 %v4095, 1.4214138
        %v4128 = vadd.f32 %v4096, 1.4214138
        %v4129 = vadd.f32 %v4097, 1.4214138
        %v4130 = vadd.f32 %v4098, 1.4214138
        %v4131 = vadd.f32 %v4099, 1.4214138
        %v4132 = vadd.f32 %v4100, 1.4214138
        %v4133 = vadd.f32 %v4101, 1.4214138
        %v4134 = vadd.f32 %v4102, 1.4214138
        %v4135 = vadd.f32 %v4103, 1.4214138
        %v4136 = vadd.f32 %v4104, 1.4214138
        %v4137 = vadd.f32 %v4105, 1.4214138
        %v4138 = vadd.f32 %v4106, 1.4214138
        %v4139 = vadd.f32 %v4107, 1.4214138
        %v4140 = vadd.f32 %v4108, 1.4214138
        %v4141 = vadd.f32 %v4109, 1.4214138
        %v4142 = vadd.f32 %v4110, 1.4214138
        %v4143 = vadd.f32 %v4111, 1.4214138
        %v4144 = vadd.f32 %v4112, 1.4214138
        %v4145 = vadd.f32 %v4113, 1.4214138
        %v4146 = vadd.f32 %v4114, 1.4214138
        %v4147 = vmul.f32 %v4115, %v3956
        %v4148 = vmul.f32 %v4116, %v3958
        %v4149 = vmul.f32 %v4117, %v3960
        %v4150 = vmul.f32 %v4118, %v3962
        %v4151 = vmul.f32 %v4119, %v3964
        %v4152 = vmul.f32 %v4120, %v3966
        %v4153 = vmul.f32 %v4121, %v3968
        %v4154 = vmul.f32 %v4122, %v3970
        %v4155 = vmul.f32 %v4123, %v3972
        %v4156 = vmul.f32 %v4124, %v3974
        %v4157 = vmul.f32 %v4125, %v3976
        %v4158 = vmul.f32 %v4126, %v3978
        %v4159 = vmul.f32 %v4127, %v3980
        %v4160 = vmul.f32 %v4128, %v3982
        %v4161 = vmul.f32 %v4129, %v3984
        %v4162 = vmul.f32 %v4130, %v3986
        %v4163 = vmul.f32 %v4131, %v3988
        %v4164 = vmul.f32 %v4132, %v3990
        %v4165 = vmul.f32 %v4133, %v3992
        %v4166 = vmul.f32 %v4134, %v3994
        %v4167 = vmul.f32 %v4135, %v3996
        %v4168 = vmul.f32 %v4136, %v3998
        %v4169 = vmul.f32 %v4137, %v4000
        %v4170 = vmul.f32 %v4138, %v4002
        %v4171 = vmul.f32 %v4139, %v4004
        %v4172 = vmul.f32 %v4140, %v4006
        %v4173 = vmul.f32 %v4141, %v4008
        %v4174 = vmul.f32 %v4142, %v4010
        %v4175 = vmul.f32 %v4143, %v4012
        %v4176 = vmul.f32 %v4144, %v4014
        %v4177 = vmul.f32 %v4145, %v4016
        %v4178 = vmul.f32 %v4146, %v4018
        %v4179 = vadd.f32 %v4147, -0.28449672
        %v4180 = vadd.f32 %v4148, -0.28449672
        %v4181 = vadd.f32 %v4149, -0.28449672
        %v4182 = vadd.f32 %v4150, -0.28449672
        %v4183 = vadd.f32 %v4151, -0.28449672
        %v4184 = vadd.f32 %v4152, -0.28449672
        %v4185 = vadd.f32 %v4153, -0.28449672
        %v4186 = vadd.f32 %v4154, -0.28449672
        %v4187 = vadd.f32 %v4155, -0.28449672
        %v4188 = vadd.f32 %v4156, -0.28449672
        %v4189 = vadd.f32 %v4157, -0.28449672
        %v4190 = vadd.f32 %v4158, -0.28449672
        %v4191 = vadd.f32 %v4159, -0.28449672
        %v4192 = vadd.f32 %v4160, -0.28449672
        %v4193 = vadd.f32 %v4161, -0.28449672
        %v4194 = vadd.f32 %v4162, -0.28449672
        %v4195 = vadd.f32 %v4163, -0.28449672
        %v4196 = vadd.f32 %v4164, -0.28449672
        %v4197 = vadd.f32 %v4165, -0.28449672
        %v4198 = vadd.f32 %v4166, -0.28449672
        %v4199 = vadd.f32 %v4167, -0.28449672
        %v4200 = vadd.f32 %v4168, -0.28449672
        %v4201 = vadd.f32 %v4169, -0.28449672
        %v4202 = vadd.f32 %v4170, -0.28449672
        %v4203 = vadd.f32 %v4171, -0.28449672
        %v4204 = vadd.f32 %v4172, -0.28449672
        %v4205 = vadd.f32 %v4173, -0.28449672
        %v4206 = vadd.f32 %v4174, -0.28449672
        %v4207 = vadd.f32 %v4175, -0.28449672
        %v4208 = vadd.f32 %v4176, -0.28449672
        %v4209 = vadd.f32 %v4177, -0.28449672
        %v4210 = vadd.f32 %v4178, -0.28449672
        %v4211 = vmul.f32 %v4179, %v3956
        %v4212 = vmul.f32 %v4180, %v3958
        %v4213 = vmul.f32 %v4181, %v3960
        %v4214 = vmul.f32 %v4182, %v3962
        %v4215 = vmul.f32 %v4183, %v3964
        %v4216 = vmul.f32 %v4184, %v3966
        %v4217 = vmul.f32 %v4185, %v3968
        %v4218 = vmul.f32 %v4186, %v3970
        %v4219 = vmul.f32 %v4187, %v3972
        %v4220 = vmul.f32 %v4188, %v3974
        %v4221 = vmul.f32 %v4189, %v3976
        %v4222 = vmul.f32 %v4190, %v3978
        %v4223 = vmul.f32 %v4191, %v3980
        %v4224 = vmul.f32 %v4192, %v3982
        %v4225 = vmul.f32 %v4193, %v3984
        %v4226 = vmul.f32 %v4194, %v3986
        %v4227 = vmul.f32 %v4195, %v3988
        %v4228 = vmul.f32 %v4196, %v3990
        %v4229 = vmul.f32 %v4197, %v3992
        %v4230 = vmul.f32 %v4198, %v3994
        %v4231 = vmul.f32 %v4199, %v3996
        %v4232 = vmul.f32 %v4200, %v3998
        %v4233 = vmul.f32 %v4201, %v4000
        %v4234 = vmul.f32 %v4202, %v4002
        %v4235 = vmul.f32 %v4203, %v4004
        %v4236 = vmul.f32 %v4204, %v4006
        %v4237 = vmul.f32 %v4205, %v4008
        %v4238 = vmul.f32 %v4206, %v4010
        %v4239 = vmul.f32 %v4207, %v4012
        %v4240 = vmul.f32 %v4208, %v4014
        %v4241 = vmul.f32 %v4209, %v4016
        %v4242 = vmul.f32 %v4210, %v4018
        %v4243 = vadd.f32 %v4211, 0.2548296
        %v4244 = vadd.f32 %v4212, 0.2548296
        %v4245 = vadd.f32 %v4213, 0.2548296
        %v4246 = vadd.f32 %v4214, 0.2548296
        %v4247 = vadd.f32 %v4215, 0.2548296
        %v4248 = vadd.f32 %v4216, 0.2548296
        %v4249 = vadd.f32 %v4217, 0.2548296
        %v4250 = vadd.f32 %v4218, 0.2548296
        %v4251 = vadd.f32 %v4219, 0.2548296
        %v4252 = vadd.f32 %v4220, 0.2548296
        %v4253 = vadd.f32 %v4221, 0.2548296
        %v4254 = vadd.f32 %v4222, 0.2548296
        %v4255 = vadd.f32 %v4223, 0.2548296
        %v4256 = vadd.f32 %v4224, 0.2548296
        %v4257 = vadd.f32 %v4225, 0.2548296
        %v4258 = vadd.f32 %v4226, 0.2548296
        %v4259 = vadd.f32 %v4227, 0.2548296
        %v4260 = vadd.f32 %v4228, 0.2548296
        %v4261 = vadd.f32 %v4229, 0.2548296
        %v4262 = vadd.f32 %v4230, 0.2548296
        %v4263 = vadd.f32 %v4231, 0.2548296
        %v4264 = vadd.f32 %v4232, 0.2548296
        %v4265 = vadd.f32 %v4233, 0.2548296
        %v4266 = vadd.f32 %v4234, 0.2548296
        %v4267 = vadd.f32 %v4235, 0.2548296
        %v4268 = vadd.f32 %v4236, 0.2548296
        %v4269 = vadd.f32 %v4237, 0.2548296
        %v4270 = vadd.f32 %v4238, 0.2548296
        %v4271 = vadd.f32 %v4239, 0.2548296
        %v4272 = vadd.f32 %v4240, 0.2548296
        %v4273 = vadd.f32 %v4241, 0.2548296
        %v4274 = vadd.f32 %v4242, 0.2548296
        %v4275 = vmul.f32 %v4243, %v3956
        %v4276 = vmul.f32 %v4244, %v3958
        %v4277 = vmul.f32 %v4245, %v3960
        %v4278 = vmul.f32 %v4246, %v3962
        %v4279 = vmul.f32 %v4247, %v3964
        %v4280 = vmul.f32 %v4248, %v3966
        %v4281 = vmul.f32 %v4249, %v3968
        %v4282 = vmul.f32 %v4250, %v3970
        %v4283 = vmul.f32 %v4251, %v3972
        %v4284 = vmul.f32 %v4252, %v3974
        %v4285 = vmul.f32 %v4253, %v3976
        %v4286 = vmul.f32 %v4254, %v3978
        %v4287 = vmul.f32 %v4255, %v3980
        %v4288 = vmul.f32 %v4256, %v3982
        %v4289 = vmul.f32 %v4257, %v3984
        %v4290 = vmul.f32 %v4258, %v3986
        %v4291 = vmul.f32 %v4259, %v3988
        %v4292 = vmul.f32 %v4260, %v3990
        %v4293 = vmul.f32 %v4261, %v3992
        %v4294 = vmul.f32 %v4262, %v3994
        %v4295 = vmul.f32 %v4263, %v3996
        %v4296 = vmul.f32 %v4264, %v3998
        %v4297 = vmul.f32 %v4265, %v4000
        %v4298 = vmul.f32 %v4266, %v4002
        %v4299 = vmul.f32 %v4267, %v4004
        %v4300 = vmul.f32 %v4268, %v4006
        %v4301 = vmul.f32 %v4269, %v4008
        %v4302 = vmul.f32 %v4270, %v4010
        %v4303 = vmul.f32 %v4271, %v4012
        %v4304 = vmul.f32 %v4272, %v4014
        %v4305 = vmul.f32 %v4273, %v4016
        %v4306 = vmul.f32 %v4274, %v4018
        %v4307 = vsub.f32 0.0, %v3859
        %v4308 = vsub.f32 0.0, %v3860
        %v4309 = vsub.f32 0.0, %v3861
        %v4310 = vsub.f32 0.0, %v3862
        %v4311 = vsub.f32 0.0, %v3863
        %v4312 = vsub.f32 0.0, %v3864
        %v4313 = vsub.f32 0.0, %v3865
        %v4314 = vsub.f32 0.0, %v3866
        %v4315 = vsub.f32 0.0, %v3867
        %v4316 = vsub.f32 0.0, %v3868
        %v4317 = vsub.f32 0.0, %v3869
        %v4318 = vsub.f32 0.0, %v3870
        %v4319 = vsub.f32 0.0, %v3871
        %v4320 = vsub.f32 0.0, %v3872
        %v4321 = vsub.f32 0.0, %v3873
        %v4322 = vsub.f32 0.0, %v3874
        %v4323 = vsub.f32 0.0, %v3875
        %v4324 = vsub.f32 0.0, %v3876
        %v4325 = vsub.f32 0.0, %v3877
        %v4326 = vsub.f32 0.0, %v3878
        %v4327 = vsub.f32 0.0, %v3879
        %v4328 = vsub.f32 0.0, %v3880
        %v4329 = vsub.f32 0.0, %v3881
        %v4330 = vsub.f32 0.0, %v3882
        %v4331 = vsub.f32 0.0, %v3883
        %v4332 = vsub.f32 0.0, %v3884
        %v4333 = vsub.f32 0.0, %v3885
        %v4334 = vsub.f32 0.0, %v3886
        %v4335 = vsub.f32 0.0, %v3887
        %v4336 = vsub.f32 0.0, %v3888
        %v4337 = vsub.f32 0.0, %v3889
        %v4338 = vsub.f32 0.0, %v3890
        %v4339 = vmul.f32 %v4307, %v3859
        %v4340 = vmul.f32 %v4308, %v3860
        %v4341 = vmul.f32 %v4309, %v3861
        %v4342 = vmul.f32 %v4310, %v3862
        %v4343 = vmul.f32 %v4311, %v3863
        %v4344 = vmul.f32 %v4312, %v3864
        %v4345 = vmul.f32 %v4313, %v3865
        %v4346 = vmul.f32 %v4314, %v3866
        %v4347 = vmul.f32 %v4315, %v3867
        %v4348 = vmul.f32 %v4316, %v3868
        %v4349 = vmul.f32 %v4317, %v3869
        %v4350 = vmul.f32 %v4318, %v3870
        %v4351 = vmul.f32 %v4319, %v3871
        %v4352 = vmul.f32 %v4320, %v3872
        %v4353 = vmul.f32 %v4321, %v3873
        %v4354 = vmul.f32 %v4322, %v3874
        %v4355 = vmul.f32 %v4323, %v3875
        %v4356 = vmul.f32 %v4324, %v3876
        %v4357 = vmul.f32 %v4325, %v3877
        %v4358 = vmul.f32 %v4326, %v3878
        %v4359 = vmul.f32 %v4327, %v3879
        %v4360 = vmul.f32 %v4328, %v3880
        %v4361 = vmul.f32 %v4329, %v3881
        %v4362 = vmul.f32 %v4330, %v3882
        %v4363 = vmul.f32 %v4331, %v3883
        %v4364 = vmul.f32 %v4332, %v3884
        %v4365 = vmul.f32 %v4333, %v3885
        %v4366 = vmul.f32 %v4334, %v3886
        %v4367 = vmul.f32 %v4335, %v3887
        %v4368 = vmul.f32 %v4336, %v3888
        %v4369 = vmul.f32 %v4337, %v3889
        %v4370 = vmul.f32 %v4338, %v3890
        %v4371 = vmul.f32 %v4339, 1.442695
        %v4372 = vpow.pop %v4371
        %v4373 = vmul.f32 %v4340, 1.442695
        %v4374 = vpow.pop %v4373
        %v4375 = vmul.f32 %v4341, 1.442695
        %v4376 = vpow.pop %v4375
        %v4377 = vmul.f32 %v4342, 1.442695
        %v4378 = vpow.pop %v4377
        %v4379 = vmul.f32 %v4343, 1.442695
        %v4380 = vpow.pop %v4379
        %v4381 = vmul.f32 %v4344, 1.442695
        %v4382 = vpow.pop %v4381
        %v4383 = vmul.f32 %v4345, 1.442695
        %v4384 = vpow.pop %v4383
        %v4385 = vmul.f32 %v4346, 1.442695
        %v4386 = vpow.pop %v4385
        %v4387 = vmul.f32 %v4347, 1.442695
        %v4388 = vpow.pop %v4387
        %v4389 = vmul.f32 %v4348, 1.442695
        %v4390 = vpow.pop %v4389
        %v4391 = vmul.f32 %v4349, 1.442695
        %v4392 = vpow.pop %v4391
        %v4393 = vmul.f32 %v4350, 1.442695
        %v4394 = vpow.pop %v4393
        %v4395 = vmul.f32 %v4351, 1.442695
        %v4396 = vpow.pop %v4395
        %v4397 = vmul.f32 %v4352, 1.442695
        %v4398 = vpow.pop %v4397
        %v4399 = vmul.f32 %v4353, 1.442695
        %v4400 = vpow.pop %v4399
        %v4401 = vmul.f32 %v4354, 1.442695
        %v4402 = vpow.pop %v4401
        %v4403 = vmul.f32 %v4355, 1.442695
        %v4404 = vpow.pop %v4403
        %v4405 = vmul.f32 %v4356, 1.442695
        %v4406 = vpow.pop %v4405
        %v4407 = vmul.f32 %v4357, 1.442695
        %v4408 = vpow.pop %v4407
        %v4409 = vmul.f32 %v4358, 1.442695
        %v4410 = vpow.pop %v4409
        %v4411 = vmul.f32 %v4359, 1.442695
        %v4412 = vpow.pop %v4411
        %v4413 = vmul.f32 %v4360, 1.442695
        %v4414 = vpow.pop %v4413
        %v4415 = vmul.f32 %v4361, 1.442695
        %v4416 = vpow.pop %v4415
        %v4417 = vmul.f32 %v4362, 1.442695
        %v4418 = vpow.pop %v4417
        %v4419 = vmul.f32 %v4363, 1.442695
        %v4420 = vpow.pop %v4419
        %v4421 = vmul.f32 %v4364, 1.442695
        %v4422 = vpow.pop %v4421
        %v4423 = vmul.f32 %v4365, 1.442695
        %v4424 = vpow.pop %v4423
        %v4425 = vmul.f32 %v4366, 1.442695
        %v4426 = vpow.pop %v4425
        %v4427 = vmul.f32 %v4367, 1.442695
        %v4428 = vpow.pop %v4427
        %v4429 = vmul.f32 %v4368, 1.442695
        %v4430 = vpow.pop %v4429
        %v4431 = vmul.f32 %v4369, 1.442695
        %v4432 = vpow.pop %v4431
        %v4433 = vmul.f32 %v4370, 1.442695
        %v4434 = vpow.pop %v4433
        %v4435 = vmul.f32 %v4275, %v4372
        %v4436 = vmul.f32 %v4276, %v4374
        %v4437 = vmul.f32 %v4277, %v4376
        %v4438 = vmul.f32 %v4278, %v4378
        %v4439 = vmul.f32 %v4279, %v4380
        %v4440 = vmul.f32 %v4280, %v4382
        %v4441 = vmul.f32 %v4281, %v4384
        %v4442 = vmul.f32 %v4282, %v4386
        %v4443 = vmul.f32 %v4283, %v4388
        %v4444 = vmul.f32 %v4284, %v4390
        %v4445 = vmul.f32 %v4285, %v4392
        %v4446 = vmul.f32 %v4286, %v4394
        %v4447 = vmul.f32 %v4287, %v4396
        %v4448 = vmul.f32 %v4288, %v4398
        %v4449 = vmul.f32 %v4289, %v4400
        %v4450 = vmul.f32 %v4290, %v4402
        %v4451 = vmul.f32 %v4291, %v4404
        %v4452 = vmul.f32 %v4292, %v4406
        %v4453 = vmul.f32 %v4293, %v4408
        %v4454 = vmul.f32 %v4294, %v4410
        %v4455 = vmul.f32 %v4295, %v4412
        %v4456 = vmul.f32 %v4296, %v4414
        %v4457 = vmul.f32 %v4297, %v4416
        %v4458 = vmul.f32 %v4298, %v4418
        %v4459 = vmul.f32 %v4299, %v4420
        %v4460 = vmul.f32 %v4300, %v4422
        %v4461 = vmul.f32 %v4301, %v4424
        %v4462 = vmul.f32 %v4302, %v4426
        %v4463 = vmul.f32 %v4303, %v4428
        %v4464 = vmul.f32 %v4304, %v4430
        %v4465 = vmul.f32 %v4305, %v4432
        %v4466 = vmul.f32 %v4306, %v4434
        %v4467 = vsub.f32 1.0, %v4435
        %v4468 = vsub.f32 1.0, %v4436
        %v4469 = vsub.f32 1.0, %v4437
        %v4470 = vsub.f32 1.0, %v4438
        %v4471 = vsub.f32 1.0, %v4439
        %v4472 = vsub.f32 1.0, %v4440
        %v4473 = vsub.f32 1.0, %v4441
        %v4474 = vsub.f32 1.0, %v4442
        %v4475 = vsub.f32 1.0, %v4443
        %v4476 = vsub.f32 1.0, %v4444
        %v4477 = vsub.f32 1.0, %v4445
        %v4478 = vsub.f32 1.0, %v4446
        %v4479 = vsub.f32 1.0, %v4447
        %v4480 = vsub.f32 1.0, %v4448
        %v4481 = vsub.f32 1.0, %v4449
        %v4482 = vsub.f32 1.0, %v4450
        %v4483 = vsub.f32 1.0, %v4451
        %v4484 = vsub.f32 1.0, %v4452
        %v4485 = vsub.f32 1.0, %v4453
        %v4486 = vsub.f32 1.0, %v4454
        %v4487 = vsub.f32 1.0, %v4455
        %v4488 = vsub.f32 1.0, %v4456
        %v4489 = vsub.f32 1.0, %v4457
        %v4490 = vsub.f32 1.0, %v4458
        %v4491 = vsub.f32 1.0, %v4459
        %v4492 = vsub.f32 1.0, %v4460
        %v4493 = vsub.f32 1.0, %v4461
        %v4494 = vsub.f32 1.0, %v4462
        %v4495 = vsub.f32 1.0, %v4463
        %v4496 = vsub.f32 1.0, %v4464
        %v4497 = vsub.f32 1.0, %v4465
        %v4498 = vsub.f32 1.0, %v4466
        %v4499 = vmul.f32 %v3827, %v4467
        %v4500 = vmul.f32 %v3828, %v4468
        %v4501 = vmul.f32 %v3829, %v4469
        %v4502 = vmul.f32 %v3830, %v4470
        %v4503 = vmul.f32 %v3831, %v4471
        %v4504 = vmul.f32 %v3832, %v4472
        %v4505 = vmul.f32 %v3833, %v4473
        %v4506 = vmul.f32 %v3834, %v4474
        %v4507 = vmul.f32 %v3835, %v4475
        %v4508 = vmul.f32 %v3836, %v4476
        %v4509 = vmul.f32 %v3837, %v4477
        %v4510 = vmul.f32 %v3838, %v4478
        %v4511 = vmul.f32 %v3839, %v4479
        %v4512 = vmul.f32 %v3840, %v4480
        %v4513 = vmul.f32 %v3841, %v4481
        %v4514 = vmul.f32 %v3842, %v4482
        %v4515 = vmul.f32 %v3843, %v4483
        %v4516 = vmul.f32 %v3844, %v4484
        %v4517 = vmul.f32 %v3845, %v4485
        %v4518 = vmul.f32 %v3846, %v4486
        %v4519 = vmul.f32 %v3847, %v4487
        %v4520 = vmul.f32 %v3848, %v4488
        %v4521 = vmul.f32 %v3849, %v4489
        %v4522 = vmul.f32 %v3850, %v4490
        %v4523 = vmul.f32 %v3851, %v4491
        %v4524 = vmul.f32 %v3852, %v4492
        %v4525 = vmul.f32 %v3853, %v4493
        %v4526 = vmul.f32 %v3854, %v4494
        %v4527 = vmul.f32 %v3855, %v4495
        %v4528 = vmul.f32 %v3856, %v4496
        %v4529 = vmul.f32 %v3857, %v4497
        %v4530 = vmul.f32 %v3858, %v4498
        %v4531 = vadd.f32 %v4499, 1.0
        %v4532 = vadd.f32 %v4500, 1.0
        %v4533 = vadd.f32 %v4501, 1.0
        %v4534 = vadd.f32 %v4502, 1.0
        %v4535 = vadd.f32 %v4503, 1.0
        %v4536 = vadd.f32 %v4504, 1.0
        %v4537 = vadd.f32 %v4505, 1.0
        %v4538 = vadd.f32 %v4506, 1.0
        %v4539 = vadd.f32 %v4507, 1.0
        %v4540 = vadd.f32 %v4508, 1.0
        %v4541 = vadd.f32 %v4509, 1.0
        %v4542 = vadd.f32 %v4510, 1.0
        %v4543 = vadd.f32 %v4511, 1.0
        %v4544 = vadd.f32 %v4512, 1.0
        %v4545 = vadd.f32 %v4513, 1.0
        %v4546 = vadd.f32 %v4514, 1.0
        %v4547 = vadd.f32 %v4515, 1.0
        %v4548 = vadd.f32 %v4516, 1.0
        %v4549 = vadd.f32 %v4517, 1.0
        %v4550 = vadd.f32 %v4518, 1.0
        %v4551 = vadd.f32 %v4519, 1.0
        %v4552 = vadd.f32 %v4520, 1.0
        %v4553 = vadd.f32 %v4521, 1.0
        %v4554 = vadd.f32 %v4522, 1.0
        %v4555 = vadd.f32 %v4523, 1.0
        %v4556 = vadd.f32 %v4524, 1.0
        %v4557 = vadd.f32 %v4525, 1.0
        %v4558 = vadd.f32 %v4526, 1.0
        %v4559 = vadd.f32 %v4527, 1.0
        %v4560 = vadd.f32 %v4528, 1.0
        %v4561 = vadd.f32 %v4529, 1.0
        %v4562 = vadd.f32 %v4530, 1.0
        %v4563 = vmul.f32 %v3731, %v4531
        %v4564 = vmul.f32 %v3732, %v4532
        %v4565 = vmul.f32 %v3733, %v4533
        %v4566 = vmul.f32 %v3734, %v4534
        %v4567 = vmul.f32 %v3735, %v4535
        %v4568 = vmul.f32 %v3736, %v4536
        %v4569 = vmul.f32 %v3737, %v4537
        %v4570 = vmul.f32 %v3738, %v4538
        %v4571 = vmul.f32 %v3739, %v4539
        %v4572 = vmul.f32 %v3740, %v4540
        %v4573 = vmul.f32 %v3741, %v4541
        %v4574 = vmul.f32 %v3742, %v4542
        %v4575 = vmul.f32 %v3743, %v4543
        %v4576 = vmul.f32 %v3744, %v4544
        %v4577 = vmul.f32 %v3745, %v4545
        %v4578 = vmul.f32 %v3746, %v4546
        %v4579 = vmul.f32 %v3747, %v4547
        %v4580 = vmul.f32 %v3748, %v4548
        %v4581 = vmul.f32 %v3749, %v4549
        %v4582 = vmul.f32 %v3750, %v4550
        %v4583 = vmul.f32 %v3751, %v4551
        %v4584 = vmul.f32 %v3752, %v4552
        %v4585 = vmul.f32 %v3753, %v4553
        %v4586 = vmul.f32 %v3754, %v4554
        %v4587 = vmul.f32 %v3755, %v4555
        %v4588 = vmul.f32 %v3756, %v4556
        %v4589 = vmul.f32 %v3757, %v4557
        %v4590 = vmul.f32 %v3758, %v4558
        %v4591 = vmul.f32 %v3759, %v4559
        %v4592 = vmul.f32 %v3760, %v4560
        %v4593 = vmul.f32 %v3761, %v4561
        %v4594 = vmul.f32 %v3762, %v4562
        %v4595 = vpack.c.bf16 %v4567, %v4563
        %v4596 = vpack.c.bf16 %v4568, %v4564
        %v4597 = vpack.c.bf16 %v4569, %v4565
        %v4598 = vpack.c.bf16 %v4570, %v4566
        %v4599 = vpack.c.bf16 %v4575, %v4571
        %v4600 = vpack.c.bf16 %v4576, %v4572
        %v4601 = vpack.c.bf16 %v4577, %v4573
        %v4602 = vpack.c.bf16 %v4578, %v4574
        %v4603 = vpack.c.bf16 %v4583, %v4579
        %v4604 = vpack.c.bf16 %v4584, %v4580
        %v4605 = vpack.c.bf16 %v4585, %v4581
        %v4606 = vpack.c.bf16 %v4586, %v4582
        %v4607 = vpack.c.bf16 %v4591, %v4587
        %v4608 = vpack.c.bf16 %v4592, %v4588
        %v4609 = vpack.c.bf16 %v4593, %v4589
        %v4610 = vpack.c.bf16 %v4594, %v4590
        %v4611 = vld [vmem:[#allocation13] sm:$0xf]
        %v4612 = vld [vmem:[#allocation13 + $0x4] sm:$0xf]
        %v4613 = vld [vmem:[#allocation13 + $0x8] sm:$0xf]
        %v4614 = vld [vmem:[#allocation13 + $0xc] sm:$0xf]
        %v4615 = vld [vmem:[#allocation13 + $0x10] sm:$0xf]
        %v4616 = vld [vmem:[#allocation13 + $0x14] sm:$0xf]
        %v4617 = vld [vmem:[#allocation13 + $0x18] sm:$0xf]
        %v4618 = vld [vmem:[#allocation13 + $0x1c] sm:$0xf]
        %v4619 = vld [vmem:[#allocation13 + $0x20] sm:$0xf]
        %v4620 = vld [vmem:[#allocation13 + $0x24] sm:$0xf]
        %v4621 = vld [vmem:[#allocation13 + $0x28] sm:$0xf]
        %v4622 = vld [vmem:[#allocation13 + $0x2c] sm:$0xf]
        %v4623 = vld [vmem:[#allocation13 + $0x30] sm:$0xf]
        %v4624 = vld [vmem:[#allocation13 + $0x34] sm:$0xf]
        %v4625 = vld [vmem:[#allocation13 + $0x38] sm:$0xf]
        %v4626 = vld [vmem:[#allocation13 + $0x3c] sm:$0xf]
        %v4627 = vld [vmem:[#allocation13 + $0x40] sm:$0xf]
        %v4628 = vld [vmem:[#allocation13 + $0x44] sm:$0xf]
        %v4629 = vld [vmem:[#allocation13 + $0x48] sm:$0xf]
        %v4630 = vld [vmem:[#allocation13 + $0x4c] sm:$0xf]
        %v4631 = vld [vmem:[#allocation13 + $0x50] sm:$0xf]
        %v4632 = vld [vmem:[#allocation13 + $0x54] sm:$0xf]
        %v4633 = vld [vmem:[#allocation13 + $0x58] sm:$0xf]
        %v4634 = vld [vmem:[#allocation13 + $0x5c] sm:$0xf]
        %v4635 = vld [vmem:[#allocation13 + $0x60] sm:$0xf]
        %v4636 = vld [vmem:[#allocation13 + $0x64] sm:$0xf]
        %v4637 = vld [vmem:[#allocation13 + $0x68] sm:$0xf]
        %v4638 = vld [vmem:[#allocation13 + $0x6c] sm:$0xf]
        %v4639 = vld [vmem:[#allocation13 + $0x70] sm:$0xf]
        %v4640 = vld [vmem:[#allocation13 + $0x74] sm:$0xf]
        %v4641 = vld [vmem:[#allocation13 + $0x78] sm:$0xf]
        %v4642 = vld [vmem:[#allocation13 + $0x7c] sm:$0xf]
        %v4643 = vld [vmem:[#allocation13 + $0x80] sm:$0xf]
        %v4644 = vld [vmem:[#allocation13 + $0x84] sm:$0xf]
        %v4645 = vld [vmem:[#allocation13 + $0x88] sm:$0xf]
        %v4646 = vld [vmem:[#allocation13 + $0x8c] sm:$0xf]
        %v4647 = vld [vmem:[#allocation13 + $0x90] sm:$0xf]
        %v4648 = vld [vmem:[#allocation13 + $0x94] sm:$0xf]
        %v4649 = vld [vmem:[#allocation13 + $0x98] sm:$0xf]
        %v4650 = vld [vmem:[#allocation13 + $0x9c] sm:$0xf]
        %v4651 = vld [vmem:[#allocation13 + $0xa0] sm:$0xf]
        %v4652 = vld [vmem:[#allocation13 + $0xa4] sm:$0xf]
        %v4653 = vld [vmem:[#allocation13 + $0xa8] sm:$0xf]
        %v4654 = vld [vmem:[#allocation13 + $0xac] sm:$0xf]
        %v4655 = vld [vmem:[#allocation13 + $0xb0] sm:$0xf]
        %v4656 = vld [vmem:[#allocation13 + $0xb4] sm:$0xf]
        %v4657 = vld [vmem:[#allocation13 + $0xb8] sm:$0xf]
        %v4658 = vld [vmem:[#allocation13 + $0xbc] sm:$0xf]
        %v4659 = vld [vmem:[#allocation13 + $0xc0] sm:$0xf]
        %v4660 = vld [vmem:[#allocation13 + $0xc4] sm:$0xf]
        %v4661 = vld [vmem:[#allocation13 + $0xc8] sm:$0xf]
        %v4662 = vld [vmem:[#allocation13 + $0xcc] sm:$0xf]
        %v4663 = vld [vmem:[#allocation13 + $0xd0] sm:$0xf]
        %v4664 = vld [vmem:[#allocation13 + $0xd4] sm:$0xf]
        %v4665 = vld [vmem:[#allocation13 + $0xd8] sm:$0xf]
        %v4666 = vld [vmem:[#allocation13 + $0xdc] sm:$0xf]
        %v4667 = vld [vmem:[#allocation13 + $0xe0] sm:$0xf]
        %v4668 = vld [vmem:[#allocation13 + $0xe4] sm:$0xf]
        %v4669 = vld [vmem:[#allocation13 + $0xe8] sm:$0xf]
        %v4670 = vld [vmem:[#allocation13 + $0xec] sm:$0xf]
        %v4671 = vld [vmem:[#allocation13 + $0xf0] sm:$0xf]
        %v4672 = vld [vmem:[#allocation13 + $0xf4] sm:$0xf]
        %v4673 = vld [vmem:[#allocation13 + $0xf8] sm:$0xf]
        %v4674 = vld [vmem:[#allocation13 + $0xfc] sm:$0xf]
        %v4675 = vld [vmem:[%s12] sm:$0x1]
        %v4677 = vlaneseq
        %v4678 = vshrl.u32 %v4677, 7
        %v4679 = vsub.s32 0, %v4678
        %v4680 = vrot.slane %v4675, %v4679
        %v4746 = vunpack.c.l.b16 %v4611
        %v4747 = vunpack.c.l.b16 %v4612
        %v4748 = vunpack.c.l.b16 %v4613
        %v4749 = vunpack.c.l.b16 %v4614
        %v4750 = vunpack.c.l.b16 %v4615
        %v4751 = vunpack.c.l.b16 %v4616
        %v4752 = vunpack.c.l.b16 %v4617
        %v4753 = vunpack.c.l.b16 %v4618
        %v4754 = vunpack.c.l.b16 %v4619
        %v4755 = vunpack.c.l.b16 %v4620
        %v4756 = vunpack.c.l.b16 %v4621
        %v4757 = vunpack.c.l.b16 %v4622
        %v4758 = vunpack.c.l.b16 %v4623
        %v4759 = vunpack.c.l.b16 %v4624
        %v4760 = vunpack.c.l.b16 %v4625
        %v4761 = vunpack.c.l.b16 %v4626
        %v4762 = vunpack.c.l.b16 %v4627
        %v4763 = vunpack.c.l.b16 %v4628
        %v4764 = vunpack.c.l.b16 %v4629
        %v4765 = vunpack.c.l.b16 %v4630
        %v4766 = vunpack.c.l.b16 %v4631
        %v4767 = vunpack.c.l.b16 %v4632
        %v4768 = vunpack.c.l.b16 %v4633
        %v4769 = vunpack.c.l.b16 %v4634
        %v4770 = vunpack.c.l.b16 %v4635
        %v4771 = vunpack.c.l.b16 %v4636
        %v4772 = vunpack.c.l.b16 %v4637
        %v4773 = vunpack.c.l.b16 %v4638
        %v4774 = vunpack.c.l.b16 %v4639
        %v4775 = vunpack.c.l.b16 %v4640
        %v4776 = vunpack.c.l.b16 %v4641
        %v4777 = vunpack.c.l.b16 %v4642
        %v4778 = vunpack.c.l.b16 %v4643
        %v4779 = vunpack.c.l.b16 %v4644
        %v4780 = vunpack.c.l.b16 %v4645
        %v4781 = vunpack.c.l.b16 %v4646
        %v4782 = vunpack.c.l.b16 %v4647
        %v4783 = vunpack.c.l.b16 %v4648
        %v4784 = vunpack.c.l.b16 %v4649
        %v4785 = vunpack.c.l.b16 %v4650
        %v4786 = vunpack.c.l.b16 %v4651
        %v4787 = vunpack.c.l.b16 %v4652
        %v4788 = vunpack.c.l.b16 %v4653
        %v4789 = vunpack.c.l.b16 %v4654
        %v4790 = vunpack.c.l.b16 %v4655
        %v4791 = vunpack.c.l.b16 %v4656
        %v4792 = vunpack.c.l.b16 %v4657
        %v4793 = vunpack.c.l.b16 %v4658
        %v4794 = vunpack.c.l.b16 %v4659
        %v4795 = vunpack.c.l.b16 %v4660
        %v4796 = vunpack.c.l.b16 %v4661
        %v4797 = vunpack.c.l.b16 %v4662
        %v4798 = vunpack.c.l.b16 %v4663
        %v4799 = vunpack.c.l.b16 %v4664
        %v4800 = vunpack.c.l.b16 %v4665
        %v4801 = vunpack.c.l.b16 %v4666
        %v4802 = vunpack.c.l.b16 %v4667
        %v4803 = vunpack.c.l.b16 %v4668
        %v4804 = vunpack.c.l.b16 %v4669
        %v4805 = vunpack.c.l.b16 %v4670
        %v4806 = vunpack.c.l.b16 %v4671
        %v4807 = vunpack.c.l.b16 %v4672
        %v4808 = vunpack.c.l.b16 %v4673
        %v4809 = vunpack.c.l.b16 %v4674
        %v4810 = vpack.c.b16 %v4747, %v4746
        %v4811 = vpack.c.b16 %v4749, %v4748
        %v4812 = vpack.c.b16 %v4751, %v4750
        %v4813 = vpack.c.b16 %v4753, %v4752
        %v4814 = vpack.c.b16 %v4755, %v4754
        %v4815 = vpack.c.b16 %v4757, %v4756
        %v4816 = vpack.c.b16 %v4759, %v4758
        %v4817 = vpack.c.b16 %v4761, %v4760
        %v4818 = vpack.c.b16 %v4763, %v4762
        %v4819 = vpack.c.b16 %v4765, %v4764
        %v4820 = vpack.c.b16 %v4767, %v4766
        %v4821 = vpack.c.b16 %v4769, %v4768
        %v4822 = vpack.c.b16 %v4771, %v4770
        %v4823 = vpack.c.b16 %v4773, %v4772
        %v4824 = vpack.c.b16 %v4775, %v4774
        %v4825 = vpack.c.b16 %v4777, %v4776
        %v4826 = vpack.c.b16 %v4779, %v4778
        %v4827 = vpack.c.b16 %v4781, %v4780
        %v4828 = vpack.c.b16 %v4783, %v4782
        %v4829 = vpack.c.b16 %v4785, %v4784
        %v4830 = vpack.c.b16 %v4787, %v4786
        %v4831 = vpack.c.b16 %v4789, %v4788
        %v4832 = vpack.c.b16 %v4791, %v4790
        %v4833 = vpack.c.b16 %v4793, %v4792
        %v4834 = vpack.c.b16 %v4795, %v4794
        %v4835 = vpack.c.b16 %v4797, %v4796
        %v4836 = vpack.c.b16 %v4799, %v4798
        %v4837 = vpack.c.b16 %v4801, %v4800
        %v4838 = vpack.c.b16 %v4803, %v4802
        %v4839 = vpack.c.b16 %v4805, %v4804
        %v4840 = vpack.c.b16 %v4807, %v4806
        %v4841 = vpack.c.b16 %v4809, %v4808
        %4874 = vmatprep.subr.bf16.mxu0 0
        %4875 = vmatpush1.bf16.msra.mxu0 %v4810
        %4876 = vmatprep.subr.bf16.mxu0 0
        %4877 = vmatpush1.bf16.msra.mxu0 %v4811
        %4878 = vmatprep.subr.bf16.mxu0 0
        %4879 = vmatpush1.bf16.msra.mxu0 %v4812
        %4880 = vmatprep.subr.bf16.mxu0 0
        %4881 = vmatpush1.bf16.msra.mxu0 %v4813
        %4882 = vmatprep.subr.bf16.mxu0 0
        %4883 = vmatpush1.bf16.msra.mxu0 %v4814
        %4884 = vmatprep.subr.bf16.mxu0 0
        %4885 = vmatpush1.bf16.msra.mxu0 %v4815
        %4886 = vmatprep.subr.bf16.mxu0 0
        %4887 = vmatpush1.bf16.msra.mxu0 %v4816
        %4888 = vmatprep.subr.bf16.mxu0 0
        %4889 = vmatpush1.bf16.msra.mxu0 %v4817
        %4890 = vmatprep.subr.bf16.mxu0 0
        %4891 = vmatpush1.bf16.msra.mxu0 %v4818
        %4892 = vmatprep.subr.bf16.mxu0 0
        %4893 = vmatpush1.bf16.msra.mxu0 %v4819
        %4894 = vmatprep.subr.bf16.mxu0 0
        %4895 = vmatpush1.bf16.msra.mxu0 %v4820
        %4896 = vmatprep.subr.bf16.mxu0 0
        %4897 = vmatpush1.bf16.msra.mxu0 %v4821
        %4898 = vmatprep.subr.bf16.mxu0 0
        %4899 = vmatpush1.bf16.msra.mxu0 %v4822
        %4900 = vmatprep.subr.bf16.mxu0 0
        %4901 = vmatpush1.bf16.msra.mxu0 %v4823
        %4902 = vmatprep.subr.bf16.mxu0 0
        %4903 = vmatpush1.bf16.msra.mxu0 %v4824
        %4904 = vmatprep.subr.bf16.mxu0 0
        %4905 = vmatpush1.bf16.msra.mxu0 %v4825
        %4906 = vmatprep.mubr.bf16.mxu0 %v4596
        %4907 = vmatmul.mubr.bf16.gmra.mrb[0].mxu0 %v4595
        %v4908 = vpop.f32.mrb[0].mxu0
        %v4909 = vadd.f32 %v4680, %v4908
        %v4910 = vpop.f32.mrb[0].mxu0
        %v4911 = vpop.f32.mrb[0].mxu0
        %v4912 = vadd.f32 %v4680, %v4911
        %v4913 = vpop.f32.mrb[0].mxu0
        %4914 = vmatprep.mubr.bf16.mxu0 %v4600
        %4915 = vmatmul.mubr.bf16.gmra.mrb[0].mxu0 %v4599
        %v4916 = vpop.f32.mrb[0].mxu0
        %v4917 = vadd.f32 %v4680, %v4916
        %v4918 = vpop.f32.mrb[0].mxu0
        %v4919 = vpop.f32.mrb[0].mxu0
        %v4920 = vadd.f32 %v4680, %v4919
        %v4921 = vpop.f32.mrb[0].mxu0
        %4922 = vmatprep.mubr.bf16.mxu0 %v4604
        %4923 = vmatmul.mubr.bf16.gmra.mrb[0].mxu0 %v4603
        %v4924 = vpop.f32.mrb[0].mxu0
        %v4925 = vadd.f32 %v4680, %v4924
        %v4926 = vpop.f32.mrb[0].mxu0
        %v4927 = vpop.f32.mrb[0].mxu0
        %v4928 = vadd.f32 %v4680, %v4927
        %v4929 = vpop.f32.mrb[0].mxu0
        %4930 = vmatprep.mubr.bf16.mxu0 %v4608
        %4931 = vmatmul.mubr.bf16.gmra.mrb[0].mxu0 %v4607
        %v4932 = vpop.f32.mrb[0].mxu0
        %v4933 = vadd.f32 %v4680, %v4932
        %v4934 = vpop.f32.mrb[0].mxu0
        %v4935 = vpop.f32.mrb[0].mxu0
        %v4936 = vadd.f32 %v4680, %v4935
        %v4937 = vpop.f32.mrb[0].mxu0
        %4938 = vdwg.mxu0
        %4939 = vmatprep.subr.bf16.mxu0 0
        %4940 = vmatpush1.bf16.msra.mxu0 %v4826
        %4941 = vmatprep.subr.bf16.mxu0 0
        %4942 = vmatpush1.bf16.msra.mxu0 %v4827
        %4943 = vmatprep.subr.bf16.mxu0 0
        %4944 = vmatpush1.bf16.msra.mxu0 %v4828
        %4945 = vmatprep.subr.bf16.mxu0 0
        %4946 = vmatpush1.bf16.msra.mxu0 %v4829
        %4947 = vmatprep.subr.bf16.mxu0 0
        %4948 = vmatpush1.bf16.msra.mxu0 %v4830
        %4949 = vmatprep.subr.bf16.mxu0 0
        %4950 = vmatpush1.bf16.msra.mxu0 %v4831
        %4951 = vmatprep.subr.bf16.mxu0 0
        %4952 = vmatpush1.bf16.msra.mxu0 %v4832
        %4953 = vmatprep.subr.bf16.mxu0 0
        %4954 = vmatpush1.bf16.msra.mxu0 %v4833
        %4955 = vmatprep.subr.bf16.mxu0 0
        %4956 = vmatpush1.bf16.msra.mxu0 %v4834
        %4957 = vmatprep.subr.bf16.mxu0 0
        %4958 = vmatpush1.bf16.msra.mxu0 %v4835
        %4959 = vmatprep.subr.bf16.mxu0 0
        %4960 = vmatpush1.bf16.msra.mxu0 %v4836
        %4961 = vmatprep.subr.bf16.mxu0 0
        %4962 = vmatpush1.bf16.msra.mxu0 %v4837
        %4963 = vmatprep.subr.bf16.mxu0 0
        %4964 = vmatpush1.bf16.msra.mxu0 %v4838
        %4965 = vmatprep.subr.bf16.mxu0 0
        %4966 = vmatpush1.bf16.msra.mxu0 %v4839
        %4967 = vmatprep.subr.bf16.mxu0 0
        %4968 = vmatpush1.bf16.msra.mxu0 %v4840
        %4969 = vmatprep.subr.bf16.mxu0 0
        %4970 = vmatpush1.bf16.msra.mxu0 %v4841
        %4971 = vmatprep.mubr.bf16.mxu0 %v4598
        %4972 = vmatmul.mubr.bf16.gmra.mrb[0].mxu0 %v4597
        %v4973 = vpop.f32.mrb[0].mxu0
        %v4974 = vadd.f32 %v4909, %v4973
        %v4975 = vpop.f32.mrb[0].mxu0
        %v4976 = vpop.f32.mrb[0].mxu0
        %v4977 = vadd.f32 %v4912, %v4976
        %v4978 = vpop.f32.mrb[0].mxu0
        %4979 = vmatprep.mubr.bf16.mxu0 %v4602
        %4980 = vmatmul.mubr.bf16.gmra.mrb[0].mxu0 %v4601
        %v4981 = vpop.f32.mrb[0].mxu0
        %v4982 = vadd.f32 %v4917, %v4981
        %v4983 = vpop.f32.mrb[0].mxu0
        %v4984 = vpop.f32.mrb[0].mxu0
        %v4985 = vadd.f32 %v4920, %v4984
        %v4986 = vpop.f32.mrb[0].mxu0
        %4987 = vmatprep.mubr.bf16.mxu0 %v4606
        %4988 = vmatmul.mubr.bf16.gmra.mrb[0].mxu0 %v4605
        %v4989 = vpop.f32.mrb[0].mxu0
        %v4990 = vadd.f32 %v4925, %v4989
        %v4991 = vpop.f32.mrb[0].mxu0
        %v4992 = vpop.f32.mrb[0].mxu0
        %v4993 = vadd.f32 %v4928, %v4992
        %v4994 = vpop.f32.mrb[0].mxu0
        %4995 = vmatprep.mubr.bf16.mxu0 %v4610
        %4996 = vmatmul.mubr.bf16.gmra.mrb[0].mxu0 %v4609
        %v4997 = vpop.f32.mrb[0].mxu0
        %v4998 = vadd.f32 %v4933, %v4997
        %v4999 = vpop.f32.mrb[0].mxu0
        %v5000 = vpop.f32.mrb[0].mxu0
        %v5001 = vadd.f32 %v4936, %v5000
        %v5002 = vpop.f32.mrb[0].mxu0
        %5003 = vdwg.mxu0
        %v5004 = vadd.f32 %v3241, %v4974
        %v5005 = vadd.f32 %v3242, %v4977
        %v5006 = vadd.f32 %v3243, %v4982
        %v5007 = vadd.f32 %v3244, %v4985
        %v5008 = vadd.f32 %v3245, %v4990
        %v5009 = vadd.f32 %v3246, %v4993
        %v5010 = vadd.f32 %v3247, %v4998
        %v5011 = vadd.f32 %v3248, %v5001
        %5012 = vst [vmem:[%s542] sm:$0xff] %v5004
        %5013 = vst [vmem:[%s542 + $0x8] sm:$0xff] %v5005
        %5014 = vst [vmem:[%s542 + $0x10] sm:$0xff] %v5006
        %5015 = vst [vmem:[%s542 + $0x18] sm:$0xff] %v5007
        %5016 = vst [vmem:[%s542 + $0x20] sm:$0xff] %v5008
        %5017 = vst [vmem:[%s542 + $0x28] sm:$0xff] %v5009
        %5018 = vst [vmem:[%s542 + $0x30] sm:$0xff] %v5010
        %5019 = vst [vmem:[%s542 + $0x38] sm:$0xff] %v5011
        %s5020 = sand.u32 %s319, 1
        %s5021 = scalar_lea.sflag [#allocation4], %s5020
        %s5022 = sand.u32 %s319, 1
        %s5023 = smul.addr %s5022, 64
        %s5024 = scalar_lea.vmem [#allocation14], %s5023
        // Predicated region
        $region101: #{tpu_custom_call.1} parent=71 // pred_check
          %p5025 = pneg %p329
        $region102: #{tpu_custom_call.1} parent=71 // pred_check_branch
          %5027 = sbr.rel (%p5025) target = $region104
        $region103: #{tpu_custom_call.1} parent=71 // pred_region
          %s5028 = smul.u32 4, %s33
          %s5030 = ssub.s32 1024, 1024
          %5031 = vsyncadd %s5021, %s5030
          %s5032 = smul.addr %s5028, 2
          %s5033 = smul.addr %s5032, 128
          %s5034 = scalar_lea.hbm %s13, %s5033
          %s5035 = sshll.u32 %s5024, 4
          %s5036 = int_to_ptr.vmem [resolvable:$true] %s5035
          %5041 = dma.vmem_to_hbm [thread:$0]  %s5036, 1024, %s5034, %s5021, 128, 128, 8
        $region104: #{tpu_custom_call.1} parent=71 // pred_fallthru
          _
      $region72: #{tpu_custom_call.1} parent=5 // pred_fallthru
        _
      %p5042 = scmp.le.s32.totalorder 2, %s28
      // Predicated region
      $region105: #{tpu_custom_call.1} parent=5 // pred_check
        %p5043 = pneg %p5042
      $region106: #{tpu_custom_call.1} parent=5 // pred_check_branch
        %5045 = sbr.rel (%p5043) target = $region108
      $region107: #{tpu_custom_call.1} parent=5 // pred_region
        %s5046 = ssub.s32 %s28, 2
        // Predicated region
        $region109: #{tpu_custom_call.1} parent=107 // pred_check
          %p5047 = pneg %p335
        $region110: #{tpu_custom_call.1} parent=107 // pred_check_branch
          %5049 = sbr.rel (%p5047) target = $region112
        $region111: #{tpu_custom_call.1} parent=107 // pred_region
          %s5050 = sand.u32 %s320, 1
          %s5051 = scalar_lea.sflag [#allocation4], %s5050
          %s5052 = sand.u32 %s320, 1
          %s5053 = smul.addr %s5052, 64
          %s5054 = scalar_lea.vmem [#allocation14], %s5053
          %5055 = dma.done %s5051, 1024
        $region112: #{tpu_custom_call.1} parent=107 // pred_fallthru
          _
      $region108: #{tpu_custom_call.1} parent=5 // pred_fallthru
        _
    $region6: #{tpu_custom_call.1} parent=1 // loop_footer
      %s32 = sadd.s32 1, %s28
    $region7: #{tpu_custom_call.1} parent=1 // loop_footer_branch
      %27 = sbr.rel target = $region3
    $region8: #{tpu_custom_call.1} parent=1 // loop_exit
      _
    %5056 = vsyncpa [#allocation3], 1
    %s5057 = scalar_lea.sflag [#allocation3], 1
    %5058 = vsyncpa %s5057, 1
    %5059 = vsyncpa [#allocation6], 1
    %5060 = vsyncpa [#allocation9], 1
    %5061 = vsyncpa [#allocation12], 1
    %5062 = vsyncpa [#allocation4], 1
    %s5063 = scalar_lea.sflag [#allocation4], 1
    %5064 = vsyncpa %s5063, 1

</llo_original>
